<compile_context>
chip_gen: v7x
topology: tpu7x:2x2x1
jax: 0.10.0
libtpu: 0.0.40
codegen_flags: <defaults>
</compile_context>

<pallas_src>
import jax
import jax.numpy as jnp
import numpy as np
from jax import lax
from jax.experimental import pallas as pl
from jax.experimental.pallas import tpu as pltpu


def _round_up(x, m):
    return ((x + m - 1) // m) * m


def make_caption_lstm_kernel(num_layers, T, Bp, Hp):
    """Builds the Pallas kernel body (layers unrolled in Python, time via fori_loop)."""
    G = 4 * Hp  # gate width, per-gate lane-aligned to 128

    def lstm_cell(gates, c_prev):
        # PyTorch gate order: i, f, g, o -- each gate occupies its own 128-lane tile.
        i_g = jax.nn.sigmoid(gates[:, 0 * Hp:1 * Hp])
        f_g = jax.nn.sigmoid(gates[:, 1 * Hp:2 * Hp])
        g_g = jnp.tanh(gates[:, 2 * Hp:3 * Hp])
        o_g = jax.nn.sigmoid(gates[:, 3 * Hp:4 * Hp])
        c_new = f_g * c_prev + i_g * g_g
        h_new = o_g * jnp.tanh(c_new)
        return h_new, c_new

    def kernel(*refs):
        # refs: x, w_ih0, w_hh0, b0, (w_cat_l, b_l)*(L-1), w_out, b_out,
        #       out, xproj_scr, htop_scr, h_scr, c_scr
        x_ref = refs[0]
        w_ih0_ref, w_hh0_ref, b0_ref = refs[1], refs[2], refs[3]
        deep_refs = refs[4:4 + 2 * (num_layers - 1)]
        idx = 4 + 2 * (num_layers - 1)
        w_out_ref = refs[idx]
        b_out_ref = refs[idx + 1]
        out_ref = refs[idx + 2]
        xproj_scr = refs[idx + 3]   # (T, Bp, 4*Hp) f32 VMEM
        htop_scr = refs[idx + 4]    # (T, Bp, Hp)   f32 VMEM
        h_scr = refs[idx + 5]       # (L, Bp, Hp)   f32 VMEM
        c_scr = refs[idx + 6]       # (L, Bp, Hp)   f32 VMEM

        # zero-initialize recurrent state
        h_scr[...] = jnp.zeros_like(h_scr)
        c_scr[...] = jnp.zeros_like(c_scr)

        # ---- batched (over T*Bp) layer-0 input projection: single MXU matmul ----
        Ep = x_ref.shape[2]
        x_all = x_ref[...].reshape(T * Bp, Ep)
        xproj = (jnp.dot(x_all, w_ih0_ref[...], preferred_element_type=jnp.float32)
                 + b0_ref[...])                                  # (T*Bp, 4Hp)
        xproj_scr[...] = xproj.reshape(T, Bp, G)

        # ---- serial recurrence: only h @ W_hh (layer 0) / fused concat matmul (l>0) ----
        def step(t, carry):
            gates0 = xproj_scr[t] + jnp.dot(h_scr[0], w_hh0_ref[...],
                                            preferred_element_type=jnp.float32)
            h_new, c_new = lstm_cell(gates0, c_scr[0])
            h_scr[0] = h_new
            c_scr[0] = c_new
            x_t = h_new
            for l in range(1, num_layers):
                w_cat_ref = deep_refs[2 * (l - 1)]               # (2*Hp, 4*Hp)
                b_ref = deep_refs[2 * (l - 1) + 1]               # (1, 4*Hp)
                cat = jnp.concatenate([x_t, h_scr[l]], axis=-1)  # (Bp, 2*Hp)
                gates = (jnp.dot(cat, w_cat_ref[...],
                                 preferred_element_type=jnp.float32) + b_ref[...])
                h_new, c_new = lstm_cell(gates, c_scr[l])
                h_scr[l] = h_new
                c_scr[l] = c_new
                x_t = h_new
            htop_scr[t] = x_t
            return carry

        lax.fori_loop(0, T, step, 0, unroll=True)

        # ---- batched output Linear over all timesteps: single MXU matmul ----
        h_all = htop_scr[...].reshape(T * Bp, Hp)
        logits = (jnp.dot(h_all, w_out_ref[...], preferred_element_type=jnp.float32)
                  + b_out_ref[...])                              # (T*Bp, Vp)
        out_ref[...] = logits.reshape(out_ref.shape).astype(out_ref.dtype)

    return kernel


def caption_generator_forward(features, captions, params, num_layers, hidden_size):
    """Equivalent of CaptionGenerator.forward(features, captions).

    features: (B, E) float32
    captions: (B, T_cap) int32
    returns:  (B, T_cap, V) float32
    """
    emb_table = params["embedding"]                              # (V, E)
    V, E = emb_table.shape
    H = hidden_size

    # ---- glue: embedding gather + feature concat (batch-first) ----
    captions = captions[:, :-1]                                  # (B, T-1)
    embeddings = jnp.take(emb_table, captions, axis=0)           # (B, T-1, E)
    seq = jnp.concatenate([features[:, None, :], embeddings], 1) # (B, T, E)
    B, T, _ = seq.shape

    # ---- padding for (8, 128) tile alignment ----
    Bp = max(8, _round_up(B, 8))
    Ep = _round_up(E, 128)
    Hp = _round_up(H, 128)
    Vp = _round_up(V, 128)
    G = 4 * Hp

    x = jnp.transpose(seq, (1, 0, 2)).astype(jnp.float32)        # (T, B, E) time-major
    x = jnp.pad(x, ((0, 0), (0, Bp - B), (0, Ep - E)))           # (T, Bp, Ep)

    def pad_gate_weight(w, in_dim_pad):
        # (in_dim, 4H), gate order [i|f|g|o] -> (in_dim_pad, 4*Hp), each gate lane-aligned
        in_dim = w.shape[0]
        w4 = w.reshape(in_dim, 4, H)
        w4 = jnp.pad(w4, ((0, in_dim_pad - in_dim), (0, 0), (0, Hp - H)))
        return w4.reshape(in_dim_pad, G)

    def pad_gate_bias(b):
        b4 = b.reshape(4, H)
        b4 = jnp.pad(b4, ((0, 0), (0, Hp - H)))
        return b4.reshape(1, G)

    # layer 0 (input projection hoisted; only w_hh stays on the serial path)
    w_ih0, w_hh0, b0 = params["layers"][0]
    inputs = [x,
              pad_gate_weight(w_ih0, Ep),
              pad_gate_weight(w_hh0, Hp),
              pad_gate_bias(b0)]
    # deeper layers: fuse [w_ih; w_hh] -> one (2*Hp, 4*Hp) weight per layer
    for l in range(1, num_layers):
        w_ih, w_hh, b = params["layers"][l]
        w_cat = jnp.concatenate([pad_gate_weight(w_ih, Hp),
                                 pad_gate_weight(w_hh, Hp)], axis=0)
        inputs += [w_cat, pad_gate_bias(b)]
    # output Linear (batched over T*Bp in the kernel epilogue)
    w_out_p = jnp.pad(params["w_out"], ((0, Hp - H), (0, Vp - V)))
    b_out_p = jnp.pad(params["b_out"], ((0, 0), (0, Vp - V)))
    inputs += [w_out_p, b_out_p]

    out_padded = pl.pallas_call(
        make_caption_lstm_kernel(num_layers, T, Bp, Hp),
        out_shape=jax.ShapeDtypeStruct((T, Bp, Vp), jnp.float32),
        in_specs=[pl.BlockSpec(memory_space=pltpu.MemorySpace.VMEM)] * len(inputs),
        out_specs=pl.BlockSpec(memory_space=pltpu.MemorySpace.VMEM),
        scratch_shapes=[
            pltpu.VMEM((T, Bp, G), jnp.float32),            # hoisted layer-0 projection
            pltpu.VMEM((T, Bp, Hp), jnp.float32),           # collected top-layer h
            pltpu.VMEM((num_layers, Bp, Hp), jnp.float32),  # h state
            pltpu.VMEM((num_layers, Bp, Hp), jnp.float32),  # c state
        ],
    )(*inputs)

    # strip padding, back to batch-first
    out = out_padded[:, :B, :V]                                  # (T, B, V)
    return jnp.transpose(out, (1, 0, 2))                         # (B, T, V)


def init_params(key, embedding_dim, hidden_size, vocab_size, num_layers):
    """Deterministic synthetic parameters (PyTorch-style, stored transposed)."""
    E, H, V = embedding_dim, hidden_size, vocab_size
    keys = jax.random.split(key, 2 + 4 * num_layers + 2)
    k = iter(keys)
    scale = 1.0 / np.sqrt(H)

    params = {"embedding": jax.random.normal(next(k), (V, E), jnp.float32) * 0.1,
              "layers": []}
    for l in range(num_layers):
        in_dim = E if l == 0 else H
        w_ih = jax.random.uniform(next(k), (in_dim, 4 * H), jnp.float32, -scale, scale)
        w_hh = jax.random.uniform(next(k), (H, 4 * H), jnp.float32, -scale, scale)
        b_ih = jax.random.uniform(next(k), (1, 4 * H), jnp.float32, -scale, scale)
        b_hh = jax.random.uniform(next(k), (1, 4 * H), jnp.float32, -scale, scale)
        params["layers"].append((w_ih, w_hh, b_ih + b_hh))   # fold the two biases
    params["w_out"] = jax.random.uniform(next(k), (H, V), jnp.float32, -scale, scale)
    params["b_out"] = jax.random.uniform(next(k), (1, V), jnp.float32, -scale, scale)
    return params


def reference_forward(features, captions, params, num_layers, hidden_size):
    """Pure-JAX reference (mirrors the PyTorch forward semantics)."""
    H = hidden_size
    emb = jnp.take(params["embedding"], captions[:, :-1], axis=0)
    seq = jnp.concatenate([features[:, None, :], emb], axis=1)
    B, T, _ = seq.shape
    h = [jnp.zeros((B, H), jnp.float32) for _ in range(num_layers)]
    c = [jnp.zeros((B, H), jnp.float32) for _ in range(num_layers)]
    outs = []
    for t in range(T):
        x = seq[:, t, :]
        for l in range(num_layers):
            w_ih, w_hh, b = params["layers"][l]
            gates = x @ w_ih + h[l] @ w_hh + b
            i_g = jax.nn.sigmoid(gates[:, :H])
            f_g = jax.nn.sigmoid(gates[:, H:2 * H])
            g_g = jnp.tanh(gates[:, 2 * H:3 * H])
            o_g = jax.nn.sigmoid(gates[:, 3 * H:])
            c[l] = f_g * c[l] + i_g * g_g
            h[l] = o_g * jnp.tanh(c[l])
            x = h[l]
        outs.append(x @ params["w_out"] + params["b_out"][0])
    return jnp.stack(outs, axis=1)


if __name__ == "__main__":
    # small, forward-consistent shapes
    embedding_dim = 32
    hidden_size = 32
    vocab_size = 64
    num_layers = 2
    batch = 2
    caption_len = 10   # forward drops last token, prepends features -> T = 10

    root = jax.random.PRNGKey(0)
    k_param, k_feat, k_cap = jax.random.split(root, 3)

    params = init_params(k_param, embedding_dim, hidden_size, vocab_size, num_layers)
    features = jax.random.normal(k_feat, (batch, embedding_dim), jnp.float32)
    captions = jax.random.randint(k_cap, (batch, caption_len), 0, vocab_size,
                                  dtype=jnp.int32)

    out = caption_generator_forward(features, captions, params,
                                    num_layers, hidden_size)
    out = jax.block_until_ready(out)

    ref = reference_forward(features, captions, params, num_layers, hidden_size)
    assert out.shape == (batch, caption_len, vocab_size), out.shape
    assert np.allclose(np.asarray(out), np.asarray(ref), atol=1e-4, rtol=1e-4), (
        "Pallas kernel output mismatch vs. pure-JAX reference")

    print("KERNEL_OK")
</pallas_src>

<mosaic_0001>
module attributes {stable_mosaic.version = 11 : i64} {
  func.func @kernel(%arg0: memref<10x8x128xf32, #tpu.memory_space<vmem>>, %arg1: memref<128x512xf32, #tpu.memory_space<vmem>>, %arg2: memref<128x512xf32, #tpu.memory_space<vmem>>, %arg3: memref<1x512xf32, #tpu.memory_space<vmem>>, %arg4: memref<256x512xf32, #tpu.memory_space<vmem>>, %arg5: memref<1x512xf32, #tpu.memory_space<vmem>>, %arg6: memref<128x128xf32, #tpu.memory_space<vmem>>, %arg7: memref<1x128xf32, #tpu.memory_space<vmem>>, %arg8: memref<10x8x128xf32, #tpu.memory_space<vmem>>, %arg9: memref<10x8x512xf32, #tpu.memory_space<vmem>>, %arg10: memref<10x8x128xf32, #tpu.memory_space<vmem>>, %arg11: memref<2x8x128xf32, #tpu.memory_space<vmem>>, %arg12: memref<2x8x128xf32, #tpu.memory_space<vmem>>) attributes {dimension_semantics = [], scalar_prefetch = 0 : i64, scratch_operands = 4 : i64, tpu.core_type = #tpu.core_type<tc>} {
    %cst = arith.constant 0.000000e+00 : f32
    %0 = vector.broadcast %cst : f32 to vector<2x8x128xf32>
    %c0 = arith.constant 0 : index
    %c0_0 = arith.constant 0 : index
    %c0_1 = arith.constant 0 : index
    %1 = vector.load %arg11[%c0, %c0_0, %c0_1] : memref<2x8x128xf32, #tpu.memory_space<vmem>>, vector<2x8x128xf32>
    tpu.vector_store %arg11[%c0, %c0_0, %c0_1], %0 {strides = array<i32>} : memref<2x8x128xf32, #tpu.memory_space<vmem>>, vector<2x8x128xf32>,
    %cst_2 = arith.constant 0.000000e+00 : f32
    %2 = vector.broadcast %cst_2 : f32 to vector<2x8x128xf32>
    %c0_3 = arith.constant 0 : index
    %c0_4 = arith.constant 0 : index
    %c0_5 = arith.constant 0 : index
    %3 = vector.load %arg12[%c0_3, %c0_4, %c0_5] : memref<2x8x128xf32, #tpu.memory_space<vmem>>, vector<2x8x128xf32>
    tpu.vector_store %arg12[%c0_3, %c0_4, %c0_5], %2 {strides = array<i32>} : memref<2x8x128xf32, #tpu.memory_space<vmem>>, vector<2x8x128xf32>,
    %c0_6 = arith.constant 0 : index
    %c0_7 = arith.constant 0 : index
    %c0_8 = arith.constant 0 : index
    %4 = vector.load %arg0[%c0_6, %c0_7, %c0_8] : memref<10x8x128xf32, #tpu.memory_space<vmem>>, vector<10x8x128xf32>
    %5 = vector.shape_cast %4 : vector<10x8x128xf32> to vector<80x128xf32>
    %c0_9 = arith.constant 0 : index
    %c0_10 = arith.constant 0 : index
    %6 = vector.load %arg1[%c0_9, %c0_10] : memref<128x512xf32, #tpu.memory_space<vmem>>, vector<128x512xf32>
    %cst_11 = arith.constant dense<0.000000e+00> : vector<80x512xf32>
    %7 = tpu.matmul %5, %6, %cst_11 {dimension_numbers = #tpu.dot_dimension_numbers<[1], [0], [0], [1], [0, 0, 1, 1], [], []>} : vector<80x128xf32>, vector<128x512xf32>, vector<80x512xf32> -> vector<80x512xf32>
    %c0_12 = arith.constant 0 : index
    %c0_13 = arith.constant 0 : index
    %8 = vector.load %arg3[%c0_12, %c0_13] : memref<1x512xf32, #tpu.memory_space<vmem>>, vector<1x512xf32>
    %9 = vector.broadcast %8 : vector<1x512xf32> to vector<80x512xf32>
    %10 = arith.addf %7, %9 : vector<80x512xf32>
    %11 = vector.shape_cast %10 : vector<80x512xf32> to vector<10x8x512xf32>
    %c0_14 = arith.constant 0 : index
    %c0_15 = arith.constant 0 : index
    %c0_16 = arith.constant 0 : index
    %12 = vector.load %arg9[%c0_14, %c0_15, %c0_16] : memref<10x8x512xf32, #tpu.memory_space<vmem>>, vector<10x8x512xf32>
    tpu.vector_store %arg9[%c0_14, %c0_15, %c0_16], %11 {strides = array<i32>} : memref<10x8x512xf32, #tpu.memory_space<vmem>>, vector<10x8x512xf32>,
    %c0_i32 = arith.constant 0 : i32
    %13 = arith.index_cast %c0_i32 : i32 to index
    %c0_17 = arith.constant 0 : index
    %c0_18 = arith.constant 0 : index
    %14 = vector.load %arg9[%13, %c0_17, %c0_18] : memref<10x8x512xf32, #tpu.memory_space<vmem>>, vector<1x8x512xf32>
    %15 = vector.shape_cast %14 : vector<1x8x512xf32> to vector<8x512xf32>
    %c0_19 = arith.constant 0 : index
    %c0_20 = arith.constant 0 : index
    %c0_21 = arith.constant 0 : index
    %16 = vector.load %arg11[%c0_19, %c0_20, %c0_21] : memref<2x8x128xf32, #tpu.memory_space<vmem>>, vector<1x8x128xf32>
    %17 = vector.shape_cast %16 : vector<1x8x128xf32> to vector<8x128xf32>
    %c0_22 = arith.constant 0 : index
    %c0_23 = arith.constant 0 : index
    %18 = vector.load %arg2[%c0_22, %c0_23] : memref<128x512xf32, #tpu.memory_space<vmem>>, vector<128x512xf32>
    %cst_24 = arith.constant dense<0.000000e+00> : vector<8x512xf32>
    %19 = tpu.matmul %17, %18, %cst_24 {dimension_numbers = #tpu.dot_dimension_numbers<[1], [0], [0], [1], [0, 0, 1, 1], [], []>} : vector<8x128xf32>, vector<128x512xf32>, vector<8x512xf32> -> vector<8x512xf32>
    %20 = arith.addf %15, %19 : vector<8x512xf32>
    %c0_25 = arith.constant 0 : index
    %c0_26 = arith.constant 0 : index
    %c0_27 = arith.constant 0 : index
    %21 = vector.load %arg12[%c0_25, %c0_26, %c0_27] : memref<2x8x128xf32, #tpu.memory_space<vmem>>, vector<1x8x128xf32>
    %22 = vector.shape_cast %21 : vector<1x8x128xf32> to vector<8x128xf32>
    %23 = vector.extract_strided_slice %20 {offsets = [0, 0], sizes = [8, 128], strides = [1, 1]} : vector<8x512xf32> to vector<8x128xf32>
    %24 = arith.negf %23 : vector<8x128xf32>
    %25 = math.exp %24 : vector<8x128xf32>
    %cst_28 = arith.constant 1.000000e+00 : f32
    %26 = vector.broadcast %cst_28 : f32 to vector<8x128xf32>
    %27 = arith.addf %26, %25 : vector<8x128xf32>
    %28 = arith.divf %26, %27 : vector<8x128xf32>
    %29 = vector.extract_strided_slice %20 {offsets = [0, 128], sizes = [8, 128], strides = [1, 1]} : vector<8x512xf32> to vector<8x128xf32>
    %30 = arith.negf %29 : vector<8x128xf32>
    %31 = math.exp %30 : vector<8x128xf32>
    %cst_29 = arith.constant 1.000000e+00 : f32
    %32 = vector.broadcast %cst_29 : f32 to vector<8x128xf32>
    %33 = arith.addf %32, %31 : vector<8x128xf32>
    %34 = arith.divf %32, %33 : vector<8x128xf32>
    %35 = vector.extract_strided_slice %20 {offsets = [0, 256], sizes = [8, 128], strides = [1, 1]} : vector<8x512xf32> to vector<8x128xf32>
    %36 = math.tanh %35 : vector<8x128xf32>
    %37 = vector.extract_strided_slice %20 {offsets = [0, 384], sizes = [8, 128], strides = [1, 1]} : vector<8x512xf32> to vector<8x128xf32>
    %38 = arith.negf %37 : vector<8x128xf32>
    %39 = math.exp %38 : vector<8x128xf32>
    %cst_30 = arith.constant 1.000000e+00 : f32
    %40 = vector.broadcast %cst_30 : f32 to vector<8x128xf32>
    %41 = arith.addf %40, %39 : vector<8x128xf32>
    %42 = arith.divf %40, %41 : vector<8x128xf32>
    %43 = arith.mulf %34, %22 : vector<8x128xf32>
    %44 = arith.mulf %28, %36 : vector<8x128xf32>
    %45 = arith.addf %43, %44 : vector<8x128xf32>
    %46 = math.tanh %45 : vector<8x128xf32>
    %47 = arith.mulf %42, %46 : vector<8x128xf32>
    %c0_31 = arith.constant 0 : index
    %c0_32 = arith.constant 0 : index
    %c0_33 = arith.constant 0 : index
    %48 = vector.load %arg11[%c0_31, %c0_32, %c0_33] : memref<2x8x128xf32, #tpu.memory_space<vmem>>, vector<1x8x128xf32>
    %49 = vector.shape_cast %48 : vector<1x8x128xf32> to vector<8x128xf32>
    %50 = vector.shape_cast %47 : vector<8x128xf32> to vector<1x8x128xf32>
    tpu.vector_store %arg11[%c0_31, %c0_32, %c0_33], %50 {strides = array<i32>} : memref<2x8x128xf32, #tpu.memory_space<vmem>>, vector<1x8x128xf32>,
    %c0_34 = arith.constant 0 : index
    %c0_35 = arith.constant 0 : index
    %c0_36 = arith.constant 0 : index
    %51 = vector.load %arg12[%c0_34, %c0_35, %c0_36] : memref<2x8x128xf32, #tpu.memory_space<vmem>>, vector<1x8x128xf32>
    %52 = vector.shape_cast %51 : vector<1x8x128xf32> to vector<8x128xf32>
    %53 = vector.shape_cast %45 : vector<8x128xf32> to vector<1x8x128xf32>
    tpu.vector_store %arg12[%c0_34, %c0_35, %c0_36], %53 {strides = array<i32>} : memref<2x8x128xf32, #tpu.memory_space<vmem>>, vector<1x8x128xf32>,
    %c1 = arith.constant 1 : index
    %c0_37 = arith.constant 0 : index
    %c0_38 = arith.constant 0 : index
    %54 = vector.load %arg11[%c1, %c0_37, %c0_38] : memref<2x8x128xf32, #tpu.memory_space<vmem>>, vector<1x8x128xf32>
    %55 = vector.shape_cast %54 : vector<1x8x128xf32> to vector<8x128xf32>
    %56 = tpu.concatenate %47, %55 in 1 : vector<8x128xf32>, vector<8x128xf32> -> vector<8x256xf32>
    %c0_39 = arith.constant 0 : index
    %c0_40 = arith.constant 0 : index
    %57 = vector.load %arg4[%c0_39, %c0_40] : memref<256x512xf32, #tpu.memory_space<vmem>>, vector<256x512xf32>
    %cst_41 = arith.constant dense<0.000000e+00> : vector<8x512xf32>
    %58 = tpu.matmul %56, %57, %cst_41 {dimension_numbers = #tpu.dot_dimension_numbers<[1], [0], [0], [1], [0, 0, 1, 1], [], []>} : vector<8x256xf32>, vector<256x512xf32>, vector<8x512xf32> -> vector<8x512xf32>
    %c0_42 = arith.constant 0 : index
    %c0_43 = arith.constant 0 : index
    %59 = vector.load %arg5[%c0_42, %c0_43] : memref<1x512xf32, #tpu.memory_space<vmem>>, vector<1x512xf32>
    %60 = vector.broadcast %59 : vector<1x512xf32> to vector<8x512xf32>
    %61 = arith.addf %58, %60 : vector<8x512xf32>
    %c1_44 = arith.constant 1 : index
    %c0_45 = arith.constant 0 : index
    %c0_46 = arith.constant 0 : index
    %62 = vector.load %arg12[%c1_44, %c0_45, %c0_46] : memref<2x8x128xf32, #tpu.memory_space<vmem>>, vector<1x8x128xf32>
    %63 = vector.shape_cast %62 : vector<1x8x128xf32> to vector<8x128xf32>
    %64 = vector.extract_strided_slice %61 {offsets = [0, 0], sizes = [8, 128], strides = [1, 1]} : vector<8x512xf32> to vector<8x128xf32>
    %65 = arith.negf %64 : vector<8x128xf32>
    %66 = math.exp %65 : vector<8x128xf32>
    %cst_47 = arith.constant 1.000000e+00 : f32
    %67 = vector.broadcast %cst_47 : f32 to vector<8x128xf32>
    %68 = arith.addf %67, %66 : vector<8x128xf32>
    %69 = arith.divf %67, %68 : vector<8x128xf32>
    %70 = vector.extract_strided_slice %61 {offsets = [0, 128], sizes = [8, 128], strides = [1, 1]} : vector<8x512xf32> to vector<8x128xf32>
    %71 = arith.negf %70 : vector<8x128xf32>
    %72 = math.exp %71 : vector<8x128xf32>
    %cst_48 = arith.constant 1.000000e+00 : f32
    %73 = vector.broadcast %cst_48 : f32 to vector<8x128xf32>
    %74 = arith.addf %73, %72 : vector<8x128xf32>
    %75 = arith.divf %73, %74 : vector<8x128xf32>
    %76 = vector.extract_strided_slice %61 {offsets = [0, 256], sizes = [8, 128], strides = [1, 1]} : vector<8x512xf32> to vector<8x128xf32>
    %77 = math.tanh %76 : vector<8x128xf32>
    %78 = vector.extract_strided_slice %61 {offsets = [0, 384], sizes = [8, 128], strides = [1, 1]} : vector<8x512xf32> to vector<8x128xf32>
    %79 = arith.negf %78 : vector<8x128xf32>
    %80 = math.exp %79 : vector<8x128xf32>
    %cst_49 = arith.constant 1.000000e+00 : f32
    %81 = vector.broadcast %cst_49 : f32 to vector<8x128xf32>
    %82 = arith.addf %81, %80 : vector<8x128xf32>
    %83 = arith.divf %81, %82 : vector<8x128xf32>
    %84 = arith.mulf %75, %63 : vector<8x128xf32>
    %85 = arith.mulf %69, %77 : vector<8x128xf32>
    %86 = arith.addf %84, %85 : vector<8x128xf32>
    %87 = math.tanh %86 : vector<8x128xf32>
    %88 = arith.mulf %83, %87 : vector<8x128xf32>
    %c1_50 = arith.constant 1 : index
    %c0_51 = arith.constant 0 : index
    %c0_52 = arith.constant 0 : index
    %89 = vector.load %arg11[%c1_50, %c0_51, %c0_52] : memref<2x8x128xf32, #tpu.memory_space<vmem>>, vector<1x8x128xf32>
    %90 = vector.shape_cast %89 : vector<1x8x128xf32> to vector<8x128xf32>
    %91 = vector.shape_cast %88 : vector<8x128xf32> to vector<1x8x128xf32>
    tpu.vector_store %arg11[%c1_50, %c0_51, %c0_52], %91 {strides = array<i32>} : memref<2x8x128xf32, #tpu.memory_space<vmem>>, vector<1x8x128xf32>,
    %c1_53 = arith.constant 1 : index
    %c0_54 = arith.constant 0 : index
    %c0_55 = arith.constant 0 : index
    %92 = vector.load %arg12[%c1_53, %c0_54, %c0_55] : memref<2x8x128xf32, #tpu.memory_space<vmem>>, vector<1x8x128xf32>
    %93 = vector.shape_cast %92 : vector<1x8x128xf32> to vector<8x128xf32>
    %94 = vector.shape_cast %86 : vector<8x128xf32> to vector<1x8x128xf32>
    tpu.vector_store %arg12[%c1_53, %c0_54, %c0_55], %94 {strides = array<i32>} : memref<2x8x128xf32, #tpu.memory_space<vmem>>, vector<1x8x128xf32>,
    %95 = arith.index_cast %c0_i32 : i32 to index
    %c0_56 = arith.constant 0 : index
    %c0_57 = arith.constant 0 : index
    %96 = vector.load %arg10[%95, %c0_56, %c0_57] : memref<10x8x128xf32, #tpu.memory_space<vmem>>, vector<1x8x128xf32>
    %97 = vector.shape_cast %96 : vector<1x8x128xf32> to vector<8x128xf32>
    %98 = vector.shape_cast %88 : vector<8x128xf32> to vector<1x8x128xf32>
    tpu.vector_store %arg10[%95, %c0_56, %c0_57], %98 {strides = array<i32>} : memref<10x8x128xf32, #tpu.memory_space<vmem>>, vector<1x8x128xf32>,
    %c1_i32 = arith.constant 1 : i32
    %99 = arith.index_cast %c1_i32 : i32 to index
    %c0_58 = arith.constant 0 : index
    %c0_59 = arith.constant 0 : index
    %100 = vector.load %arg9[%99, %c0_58, %c0_59] : memref<10x8x512xf32, #tpu.memory_space<vmem>>, vector<1x8x512xf32>
    %101 = vector.shape_cast %100 : vector<1x8x512xf32> to vector<8x512xf32>
    %c0_60 = arith.constant 0 : index
    %c0_61 = arith.constant 0 : index
    %c0_62 = arith.constant 0 : index
    %102 = vector.load %arg11[%c0_60, %c0_61, %c0_62] : memref<2x8x128xf32, #tpu.memory_space<vmem>>, vector<1x8x128xf32>
    %103 = vector.shape_cast %102 : vector<1x8x128xf32> to vector<8x128xf32>
    %c0_63 = arith.constant 0 : index
    %c0_64 = arith.constant 0 : index
    %104 = vector.load %arg2[%c0_63, %c0_64] : memref<128x512xf32, #tpu.memory_space<vmem>>, vector<128x512xf32>
    %cst_65 = arith.constant dense<0.000000e+00> : vector<8x512xf32>
    %105 = tpu.matmul %103, %104, %cst_65 {dimension_numbers = #tpu.dot_dimension_numbers<[1], [0], [0], [1], [0, 0, 1, 1], [], []>} : vector<8x128xf32>, vector<128x512xf32>, vector<8x512xf32> -> vector<8x512xf32>
    %106 = arith.addf %101, %105 : vector<8x512xf32>
    %c0_66 = arith.constant 0 : index
    %c0_67 = arith.constant 0 : index
    %c0_68 = arith.constant 0 : index
    %107 = vector.load %arg12[%c0_66, %c0_67, %c0_68] : memref<2x8x128xf32, #tpu.memory_space<vmem>>, vector<1x8x128xf32>
    %108 = vector.shape_cast %107 : vector<1x8x128xf32> to vector<8x128xf32>
    %109 = vector.extract_strided_slice %106 {offsets = [0, 0], sizes = [8, 128], strides = [1, 1]} : vector<8x512xf32> to vector<8x128xf32>
    %110 = arith.negf %109 : vector<8x128xf32>
    %111 = math.exp %110 : vector<8x128xf32>
    %cst_69 = arith.constant 1.000000e+00 : f32
    %112 = vector.broadcast %cst_69 : f32 to vector<8x128xf32>
    %113 = arith.addf %112, %111 : vector<8x128xf32>
    %114 = arith.divf %112, %113 : vector<8x128xf32>
    %115 = vector.extract_strided_slice %106 {offsets = [0, 128], sizes = [8, 128], strides = [1, 1]} : vector<8x512xf32> to vector<8x128xf32>
    %116 = arith.negf %115 : vector<8x128xf32>
    %117 = math.exp %116 : vector<8x128xf32>
    %cst_70 = arith.constant 1.000000e+00 : f32
    %118 = vector.broadcast %cst_70 : f32 to vector<8x128xf32>
    %119 = arith.addf %118, %117 : vector<8x128xf32>
    %120 = arith.divf %118, %119 : vector<8x128xf32>
    %121 = vector.extract_strided_slice %106 {offsets = [0, 256], sizes = [8, 128], strides = [1, 1]} : vector<8x512xf32> to vector<8x128xf32>
    %122 = math.tanh %121 : vector<8x128xf32>
    %123 = vector.extract_strided_slice %106 {offsets = [0, 384], sizes = [8, 128], strides = [1, 1]} : vector<8x512xf32> to vector<8x128xf32>
    %124 = arith.negf %123 : vector<8x128xf32>
    %125 = math.exp %124 : vector<8x128xf32>
    %cst_71 = arith.constant 1.000000e+00 : f32
    %126 = vector.broadcast %cst_71 : f32 to vector<8x128xf32>
    %127 = arith.addf %126, %125 : vector<8x128xf32>
    %128 = arith.divf %126, %127 : vector<8x128xf32>
    %129 = arith.mulf %120, %108 : vector<8x128xf32>
    %130 = arith.mulf %114, %122 : vector<8x128xf32>
    %131 = arith.addf %129, %130 : vector<8x128xf32>
    %132 = math.tanh %131 : vector<8x128xf32>
    %133 = arith.mulf %128, %132 : vector<8x128xf32>
    %c0_72 = arith.constant 0 : index
    %c0_73 = arith.constant 0 : index
    %c0_74 = arith.constant 0 : index
    %134 = vector.load %arg11[%c0_72, %c0_73, %c0_74] : memref<2x8x128xf32, #tpu.memory_space<vmem>>, vector<1x8x128xf32>
    %135 = vector.shape_cast %134 : vector<1x8x128xf32> to vector<8x128xf32>
    %136 = vector.shape_cast %133 : vector<8x128xf32> to vector<1x8x128xf32>
    tpu.vector_store %arg11[%c0_72, %c0_73, %c0_74], %136 {strides = array<i32>} : memref<2x8x128xf32, #tpu.memory_space<vmem>>, vector<1x8x128xf32>,
    %c0_75 = arith.constant 0 : index
    %c0_76 = arith.constant 0 : index
    %c0_77 = arith.constant 0 : index
    %137 = vector.load %arg12[%c0_75, %c0_76, %c0_77] : memref<2x8x128xf32, #tpu.memory_space<vmem>>, vector<1x8x128xf32>
    %138 = vector.shape_cast %137 : vector<1x8x128xf32> to vector<8x128xf32>
    %139 = vector.shape_cast %131 : vector<8x128xf32> to vector<1x8x128xf32>
    tpu.vector_store %arg12[%c0_75, %c0_76, %c0_77], %139 {strides = array<i32>} : memref<2x8x128xf32, #tpu.memory_space<vmem>>, vector<1x8x128xf32>,
    %c1_78 = arith.constant 1 : index
    %c0_79 = arith.constant 0 : index
    %c0_80 = arith.constant 0 : index
    %140 = vector.load %arg11[%c1_78, %c0_79, %c0_80] : memref<2x8x128xf32, #tpu.memory_space<vmem>>, vector<1x8x128xf32>
    %141 = vector.shape_cast %140 : vector<1x8x128xf32> to vector<8x128xf32>
    %142 = tpu.concatenate %133, %141 in 1 : vector<8x128xf32>, vector<8x128xf32> -> vector<8x256xf32>
    %c0_81 = arith.constant 0 : index
    %c0_82 = arith.constant 0 : index
    %143 = vector.load %arg4[%c0_81, %c0_82] : memref<256x512xf32, #tpu.memory_space<vmem>>, vector<256x512xf32>
    %cst_83 = arith.constant dense<0.000000e+00> : vector<8x512xf32>
    %144 = tpu.matmul %142, %143, %cst_83 {dimension_numbers = #tpu.dot_dimension_numbers<[1], [0], [0], [1], [0, 0, 1, 1], [], []>} : vector<8x256xf32>, vector<256x512xf32>, vector<8x512xf32> -> vector<8x512xf32>
    %c0_84 = arith.constant 0 : index
    %c0_85 = arith.constant 0 : index
    %145 = vector.load %arg5[%c0_84, %c0_85] : memref<1x512xf32, #tpu.memory_space<vmem>>, vector<1x512xf32>
    %146 = vector.broadcast %145 : vector<1x512xf32> to vector<8x512xf32>
    %147 = arith.addf %144, %146 : vector<8x512xf32>
    %c1_86 = arith.constant 1 : index
    %c0_87 = arith.constant 0 : index
    %c0_88 = arith.constant 0 : index
    %148 = vector.load %arg12[%c1_86, %c0_87, %c0_88] : memref<2x8x128xf32, #tpu.memory_space<vmem>>, vector<1x8x128xf32>
    %149 = vector.shape_cast %148 : vector<1x8x128xf32> to vector<8x128xf32>
    %150 = vector.extract_strided_slice %147 {offsets = [0, 0], sizes = [8, 128], strides = [1, 1]} : vector<8x512xf32> to vector<8x128xf32>
    %151 = arith.negf %150 : vector<8x128xf32>
    %152 = math.exp %151 : vector<8x128xf32>
    %cst_89 = arith.constant 1.000000e+00 : f32
    %153 = vector.broadcast %cst_89 : f32 to vector<8x128xf32>
    %154 = arith.addf %153, %152 : vector<8x128xf32>
    %155 = arith.divf %153, %154 : vector<8x128xf32>
    %156 = vector.extract_strided_slice %147 {offsets = [0, 128], sizes = [8, 128], strides = [1, 1]} : vector<8x512xf32> to vector<8x128xf32>
    %157 = arith.negf %156 : vector<8x128xf32>
    %158 = math.exp %157 : vector<8x128xf32>
    %cst_90 = arith.constant 1.000000e+00 : f32
    %159 = vector.broadcast %cst_90 : f32 to vector<8x128xf32>
    %160 = arith.addf %159, %158 : vector<8x128xf32>
    %161 = arith.divf %159, %160 : vector<8x128xf32>
    %162 = vector.extract_strided_slice %147 {offsets = [0, 256], sizes = [8, 128], strides = [1, 1]} : vector<8x512xf32> to vector<8x128xf32>
    %163 = math.tanh %162 : vector<8x128xf32>
    %164 = vector.extract_strided_slice %147 {offsets = [0, 384], sizes = [8, 128], strides = [1, 1]} : vector<8x512xf32> to vector<8x128xf32>
    %165 = arith.negf %164 : vector<8x128xf32>
    %166 = math.exp %165 : vector<8x128xf32>
    %cst_91 = arith.constant 1.000000e+00 : f32
    %167 = vector.broadcast %cst_91 : f32 to vector<8x128xf32>
    %168 = arith.addf %167, %166 : vector<8x128xf32>
    %169 = arith.divf %167, %168 : vector<8x128xf32>
    %170 = arith.mulf %161, %149 : vector<8x128xf32>
    %171 = arith.mulf %155, %163 : vector<8x128xf32>
    %172 = arith.addf %170, %171 : vector<8x128xf32>
    %173 = math.tanh %172 : vector<8x128xf32>
    %174 = arith.mulf %169, %173 : vector<8x128xf32>
    %c1_92 = arith.constant 1 : index
    %c0_93 = arith.constant 0 : index
    %c0_94 = arith.constant 0 : index
    %175 = vector.load %arg11[%c1_92, %c0_93, %c0_94] : memref<2x8x128xf32, #tpu.memory_space<vmem>>, vector<1x8x128xf32>
    %176 = vector.shape_cast %175 : vector<1x8x128xf32> to vector<8x128xf32>
    %177 = vector.shape_cast %174 : vector<8x128xf32> to vector<1x8x128xf32>
    tpu.vector_store %arg11[%c1_92, %c0_93, %c0_94], %177 {strides = array<i32>} : memref<2x8x128xf32, #tpu.memory_space<vmem>>, vector<1x8x128xf32>,
    %c1_95 = arith.constant 1 : index
    %c0_96 = arith.constant 0 : index
    %c0_97 = arith.constant 0 : index
    %178 = vector.load %arg12[%c1_95, %c0_96, %c0_97] : memref<2x8x128xf32, #tpu.memory_space<vmem>>, vector<1x8x128xf32>
    %179 = vector.shape_cast %178 : vector<1x8x128xf32> to vector<8x128xf32>
    %180 = vector.shape_cast %172 : vector<8x128xf32> to vector<1x8x128xf32>
    tpu.vector_store %arg12[%c1_95, %c0_96, %c0_97], %180 {strides = array<i32>} : memref<2x8x128xf32, #tpu.memory_space<vmem>>, vector<1x8x128xf32>,
    %181 = arith.index_cast %c1_i32 : i32 to index
    %c0_98 = arith.constant 0 : index
    %c0_99 = arith.constant 0 : index
    %182 = vector.load %arg10[%181, %c0_98, %c0_99] : memref<10x8x128xf32, #tpu.memory_space<vmem>>, vector<1x8x128xf32>
    %183 = vector.shape_cast %182 : vector<1x8x128xf32> to vector<8x128xf32>
    %184 = vector.shape_cast %174 : vector<8x128xf32> to vector<1x8x128xf32>
    tpu.vector_store %arg10[%181, %c0_98, %c0_99], %184 {strides = array<i32>} : memref<10x8x128xf32, #tpu.memory_space<vmem>>, vector<1x8x128xf32>,
    %c2_i32 = arith.constant 2 : i32
    %185 = arith.index_cast %c2_i32 : i32 to index
    %c0_100 = arith.constant 0 : index
    %c0_101 = arith.constant 0 : index
    %186 = vector.load %arg9[%185, %c0_100, %c0_101] : memref<10x8x512xf32, #tpu.memory_space<vmem>>, vector<1x8x512xf32>
    %187 = vector.shape_cast %186 : vector<1x8x512xf32> to vector<8x512xf32>
    %c0_102 = arith.constant 0 : index
    %c0_103 = arith.constant 0 : index
    %c0_104 = arith.constant 0 : index
    %188 = vector.load %arg11[%c0_102, %c0_103, %c0_104] : memref<2x8x128xf32, #tpu.memory_space<vmem>>, vector<1x8x128xf32>
    %189 = vector.shape_cast %188 : vector<1x8x128xf32> to vector<8x128xf32>
    %c0_105 = arith.constant 0 : index
    %c0_106 = arith.constant 0 : index
    %190 = vector.load %arg2[%c0_105, %c0_106] : memref<128x512xf32, #tpu.memory_space<vmem>>, vector<128x512xf32>
    %cst_107 = arith.constant dense<0.000000e+00> : vector<8x512xf32>
    %191 = tpu.matmul %189, %190, %cst_107 {dimension_numbers = #tpu.dot_dimension_numbers<[1], [0], [0], [1], [0, 0, 1, 1], [], []>} : vector<8x128xf32>, vector<128x512xf32>, vector<8x512xf32> -> vector<8x512xf32>
    %192 = arith.addf %187, %191 : vector<8x512xf32>
    %c0_108 = arith.constant 0 : index
    %c0_109 = arith.constant 0 : index
    %c0_110 = arith.constant 0 : index
    %193 = vector.load %arg12[%c0_108, %c0_109, %c0_110] : memref<2x8x128xf32, #tpu.memory_space<vmem>>, vector<1x8x128xf32>
    %194 = vector.shape_cast %193 : vector<1x8x128xf32> to vector<8x128xf32>
    %195 = vector.extract_strided_slice %192 {offsets = [0, 0], sizes = [8, 128], strides = [1, 1]} : vector<8x512xf32> to vector<8x128xf32>
    %196 = arith.negf %195 : vector<8x128xf32>
    %197 = math.exp %196 : vector<8x128xf32>
    %cst_111 = arith.constant 1.000000e+00 : f32
    %198 = vector.broadcast %cst_111 : f32 to vector<8x128xf32>
    %199 = arith.addf %198, %197 : vector<8x128xf32>
    %200 = arith.divf %198, %199 : vector<8x128xf32>
    %201 = vector.extract_strided_slice %192 {offsets = [0, 128], sizes = [8, 128], strides = [1, 1]} : vector<8x512xf32> to vector<8x128xf32>
    %202 = arith.negf %201 : vector<8x128xf32>
    %203 = math.exp %202 : vector<8x128xf32>
    %cst_112 = arith.constant 1.000000e+00 : f32
    %204 = vector.broadcast %cst_112 : f32 to vector<8x128xf32>
    %205 = arith.addf %204, %203 : vector<8x128xf32>
    %206 = arith.divf %204, %205 : vector<8x128xf32>
    %207 = vector.extract_strided_slice %192 {offsets = [0, 256], sizes = [8, 128], strides = [1, 1]} : vector<8x512xf32> to vector<8x128xf32>
    %208 = math.tanh %207 : vector<8x128xf32>
    %209 = vector.extract_strided_slice %192 {offsets = [0, 384], sizes = [8, 128], strides = [1, 1]} : vector<8x512xf32> to vector<8x128xf32>
    %210 = arith.negf %209 : vector<8x128xf32>
    %211 = math.exp %210 : vector<8x128xf32>
    %cst_113 = arith.constant 1.000000e+00 : f32
    %212 = vector.broadcast %cst_113 : f32 to vector<8x128xf32>
    %213 = arith.addf %212, %211 : vector<8x128xf32>
    %214 = arith.divf %212, %213 : vector<8x128xf32>
    %215 = arith.mulf %206, %194 : vector<8x128xf32>
    %216 = arith.mulf %200, %208 : vector<8x128xf32>
    %217 = arith.addf %215, %216 : vector<8x128xf32>
    %218 = math.tanh %217 : vector<8x128xf32>
    %219 = arith.mulf %214, %218 : vector<8x128xf32>
    %c0_114 = arith.constant 0 : index
    %c0_115 = arith.constant 0 : index
    %c0_116 = arith.constant 0 : index
    %220 = vector.load %arg11[%c0_114, %c0_115, %c0_116] : memref<2x8x128xf32, #tpu.memory_space<vmem>>, vector<1x8x128xf32>
    %221 = vector.shape_cast %220 : vector<1x8x128xf32> to vector<8x128xf32>
    %222 = vector.shape_cast %219 : vector<8x128xf32> to vector<1x8x128xf32>
    tpu.vector_store %arg11[%c0_114, %c0_115, %c0_116], %222 {strides = array<i32>} : memref<2x8x128xf32, #tpu.memory_space<vmem>>, vector<1x8x128xf32>,
    %c0_117 = arith.constant 0 : index
    %c0_118 = arith.constant 0 : index
    %c0_119 = arith.constant 0 : index
    %223 = vector.load %arg12[%c0_117, %c0_118, %c0_119] : memref<2x8x128xf32, #tpu.memory_space<vmem>>, vector<1x8x128xf32>
    %224 = vector.shape_cast %223 : vector<1x8x128xf32> to vector<8x128xf32>
    %225 = vector.shape_cast %217 : vector<8x128xf32> to vector<1x8x128xf32>
    tpu.vector_store %arg12[%c0_117, %c0_118, %c0_119], %225 {strides = array<i32>} : memref<2x8x128xf32, #tpu.memory_space<vmem>>, vector<1x8x128xf32>,
    %c1_120 = arith.constant 1 : index
    %c0_121 = arith.constant 0 : index
    %c0_122 = arith.constant 0 : index
    %226 = vector.load %arg11[%c1_120, %c0_121, %c0_122] : memref<2x8x128xf32, #tpu.memory_space<vmem>>, vector<1x8x128xf32>
    %227 = vector.shape_cast %226 : vector<1x8x128xf32> to vector<8x128xf32>
    %228 = tpu.concatenate %219, %227 in 1 : vector<8x128xf32>, vector<8x128xf32> -> vector<8x256xf32>
    %c0_123 = arith.constant 0 : index
    %c0_124 = arith.constant 0 : index
    %229 = vector.load %arg4[%c0_123, %c0_124] : memref<256x512xf32, #tpu.memory_space<vmem>>, vector<256x512xf32>
    %cst_125 = arith.constant dense<0.000000e+00> : vector<8x512xf32>
    %230 = tpu.matmul %228, %229, %cst_125 {dimension_numbers = #tpu.dot_dimension_numbers<[1], [0], [0], [1], [0, 0, 1, 1], [], []>} : vector<8x256xf32>, vector<256x512xf32>, vector<8x512xf32> -> vector<8x512xf32>
    %c0_126 = arith.constant 0 : index
    %c0_127 = arith.constant 0 : index
    %231 = vector.load %arg5[%c0_126, %c0_127] : memref<1x512xf32, #tpu.memory_space<vmem>>, vector<1x512xf32>
    %232 = vector.broadcast %231 : vector<1x512xf32> to vector<8x512xf32>
    %233 = arith.addf %230, %232 : vector<8x512xf32>
    %c1_128 = arith.constant 1 : index
    %c0_129 = arith.constant 0 : index
    %c0_130 = arith.constant 0 : index
    %234 = vector.load %arg12[%c1_128, %c0_129, %c0_130] : memref<2x8x128xf32, #tpu.memory_space<vmem>>, vector<1x8x128xf32>
    %235 = vector.shape_cast %234 : vector<1x8x128xf32> to vector<8x128xf32>
    %236 = vector.extract_strided_slice %233 {offsets = [0, 0], sizes = [8, 128], strides = [1, 1]} : vector<8x512xf32> to vector<8x128xf32>
    %237 = arith.negf %236 : vector<8x128xf32>
    %238 = math.exp %237 : vector<8x128xf32>
    %cst_131 = arith.constant 1.000000e+00 : f32
    %239 = vector.broadcast %cst_131 : f32 to vector<8x128xf32>
    %240 = arith.addf %239, %238 : vector<8x128xf32>
    %241 = arith.divf %239, %240 : vector<8x128xf32>
    %242 = vector.extract_strided_slice %233 {offsets = [0, 128], sizes = [8, 128], strides = [1, 1]} : vector<8x512xf32> to vector<8x128xf32>
    %243 = arith.negf %242 : vector<8x128xf32>
    %244 = math.exp %243 : vector<8x128xf32>
    %cst_132 = arith.constant 1.000000e+00 : f32
    %245 = vector.broadcast %cst_132 : f32 to vector<8x128xf32>
    %246 = arith.addf %245, %244 : vector<8x128xf32>
    %247 = arith.divf %245, %246 : vector<8x128xf32>
    %248 = vector.extract_strided_slice %233 {offsets = [0, 256], sizes = [8, 128], strides = [1, 1]} : vector<8x512xf32> to vector<8x128xf32>
    %249 = math.tanh %248 : vector<8x128xf32>
    %250 = vector.extract_strided_slice %233 {offsets = [0, 384], sizes = [8, 128], strides = [1, 1]} : vector<8x512xf32> to vector<8x128xf32>
    %251 = arith.negf %250 : vector<8x128xf32>
    %252 = math.exp %251 : vector<8x128xf32>
    %cst_133 = arith.constant 1.000000e+00 : f32
    %253 = vector.broadcast %cst_133 : f32 to vector<8x128xf32>
    %254 = arith.addf %253, %252 : vector<8x128xf32>
    %255 = arith.divf %253, %254 : vector<8x128xf32>
    %256 = arith.mulf %247, %235 : vector<8x128xf32>
    %257 = arith.mulf %241, %249 : vector<8x128xf32>
    %258 = arith.addf %256, %257 : vector<8x128xf32>
    %259 = math.tanh %258 : vector<8x128xf32>
    %260 = arith.mulf %255, %259 : vector<8x128xf32>
    %c1_134 = arith.constant 1 : index
    %c0_135 = arith.constant 0 : index
    %c0_136 = arith.constant 0 : index
    %261 = vector.load %arg11[%c1_134, %c0_135, %c0_136] : memref<2x8x128xf32, #tpu.memory_space<vmem>>, vector<1x8x128xf32>
    %262 = vector.shape_cast %261 : vector<1x8x128xf32> to vector<8x128xf32>
    %263 = vector.shape_cast %260 : vector<8x128xf32> to vector<1x8x128xf32>
    tpu.vector_store %arg11[%c1_134, %c0_135, %c0_136], %263 {strides = array<i32>} : memref<2x8x128xf32, #tpu.memory_space<vmem>>, vector<1x8x128xf32>,
    %c1_137 = arith.constant 1 : index
    %c0_138 = arith.constant 0 : index
    %c0_139 = arith.constant 0 : index
    %264 = vector.load %arg12[%c1_137, %c0_138, %c0_139] : memref<2x8x128xf32, #tpu.memory_space<vmem>>, vector<1x8x128xf32>
    %265 = vector.shape_cast %264 : vector<1x8x128xf32> to vector<8x128xf32>
    %266 = vector.shape_cast %258 : vector<8x128xf32> to vector<1x8x128xf32>
    tpu.vector_store %arg12[%c1_137, %c0_138, %c0_139], %266 {strides = array<i32>} : memref<2x8x128xf32, #tpu.memory_space<vmem>>, vector<1x8x128xf32>,
    %267 = arith.index_cast %c2_i32 : i32 to index
    %c0_140 = arith.constant 0 : index
    %c0_141 = arith.constant 0 : index
    %268 = vector.load %arg10[%267, %c0_140, %c0_141] : memref<10x8x128xf32, #tpu.memory_space<vmem>>, vector<1x8x128xf32>
    %269 = vector.shape_cast %268 : vector<1x8x128xf32> to vector<8x128xf32>
    %270 = vector.shape_cast %260 : vector<8x128xf32> to vector<1x8x128xf32>
    tpu.vector_store %arg10[%267, %c0_140, %c0_141], %270 {strides = array<i32>} : memref<10x8x128xf32, #tpu.memory_space<vmem>>, vector<1x8x128xf32>,
    %c3_i32 = arith.constant 3 : i32
    %271 = arith.index_cast %c3_i32 : i32 to index
    %c0_142 = arith.constant 0 : index
    %c0_143 = arith.constant 0 : index
    %272 = vector.load %arg9[%271, %c0_142, %c0_143] : memref<10x8x512xf32, #tpu.memory_space<vmem>>, vector<1x8x512xf32>
    %273 = vector.shape_cast %272 : vector<1x8x512xf32> to vector<8x512xf32>
    %c0_144 = arith.constant 0 : index
    %c0_145 = arith.constant 0 : index
    %c0_146 = arith.constant 0 : index
    %274 = vector.load %arg11[%c0_144, %c0_145, %c0_146] : memref<2x8x128xf32, #tpu.memory_space<vmem>>, vector<1x8x128xf32>
    %275 = vector.shape_cast %274 : vector<1x8x128xf32> to vector<8x128xf32>
    %c0_147 = arith.constant 0 : index
    %c0_148 = arith.constant 0 : index
    %276 = vector.load %arg2[%c0_147, %c0_148] : memref<128x512xf32, #tpu.memory_space<vmem>>, vector<128x512xf32>
    %cst_149 = arith.constant dense<0.000000e+00> : vector<8x512xf32>
    %277 = tpu.matmul %275, %276, %cst_149 {dimension_numbers = #tpu.dot_dimension_numbers<[1], [0], [0], [1], [0, 0, 1, 1], [], []>} : vector<8x128xf32>, vector<128x512xf32>, vector<8x512xf32> -> vector<8x512xf32>
    %278 = arith.addf %273, %277 : vector<8x512xf32>
    %c0_150 = arith.constant 0 : index
    %c0_151 = arith.constant 0 : index
    %c0_152 = arith.constant 0 : index
    %279 = vector.load %arg12[%c0_150, %c0_151, %c0_152] : memref<2x8x128xf32, #tpu.memory_space<vmem>>, vector<1x8x128xf32>
    %280 = vector.shape_cast %279 : vector<1x8x128xf32> to vector<8x128xf32>
    %281 = vector.extract_strided_slice %278 {offsets = [0, 0], sizes = [8, 128], strides = [1, 1]} : vector<8x512xf32> to vector<8x128xf32>
    %282 = arith.negf %281 : vector<8x128xf32>
    %283 = math.exp %282 : vector<8x128xf32>
    %cst_153 = arith.constant 1.000000e+00 : f32
    %284 = vector.broadcast %cst_153 : f32 to vector<8x128xf32>
    %285 = arith.addf %284, %283 : vector<8x128xf32>
    %286 = arith.divf %284, %285 : vector<8x128xf32>
    %287 = vector.extract_strided_slice %278 {offsets = [0, 128], sizes = [8, 128], strides = [1, 1]} : vector<8x512xf32> to vector<8x128xf32>
    %288 = arith.negf %287 : vector<8x128xf32>
    %289 = math.exp %288 : vector<8x128xf32>
    %cst_154 = arith.constant 1.000000e+00 : f32
    %290 = vector.broadcast %cst_154 : f32 to vector<8x128xf32>
    %291 = arith.addf %290, %289 : vector<8x128xf32>
    %292 = arith.divf %290, %291 : vector<8x128xf32>
    %293 = vector.extract_strided_slice %278 {offsets = [0, 256], sizes = [8, 128], strides = [1, 1]} : vector<8x512xf32> to vector<8x128xf32>
    %294 = math.tanh %293 : vector<8x128xf32>
    %295 = vector.extract_strided_slice %278 {offsets = [0, 384], sizes = [8, 128], strides = [1, 1]} : vector<8x512xf32> to vector<8x128xf32>
    %296 = arith.negf %295 : vector<8x128xf32>
    %297 = math.exp %296 : vector<8x128xf32>
    %cst_155 = arith.constant 1.000000e+00 : f32
    %298 = vector.broadcast %cst_155 : f32 to vector<8x128xf32>
    %299 = arith.addf %298, %297 : vector<8x128xf32>
    %300 = arith.divf %298, %299 : vector<8x128xf32>
    %301 = arith.mulf %292, %280 : vector<8x128xf32>
    %302 = arith.mulf %286, %294 : vector<8x128xf32>
    %303 = arith.addf %301, %302 : vector<8x128xf32>
    %304 = math.tanh %303 : vector<8x128xf32>
    %305 = arith.mulf %300, %304 : vector<8x128xf32>
    %c0_156 = arith.constant 0 : index
    %c0_157 = arith.constant 0 : index
    %c0_158 = arith.constant 0 : index
    %306 = vector.load %arg11[%c0_156, %c0_157, %c0_158] : memref<2x8x128xf32, #tpu.memory_space<vmem>>, vector<1x8x128xf32>
    %307 = vector.shape_cast %306 : vector<1x8x128xf32> to vector<8x128xf32>
    %308 = vector.shape_cast %305 : vector<8x128xf32> to vector<1x8x128xf32>
    tpu.vector_store %arg11[%c0_156, %c0_157, %c0_158], %308 {strides = array<i32>} : memref<2x8x128xf32, #tpu.memory_space<vmem>>, vector<1x8x128xf32>,
    %c0_159 = arith.constant 0 : index
    %c0_160 = arith.constant 0 : index
    %c0_161 = arith.constant 0 : index
    %309 = vector.load %arg12[%c0_159, %c0_160, %c0_161] : memref<2x8x128xf32, #tpu.memory_space<vmem>>, vector<1x8x128xf32>
    %310 = vector.shape_cast %309 : vector<1x8x128xf32> to vector<8x128xf32>
    %311 = vector.shape_cast %303 : vector<8x128xf32> to vector<1x8x128xf32>
    tpu.vector_store %arg12[%c0_159, %c0_160, %c0_161], %311 {strides = array<i32>} : memref<2x8x128xf32, #tpu.memory_space<vmem>>, vector<1x8x128xf32>,
    %c1_162 = arith.constant 1 : index
    %c0_163 = arith.constant 0 : index
    %c0_164 = arith.constant 0 : index
    %312 = vector.load %arg11[%c1_162, %c0_163, %c0_164] : memref<2x8x128xf32, #tpu.memory_space<vmem>>, vector<1x8x128xf32>
    %313 = vector.shape_cast %312 : vector<1x8x128xf32> to vector<8x128xf32>
    %314 = tpu.concatenate %305, %313 in 1 : vector<8x128xf32>, vector<8x128xf32> -> vector<8x256xf32>
    %c0_165 = arith.constant 0 : index
    %c0_166 = arith.constant 0 : index
    %315 = vector.load %arg4[%c0_165, %c0_166] : memref<256x512xf32, #tpu.memory_space<vmem>>, vector<256x512xf32>
    %cst_167 = arith.constant dense<0.000000e+00> : vector<8x512xf32>
    %316 = tpu.matmul %314, %315, %cst_167 {dimension_numbers = #tpu.dot_dimension_numbers<[1], [0], [0], [1], [0, 0, 1, 1], [], []>} : vector<8x256xf32>, vector<256x512xf32>, vector<8x512xf32> -> vector<8x512xf32>
    %c0_168 = arith.constant 0 : index
    %c0_169 = arith.constant 0 : index
    %317 = vector.load %arg5[%c0_168, %c0_169] : memref<1x512xf32, #tpu.memory_space<vmem>>, vector<1x512xf32>
    %318 = vector.broadcast %317 : vector<1x512xf32> to vector<8x512xf32>
    %319 = arith.addf %316, %318 : vector<8x512xf32>
    %c1_170 = arith.constant 1 : index
    %c0_171 = arith.constant 0 : index
    %c0_172 = arith.constant 0 : index
    %320 = vector.load %arg12[%c1_170, %c0_171, %c0_172] : memref<2x8x128xf32, #tpu.memory_space<vmem>>, vector<1x8x128xf32>
    %321 = vector.shape_cast %320 : vector<1x8x128xf32> to vector<8x128xf32>
    %322 = vector.extract_strided_slice %319 {offsets = [0, 0], sizes = [8, 128], strides = [1, 1]} : vector<8x512xf32> to vector<8x128xf32>
    %323 = arith.negf %322 : vector<8x128xf32>
    %324 = math.exp %323 : vector<8x128xf32>
    %cst_173 = arith.constant 1.000000e+00 : f32
    %325 = vector.broadcast %cst_173 : f32 to vector<8x128xf32>
    %326 = arith.addf %325, %324 : vector<8x128xf32>
    %327 = arith.divf %325, %326 : vector<8x128xf32>
    %328 = vector.extract_strided_slice %319 {offsets = [0, 128], sizes = [8, 128], strides = [1, 1]} : vector<8x512xf32> to vector<8x128xf32>
    %329 = arith.negf %328 : vector<8x128xf32>
    %330 = math.exp %329 : vector<8x128xf32>
    %cst_174 = arith.constant 1.000000e+00 : f32
    %331 = vector.broadcast %cst_174 : f32 to vector<8x128xf32>
    %332 = arith.addf %331, %330 : vector<8x128xf32>
    %333 = arith.divf %331, %332 : vector<8x128xf32>
    %334 = vector.extract_strided_slice %319 {offsets = [0, 256], sizes = [8, 128], strides = [1, 1]} : vector<8x512xf32> to vector<8x128xf32>
    %335 = math.tanh %334 : vector<8x128xf32>
    %336 = vector.extract_strided_slice %319 {offsets = [0, 384], sizes = [8, 128], strides = [1, 1]} : vector<8x512xf32> to vector<8x128xf32>
    %337 = arith.negf %336 : vector<8x128xf32>
    %338 = math.exp %337 : vector<8x128xf32>
    %cst_175 = arith.constant 1.000000e+00 : f32
    %339 = vector.broadcast %cst_175 : f32 to vector<8x128xf32>
    %340 = arith.addf %339, %338 : vector<8x128xf32>
    %341 = arith.divf %339, %340 : vector<8x128xf32>
    %342 = arith.mulf %333, %321 : vector<8x128xf32>
    %343 = arith.mulf %327, %335 : vector<8x128xf32>
    %344 = arith.addf %342, %343 : vector<8x128xf32>
    %345 = math.tanh %344 : vector<8x128xf32>
    %346 = arith.mulf %341, %345 : vector<8x128xf32>
    %c1_176 = arith.constant 1 : index
    %c0_177 = arith.constant 0 : index
    %c0_178 = arith.constant 0 : index
    %347 = vector.load %arg11[%c1_176, %c0_177, %c0_178] : memref<2x8x128xf32, #tpu.memory_space<vmem>>, vector<1x8x128xf32>
    %348 = vector.shape_cast %347 : vector<1x8x128xf32> to vector<8x128xf32>
    %349 = vector.shape_cast %346 : vector<8x128xf32> to vector<1x8x128xf32>
    tpu.vector_store %arg11[%c1_176, %c0_177, %c0_178], %349 {strides = array<i32>} : memref<2x8x128xf32, #tpu.memory_space<vmem>>, vector<1x8x128xf32>,
    %c1_179 = arith.constant 1 : index
    %c0_180 = arith.constant 0 : index
    %c0_181 = arith.constant 0 : index
    %350 = vector.load %arg12[%c1_179, %c0_180, %c0_181] : memref<2x8x128xf32, #tpu.memory_space<vmem>>, vector<1x8x128xf32>
    %351 = vector.shape_cast %350 : vector<1x8x128xf32> to vector<8x128xf32>
    %352 = vector.shape_cast %344 : vector<8x128xf32> to vector<1x8x128xf32>
    tpu.vector_store %arg12[%c1_179, %c0_180, %c0_181], %352 {strides = array<i32>} : memref<2x8x128xf32, #tpu.memory_space<vmem>>, vector<1x8x128xf32>,
    %353 = arith.index_cast %c3_i32 : i32 to index
    %c0_182 = arith.constant 0 : index
    %c0_183 = arith.constant 0 : index
    %354 = vector.load %arg10[%353, %c0_182, %c0_183] : memref<10x8x128xf32, #tpu.memory_space<vmem>>, vector<1x8x128xf32>
    %355 = vector.shape_cast %354 : vector<1x8x128xf32> to vector<8x128xf32>
    %356 = vector.shape_cast %346 : vector<8x128xf32> to vector<1x8x128xf32>
    tpu.vector_store %arg10[%353, %c0_182, %c0_183], %356 {strides = array<i32>} : memref<10x8x128xf32, #tpu.memory_space<vmem>>, vector<1x8x128xf32>,
    %c4_i32 = arith.constant 4 : i32
    %357 = arith.index_cast %c4_i32 : i32 to index
    %c0_184 = arith.constant 0 : index
    %c0_185 = arith.constant 0 : index
    %358 = vector.load %arg9[%357, %c0_184, %c0_185] : memref<10x8x512xf32, #tpu.memory_space<vmem>>, vector<1x8x512xf32>
    %359 = vector.shape_cast %358 : vector<1x8x512xf32> to vector<8x512xf32>
    %c0_186 = arith.constant 0 : index
    %c0_187 = arith.constant 0 : index
    %c0_188 = arith.constant 0 : index
    %360 = vector.load %arg11[%c0_186, %c0_187, %c0_188] : memref<2x8x128xf32, #tpu.memory_space<vmem>>, vector<1x8x128xf32>
    %361 = vector.shape_cast %360 : vector<1x8x128xf32> to vector<8x128xf32>
    %c0_189 = arith.constant 0 : index
    %c0_190 = arith.constant 0 : index
    %362 = vector.load %arg2[%c0_189, %c0_190] : memref<128x512xf32, #tpu.memory_space<vmem>>, vector<128x512xf32>
    %cst_191 = arith.constant dense<0.000000e+00> : vector<8x512xf32>
    %363 = tpu.matmul %361, %362, %cst_191 {dimension_numbers = #tpu.dot_dimension_numbers<[1], [0], [0], [1], [0, 0, 1, 1], [], []>} : vector<8x128xf32>, vector<128x512xf32>, vector<8x512xf32> -> vector<8x512xf32>
    %364 = arith.addf %359, %363 : vector<8x512xf32>
    %c0_192 = arith.constant 0 : index
    %c0_193 = arith.constant 0 : index
    %c0_194 = arith.constant 0 : index
    %365 = vector.load %arg12[%c0_192, %c0_193, %c0_194] : memref<2x8x128xf32, #tpu.memory_space<vmem>>, vector<1x8x128xf32>
    %366 = vector.shape_cast %365 : vector<1x8x128xf32> to vector<8x128xf32>
    %367 = vector.extract_strided_slice %364 {offsets = [0, 0], sizes = [8, 128], strides = [1, 1]} : vector<8x512xf32> to vector<8x128xf32>
    %368 = arith.negf %367 : vector<8x128xf32>
    %369 = math.exp %368 : vector<8x128xf32>
    %cst_195 = arith.constant 1.000000e+00 : f32
    %370 = vector.broadcast %cst_195 : f32 to vector<8x128xf32>
    %371 = arith.addf %370, %369 : vector<8x128xf32>
    %372 = arith.divf %370, %371 : vector<8x128xf32>
    %373 = vector.extract_strided_slice %364 {offsets = [0, 128], sizes = [8, 128], strides = [1, 1]} : vector<8x512xf32> to vector<8x128xf32>
    %374 = arith.negf %373 : vector<8x128xf32>
    %375 = math.exp %374 : vector<8x128xf32>
    %cst_196 = arith.constant 1.000000e+00 : f32
    %376 = vector.broadcast %cst_196 : f32 to vector<8x128xf32>
    %377 = arith.addf %376, %375 : vector<8x128xf32>
    %378 = arith.divf %376, %377 : vector<8x128xf32>
    %379 = vector.extract_strided_slice %364 {offsets = [0, 256], sizes = [8, 128], strides = [1, 1]} : vector<8x512xf32> to vector<8x128xf32>
    %380 = math.tanh %379 : vector<8x128xf32>
    %381 = vector.extract_strided_slice %364 {offsets = [0, 384], sizes = [8, 128], strides = [1, 1]} : vector<8x512xf32> to vector<8x128xf32>
    %382 = arith.negf %381 : vector<8x128xf32>
    %383 = math.exp %382 : vector<8x128xf32>
    %cst_197 = arith.constant 1.000000e+00 : f32
    %384 = vector.broadcast %cst_197 : f32 to vector<8x128xf32>
    %385 = arith.addf %384, %383 : vector<8x128xf32>
    %386 = arith.divf %384, %385 : vector<8x128xf32>
    %387 = arith.mulf %378, %366 : vector<8x128xf32>
    %388 = arith.mulf %372, %380 : vector<8x128xf32>
    %389 = arith.addf %387, %388 : vector<8x128xf32>
    %390 = math.tanh %389 : vector<8x128xf32>
    %391 = arith.mulf %386, %390 : vector<8x128xf32>
    %c0_198 = arith.constant 0 : index
    %c0_199 = arith.constant 0 : index
    %c0_200 = arith.constant 0 : index
    %392 = vector.load %arg11[%c0_198, %c0_199, %c0_200] : memref<2x8x128xf32, #tpu.memory_space<vmem>>, vector<1x8x128xf32>
    %393 = vector.shape_cast %392 : vector<1x8x128xf32> to vector<8x128xf32>
    %394 = vector.shape_cast %391 : vector<8x128xf32> to vector<1x8x128xf32>
    tpu.vector_store %arg11[%c0_198, %c0_199, %c0_200], %394 {strides = array<i32>} : memref<2x8x128xf32, #tpu.memory_space<vmem>>, vector<1x8x128xf32>,
    %c0_201 = arith.constant 0 : index
    %c0_202 = arith.constant 0 : index
    %c0_203 = arith.constant 0 : index
    %395 = vector.load %arg12[%c0_201, %c0_202, %c0_203] : memref<2x8x128xf32, #tpu.memory_space<vmem>>, vector<1x8x128xf32>
    %396 = vector.shape_cast %395 : vector<1x8x128xf32> to vector<8x128xf32>
    %397 = vector.shape_cast %389 : vector<8x128xf32> to vector<1x8x128xf32>
    tpu.vector_store %arg12[%c0_201, %c0_202, %c0_203], %397 {strides = array<i32>} : memref<2x8x128xf32, #tpu.memory_space<vmem>>, vector<1x8x128xf32>,
    %c1_204 = arith.constant 1 : index
    %c0_205 = arith.constant 0 : index
    %c0_206 = arith.constant 0 : index
    %398 = vector.load %arg11[%c1_204, %c0_205, %c0_206] : memref<2x8x128xf32, #tpu.memory_space<vmem>>, vector<1x8x128xf32>
    %399 = vector.shape_cast %398 : vector<1x8x128xf32> to vector<8x128xf32>
    %400 = tpu.concatenate %391, %399 in 1 : vector<8x128xf32>, vector<8x128xf32> -> vector<8x256xf32>
    %c0_207 = arith.constant 0 : index
    %c0_208 = arith.constant 0 : index
    %401 = vector.load %arg4[%c0_207, %c0_208] : memref<256x512xf32, #tpu.memory_space<vmem>>, vector<256x512xf32>
    %cst_209 = arith.constant dense<0.000000e+00> : vector<8x512xf32>
    %402 = tpu.matmul %400, %401, %cst_209 {dimension_numbers = #tpu.dot_dimension_numbers<[1], [0], [0], [1], [0, 0, 1, 1], [], []>} : vector<8x256xf32>, vector<256x512xf32>, vector<8x512xf32> -> vector<8x512xf32>
    %c0_210 = arith.constant 0 : index
    %c0_211 = arith.constant 0 : index
    %403 = vector.load %arg5[%c0_210, %c0_211] : memref<1x512xf32, #tpu.memory_space<vmem>>, vector<1x512xf32>
    %404 = vector.broadcast %403 : vector<1x512xf32> to vector<8x512xf32>
    %405 = arith.addf %402, %404 : vector<8x512xf32>
    %c1_212 = arith.constant 1 : index
    %c0_213 = arith.constant 0 : index
    %c0_214 = arith.constant 0 : index
    %406 = vector.load %arg12[%c1_212, %c0_213, %c0_214] : memref<2x8x128xf32, #tpu.memory_space<vmem>>, vector<1x8x128xf32>
    %407 = vector.shape_cast %406 : vector<1x8x128xf32> to vector<8x128xf32>
    %408 = vector.extract_strided_slice %405 {offsets = [0, 0], sizes = [8, 128], strides = [1, 1]} : vector<8x512xf32> to vector<8x128xf32>
    %409 = arith.negf %408 : vector<8x128xf32>
    %410 = math.exp %409 : vector<8x128xf32>
    %cst_215 = arith.constant 1.000000e+00 : f32
    %411 = vector.broadcast %cst_215 : f32 to vector<8x128xf32>
    %412 = arith.addf %411, %410 : vector<8x128xf32>
    %413 = arith.divf %411, %412 : vector<8x128xf32>
    %414 = vector.extract_strided_slice %405 {offsets = [0, 128], sizes = [8, 128], strides = [1, 1]} : vector<8x512xf32> to vector<8x128xf32>
    %415 = arith.negf %414 : vector<8x128xf32>
    %416 = math.exp %415 : vector<8x128xf32>
    %cst_216 = arith.constant 1.000000e+00 : f32
    %417 = vector.broadcast %cst_216 : f32 to vector<8x128xf32>
    %418 = arith.addf %417, %416 : vector<8x128xf32>
    %419 = arith.divf %417, %418 : vector<8x128xf32>
    %420 = vector.extract_strided_slice %405 {offsets = [0, 256], sizes = [8, 128], strides = [1, 1]} : vector<8x512xf32> to vector<8x128xf32>
    %421 = math.tanh %420 : vector<8x128xf32>
    %422 = vector.extract_strided_slice %405 {offsets = [0, 384], sizes = [8, 128], strides = [1, 1]} : vector<8x512xf32> to vector<8x128xf32>
    %423 = arith.negf %422 : vector<8x128xf32>
    %424 = math.exp %423 : vector<8x128xf32>
    %cst_217 = arith.constant 1.000000e+00 : f32
    %425 = vector.broadcast %cst_217 : f32 to vector<8x128xf32>
    %426 = arith.addf %425, %424 : vector<8x128xf32>
    %427 = arith.divf %425, %426 : vector<8x128xf32>
    %428 = arith.mulf %419, %407 : vector<8x128xf32>
    %429 = arith.mulf %413, %421 : vector<8x128xf32>
    %430 = arith.addf %428, %429 : vector<8x128xf32>
    %431 = math.tanh %430 : vector<8x128xf32>
    %432 = arith.mulf %427, %431 : vector<8x128xf32>
    %c1_218 = arith.constant 1 : index
    %c0_219 = arith.constant 0 : index
    %c0_220 = arith.constant 0 : index
    %433 = vector.load %arg11[%c1_218, %c0_219, %c0_220] : memref<2x8x128xf32, #tpu.memory_space<vmem>>, vector<1x8x128xf32>
    %434 = vector.shape_cast %433 : vector<1x8x128xf32> to vector<8x128xf32>
    %435 = vector.shape_cast %432 : vector<8x128xf32> to vector<1x8x128xf32>
    tpu.vector_store %arg11[%c1_218, %c0_219, %c0_220], %435 {strides = array<i32>} : memref<2x8x128xf32, #tpu.memory_space<vmem>>, vector<1x8x128xf32>,
    %c1_221 = arith.constant 1 : index
    %c0_222 = arith.constant 0 : index
    %c0_223 = arith.constant 0 : index
    %436 = vector.load %arg12[%c1_221, %c0_222, %c0_223] : memref<2x8x128xf32, #tpu.memory_space<vmem>>, vector<1x8x128xf32>
    %437 = vector.shape_cast %436 : vector<1x8x128xf32> to vector<8x128xf32>
    %438 = vector.shape_cast %430 : vector<8x128xf32> to vector<1x8x128xf32>
    tpu.vector_store %arg12[%c1_221, %c0_222, %c0_223], %438 {strides = array<i32>} : memref<2x8x128xf32, #tpu.memory_space<vmem>>, vector<1x8x128xf32>,
    %439 = arith.index_cast %c4_i32 : i32 to index
    %c0_224 = arith.constant 0 : index
    %c0_225 = arith.constant 0 : index
    %440 = vector.load %arg10[%439, %c0_224, %c0_225] : memref<10x8x128xf32, #tpu.memory_space<vmem>>, vector<1x8x128xf32>
    %441 = vector.shape_cast %440 : vector<1x8x128xf32> to vector<8x128xf32>
    %442 = vector.shape_cast %432 : vector<8x128xf32> to vector<1x8x128xf32>
    tpu.vector_store %arg10[%439, %c0_224, %c0_225], %442 {strides = array<i32>} : memref<10x8x128xf32, #tpu.memory_space<vmem>>, vector<1x8x128xf32>,
    %c5_i32 = arith.constant 5 : i32
    %443 = arith.index_cast %c5_i32 : i32 to index
    %c0_226 = arith.constant 0 : index
    %c0_227 = arith.constant 0 : index
    %444 = vector.load %arg9[%443, %c0_226, %c0_227] : memref<10x8x512xf32, #tpu.memory_space<vmem>>, vector<1x8x512xf32>
    %445 = vector.shape_cast %444 : vector<1x8x512xf32> to vector<8x512xf32>
    %c0_228 = arith.constant 0 : index
    %c0_229 = arith.constant 0 : index
    %c0_230 = arith.constant 0 : index
    %446 = vector.load %arg11[%c0_228, %c0_229, %c0_230] : memref<2x8x128xf32, #tpu.memory_space<vmem>>, vector<1x8x128xf32>
    %447 = vector.shape_cast %446 : vector<1x8x128xf32> to vector<8x128xf32>
    %c0_231 = arith.constant 0 : index
    %c0_232 = arith.constant 0 : index
    %448 = vector.load %arg2[%c0_231, %c0_232] : memref<128x512xf32, #tpu.memory_space<vmem>>, vector<128x512xf32>
    %cst_233 = arith.constant dense<0.000000e+00> : vector<8x512xf32>
    %449 = tpu.matmul %447, %448, %cst_233 {dimension_numbers = #tpu.dot_dimension_numbers<[1], [0], [0], [1], [0, 0, 1, 1], [], []>} : vector<8x128xf32>, vector<128x512xf32>, vector<8x512xf32> -> vector<8x512xf32>
    %450 = arith.addf %445, %449 : vector<8x512xf32>
    %c0_234 = arith.constant 0 : index
    %c0_235 = arith.constant 0 : index
    %c0_236 = arith.constant 0 : index
    %451 = vector.load %arg12[%c0_234, %c0_235, %c0_236] : memref<2x8x128xf32, #tpu.memory_space<vmem>>, vector<1x8x128xf32>
    %452 = vector.shape_cast %451 : vector<1x8x128xf32> to vector<8x128xf32>
    %453 = vector.extract_strided_slice %450 {offsets = [0, 0], sizes = [8, 128], strides = [1, 1]} : vector<8x512xf32> to vector<8x128xf32>
    %454 = arith.negf %453 : vector<8x128xf32>
    %455 = math.exp %454 : vector<8x128xf32>
    %cst_237 = arith.constant 1.000000e+00 : f32
    %456 = vector.broadcast %cst_237 : f32 to vector<8x128xf32>
    %457 = arith.addf %456, %455 : vector<8x128xf32>
    %458 = arith.divf %456, %457 : vector<8x128xf32>
    %459 = vector.extract_strided_slice %450 {offsets = [0, 128], sizes = [8, 128], strides = [1, 1]} : vector<8x512xf32> to vector<8x128xf32>
    %460 = arith.negf %459 : vector<8x128xf32>
    %461 = math.exp %460 : vector<8x128xf32>
    %cst_238 = arith.constant 1.000000e+00 : f32
    %462 = vector.broadcast %cst_238 : f32 to vector<8x128xf32>
    %463 = arith.addf %462, %461 : vector<8x128xf32>
    %464 = arith.divf %462, %463 : vector<8x128xf32>
    %465 = vector.extract_strided_slice %450 {offsets = [0, 256], sizes = [8, 128], strides = [1, 1]} : vector<8x512xf32> to vector<8x128xf32>
    %466 = math.tanh %465 : vector<8x128xf32>
    %467 = vector.extract_strided_slice %450 {offsets = [0, 384], sizes = [8, 128], strides = [1, 1]} : vector<8x512xf32> to vector<8x128xf32>
    %468 = arith.negf %467 : vector<8x128xf32>
    %469 = math.exp %468 : vector<8x128xf32>
    %cst_239 = arith.constant 1.000000e+00 : f32
    %470 = vector.broadcast %cst_239 : f32 to vector<8x128xf32>
    %471 = arith.addf %470, %469 : vector<8x128xf32>
    %472 = arith.divf %470, %471 : vector<8x128xf32>
    %473 = arith.mulf %464, %452 : vector<8x128xf32>
    %474 = arith.mulf %458, %466 : vector<8x128xf32>
    %475 = arith.addf %473, %474 : vector<8x128xf32>
    %476 = math.tanh %475 : vector<8x128xf32>
    %477 = arith.mulf %472, %476 : vector<8x128xf32>
    %c0_240 = arith.constant 0 : index
    %c0_241 = arith.constant 0 : index
    %c0_242 = arith.constant 0 : index
    %478 = vector.load %arg11[%c0_240, %c0_241, %c0_242] : memref<2x8x128xf32, #tpu.memory_space<vmem>>, vector<1x8x128xf32>
    %479 = vector.shape_cast %478 : vector<1x8x128xf32> to vector<8x128xf32>
    %480 = vector.shape_cast %477 : vector<8x128xf32> to vector<1x8x128xf32>
    tpu.vector_store %arg11[%c0_240, %c0_241, %c0_242], %480 {strides = array<i32>} : memref<2x8x128xf32, #tpu.memory_space<vmem>>, vector<1x8x128xf32>,
    %c0_243 = arith.constant 0 : index
    %c0_244 = arith.constant 0 : index
    %c0_245 = arith.constant 0 : index
    %481 = vector.load %arg12[%c0_243, %c0_244, %c0_245] : memref<2x8x128xf32, #tpu.memory_space<vmem>>, vector<1x8x128xf32>
    %482 = vector.shape_cast %481 : vector<1x8x128xf32> to vector<8x128xf32>
    %483 = vector.shape_cast %475 : vector<8x128xf32> to vector<1x8x128xf32>
    tpu.vector_store %arg12[%c0_243, %c0_244, %c0_245], %483 {strides = array<i32>} : memref<2x8x128xf32, #tpu.memory_space<vmem>>, vector<1x8x128xf32>,
    %c1_246 = arith.constant 1 : index
    %c0_247 = arith.constant 0 : index
    %c0_248 = arith.constant 0 : index
    %484 = vector.load %arg11[%c1_246, %c0_247, %c0_248] : memref<2x8x128xf32, #tpu.memory_space<vmem>>, vector<1x8x128xf32>
    %485 = vector.shape_cast %484 : vector<1x8x128xf32> to vector<8x128xf32>
    %486 = tpu.concatenate %477, %485 in 1 : vector<8x128xf32>, vector<8x128xf32> -> vector<8x256xf32>
    %c0_249 = arith.constant 0 : index
    %c0_250 = arith.constant 0 : index
    %487 = vector.load %arg4[%c0_249, %c0_250] : memref<256x512xf32, #tpu.memory_space<vmem>>, vector<256x512xf32>
    %cst_251 = arith.constant dense<0.000000e+00> : vector<8x512xf32>
    %488 = tpu.matmul %486, %487, %cst_251 {dimension_numbers = #tpu.dot_dimension_numbers<[1], [0], [0], [1], [0, 0, 1, 1], [], []>} : vector<8x256xf32>, vector<256x512xf32>, vector<8x512xf32> -> vector<8x512xf32>
    %c0_252 = arith.constant 0 : index
    %c0_253 = arith.constant 0 : index
    %489 = vector.load %arg5[%c0_252, %c0_253] : memref<1x512xf32, #tpu.memory_space<vmem>>, vector<1x512xf32>
    %490 = vector.broadcast %489 : vector<1x512xf32> to vector<8x512xf32>
    %491 = arith.addf %488, %490 : vector<8x512xf32>
    %c1_254 = arith.constant 1 : index
    %c0_255 = arith.constant 0 : index
    %c0_256 = arith.constant 0 : index
    %492 = vector.load %arg12[%c1_254, %c0_255, %c0_256] : memref<2x8x128xf32, #tpu.memory_space<vmem>>, vector<1x8x128xf32>
    %493 = vector.shape_cast %492 : vector<1x8x128xf32> to vector<8x128xf32>
    %494 = vector.extract_strided_slice %491 {offsets = [0, 0], sizes = [8, 128], strides = [1, 1]} : vector<8x512xf32> to vector<8x128xf32>
    %495 = arith.negf %494 : vector<8x128xf32>
    %496 = math.exp %495 : vector<8x128xf32>
    %cst_257 = arith.constant 1.000000e+00 : f32
    %497 = vector.broadcast %cst_257 : f32 to vector<8x128xf32>
    %498 = arith.addf %497, %496 : vector<8x128xf32>
    %499 = arith.divf %497, %498 : vector<8x128xf32>
    %500 = vector.extract_strided_slice %491 {offsets = [0, 128], sizes = [8, 128], strides = [1, 1]} : vector<8x512xf32> to vector<8x128xf32>
    %501 = arith.negf %500 : vector<8x128xf32>
    %502 = math.exp %501 : vector<8x128xf32>
    %cst_258 = arith.constant 1.000000e+00 : f32
    %503 = vector.broadcast %cst_258 : f32 to vector<8x128xf32>
    %504 = arith.addf %503, %502 : vector<8x128xf32>
    %505 = arith.divf %503, %504 : vector<8x128xf32>
    %506 = vector.extract_strided_slice %491 {offsets = [0, 256], sizes = [8, 128], strides = [1, 1]} : vector<8x512xf32> to vector<8x128xf32>
    %507 = math.tanh %506 : vector<8x128xf32>
    %508 = vector.extract_strided_slice %491 {offsets = [0, 384], sizes = [8, 128], strides = [1, 1]} : vector<8x512xf32> to vector<8x128xf32>
    %509 = arith.negf %508 : vector<8x128xf32>
    %510 = math.exp %509 : vector<8x128xf32>
    %cst_259 = arith.constant 1.000000e+00 : f32
    %511 = vector.broadcast %cst_259 : f32 to vector<8x128xf32>
    %512 = arith.addf %511, %510 : vector<8x128xf32>
    %513 = arith.divf %511, %512 : vector<8x128xf32>
    %514 = arith.mulf %505, %493 : vector<8x128xf32>
    %515 = arith.mulf %499, %507 : vector<8x128xf32>
    %516 = arith.addf %514, %515 : vector<8x128xf32>
    %517 = math.tanh %516 : vector<8x128xf32>
    %518 = arith.mulf %513, %517 : vector<8x128xf32>
    %c1_260 = arith.constant 1 : index
    %c0_261 = arith.constant 0 : index
    %c0_262 = arith.constant 0 : index
    %519 = vector.load %arg11[%c1_260, %c0_261, %c0_262] : memref<2x8x128xf32, #tpu.memory_space<vmem>>, vector<1x8x128xf32>
    %520 = vector.shape_cast %519 : vector<1x8x128xf32> to vector<8x128xf32>
    %521 = vector.shape_cast %518 : vector<8x128xf32> to vector<1x8x128xf32>
    tpu.vector_store %arg11[%c1_260, %c0_261, %c0_262], %521 {strides = array<i32>} : memref<2x8x128xf32, #tpu.memory_space<vmem>>, vector<1x8x128xf32>,
    %c1_263 = arith.constant 1 : index
    %c0_264 = arith.constant 0 : index
    %c0_265 = arith.constant 0 : index
    %522 = vector.load %arg12[%c1_263, %c0_264, %c0_265] : memref<2x8x128xf32, #tpu.memory_space<vmem>>, vector<1x8x128xf32>
    %523 = vector.shape_cast %522 : vector<1x8x128xf32> to vector<8x128xf32>
    %524 = vector.shape_cast %516 : vector<8x128xf32> to vector<1x8x128xf32>
    tpu.vector_store %arg12[%c1_263, %c0_264, %c0_265], %524 {strides = array<i32>} : memref<2x8x128xf32, #tpu.memory_space<vmem>>, vector<1x8x128xf32>,
    %525 = arith.index_cast %c5_i32 : i32 to index
    %c0_266 = arith.constant 0 : index
    %c0_267 = arith.constant 0 : index
    %526 = vector.load %arg10[%525, %c0_266, %c0_267] : memref<10x8x128xf32, #tpu.memory_space<vmem>>, vector<1x8x128xf32>
    %527 = vector.shape_cast %526 : vector<1x8x128xf32> to vector<8x128xf32>
    %528 = vector.shape_cast %518 : vector<8x128xf32> to vector<1x8x128xf32>
    tpu.vector_store %arg10[%525, %c0_266, %c0_267], %528 {strides = array<i32>} : memref<10x8x128xf32, #tpu.memory_space<vmem>>, vector<1x8x128xf32>,
    %c6_i32 = arith.constant 6 : i32
    %529 = arith.index_cast %c6_i32 : i32 to index
    %c0_268 = arith.constant 0 : index
    %c0_269 = arith.constant 0 : index
    %530 = vector.load %arg9[%529, %c0_268, %c0_269] : memref<10x8x512xf32, #tpu.memory_space<vmem>>, vector<1x8x512xf32>
    %531 = vector.shape_cast %530 : vector<1x8x512xf32> to vector<8x512xf32>
    %c0_270 = arith.constant 0 : index
    %c0_271 = arith.constant 0 : index
    %c0_272 = arith.constant 0 : index
    %532 = vector.load %arg11[%c0_270, %c0_271, %c0_272] : memref<2x8x128xf32, #tpu.memory_space<vmem>>, vector<1x8x128xf32>
    %533 = vector.shape_cast %532 : vector<1x8x128xf32> to vector<8x128xf32>
    %c0_273 = arith.constant 0 : index
    %c0_274 = arith.constant 0 : index
    %534 = vector.load %arg2[%c0_273, %c0_274] : memref<128x512xf32, #tpu.memory_space<vmem>>, vector<128x512xf32>
    %cst_275 = arith.constant dense<0.000000e+00> : vector<8x512xf32>
    %535 = tpu.matmul %533, %534, %cst_275 {dimension_numbers = #tpu.dot_dimension_numbers<[1], [0], [0], [1], [0, 0, 1, 1], [], []>} : vector<8x128xf32>, vector<128x512xf32>, vector<8x512xf32> -> vector<8x512xf32>
    %536 = arith.addf %531, %535 : vector<8x512xf32>
    %c0_276 = arith.constant 0 : index
    %c0_277 = arith.constant 0 : index
    %c0_278 = arith.constant 0 : index
    %537 = vector.load %arg12[%c0_276, %c0_277, %c0_278] : memref<2x8x128xf32, #tpu.memory_space<vmem>>, vector<1x8x128xf32>
    %538 = vector.shape_cast %537 : vector<1x8x128xf32> to vector<8x128xf32>
    %539 = vector.extract_strided_slice %536 {offsets = [0, 0], sizes = [8, 128], strides = [1, 1]} : vector<8x512xf32> to vector<8x128xf32>
    %540 = arith.negf %539 : vector<8x128xf32>
    %541 = math.exp %540 : vector<8x128xf32>
    %cst_279 = arith.constant 1.000000e+00 : f32
    %542 = vector.broadcast %cst_279 : f32 to vector<8x128xf32>
    %543 = arith.addf %542, %541 : vector<8x128xf32>
    %544 = arith.divf %542, %543 : vector<8x128xf32>
    %545 = vector.extract_strided_slice %536 {offsets = [0, 128], sizes = [8, 128], strides = [1, 1]} : vector<8x512xf32> to vector<8x128xf32>
    %546 = arith.negf %545 : vector<8x128xf32>
    %547 = math.exp %546 : vector<8x128xf32>
    %cst_280 = arith.constant 1.000000e+00 : f32
    %548 = vector.broadcast %cst_280 : f32 to vector<8x128xf32>
    %549 = arith.addf %548, %547 : vector<8x128xf32>
    %550 = arith.divf %548, %549 : vector<8x128xf32>
    %551 = vector.extract_strided_slice %536 {offsets = [0, 256], sizes = [8, 128], strides = [1, 1]} : vector<8x512xf32> to vector<8x128xf32>
    %552 = math.tanh %551 : vector<8x128xf32>
    %553 = vector.extract_strided_slice %536 {offsets = [0, 384], sizes = [8, 128], strides = [1, 1]} : vector<8x512xf32> to vector<8x128xf32>
    %554 = arith.negf %553 : vector<8x128xf32>
    %555 = math.exp %554 : vector<8x128xf32>
    %cst_281 = arith.constant 1.000000e+00 : f32
    %556 = vector.broadcast %cst_281 : f32 to vector<8x128xf32>
    %557 = arith.addf %556, %555 : vector<8x128xf32>
    %558 = arith.divf %556, %557 : vector<8x128xf32>
    %559 = arith.mulf %550, %538 : vector<8x128xf32>
    %560 = arith.mulf %544, %552 : vector<8x128xf32>
    %561 = arith.addf %559, %560 : vector<8x128xf32>
    %562 = math.tanh %561 : vector<8x128xf32>
    %563 = arith.mulf %558, %562 : vector<8x128xf32>
    %c0_282 = arith.constant 0 : index
    %c0_283 = arith.constant 0 : index
    %c0_284 = arith.constant 0 : index
    %564 = vector.load %arg11[%c0_282, %c0_283, %c0_284] : memref<2x8x128xf32, #tpu.memory_space<vmem>>, vector<1x8x128xf32>
    %565 = vector.shape_cast %564 : vector<1x8x128xf32> to vector<8x128xf32>
    %566 = vector.shape_cast %563 : vector<8x128xf32> to vector<1x8x128xf32>
    tpu.vector_store %arg11[%c0_282, %c0_283, %c0_284], %566 {strides = array<i32>} : memref<2x8x128xf32, #tpu.memory_space<vmem>>, vector<1x8x128xf32>,
    %c0_285 = arith.constant 0 : index
    %c0_286 = arith.constant 0 : index
    %c0_287 = arith.constant 0 : index
    %567 = vector.load %arg12[%c0_285, %c0_286, %c0_287] : memref<2x8x128xf32, #tpu.memory_space<vmem>>, vector<1x8x128xf32>
    %568 = vector.shape_cast %567 : vector<1x8x128xf32> to vector<8x128xf32>
    %569 = vector.shape_cast %561 : vector<8x128xf32> to vector<1x8x128xf32>
    tpu.vector_store %arg12[%c0_285, %c0_286, %c0_287], %569 {strides = array<i32>} : memref<2x8x128xf32, #tpu.memory_space<vmem>>, vector<1x8x128xf32>,
    %c1_288 = arith.constant 1 : index
    %c0_289 = arith.constant 0 : index
    %c0_290 = arith.constant 0 : index
    %570 = vector.load %arg11[%c1_288, %c0_289, %c0_290] : memref<2x8x128xf32, #tpu.memory_space<vmem>>, vector<1x8x128xf32>
    %571 = vector.shape_cast %570 : vector<1x8x128xf32> to vector<8x128xf32>
    %572 = tpu.concatenate %563, %571 in 1 : vector<8x128xf32>, vector<8x128xf32> -> vector<8x256xf32>
    %c0_291 = arith.constant 0 : index
    %c0_292 = arith.constant 0 : index
    %573 = vector.load %arg4[%c0_291, %c0_292] : memref<256x512xf32, #tpu.memory_space<vmem>>, vector<256x512xf32>
    %cst_293 = arith.constant dense<0.000000e+00> : vector<8x512xf32>
    %574 = tpu.matmul %572, %573, %cst_293 {dimension_numbers = #tpu.dot_dimension_numbers<[1], [0], [0], [1], [0, 0, 1, 1], [], []>} : vector<8x256xf32>, vector<256x512xf32>, vector<8x512xf32> -> vector<8x512xf32>
    %c0_294 = arith.constant 0 : index
    %c0_295 = arith.constant 0 : index
    %575 = vector.load %arg5[%c0_294, %c0_295] : memref<1x512xf32, #tpu.memory_space<vmem>>, vector<1x512xf32>
    %576 = vector.broadcast %575 : vector<1x512xf32> to vector<8x512xf32>
    %577 = arith.addf %574, %576 : vector<8x512xf32>
    %c1_296 = arith.constant 1 : index
    %c0_297 = arith.constant 0 : index
    %c0_298 = arith.constant 0 : index
    %578 = vector.load %arg12[%c1_296, %c0_297, %c0_298] : memref<2x8x128xf32, #tpu.memory_space<vmem>>, vector<1x8x128xf32>
    %579 = vector.shape_cast %578 : vector<1x8x128xf32> to vector<8x128xf32>
    %580 = vector.extract_strided_slice %577 {offsets = [0, 0], sizes = [8, 128], strides = [1, 1]} : vector<8x512xf32> to vector<8x128xf32>
    %581 = arith.negf %580 : vector<8x128xf32>
    %582 = math.exp %581 : vector<8x128xf32>
    %cst_299 = arith.constant 1.000000e+00 : f32
    %583 = vector.broadcast %cst_299 : f32 to vector<8x128xf32>
    %584 = arith.addf %583, %582 : vector<8x128xf32>
    %585 = arith.divf %583, %584 : vector<8x128xf32>
    %586 = vector.extract_strided_slice %577 {offsets = [0, 128], sizes = [8, 128], strides = [1, 1]} : vector<8x512xf32> to vector<8x128xf32>
    %587 = arith.negf %586 : vector<8x128xf32>
    %588 = math.exp %587 : vector<8x128xf32>
    %cst_300 = arith.constant 1.000000e+00 : f32
    %589 = vector.broadcast %cst_300 : f32 to vector<8x128xf32>
    %590 = arith.addf %589, %588 : vector<8x128xf32>
    %591 = arith.divf %589, %590 : vector<8x128xf32>
    %592 = vector.extract_strided_slice %577 {offsets = [0, 256], sizes = [8, 128], strides = [1, 1]} : vector<8x512xf32> to vector<8x128xf32>
    %593 = math.tanh %592 : vector<8x128xf32>
    %594 = vector.extract_strided_slice %577 {offsets = [0, 384], sizes = [8, 128], strides = [1, 1]} : vector<8x512xf32> to vector<8x128xf32>
    %595 = arith.negf %594 : vector<8x128xf32>
    %596 = math.exp %595 : vector<8x128xf32>
    %cst_301 = arith.constant 1.000000e+00 : f32
    %597 = vector.broadcast %cst_301 : f32 to vector<8x128xf32>
    %598 = arith.addf %597, %596 : vector<8x128xf32>
    %599 = arith.divf %597, %598 : vector<8x128xf32>
    %600 = arith.mulf %591, %579 : vector<8x128xf32>
    %601 = arith.mulf %585, %593 : vector<8x128xf32>
    %602 = arith.addf %600, %601 : vector<8x128xf32>
    %603 = math.tanh %602 : vector<8x128xf32>
    %604 = arith.mulf %599, %603 : vector<8x128xf32>
    %c1_302 = arith.constant 1 : index
    %c0_303 = arith.constant 0 : index
    %c0_304 = arith.constant 0 : index
    %605 = vector.load %arg11[%c1_302, %c0_303, %c0_304] : memref<2x8x128xf32, #tpu.memory_space<vmem>>, vector<1x8x128xf32>
    %606 = vector.shape_cast %605 : vector<1x8x128xf32> to vector<8x128xf32>
    %607 = vector.shape_cast %604 : vector<8x128xf32> to vector<1x8x128xf32>
    tpu.vector_store %arg11[%c1_302, %c0_303, %c0_304], %607 {strides = array<i32>} : memref<2x8x128xf32, #tpu.memory_space<vmem>>, vector<1x8x128xf32>,
    %c1_305 = arith.constant 1 : index
    %c0_306 = arith.constant 0 : index
    %c0_307 = arith.constant 0 : index
    %608 = vector.load %arg12[%c1_305, %c0_306, %c0_307] : memref<2x8x128xf32, #tpu.memory_space<vmem>>, vector<1x8x128xf32>
    %609 = vector.shape_cast %608 : vector<1x8x128xf32> to vector<8x128xf32>
    %610 = vector.shape_cast %602 : vector<8x128xf32> to vector<1x8x128xf32>
    tpu.vector_store %arg12[%c1_305, %c0_306, %c0_307], %610 {strides = array<i32>} : memref<2x8x128xf32, #tpu.memory_space<vmem>>, vector<1x8x128xf32>,
    %611 = arith.index_cast %c6_i32 : i32 to index
    %c0_308 = arith.constant 0 : index
    %c0_309 = arith.constant 0 : index
    %612 = vector.load %arg10[%611, %c0_308, %c0_309] : memref<10x8x128xf32, #tpu.memory_space<vmem>>, vector<1x8x128xf32>
    %613 = vector.shape_cast %612 : vector<1x8x128xf32> to vector<8x128xf32>
    %614 = vector.shape_cast %604 : vector<8x128xf32> to vector<1x8x128xf32>
    tpu.vector_store %arg10[%611, %c0_308, %c0_309], %614 {strides = array<i32>} : memref<10x8x128xf32, #tpu.memory_space<vmem>>, vector<1x8x128xf32>,
    %c7_i32 = arith.constant 7 : i32
    %615 = arith.index_cast %c7_i32 : i32 to index
    %c0_310 = arith.constant 0 : index
    %c0_311 = arith.constant 0 : index
    %616 = vector.load %arg9[%615, %c0_310, %c0_311] : memref<10x8x512xf32, #tpu.memory_space<vmem>>, vector<1x8x512xf32>
    %617 = vector.shape_cast %616 : vector<1x8x512xf32> to vector<8x512xf32>
    %c0_312 = arith.constant 0 : index
    %c0_313 = arith.constant 0 : index
    %c0_314 = arith.constant 0 : index
    %618 = vector.load %arg11[%c0_312, %c0_313, %c0_314] : memref<2x8x128xf32, #tpu.memory_space<vmem>>, vector<1x8x128xf32>
    %619 = vector.shape_cast %618 : vector<1x8x128xf32> to vector<8x128xf32>
    %c0_315 = arith.constant 0 : index
    %c0_316 = arith.constant 0 : index
    %620 = vector.load %arg2[%c0_315, %c0_316] : memref<128x512xf32, #tpu.memory_space<vmem>>, vector<128x512xf32>
    %cst_317 = arith.constant dense<0.000000e+00> : vector<8x512xf32>
    %621 = tpu.matmul %619, %620, %cst_317 {dimension_numbers = #tpu.dot_dimension_numbers<[1], [0], [0], [1], [0, 0, 1, 1], [], []>} : vector<8x128xf32>, vector<128x512xf32>, vector<8x512xf32> -> vector<8x512xf32>
    %622 = arith.addf %617, %621 : vector<8x512xf32>
    %c0_318 = arith.constant 0 : index
    %c0_319 = arith.constant 0 : index
    %c0_320 = arith.constant 0 : index
    %623 = vector.load %arg12[%c0_318, %c0_319, %c0_320] : memref<2x8x128xf32, #tpu.memory_space<vmem>>, vector<1x8x128xf32>
    %624 = vector.shape_cast %623 : vector<1x8x128xf32> to vector<8x128xf32>
    %625 = vector.extract_strided_slice %622 {offsets = [0, 0], sizes = [8, 128], strides = [1, 1]} : vector<8x512xf32> to vector<8x128xf32>
    %626 = arith.negf %625 : vector<8x128xf32>
    %627 = math.exp %626 : vector<8x128xf32>
    %cst_321 = arith.constant 1.000000e+00 : f32
    %628 = vector.broadcast %cst_321 : f32 to vector<8x128xf32>
    %629 = arith.addf %628, %627 : vector<8x128xf32>
    %630 = arith.divf %628, %629 : vector<8x128xf32>
    %631 = vector.extract_strided_slice %622 {offsets = [0, 128], sizes = [8, 128], strides = [1, 1]} : vector<8x512xf32> to vector<8x128xf32>
    %632 = arith.negf %631 : vector<8x128xf32>
    %633 = math.exp %632 : vector<8x128xf32>
    %cst_322 = arith.constant 1.000000e+00 : f32
    %634 = vector.broadcast %cst_322 : f32 to vector<8x128xf32>
    %635 = arith.addf %634, %633 : vector<8x128xf32>
    %636 = arith.divf %634, %635 : vector<8x128xf32>
    %637 = vector.extract_strided_slice %622 {offsets = [0, 256], sizes = [8, 128], strides = [1, 1]} : vector<8x512xf32> to vector<8x128xf32>
    %638 = math.tanh %637 : vector<8x128xf32>
    %639 = vector.extract_strided_slice %622 {offsets = [0, 384], sizes = [8, 128], strides = [1, 1]} : vector<8x512xf32> to vector<8x128xf32>
    %640 = arith.negf %639 : vector<8x128xf32>
    %641 = math.exp %640 : vector<8x128xf32>
    %cst_323 = arith.constant 1.000000e+00 : f32
    %642 = vector.broadcast %cst_323 : f32 to vector<8x128xf32>
    %643 = arith.addf %642, %641 : vector<8x128xf32>
    %644 = arith.divf %642, %643 : vector<8x128xf32>
    %645 = arith.mulf %636, %624 : vector<8x128xf32>
    %646 = arith.mulf %630, %638 : vector<8x128xf32>
    %647 = arith.addf %645, %646 : vector<8x128xf32>
    %648 = math.tanh %647 : vector<8x128xf32>
    %649 = arith.mulf %644, %648 : vector<8x128xf32>
    %c0_324 = arith.constant 0 : index
    %c0_325 = arith.constant 0 : index
    %c0_326 = arith.constant 0 : index
    %650 = vector.load %arg11[%c0_324, %c0_325, %c0_326] : memref<2x8x128xf32, #tpu.memory_space<vmem>>, vector<1x8x128xf32>
    %651 = vector.shape_cast %650 : vector<1x8x128xf32> to vector<8x128xf32>
    %652 = vector.shape_cast %649 : vector<8x128xf32> to vector<1x8x128xf32>
    tpu.vector_store %arg11[%c0_324, %c0_325, %c0_326], %652 {strides = array<i32>} : memref<2x8x128xf32, #tpu.memory_space<vmem>>, vector<1x8x128xf32>,
    %c0_327 = arith.constant 0 : index
    %c0_328 = arith.constant 0 : index
    %c0_329 = arith.constant 0 : index
    %653 = vector.load %arg12[%c0_327, %c0_328, %c0_329] : memref<2x8x128xf32, #tpu.memory_space<vmem>>, vector<1x8x128xf32>
    %654 = vector.shape_cast %653 : vector<1x8x128xf32> to vector<8x128xf32>
    %655 = vector.shape_cast %647 : vector<8x128xf32> to vector<1x8x128xf32>
    tpu.vector_store %arg12[%c0_327, %c0_328, %c0_329], %655 {strides = array<i32>} : memref<2x8x128xf32, #tpu.memory_space<vmem>>, vector<1x8x128xf32>,
    %c1_330 = arith.constant 1 : index
    %c0_331 = arith.constant 0 : index
    %c0_332 = arith.constant 0 : index
    %656 = vector.load %arg11[%c1_330, %c0_331, %c0_332] : memref<2x8x128xf32, #tpu.memory_space<vmem>>, vector<1x8x128xf32>
    %657 = vector.shape_cast %656 : vector<1x8x128xf32> to vector<8x128xf32>
    %658 = tpu.concatenate %649, %657 in 1 : vector<8x128xf32>, vector<8x128xf32> -> vector<8x256xf32>
    %c0_333 = arith.constant 0 : index
    %c0_334 = arith.constant 0 : index
    %659 = vector.load %arg4[%c0_333, %c0_334] : memref<256x512xf32, #tpu.memory_space<vmem>>, vector<256x512xf32>
    %cst_335 = arith.constant dense<0.000000e+00> : vector<8x512xf32>
    %660 = tpu.matmul %658, %659, %cst_335 {dimension_numbers = #tpu.dot_dimension_numbers<[1], [0], [0], [1], [0, 0, 1, 1], [], []>} : vector<8x256xf32>, vector<256x512xf32>, vector<8x512xf32> -> vector<8x512xf32>
    %c0_336 = arith.constant 0 : index
    %c0_337 = arith.constant 0 : index
    %661 = vector.load %arg5[%c0_336, %c0_337] : memref<1x512xf32, #tpu.memory_space<vmem>>, vector<1x512xf32>
    %662 = vector.broadcast %661 : vector<1x512xf32> to vector<8x512xf32>
    %663 = arith.addf %660, %662 : vector<8x512xf32>
    %c1_338 = arith.constant 1 : index
    %c0_339 = arith.constant 0 : index
    %c0_340 = arith.constant 0 : index
    %664 = vector.load %arg12[%c1_338, %c0_339, %c0_340] : memref<2x8x128xf32, #tpu.memory_space<vmem>>, vector<1x8x128xf32>
    %665 = vector.shape_cast %664 : vector<1x8x128xf32> to vector<8x128xf32>
    %666 = vector.extract_strided_slice %663 {offsets = [0, 0], sizes = [8, 128], strides = [1, 1]} : vector<8x512xf32> to vector<8x128xf32>
    %667 = arith.negf %666 : vector<8x128xf32>
    %668 = math.exp %667 : vector<8x128xf32>
    %cst_341 = arith.constant 1.000000e+00 : f32
    %669 = vector.broadcast %cst_341 : f32 to vector<8x128xf32>
    %670 = arith.addf %669, %668 : vector<8x128xf32>
    %671 = arith.divf %669, %670 : vector<8x128xf32>
    %672 = vector.extract_strided_slice %663 {offsets = [0, 128], sizes = [8, 128], strides = [1, 1]} : vector<8x512xf32> to vector<8x128xf32>
    %673 = arith.negf %672 : vector<8x128xf32>
    %674 = math.exp %673 : vector<8x128xf32>
    %cst_342 = arith.constant 1.000000e+00 : f32
    %675 = vector.broadcast %cst_342 : f32 to vector<8x128xf32>
    %676 = arith.addf %675, %674 : vector<8x128xf32>
    %677 = arith.divf %675, %676 : vector<8x128xf32>
    %678 = vector.extract_strided_slice %663 {offsets = [0, 256], sizes = [8, 128], strides = [1, 1]} : vector<8x512xf32> to vector<8x128xf32>
    %679 = math.tanh %678 : vector<8x128xf32>
    %680 = vector.extract_strided_slice %663 {offsets = [0, 384], sizes = [8, 128], strides = [1, 1]} : vector<8x512xf32> to vector<8x128xf32>
    %681 = arith.negf %680 : vector<8x128xf32>
    %682 = math.exp %681 : vector<8x128xf32>
    %cst_343 = arith.constant 1.000000e+00 : f32
    %683 = vector.broadcast %cst_343 : f32 to vector<8x128xf32>
    %684 = arith.addf %683, %682 : vector<8x128xf32>
    %685 = arith.divf %683, %684 : vector<8x128xf32>
    %686 = arith.mulf %677, %665 : vector<8x128xf32>
    %687 = arith.mulf %671, %679 : vector<8x128xf32>
    %688 = arith.addf %686, %687 : vector<8x128xf32>
    %689 = math.tanh %688 : vector<8x128xf32>
    %690 = arith.mulf %685, %689 : vector<8x128xf32>
    %c1_344 = arith.constant 1 : index
    %c0_345 = arith.constant 0 : index
    %c0_346 = arith.constant 0 : index
    %691 = vector.load %arg11[%c1_344, %c0_345, %c0_346] : memref<2x8x128xf32, #tpu.memory_space<vmem>>, vector<1x8x128xf32>
    %692 = vector.shape_cast %691 : vector<1x8x128xf32> to vector<8x128xf32>
    %693 = vector.shape_cast %690 : vector<8x128xf32> to vector<1x8x128xf32>
    tpu.vector_store %arg11[%c1_344, %c0_345, %c0_346], %693 {strides = array<i32>} : memref<2x8x128xf32, #tpu.memory_space<vmem>>, vector<1x8x128xf32>,
    %c1_347 = arith.constant 1 : index
    %c0_348 = arith.constant 0 : index
    %c0_349 = arith.constant 0 : index
    %694 = vector.load %arg12[%c1_347, %c0_348, %c0_349] : memref<2x8x128xf32, #tpu.memory_space<vmem>>, vector<1x8x128xf32>
    %695 = vector.shape_cast %694 : vector<1x8x128xf32> to vector<8x128xf32>
    %696 = vector.shape_cast %688 : vector<8x128xf32> to vector<1x8x128xf32>
    tpu.vector_store %arg12[%c1_347, %c0_348, %c0_349], %696 {strides = array<i32>} : memref<2x8x128xf32, #tpu.memory_space<vmem>>, vector<1x8x128xf32>,
    %697 = arith.index_cast %c7_i32 : i32 to index
    %c0_350 = arith.constant 0 : index
    %c0_351 = arith.constant 0 : index
    %698 = vector.load %arg10[%697, %c0_350, %c0_351] : memref<10x8x128xf32, #tpu.memory_space<vmem>>, vector<1x8x128xf32>
    %699 = vector.shape_cast %698 : vector<1x8x128xf32> to vector<8x128xf32>
    %700 = vector.shape_cast %690 : vector<8x128xf32> to vector<1x8x128xf32>
    tpu.vector_store %arg10[%697, %c0_350, %c0_351], %700 {strides = array<i32>} : memref<10x8x128xf32, #tpu.memory_space<vmem>>, vector<1x8x128xf32>,
    %c8_i32 = arith.constant 8 : i32
    %701 = arith.index_cast %c8_i32 : i32 to index
    %c0_352 = arith.constant 0 : index
    %c0_353 = arith.constant 0 : index
    %702 = vector.load %arg9[%701, %c0_352, %c0_353] : memref<10x8x512xf32, #tpu.memory_space<vmem>>, vector<1x8x512xf32>
    %703 = vector.shape_cast %702 : vector<1x8x512xf32> to vector<8x512xf32>
    %c0_354 = arith.constant 0 : index
    %c0_355 = arith.constant 0 : index
    %c0_356 = arith.constant 0 : index
    %704 = vector.load %arg11[%c0_354, %c0_355, %c0_356] : memref<2x8x128xf32, #tpu.memory_space<vmem>>, vector<1x8x128xf32>
    %705 = vector.shape_cast %704 : vector<1x8x128xf32> to vector<8x128xf32>
    %c0_357 = arith.constant 0 : index
    %c0_358 = arith.constant 0 : index
    %706 = vector.load %arg2[%c0_357, %c0_358] : memref<128x512xf32, #tpu.memory_space<vmem>>, vector<128x512xf32>
    %cst_359 = arith.constant dense<0.000000e+00> : vector<8x512xf32>
    %707 = tpu.matmul %705, %706, %cst_359 {dimension_numbers = #tpu.dot_dimension_numbers<[1], [0], [0], [1], [0, 0, 1, 1], [], []>} : vector<8x128xf32>, vector<128x512xf32>, vector<8x512xf32> -> vector<8x512xf32>
    %708 = arith.addf %703, %707 : vector<8x512xf32>
    %c0_360 = arith.constant 0 : index
    %c0_361 = arith.constant 0 : index
    %c0_362 = arith.constant 0 : index
    %709 = vector.load %arg12[%c0_360, %c0_361, %c0_362] : memref<2x8x128xf32, #tpu.memory_space<vmem>>, vector<1x8x128xf32>
    %710 = vector.shape_cast %709 : vector<1x8x128xf32> to vector<8x128xf32>
    %711 = vector.extract_strided_slice %708 {offsets = [0, 0], sizes = [8, 128], strides = [1, 1]} : vector<8x512xf32> to vector<8x128xf32>
    %712 = arith.negf %711 : vector<8x128xf32>
    %713 = math.exp %712 : vector<8x128xf32>
    %cst_363 = arith.constant 1.000000e+00 : f32
    %714 = vector.broadcast %cst_363 : f32 to vector<8x128xf32>
    %715 = arith.addf %714, %713 : vector<8x128xf32>
    %716 = arith.divf %714, %715 : vector<8x128xf32>
    %717 = vector.extract_strided_slice %708 {offsets = [0, 128], sizes = [8, 128], strides = [1, 1]} : vector<8x512xf32> to vector<8x128xf32>
    %718 = arith.negf %717 : vector<8x128xf32>
    %719 = math.exp %718 : vector<8x128xf32>
    %cst_364 = arith.constant 1.000000e+00 : f32
    %720 = vector.broadcast %cst_364 : f32 to vector<8x128xf32>
    %721 = arith.addf %720, %719 : vector<8x128xf32>
    %722 = arith.divf %720, %721 : vector<8x128xf32>
    %723 = vector.extract_strided_slice %708 {offsets = [0, 256], sizes = [8, 128], strides = [1, 1]} : vector<8x512xf32> to vector<8x128xf32>
    %724 = math.tanh %723 : vector<8x128xf32>
    %725 = vector.extract_strided_slice %708 {offsets = [0, 384], sizes = [8, 128], strides = [1, 1]} : vector<8x512xf32> to vector<8x128xf32>
    %726 = arith.negf %725 : vector<8x128xf32>
    %727 = math.exp %726 : vector<8x128xf32>
    %cst_365 = arith.constant 1.000000e+00 : f32
    %728 = vector.broadcast %cst_365 : f32 to vector<8x128xf32>
    %729 = arith.addf %728, %727 : vector<8x128xf32>
    %730 = arith.divf %728, %729 : vector<8x128xf32>
    %731 = arith.mulf %722, %710 : vector<8x128xf32>
    %732 = arith.mulf %716, %724 : vector<8x128xf32>
    %733 = arith.addf %731, %732 : vector<8x128xf32>
    %734 = math.tanh %733 : vector<8x128xf32>
    %735 = arith.mulf %730, %734 : vector<8x128xf32>
    %c0_366 = arith.constant 0 : index
    %c0_367 = arith.constant 0 : index
    %c0_368 = arith.constant 0 : index
    %736 = vector.load %arg11[%c0_366, %c0_367, %c0_368] : memref<2x8x128xf32, #tpu.memory_space<vmem>>, vector<1x8x128xf32>
    %737 = vector.shape_cast %736 : vector<1x8x128xf32> to vector<8x128xf32>
    %738 = vector.shape_cast %735 : vector<8x128xf32> to vector<1x8x128xf32>
    tpu.vector_store %arg11[%c0_366, %c0_367, %c0_368], %738 {strides = array<i32>} : memref<2x8x128xf32, #tpu.memory_space<vmem>>, vector<1x8x128xf32>,
    %c0_369 = arith.constant 0 : index
    %c0_370 = arith.constant 0 : index
    %c0_371 = arith.constant 0 : index
    %739 = vector.load %arg12[%c0_369, %c0_370, %c0_371] : memref<2x8x128xf32, #tpu.memory_space<vmem>>, vector<1x8x128xf32>
    %740 = vector.shape_cast %739 : vector<1x8x128xf32> to vector<8x128xf32>
    %741 = vector.shape_cast %733 : vector<8x128xf32> to vector<1x8x128xf32>
    tpu.vector_store %arg12[%c0_369, %c0_370, %c0_371], %741 {strides = array<i32>} : memref<2x8x128xf32, #tpu.memory_space<vmem>>, vector<1x8x128xf32>,
    %c1_372 = arith.constant 1 : index
    %c0_373 = arith.constant 0 : index
    %c0_374 = arith.constant 0 : index
    %742 = vector.load %arg11[%c1_372, %c0_373, %c0_374] : memref<2x8x128xf32, #tpu.memory_space<vmem>>, vector<1x8x128xf32>
    %743 = vector.shape_cast %742 : vector<1x8x128xf32> to vector<8x128xf32>
    %744 = tpu.concatenate %735, %743 in 1 : vector<8x128xf32>, vector<8x128xf32> -> vector<8x256xf32>
    %c0_375 = arith.constant 0 : index
    %c0_376 = arith.constant 0 : index
    %745 = vector.load %arg4[%c0_375, %c0_376] : memref<256x512xf32, #tpu.memory_space<vmem>>, vector<256x512xf32>
    %cst_377 = arith.constant dense<0.000000e+00> : vector<8x512xf32>
    %746 = tpu.matmul %744, %745, %cst_377 {dimension_numbers = #tpu.dot_dimension_numbers<[1], [0], [0], [1], [0, 0, 1, 1], [], []>} : vector<8x256xf32>, vector<256x512xf32>, vector<8x512xf32> -> vector<8x512xf32>
    %c0_378 = arith.constant 0 : index
    %c0_379 = arith.constant 0 : index
    %747 = vector.load %arg5[%c0_378, %c0_379] : memref<1x512xf32, #tpu.memory_space<vmem>>, vector<1x512xf32>
    %748 = vector.broadcast %747 : vector<1x512xf32> to vector<8x512xf32>
    %749 = arith.addf %746, %748 : vector<8x512xf32>
    %c1_380 = arith.constant 1 : index
    %c0_381 = arith.constant 0 : index
    %c0_382 = arith.constant 0 : index
    %750 = vector.load %arg12[%c1_380, %c0_381, %c0_382] : memref<2x8x128xf32, #tpu.memory_space<vmem>>, vector<1x8x128xf32>
    %751 = vector.shape_cast %750 : vector<1x8x128xf32> to vector<8x128xf32>
    %752 = vector.extract_strided_slice %749 {offsets = [0, 0], sizes = [8, 128], strides = [1, 1]} : vector<8x512xf32> to vector<8x128xf32>
    %753 = arith.negf %752 : vector<8x128xf32>
    %754 = math.exp %753 : vector<8x128xf32>
    %cst_383 = arith.constant 1.000000e+00 : f32
    %755 = vector.broadcast %cst_383 : f32 to vector<8x128xf32>
    %756 = arith.addf %755, %754 : vector<8x128xf32>
    %757 = arith.divf %755, %756 : vector<8x128xf32>
    %758 = vector.extract_strided_slice %749 {offsets = [0, 128], sizes = [8, 128], strides = [1, 1]} : vector<8x512xf32> to vector<8x128xf32>
    %759 = arith.negf %758 : vector<8x128xf32>
    %760 = math.exp %759 : vector<8x128xf32>
    %cst_384 = arith.constant 1.000000e+00 : f32
    %761 = vector.broadcast %cst_384 : f32 to vector<8x128xf32>
    %762 = arith.addf %761, %760 : vector<8x128xf32>
    %763 = arith.divf %761, %762 : vector<8x128xf32>
    %764 = vector.extract_strided_slice %749 {offsets = [0, 256], sizes = [8, 128], strides = [1, 1]} : vector<8x512xf32> to vector<8x128xf32>
    %765 = math.tanh %764 : vector<8x128xf32>
    %766 = vector.extract_strided_slice %749 {offsets = [0, 384], sizes = [8, 128], strides = [1, 1]} : vector<8x512xf32> to vector<8x128xf32>
    %767 = arith.negf %766 : vector<8x128xf32>
    %768 = math.exp %767 : vector<8x128xf32>
    %cst_385 = arith.constant 1.000000e+00 : f32
    %769 = vector.broadcast %cst_385 : f32 to vector<8x128xf32>
    %770 = arith.addf %769, %768 : vector<8x128xf32>
    %771 = arith.divf %769, %770 : vector<8x128xf32>
    %772 = arith.mulf %763, %751 : vector<8x128xf32>
    %773 = arith.mulf %757, %765 : vector<8x128xf32>
    %774 = arith.addf %772, %773 : vector<8x128xf32>
    %775 = math.tanh %774 : vector<8x128xf32>
    %776 = arith.mulf %771, %775 : vector<8x128xf32>
    %c1_386 = arith.constant 1 : index
    %c0_387 = arith.constant 0 : index
    %c0_388 = arith.constant 0 : index
    %777 = vector.load %arg11[%c1_386, %c0_387, %c0_388] : memref<2x8x128xf32, #tpu.memory_space<vmem>>, vector<1x8x128xf32>
    %778 = vector.shape_cast %777 : vector<1x8x128xf32> to vector<8x128xf32>
    %779 = vector.shape_cast %776 : vector<8x128xf32> to vector<1x8x128xf32>
    tpu.vector_store %arg11[%c1_386, %c0_387, %c0_388], %779 {strides = array<i32>} : memref<2x8x128xf32, #tpu.memory_space<vmem>>, vector<1x8x128xf32>,
    %c1_389 = arith.constant 1 : index
    %c0_390 = arith.constant 0 : index
    %c0_391 = arith.constant 0 : index
    %780 = vector.load %arg12[%c1_389, %c0_390, %c0_391] : memref<2x8x128xf32, #tpu.memory_space<vmem>>, vector<1x8x128xf32>
    %781 = vector.shape_cast %780 : vector<1x8x128xf32> to vector<8x128xf32>
    %782 = vector.shape_cast %774 : vector<8x128xf32> to vector<1x8x128xf32>
    tpu.vector_store %arg12[%c1_389, %c0_390, %c0_391], %782 {strides = array<i32>} : memref<2x8x128xf32, #tpu.memory_space<vmem>>, vector<1x8x128xf32>,
    %783 = arith.index_cast %c8_i32 : i32 to index
    %c0_392 = arith.constant 0 : index
    %c0_393 = arith.constant 0 : index
    %784 = vector.load %arg10[%783, %c0_392, %c0_393] : memref<10x8x128xf32, #tpu.memory_space<vmem>>, vector<1x8x128xf32>
    %785 = vector.shape_cast %784 : vector<1x8x128xf32> to vector<8x128xf32>
    %786 = vector.shape_cast %776 : vector<8x128xf32> to vector<1x8x128xf32>
    tpu.vector_store %arg10[%783, %c0_392, %c0_393], %786 {strides = array<i32>} : memref<10x8x128xf32, #tpu.memory_space<vmem>>, vector<1x8x128xf32>,
    %c9_i32 = arith.constant 9 : i32
    %787 = arith.index_cast %c9_i32 : i32 to index
    %c0_394 = arith.constant 0 : index
    %c0_395 = arith.constant 0 : index
    %788 = vector.load %arg9[%787, %c0_394, %c0_395] : memref<10x8x512xf32, #tpu.memory_space<vmem>>, vector<1x8x512xf32>
    %789 = vector.shape_cast %788 : vector<1x8x512xf32> to vector<8x512xf32>
    %c0_396 = arith.constant 0 : index
    %c0_397 = arith.constant 0 : index
    %c0_398 = arith.constant 0 : index
    %790 = vector.load %arg11[%c0_396, %c0_397, %c0_398] : memref<2x8x128xf32, #tpu.memory_space<vmem>>, vector<1x8x128xf32>
    %791 = vector.shape_cast %790 : vector<1x8x128xf32> to vector<8x128xf32>
    %c0_399 = arith.constant 0 : index
    %c0_400 = arith.constant 0 : index
    %792 = vector.load %arg2[%c0_399, %c0_400] : memref<128x512xf32, #tpu.memory_space<vmem>>, vector<128x512xf32>
    %cst_401 = arith.constant dense<0.000000e+00> : vector<8x512xf32>
    %793 = tpu.matmul %791, %792, %cst_401 {dimension_numbers = #tpu.dot_dimension_numbers<[1], [0], [0], [1], [0, 0, 1, 1], [], []>} : vector<8x128xf32>, vector<128x512xf32>, vector<8x512xf32> -> vector<8x512xf32>
    %794 = arith.addf %789, %793 : vector<8x512xf32>
    %c0_402 = arith.constant 0 : index
    %c0_403 = arith.constant 0 : index
    %c0_404 = arith.constant 0 : index
    %795 = vector.load %arg12[%c0_402, %c0_403, %c0_404] : memref<2x8x128xf32, #tpu.memory_space<vmem>>, vector<1x8x128xf32>
    %796 = vector.shape_cast %795 : vector<1x8x128xf32> to vector<8x128xf32>
    %797 = vector.extract_strided_slice %794 {offsets = [0, 0], sizes = [8, 128], strides = [1, 1]} : vector<8x512xf32> to vector<8x128xf32>
    %798 = arith.negf %797 : vector<8x128xf32>
    %799 = math.exp %798 : vector<8x128xf32>
    %cst_405 = arith.constant 1.000000e+00 : f32
    %800 = vector.broadcast %cst_405 : f32 to vector<8x128xf32>
    %801 = arith.addf %800, %799 : vector<8x128xf32>
    %802 = arith.divf %800, %801 : vector<8x128xf32>
    %803 = vector.extract_strided_slice %794 {offsets = [0, 128], sizes = [8, 128], strides = [1, 1]} : vector<8x512xf32> to vector<8x128xf32>
    %804 = arith.negf %803 : vector<8x128xf32>
    %805 = math.exp %804 : vector<8x128xf32>
    %cst_406 = arith.constant 1.000000e+00 : f32
    %806 = vector.broadcast %cst_406 : f32 to vector<8x128xf32>
    %807 = arith.addf %806, %805 : vector<8x128xf32>
    %808 = arith.divf %806, %807 : vector<8x128xf32>
    %809 = vector.extract_strided_slice %794 {offsets = [0, 256], sizes = [8, 128], strides = [1, 1]} : vector<8x512xf32> to vector<8x128xf32>
    %810 = math.tanh %809 : vector<8x128xf32>
    %811 = vector.extract_strided_slice %794 {offsets = [0, 384], sizes = [8, 128], strides = [1, 1]} : vector<8x512xf32> to vector<8x128xf32>
    %812 = arith.negf %811 : vector<8x128xf32>
    %813 = math.exp %812 : vector<8x128xf32>
    %cst_407 = arith.constant 1.000000e+00 : f32
    %814 = vector.broadcast %cst_407 : f32 to vector<8x128xf32>
    %815 = arith.addf %814, %813 : vector<8x128xf32>
    %816 = arith.divf %814, %815 : vector<8x128xf32>
    %817 = arith.mulf %808, %796 : vector<8x128xf32>
    %818 = arith.mulf %802, %810 : vector<8x128xf32>
    %819 = arith.addf %817, %818 : vector<8x128xf32>
    %820 = math.tanh %819 : vector<8x128xf32>
    %821 = arith.mulf %816, %820 : vector<8x128xf32>
    %c0_408 = arith.constant 0 : index
    %c0_409 = arith.constant 0 : index
    %c0_410 = arith.constant 0 : index
    %822 = vector.load %arg11[%c0_408, %c0_409, %c0_410] : memref<2x8x128xf32, #tpu.memory_space<vmem>>, vector<1x8x128xf32>
    %823 = vector.shape_cast %822 : vector<1x8x128xf32> to vector<8x128xf32>
    %824 = vector.shape_cast %821 : vector<8x128xf32> to vector<1x8x128xf32>
    tpu.vector_store %arg11[%c0_408, %c0_409, %c0_410], %824 {strides = array<i32>} : memref<2x8x128xf32, #tpu.memory_space<vmem>>, vector<1x8x128xf32>,
    %c0_411 = arith.constant 0 : index
    %c0_412 = arith.constant 0 : index
    %c0_413 = arith.constant 0 : index
    %825 = vector.load %arg12[%c0_411, %c0_412, %c0_413] : memref<2x8x128xf32, #tpu.memory_space<vmem>>, vector<1x8x128xf32>
    %826 = vector.shape_cast %825 : vector<1x8x128xf32> to vector<8x128xf32>
    %827 = vector.shape_cast %819 : vector<8x128xf32> to vector<1x8x128xf32>
    tpu.vector_store %arg12[%c0_411, %c0_412, %c0_413], %827 {strides = array<i32>} : memref<2x8x128xf32, #tpu.memory_space<vmem>>, vector<1x8x128xf32>,
    %c1_414 = arith.constant 1 : index
    %c0_415 = arith.constant 0 : index
    %c0_416 = arith.constant 0 : index
    %828 = vector.load %arg11[%c1_414, %c0_415, %c0_416] : memref<2x8x128xf32, #tpu.memory_space<vmem>>, vector<1x8x128xf32>
    %829 = vector.shape_cast %828 : vector<1x8x128xf32> to vector<8x128xf32>
    %830 = tpu.concatenate %821, %829 in 1 : vector<8x128xf32>, vector<8x128xf32> -> vector<8x256xf32>
    %c0_417 = arith.constant 0 : index
    %c0_418 = arith.constant 0 : index
    %831 = vector.load %arg4[%c0_417, %c0_418] : memref<256x512xf32, #tpu.memory_space<vmem>>, vector<256x512xf32>
    %cst_419 = arith.constant dense<0.000000e+00> : vector<8x512xf32>
    %832 = tpu.matmul %830, %831, %cst_419 {dimension_numbers = #tpu.dot_dimension_numbers<[1], [0], [0], [1], [0, 0, 1, 1], [], []>} : vector<8x256xf32>, vector<256x512xf32>, vector<8x512xf32> -> vector<8x512xf32>
    %c0_420 = arith.constant 0 : index
    %c0_421 = arith.constant 0 : index
    %833 = vector.load %arg5[%c0_420, %c0_421] : memref<1x512xf32, #tpu.memory_space<vmem>>, vector<1x512xf32>
    %834 = vector.broadcast %833 : vector<1x512xf32> to vector<8x512xf32>
    %835 = arith.addf %832, %834 : vector<8x512xf32>
    %c1_422 = arith.constant 1 : index
    %c0_423 = arith.constant 0 : index
    %c0_424 = arith.constant 0 : index
    %836 = vector.load %arg12[%c1_422, %c0_423, %c0_424] : memref<2x8x128xf32, #tpu.memory_space<vmem>>, vector<1x8x128xf32>
    %837 = vector.shape_cast %836 : vector<1x8x128xf32> to vector<8x128xf32>
    %838 = vector.extract_strided_slice %835 {offsets = [0, 0], sizes = [8, 128], strides = [1, 1]} : vector<8x512xf32> to vector<8x128xf32>
    %839 = arith.negf %838 : vector<8x128xf32>
    %840 = math.exp %839 : vector<8x128xf32>
    %cst_425 = arith.constant 1.000000e+00 : f32
    %841 = vector.broadcast %cst_425 : f32 to vector<8x128xf32>
    %842 = arith.addf %841, %840 : vector<8x128xf32>
    %843 = arith.divf %841, %842 : vector<8x128xf32>
    %844 = vector.extract_strided_slice %835 {offsets = [0, 128], sizes = [8, 128], strides = [1, 1]} : vector<8x512xf32> to vector<8x128xf32>
    %845 = arith.negf %844 : vector<8x128xf32>
    %846 = math.exp %845 : vector<8x128xf32>
    %cst_426 = arith.constant 1.000000e+00 : f32
    %847 = vector.broadcast %cst_426 : f32 to vector<8x128xf32>
    %848 = arith.addf %847, %846 : vector<8x128xf32>
    %849 = arith.divf %847, %848 : vector<8x128xf32>
    %850 = vector.extract_strided_slice %835 {offsets = [0, 256], sizes = [8, 128], strides = [1, 1]} : vector<8x512xf32> to vector<8x128xf32>
    %851 = math.tanh %850 : vector<8x128xf32>
    %852 = vector.extract_strided_slice %835 {offsets = [0, 384], sizes = [8, 128], strides = [1, 1]} : vector<8x512xf32> to vector<8x128xf32>
    %853 = arith.negf %852 : vector<8x128xf32>
    %854 = math.exp %853 : vector<8x128xf32>
    %cst_427 = arith.constant 1.000000e+00 : f32
    %855 = vector.broadcast %cst_427 : f32 to vector<8x128xf32>
    %856 = arith.addf %855, %854 : vector<8x128xf32>
    %857 = arith.divf %855, %856 : vector<8x128xf32>
    %858 = arith.mulf %849, %837 : vector<8x128xf32>
    %859 = arith.mulf %843, %851 : vector<8x128xf32>
    %860 = arith.addf %858, %859 : vector<8x128xf32>
    %861 = math.tanh %860 : vector<8x128xf32>
    %862 = arith.mulf %857, %861 : vector<8x128xf32>
    %c1_428 = arith.constant 1 : index
    %c0_429 = arith.constant 0 : index
    %c0_430 = arith.constant 0 : index
    %863 = vector.load %arg11[%c1_428, %c0_429, %c0_430] : memref<2x8x128xf32, #tpu.memory_space<vmem>>, vector<1x8x128xf32>
    %864 = vector.shape_cast %863 : vector<1x8x128xf32> to vector<8x128xf32>
    %865 = vector.shape_cast %862 : vector<8x128xf32> to vector<1x8x128xf32>
    tpu.vector_store %arg11[%c1_428, %c0_429, %c0_430], %865 {strides = array<i32>} : memref<2x8x128xf32, #tpu.memory_space<vmem>>, vector<1x8x128xf32>,
    %c1_431 = arith.constant 1 : index
    %c0_432 = arith.constant 0 : index
    %c0_433 = arith.constant 0 : index
    %866 = vector.load %arg12[%c1_431, %c0_432, %c0_433] : memref<2x8x128xf32, #tpu.memory_space<vmem>>, vector<1x8x128xf32>
    %867 = vector.shape_cast %866 : vector<1x8x128xf32> to vector<8x128xf32>
    %868 = vector.shape_cast %860 : vector<8x128xf32> to vector<1x8x128xf32>
    tpu.vector_store %arg12[%c1_431, %c0_432, %c0_433], %868 {strides = array<i32>} : memref<2x8x128xf32, #tpu.memory_space<vmem>>, vector<1x8x128xf32>,
    %869 = arith.index_cast %c9_i32 : i32 to index
    %c0_434 = arith.constant 0 : index
    %c0_435 = arith.constant 0 : index
    %870 = vector.load %arg10[%869, %c0_434, %c0_435] : memref<10x8x128xf32, #tpu.memory_space<vmem>>, vector<1x8x128xf32>
    %871 = vector.shape_cast %870 : vector<1x8x128xf32> to vector<8x128xf32>
    %872 = vector.shape_cast %862 : vector<8x128xf32> to vector<1x8x128xf32>
    tpu.vector_store %arg10[%869, %c0_434, %c0_435], %872 {strides = array<i32>} : memref<10x8x128xf32, #tpu.memory_space<vmem>>, vector<1x8x128xf32>,
    %c10_i32 = arith.constant 10 : i32
    %c0_436 = arith.constant 0 : index
    %c0_437 = arith.constant 0 : index
    %c0_438 = arith.constant 0 : index
    %873 = vector.load %arg10[%c0_436, %c0_437, %c0_438] : memref<10x8x128xf32, #tpu.memory_space<vmem>>, vector<10x8x128xf32>
    %874 = vector.shape_cast %873 : vector<10x8x128xf32> to vector<80x128xf32>
    %c0_439 = arith.constant 0 : index
    %c0_440 = arith.constant 0 : index
    %875 = vector.load %arg6[%c0_439, %c0_440] : memref<128x128xf32, #tpu.memory_space<vmem>>, vector<128x128xf32>
    %cst_441 = arith.constant dense<0.000000e+00> : vector<80x128xf32>
    %876 = tpu.matmul %874, %875, %cst_441 {dimension_numbers = #tpu.dot_dimension_numbers<[1], [0], [0], [1], [0, 0, 1, 1], [], []>} : vector<80x128xf32>, vector<128x128xf32>, vector<80x128xf32> -> vector<80x128xf32>
    %c0_442 = arith.constant 0 : index
    %c0_443 = arith.constant 0 : index
    %877 = vector.load %arg7[%c0_442, %c0_443] : memref<1x128xf32, #tpu.memory_space<vmem>>, vector<1x128xf32>
    %878 = vector.broadcast %877 : vector<1x128xf32> to vector<80x128xf32>
    %879 = arith.addf %876, %878 : vector<80x128xf32>
    %880 = vector.shape_cast %879 : vector<80x128xf32> to vector<10x8x128xf32>
    %c0_444 = arith.constant 0 : index
    %c0_445 = arith.constant 0 : index
    %c0_446 = arith.constant 0 : index
    %881 = vector.load %arg8[%c0_444, %c0_445, %c0_446] : memref<10x8x128xf32, #tpu.memory_space<vmem>>, vector<10x8x128xf32>
    tpu.vector_store %arg8[%c0_444, %c0_445, %c0_446], %880 {strides = array<i32>} : memref<10x8x128xf32, #tpu.memory_space<vmem>>, vector<10x8x128xf32>,
    return
  }
}

</mosaic_0001>

<llo_original>
// kernel: tpu_custom_call.1
$region0: #{tpu_custom_call.1}
  #allocation0 [shape = 'u32[]', space=smem, size = 0x4, offset = 0x4, fixed_abs, tag = 'smem constant byte address 0x4 - core index']
  #allocation1 [shape = 'u32[144,128]{1,0:T(1,128)}', space=vmem, size = 0x12000, scoped, tag = 'internal scratch']
  #allocation2 [shape = 'f32[10,8,512]{2,1,0:T(8,128)}', space=vmem, size = 0x28000, scoped, tag = 'scratch operand']
  #allocation3 [shape = 'f32[10,8,128]{2,1,0:T(8,128)}', space=vmem, size = 0xa000, scoped, tag = 'scratch operand']
  #allocation4 [shape = 'f32[2,8,128]{2,1,0:T(8,128)}', space=vmem, size = 0x2000, scoped, tag = 'scratch operand']
  #allocation5 [shape = 'f32[2,8,128]{2,1,0:T(8,128)}', space=vmem, size = 0x2000, scoped, tag = 'scratch operand']
  %s0 = inlined_call_operand.hbm [shape: f32[10,8,128], index: 0, kind: input, shape index: {}]
  %s1 = inlined_call_operand.hbm [shape: f32[128,512], index: 1, kind: input, shape index: {}]
  %s2 = inlined_call_operand.hbm [shape: f32[128,512], index: 2, kind: input, shape index: {}]
  %s3 = inlined_call_operand.vmem [shape: f32[1,512], index: 3, kind: input, shape index: {}]
  %s4 = inlined_call_operand.hbm [shape: f32[256,512], index: 4, kind: input, shape index: {}]
  %s5 = inlined_call_operand.vmem [shape: f32[1,512], index: 5, kind: input, shape index: {}]
  %s6 = inlined_call_operand.hbm [shape: f32[128,128], index: 6, kind: input, shape index: {}]
  %s7 = inlined_call_operand.vmem [shape: f32[1,128], index: 7, kind: input, shape index: {}]
  %s8 = inlined_call_operand.hbm [shape: f32[10,8,128], index: 8, kind: output, shape index: {}]
  %s9 = sld [smem:[#allocation0]]
  $region62: #{tpu_custom_call.1} parent=0
    _
  %s11 = ssub.s32 1, %s9
  %s12 = scalar_select 0, %s11, %s9
  $region1: #{tpu_custom_call.1} parent=0
    #allocation6 [shape = 'u8[40960]{0}', space=vmem, size = 0xa000, scoped, tag = 'input window, operand 0, single buffered']
    #allocation7 [shape = 's32[1]{0}', space=sflag, size = 0x4, scoped, tag = 'scoped memory for tpu_custom_call.1']
    #allocation8 [shape = 's32[1]{0}', space=sflag, size = 0x4, scoped, tag = 'scoped memory for tpu_custom_call.1']
    #allocation9 [shape = 'u8[262144]{0}', space=vmem, size = 0x40000, scoped, tag = 'input window, operand 1, single buffered']
    #allocation10 [shape = 's32[1]{0}', space=sflag, size = 0x4, scoped, tag = 'scoped memory for tpu_custom_call.1']
    #allocation11 [shape = 'u8[262144]{0}', space=vmem, size = 0x40000, scoped, tag = 'input window, operand 2, single buffered']
    #allocation12 [shape = 'u8[524288]{0}', space=vmem, size = 0x80000, scoped, tag = 'input window, operand 4, single buffered']
    #allocation13 [shape = 's32[1]{0}', space=sflag, size = 0x4, scoped, tag = 'scoped memory for tpu_custom_call.1']
    #allocation14 [shape = 'u8[65536]{0}', space=vmem, size = 0x10000, scoped, tag = 'input window, operand 6, single buffered']
    #allocation15 [shape = 'u8[40960]{0}', space=vmem, size = 0xa000, scoped, tag = 'output window, operand 0, single buffered']
    %13 = vsyncpa [#allocation7], 0
    %14 = vsyncpa [#allocation10], 0
    %15 = vsyncpa [#allocation13], 0
    %16 = vsyncpa [#allocation8], 0
    // Predicated region
    $region2: #{tpu_custom_call.1} parent=1 // pred_check
      _
    $region3: #{tpu_custom_call.1} parent=1 // pred_check_branch
      %18 = sbr.rel (0) target = $region5
    $region4: #{tpu_custom_call.1} parent=1 // pred_region
      %s20 = ssub.s32 1280, 1280
      %21 = vsyncadd [#allocation7], %s20
      %s22 = sshll.u32 [#allocation6], 4
      %s23 = int_to_ptr.vmem [resolvable:$true] %s22
      %28 = dma.hbm_to_vmem [thread:$0]  %s0, 1280, %s23, [#allocation7], 128, 128, 8
    $region5: #{tpu_custom_call.1} parent=1 // pred_fallthru
      _
    // Predicated region
    $region6: #{tpu_custom_call.1} parent=1 // pred_check
      _
    $region7: #{tpu_custom_call.1} parent=1 // pred_check_branch
      %30 = sbr.rel (0) target = $region9
    $region8: #{tpu_custom_call.1} parent=1 // pred_region
      %s32 = ssub.s32 8192, 8192
      %33 = vsyncadd [#allocation10], %s32
      %s34 = sshll.u32 [#allocation9], 4
      %s35 = int_to_ptr.vmem [resolvable:$true] %s34
      %40 = dma.hbm_to_vmem [thread:$0]  %s1, 8192, %s35, [#allocation10], 512, 512, 32
    $region9: #{tpu_custom_call.1} parent=1 // pred_fallthru
      _
    // Predicated region
    $region10: #{tpu_custom_call.1} parent=1 // pred_check
      _
    $region11: #{tpu_custom_call.1} parent=1 // pred_check_branch
      %42 = sbr.rel (0) target = $region13
    $region12: #{tpu_custom_call.1} parent=1 // pred_region
      %s44 = ssub.s32 8192, 8192
      %45 = vsyncadd [#allocation10], %s44
      %s46 = sshll.u32 [#allocation11], 4
      %s47 = int_to_ptr.vmem [resolvable:$true] %s46
      %52 = dma.hbm_to_vmem [thread:$0]  %s2, 8192, %s47, [#allocation10], 512, 512, 32
    $region13: #{tpu_custom_call.1} parent=1 // pred_fallthru
      _
    // Predicated region
    $region14: #{tpu_custom_call.1} parent=1 // pred_check
      _
    $region15: #{tpu_custom_call.1} parent=1 // pred_check_branch
      %54 = sbr.rel (0) target = $region17
    $region16: #{tpu_custom_call.1} parent=1 // pred_region
      _
    $region17: #{tpu_custom_call.1} parent=1 // pred_fallthru
      _
    // Predicated region
    $region18: #{tpu_custom_call.1} parent=1 // pred_check
      _
    $region19: #{tpu_custom_call.1} parent=1 // pred_check_branch
      %56 = sbr.rel (0) target = $region21
    $region20: #{tpu_custom_call.1} parent=1 // pred_region
      %s58 = ssub.s32 16384, 16384
      %59 = vsyncadd [#allocation13], %s58
      %s60 = sshll.u32 [#allocation12], 4
      %s61 = int_to_ptr.vmem [resolvable:$true] %s60
      %66 = dma.hbm_to_vmem [thread:$0]  %s4, 16384, %s61, [#allocation13], 512, 512, 32
    $region21: #{tpu_custom_call.1} parent=1 // pred_fallthru
      _
    // Predicated region
    $region22: #{tpu_custom_call.1} parent=1 // pred_check
      _
    $region23: #{tpu_custom_call.1} parent=1 // pred_check_branch
      %68 = sbr.rel (0) target = $region25
    $region24: #{tpu_custom_call.1} parent=1 // pred_region
      _
    $region25: #{tpu_custom_call.1} parent=1 // pred_fallthru
      _
    // Predicated region
    $region26: #{tpu_custom_call.1} parent=1 // pred_check
      _
    $region27: #{tpu_custom_call.1} parent=1 // pred_check_branch
      %70 = sbr.rel (0) target = $region29
    $region28: #{tpu_custom_call.1} parent=1 // pred_region
      %s72 = ssub.s32 2048, 2048
      %73 = vsyncadd [#allocation13], %s72
      %s74 = sshll.u32 [#allocation14], 4
      %s75 = int_to_ptr.vmem [resolvable:$true] %s74
      %80 = dma.hbm_to_vmem [thread:$0]  %s6, 2048, %s75, [#allocation13], 128, 128, 8
    $region29: #{tpu_custom_call.1} parent=1 // pred_fallthru
      _
    // Predicated region
    $region30: #{tpu_custom_call.1} parent=1 // pred_check
      _
    $region31: #{tpu_custom_call.1} parent=1 // pred_check_branch
      %82 = sbr.rel (0) target = $region33
    $region32: #{tpu_custom_call.1} parent=1 // pred_region
      _
    $region33: #{tpu_custom_call.1} parent=1 // pred_fallthru
      _
    // Predicated region
    $region34: #{tpu_custom_call.1} parent=1 // pred_check
      _
    $region35: #{tpu_custom_call.1} parent=1 // pred_check_branch
      %84 = sbr.rel (0) target = $region37
    $region36: #{tpu_custom_call.1} parent=1 // pred_region
      %85 = dma.done [#allocation7], 1280
    $region37: #{tpu_custom_call.1} parent=1 // pred_fallthru
      _
    // Predicated region
    $region38: #{tpu_custom_call.1} parent=1 // pred_check
      _
    $region39: #{tpu_custom_call.1} parent=1 // pred_check_branch
      %87 = sbr.rel (0) target = $region41
    $region40: #{tpu_custom_call.1} parent=1 // pred_region
      %88 = dma.done [#allocation10], 8192
    $region41: #{tpu_custom_call.1} parent=1 // pred_fallthru
      _
    // Predicated region
    $region42: #{tpu_custom_call.1} parent=1 // pred_check
      _
    $region43: #{tpu_custom_call.1} parent=1 // pred_check_branch
      %90 = sbr.rel (0) target = $region45
    $region44: #{tpu_custom_call.1} parent=1 // pred_region
      %91 = dma.done [#allocation10], 8192
    $region45: #{tpu_custom_call.1} parent=1 // pred_fallthru
      _
    // Predicated region
    $region46: #{tpu_custom_call.1} parent=1 // pred_check
      _
    $region47: #{tpu_custom_call.1} parent=1 // pred_check_branch
      %93 = sbr.rel (0) target = $region49
    $region48: #{tpu_custom_call.1} parent=1 // pred_region
      %94 = dma.done [#allocation13], 16384
    $region49: #{tpu_custom_call.1} parent=1 // pred_fallthru
      _
    // Predicated region
    $region50: #{tpu_custom_call.1} parent=1 // pred_check
      _
    $region51: #{tpu_custom_call.1} parent=1 // pred_check_branch
      %96 = sbr.rel (0) target = $region53
    $region52: #{tpu_custom_call.1} parent=1 // pred_region
      %97 = dma.done [#allocation13], 2048
    $region53: #{tpu_custom_call.1} parent=1 // pred_fallthru
      _
    %98 = vst [vmem:[#allocation4] sm:$0xff] 0.0
    %99 = vst [vmem:[#allocation4 + $0x8] sm:$0xff] 0.0
    %100 = vst [vmem:[#allocation5] sm:$0xff] 0.0
    %101 = vst [vmem:[#allocation5 + $0x8] sm:$0xff] 0.0
    %v102 = vld [vmem:[#allocation6] sm:$0xff]
    %v103 = vld [vmem:[#allocation6 + $0x8] sm:$0xff]
    %v104 = vld [vmem:[#allocation6 + $0x10] sm:$0xff]
    %v105 = vld [vmem:[#allocation6 + $0x18] sm:$0xff]
    %v106 = vld [vmem:[#allocation6 + $0x20] sm:$0xff]
    %v107 = vld [vmem:[#allocation6 + $0x28] sm:$0xff]
    %v108 = vld [vmem:[#allocation6 + $0x30] sm:$0xff]
    %v109 = vld [vmem:[#allocation6 + $0x38] sm:$0xff]
    %v110 = vld [vmem:[#allocation6 + $0x40] sm:$0xff]
    %v111 = vld [vmem:[#allocation6 + $0x48] sm:$0xff]
    %v112 = vld [vmem:[#allocation9] sm:$0xff]
    %v113 = vld [vmem:[#allocation9 + $0x8] sm:$0xff]
    %v114 = vld [vmem:[#allocation9 + $0x10] sm:$0xff]
    %v115 = vld [vmem:[#allocation9 + $0x18] sm:$0xff]
    %v116 = vld [vmem:[#allocation9 + $0x20] sm:$0xff]
    %v117 = vld [vmem:[#allocation9 + $0x28] sm:$0xff]
    %v118 = vld [vmem:[#allocation9 + $0x30] sm:$0xff]
    %v119 = vld [vmem:[#allocation9 + $0x38] sm:$0xff]
    %v120 = vld [vmem:[#allocation9 + $0x40] sm:$0xff]
    %v121 = vld [vmem:[#allocation9 + $0x48] sm:$0xff]
    %v122 = vld [vmem:[#allocation9 + $0x50] sm:$0xff]
    %v123 = vld [vmem:[#allocation9 + $0x58] sm:$0xff]
    %v124 = vld [vmem:[#allocation9 + $0x60] sm:$0xff]
    %v125 = vld [vmem:[#allocation9 + $0x68] sm:$0xff]
    %v126 = vld [vmem:[#allocation9 + $0x70] sm:$0xff]
    %v127 = vld [vmem:[#allocation9 + $0x78] sm:$0xff]
    %v128 = vld [vmem:[#allocation9 + $0x80] sm:$0xff]
    %v129 = vld [vmem:[#allocation9 + $0x88] sm:$0xff]
    %v130 = vld [vmem:[#allocation9 + $0x90] sm:$0xff]
    %v131 = vld [vmem:[#allocation9 + $0x98] sm:$0xff]
    %v132 = vld [vmem:[#allocation9 + $0xa0] sm:$0xff]
    %v133 = vld [vmem:[#allocation9 + $0xa8] sm:$0xff]
    %v134 = vld [vmem:[#allocation9 + $0xb0] sm:$0xff]
    %v135 = vld [vmem:[#allocation9 + $0xb8] sm:$0xff]
    %v136 = vld [vmem:[#allocation9 + $0xc0] sm:$0xff]
    %v137 = vld [vmem:[#allocation9 + $0xc8] sm:$0xff]
    %v138 = vld [vmem:[#allocation9 + $0xd0] sm:$0xff]
    %v139 = vld [vmem:[#allocation9 + $0xd8] sm:$0xff]
    %v140 = vld [vmem:[#allocation9 + $0xe0] sm:$0xff]
    %v141 = vld [vmem:[#allocation9 + $0xe8] sm:$0xff]
    %v142 = vld [vmem:[#allocation9 + $0xf0] sm:$0xff]
    %v143 = vld [vmem:[#allocation9 + $0xf8] sm:$0xff]
    %v144 = vld [vmem:[#allocation9 + $0x100] sm:$0xff]
    %v145 = vld [vmem:[#allocation9 + $0x108] sm:$0xff]
    %v146 = vld [vmem:[#allocation9 + $0x110] sm:$0xff]
    %v147 = vld [vmem:[#allocation9 + $0x118] sm:$0xff]
    %v148 = vld [vmem:[#allocation9 + $0x120] sm:$0xff]
    %v149 = vld [vmem:[#allocation9 + $0x128] sm:$0xff]
    %v150 = vld [vmem:[#allocation9 + $0x130] sm:$0xff]
    %v151 = vld [vmem:[#allocation9 + $0x138] sm:$0xff]
    %v152 = vld [vmem:[#allocation9 + $0x140] sm:$0xff]
    %v153 = vld [vmem:[#allocation9 + $0x148] sm:$0xff]
    %v154 = vld [vmem:[#allocation9 + $0x150] sm:$0xff]
    %v155 = vld [vmem:[#allocation9 + $0x158] sm:$0xff]
    %v156 = vld [vmem:[#allocation9 + $0x160] sm:$0xff]
    %v157 = vld [vmem:[#allocation9 + $0x168] sm:$0xff]
    %v158 = vld [vmem:[#allocation9 + $0x170] sm:$0xff]
    %v159 = vld [vmem:[#allocation9 + $0x178] sm:$0xff]
    %v160 = vld [vmem:[#allocation9 + $0x180] sm:$0xff]
    %v161 = vld [vmem:[#allocation9 + $0x188] sm:$0xff]
    %v162 = vld [vmem:[#allocation9 + $0x190] sm:$0xff]
    %v163 = vld [vmem:[#allocation9 + $0x198] sm:$0xff]
    %v164 = vld [vmem:[#allocation9 + $0x1a0] sm:$0xff]
    %v165 = vld [vmem:[#allocation9 + $0x1a8] sm:$0xff]
    %v166 = vld [vmem:[#allocation9 + $0x1b0] sm:$0xff]
    %v167 = vld [vmem:[#allocation9 + $0x1b8] sm:$0xff]
    %v168 = vld [vmem:[#allocation9 + $0x1c0] sm:$0xff]
    %v169 = vld [vmem:[#allocation9 + $0x1c8] sm:$0xff]
    %v170 = vld [vmem:[#allocation9 + $0x1d0] sm:$0xff]
    %v171 = vld [vmem:[#allocation9 + $0x1d8] sm:$0xff]
    %v172 = vld [vmem:[#allocation9 + $0x1e0] sm:$0xff]
    %v173 = vld [vmem:[#allocation9 + $0x1e8] sm:$0xff]
    %v174 = vld [vmem:[#allocation9 + $0x1f0] sm:$0xff]
    %v175 = vld [vmem:[#allocation9 + $0x1f8] sm:$0xff]
    %v176 = vld [vmem:[%s3] sm:$0xf]
    %v178 = vlaneseq
    %v179 = vshrl.u32 %v178, 7
    %v180 = vsub.s32 0, %v179
    %v181 = vrot.slane %v176, %v180
    %v182 = vlaneseq
    %v183 = vshrl.u32 %v182, 7
    %v184 = vsub.s32 1, %v183
    %v185 = vrot.slane %v176, %v184
    %v186 = vlaneseq
    %v187 = vshrl.u32 %v186, 7
    %v188 = vsub.s32 2, %v187
    %v189 = vrot.slane %v176, %v188
    %v190 = vlaneseq
    %v191 = vshrl.u32 %v190, 7
    %v192 = vsub.s32 3, %v191
    %v193 = vrot.slane %v176, %v192
    %198 = vmatprep.subr.mxu0 %v113
    %199 = vmatpush1.msra.mxu0 %v112
    %200 = vmatprep.subr.mxu0 %v117
    %201 = vmatpush1.msra.mxu0 %v116
    %202 = vmatprep.subr.mxu0 %v121
    %203 = vmatpush1.msra.mxu0 %v120
    %204 = vmatprep.subr.mxu0 %v125
    %205 = vmatpush1.msra.mxu0 %v124
    %206 = vmatprep.subr.mxu0 %v129
    %207 = vmatpush1.msra.mxu0 %v128
    %208 = vmatprep.subr.mxu0 %v133
    %209 = vmatpush1.msra.mxu0 %v132
    %210 = vmatprep.subr.mxu0 %v137
    %211 = vmatpush1.msra.mxu0 %v136
    %212 = vmatprep.subr.mxu0 %v141
    %213 = vmatpush1.msra.mxu0 %v140
    %214 = vmatprep.subr.mxu0 %v145
    %215 = vmatpush1.msra.mxu0 %v144
    %216 = vmatprep.subr.mxu0 %v149
    %217 = vmatpush1.msra.mxu0 %v148
    %218 = vmatprep.subr.mxu0 %v153
    %219 = vmatpush1.msra.mxu0 %v152
    %220 = vmatprep.subr.mxu0 %v157
    %221 = vmatpush1.msra.mxu0 %v156
    %222 = vmatprep.subr.mxu0 %v161
    %223 = vmatpush1.msra.mxu0 %v160
    %224 = vmatprep.subr.mxu0 %v165
    %225 = vmatpush1.msra.mxu0 %v164
    %226 = vmatprep.subr.mxu0 %v169
    %227 = vmatpush1.msra.mxu0 %v168
    %228 = vmatprep.subr.mxu0 %v173
    %229 = vmatpush1.msra.mxu0 %v172
    %230 = vmatprep.subr.mxu0 0.0
    %231 = vmatpush1.msra.mxu0 0.0
    %232 = vmatprep.subr.mxu0 0.0
    %233 = vmatpush1.msra.mxu0 0.0
    %234 = vmatprep.subr.mxu0 0.0
    %235 = vmatpush1.msra.mxu0 0.0
    %236 = vmatprep.subr.mxu0 0.0
    %237 = vmatpush1.msra.mxu0 0.0
    %238 = vmatprep.subr.mxu0 0.0
    %239 = vmatpush1.msra.mxu0 0.0
    %240 = vmatprep.subr.mxu0 0.0
    %241 = vmatpush1.msra.mxu0 0.0
    %242 = vmatprep.subr.mxu0 0.0
    %243 = vmatpush1.msra.mxu0 0.0
    %244 = vmatprep.subr.mxu0 0.0
    %245 = vmatpush1.msra.mxu0 0.0
    %246 = vmatprep.subr.mxu0 0.0
    %247 = vmatpush1.msra.mxu0 0.0
    %248 = vmatprep.subr.mxu0 0.0
    %249 = vmatpush1.msra.mxu0 0.0
    %250 = vmatprep.subr.mxu0 0.0
    %251 = vmatpush1.msra.mxu0 0.0
    %252 = vmatprep.subr.mxu0 0.0
    %253 = vmatpush1.msra.mxu0 0.0
    %254 = vmatprep.subr.mxu0 0.0
    %255 = vmatpush1.msra.mxu0 0.0
    %256 = vmatprep.subr.mxu0 0.0
    %257 = vmatpush1.msra.mxu0 0.0
    %258 = vmatprep.subr.mxu0 0.0
    %259 = vmatpush1.msra.mxu0 0.0
    %260 = vmatprep.subr.mxu0 0.0
    %261 = vmatpush1.msra.mxu0 0.0
    %262 = vmatprep.mubr.f32.mxu0 0.0
    %263 = vmatmul.mubr.f32.gmra.mrb[0].mxu0 %v102
    %v264 = vpop.f32.mrb[0].mxu0
    %v265 = vadd.f32 %v181, %v264
    %v266 = vpop.f32.mrb[0].mxu0
    %v267 = vadd.f32 %v185, %v266
    %268 = vmatprep.mubr.f32.mxu0 0.0
    %269 = vmatmul.mubr.f32.gmra.mrb[0].mxu0 %v103
    %v270 = vpop.f32.mrb[0].mxu0
    %v271 = vadd.f32 %v181, %v270
    %v272 = vpop.f32.mrb[0].mxu0
    %v273 = vadd.f32 %v185, %v272
    %274 = vmatprep.mubr.f32.mxu0 0.0
    %275 = vmatmul.mubr.f32.gmra.mrb[0].mxu0 %v104
    %v276 = vpop.f32.mrb[0].mxu0
    %v277 = vadd.f32 %v181, %v276
    %v278 = vpop.f32.mrb[0].mxu0
    %v279 = vadd.f32 %v185, %v278
    %280 = vmatprep.mubr.f32.mxu0 0.0
    %281 = vmatmul.mubr.f32.gmra.mrb[0].mxu0 %v105
    %v282 = vpop.f32.mrb[0].mxu0
    %v283 = vadd.f32 %v181, %v282
    %v284 = vpop.f32.mrb[0].mxu0
    %v285 = vadd.f32 %v185, %v284
    %286 = vmatprep.mubr.f32.mxu0 0.0
    %287 = vmatmul.mubr.f32.gmra.mrb[0].mxu0 %v106
    %v288 = vpop.f32.mrb[0].mxu0
    %v289 = vadd.f32 %v181, %v288
    %v290 = vpop.f32.mrb[0].mxu0
    %v291 = vadd.f32 %v185, %v290
    %292 = vmatprep.mubr.f32.mxu0 0.0
    %293 = vmatmul.mubr.f32.gmra.mrb[0].mxu0 %v107
    %v294 = vpop.f32.mrb[0].mxu0
    %v295 = vadd.f32 %v181, %v294
    %v296 = vpop.f32.mrb[0].mxu0
    %v297 = vadd.f32 %v185, %v296
    %298 = vmatprep.mubr.f32.mxu0 0.0
    %299 = vmatmul.mubr.f32.gmra.mrb[0].mxu0 %v108
    %v300 = vpop.f32.mrb[0].mxu0
    %v301 = vadd.f32 %v181, %v300
    %v302 = vpop.f32.mrb[0].mxu0
    %v303 = vadd.f32 %v185, %v302
    %304 = vmatprep.mubr.f32.mxu0 0.0
    %305 = vmatmul.mubr.f32.gmra.mrb[0].mxu0 %v109
    %v306 = vpop.f32.mrb[0].mxu0
    %v307 = vadd.f32 %v181, %v306
    %v308 = vpop.f32.mrb[0].mxu0
    %v309 = vadd.f32 %v185, %v308
    %310 = vmatprep.mubr.f32.mxu0 0.0
    %311 = vmatmul.mubr.f32.gmra.mrb[0].mxu0 %v110
    %v312 = vpop.f32.mrb[0].mxu0
    %v313 = vadd.f32 %v181, %v312
    %v314 = vpop.f32.mrb[0].mxu0
    %v315 = vadd.f32 %v185, %v314
    %316 = vmatprep.mubr.f32.mxu0 0.0
    %317 = vmatmul.mubr.f32.gmra.mrb[0].mxu0 %v111
    %v318 = vpop.f32.mrb[0].mxu0
    %v319 = vadd.f32 %v181, %v318
    %v320 = vpop.f32.mrb[0].mxu0
    %v321 = vadd.f32 %v185, %v320
    %322 = vdwg.mxu0
    %323 = vmatprep.subr.mxu0 %v115
    %324 = vmatpush1.msra.mxu0 %v114
    %325 = vmatprep.subr.mxu0 %v119
    %326 = vmatpush1.msra.mxu0 %v118
    %327 = vmatprep.subr.mxu0 %v123
    %328 = vmatpush1.msra.mxu0 %v122
    %329 = vmatprep.subr.mxu0 %v127
    %330 = vmatpush1.msra.mxu0 %v126
    %331 = vmatprep.subr.mxu0 %v131
    %332 = vmatpush1.msra.mxu0 %v130
    %333 = vmatprep.subr.mxu0 %v135
    %334 = vmatpush1.msra.mxu0 %v134
    %335 = vmatprep.subr.mxu0 %v139
    %336 = vmatpush1.msra.mxu0 %v138
    %337 = vmatprep.subr.mxu0 %v143
    %338 = vmatpush1.msra.mxu0 %v142
    %339 = vmatprep.subr.mxu0 %v147
    %340 = vmatpush1.msra.mxu0 %v146
    %341 = vmatprep.subr.mxu0 %v151
    %342 = vmatpush1.msra.mxu0 %v150
    %343 = vmatprep.subr.mxu0 %v155
    %344 = vmatpush1.msra.mxu0 %v154
    %345 = vmatprep.subr.mxu0 %v159
    %346 = vmatpush1.msra.mxu0 %v158
    %347 = vmatprep.subr.mxu0 %v163
    %348 = vmatpush1.msra.mxu0 %v162
    %349 = vmatprep.subr.mxu0 %v167
    %350 = vmatpush1.msra.mxu0 %v166
    %351 = vmatprep.subr.mxu0 %v171
    %352 = vmatpush1.msra.mxu0 %v170
    %353 = vmatprep.subr.mxu0 %v175
    %354 = vmatpush1.msra.mxu0 %v174
    %355 = vmatprep.subr.mxu0 0.0
    %356 = vmatpush1.msra.mxu0 0.0
    %357 = vmatprep.subr.mxu0 0.0
    %358 = vmatpush1.msra.mxu0 0.0
    %359 = vmatprep.subr.mxu0 0.0
    %360 = vmatpush1.msra.mxu0 0.0
    %361 = vmatprep.subr.mxu0 0.0
    %362 = vmatpush1.msra.mxu0 0.0
    %363 = vmatprep.subr.mxu0 0.0
    %364 = vmatpush1.msra.mxu0 0.0
    %365 = vmatprep.subr.mxu0 0.0
    %366 = vmatpush1.msra.mxu0 0.0
    %367 = vmatprep.subr.mxu0 0.0
    %368 = vmatpush1.msra.mxu0 0.0
    %369 = vmatprep.subr.mxu0 0.0
    %370 = vmatpush1.msra.mxu0 0.0
    %371 = vmatprep.subr.mxu0 0.0
    %372 = vmatpush1.msra.mxu0 0.0
    %373 = vmatprep.subr.mxu0 0.0
    %374 = vmatpush1.msra.mxu0 0.0
    %375 = vmatprep.subr.mxu0 0.0
    %376 = vmatpush1.msra.mxu0 0.0
    %377 = vmatprep.subr.mxu0 0.0
    %378 = vmatpush1.msra.mxu0 0.0
    %379 = vmatprep.subr.mxu0 0.0
    %380 = vmatpush1.msra.mxu0 0.0
    %381 = vmatprep.subr.mxu0 0.0
    %382 = vmatpush1.msra.mxu0 0.0
    %383 = vmatprep.subr.mxu0 0.0
    %384 = vmatpush1.msra.mxu0 0.0
    %385 = vmatprep.subr.mxu0 0.0
    %386 = vmatpush1.msra.mxu0 0.0
    %387 = vmatprep.mubr.f32.mxu0 0.0
    %388 = vmatmul.mubr.f32.gmra.mrb[0].mxu0 %v102
    %v389 = vpop.f32.mrb[0].mxu0
    %v390 = vadd.f32 %v189, %v389
    %v391 = vpop.f32.mrb[0].mxu0
    %v392 = vadd.f32 %v193, %v391
    %393 = vmatprep.mubr.f32.mxu0 0.0
    %394 = vmatmul.mubr.f32.gmra.mrb[0].mxu0 %v103
    %v395 = vpop.f32.mrb[0].mxu0
    %v396 = vadd.f32 %v189, %v395
    %v397 = vpop.f32.mrb[0].mxu0
    %v398 = vadd.f32 %v193, %v397
    %399 = vmatprep.mubr.f32.mxu0 0.0
    %400 = vmatmul.mubr.f32.gmra.mrb[0].mxu0 %v104
    %v401 = vpop.f32.mrb[0].mxu0
    %v402 = vadd.f32 %v189, %v401
    %v403 = vpop.f32.mrb[0].mxu0
    %v404 = vadd.f32 %v193, %v403
    %405 = vmatprep.mubr.f32.mxu0 0.0
    %406 = vmatmul.mubr.f32.gmra.mrb[0].mxu0 %v105
    %v407 = vpop.f32.mrb[0].mxu0
    %v408 = vadd.f32 %v189, %v407
    %v409 = vpop.f32.mrb[0].mxu0
    %v410 = vadd.f32 %v193, %v409
    %411 = vmatprep.mubr.f32.mxu0 0.0
    %412 = vmatmul.mubr.f32.gmra.mrb[0].mxu0 %v106
    %v413 = vpop.f32.mrb[0].mxu0
    %v414 = vadd.f32 %v189, %v413
    %v415 = vpop.f32.mrb[0].mxu0
    %v416 = vadd.f32 %v193, %v415
    %417 = vmatprep.mubr.f32.mxu0 0.0
    %418 = vmatmul.mubr.f32.gmra.mrb[0].mxu0 %v107
    %v419 = vpop.f32.mrb[0].mxu0
    %v420 = vadd.f32 %v189, %v419
    %v421 = vpop.f32.mrb[0].mxu0
    %v422 = vadd.f32 %v193, %v421
    %423 = vmatprep.mubr.f32.mxu0 0.0
    %424 = vmatmul.mubr.f32.gmra.mrb[0].mxu0 %v108
    %v425 = vpop.f32.mrb[0].mxu0
    %v426 = vadd.f32 %v189, %v425
    %v427 = vpop.f32.mrb[0].mxu0
    %v428 = vadd.f32 %v193, %v427
    %429 = vmatprep.mubr.f32.mxu0 0.0
    %430 = vmatmul.mubr.f32.gmra.mrb[0].mxu0 %v109
    %v431 = vpop.f32.mrb[0].mxu0
    %v432 = vadd.f32 %v189, %v431
    %v433 = vpop.f32.mrb[0].mxu0
    %v434 = vadd.f32 %v193, %v433
    %435 = vmatprep.mubr.f32.mxu0 0.0
    %436 = vmatmul.mubr.f32.gmra.mrb[0].mxu0 %v110
    %v437 = vpop.f32.mrb[0].mxu0
    %v438 = vadd.f32 %v189, %v437
    %v439 = vpop.f32.mrb[0].mxu0
    %v440 = vadd.f32 %v193, %v439
    %441 = vmatprep.mubr.f32.mxu0 0.0
    %442 = vmatmul.mubr.f32.gmra.mrb[0].mxu0 %v111
    %v443 = vpop.f32.mrb[0].mxu0
    %v444 = vadd.f32 %v189, %v443
    %v445 = vpop.f32.mrb[0].mxu0
    %v446 = vadd.f32 %v193, %v445
    %447 = vdwg.mxu0
    %448 = vst [vmem:[#allocation2] sm:$0xff] %v265
    %449 = vst [vmem:[#allocation2 + $0x8] sm:$0xff] %v267
    %450 = vst [vmem:[#allocation2 + $0x10] sm:$0xff] %v390
    %451 = vst [vmem:[#allocation2 + $0x18] sm:$0xff] %v392
    %452 = vst [vmem:[#allocation2 + $0x20] sm:$0xff] %v271
    %453 = vst [vmem:[#allocation2 + $0x28] sm:$0xff] %v273
    %454 = vst [vmem:[#allocation2 + $0x30] sm:$0xff] %v396
    %455 = vst [vmem:[#allocation2 + $0x38] sm:$0xff] %v398
    %456 = vst [vmem:[#allocation2 + $0x40] sm:$0xff] %v277
    %457 = vst [vmem:[#allocation2 + $0x48] sm:$0xff] %v279
    %458 = vst [vmem:[#allocation2 + $0x50] sm:$0xff] %v402
    %459 = vst [vmem:[#allocation2 + $0x58] sm:$0xff] %v404
    %460 = vst [vmem:[#allocation2 + $0x60] sm:$0xff] %v283
    %461 = vst [vmem:[#allocation2 + $0x68] sm:$0xff] %v285
    %462 = vst [vmem:[#allocation2 + $0x70] sm:$0xff] %v408
    %463 = vst [vmem:[#allocation2 + $0x78] sm:$0xff] %v410
    %464 = vst [vmem:[#allocation2 + $0x80] sm:$0xff] %v289
    %465 = vst [vmem:[#allocation2 + $0x88] sm:$0xff] %v291
    %466 = vst [vmem:[#allocation2 + $0x90] sm:$0xff] %v414
    %467 = vst [vmem:[#allocation2 + $0x98] sm:$0xff] %v416
    %468 = vst [vmem:[#allocation2 + $0xa0] sm:$0xff] %v295
    %469 = vst [vmem:[#allocation2 + $0xa8] sm:$0xff] %v297
    %470 = vst [vmem:[#allocation2 + $0xb0] sm:$0xff] %v420
    %471 = vst [vmem:[#allocation2 + $0xb8] sm:$0xff] %v422
    %472 = vst [vmem:[#allocation2 + $0xc0] sm:$0xff] %v301
    %473 = vst [vmem:[#allocation2 + $0xc8] sm:$0xff] %v303
    %474 = vst [vmem:[#allocation2 + $0xd0] sm:$0xff] %v426
    %475 = vst [vmem:[#allocation2 + $0xd8] sm:$0xff] %v428
    %476 = vst [vmem:[#allocation2 + $0xe0] sm:$0xff] %v307
    %477 = vst [vmem:[#allocation2 + $0xe8] sm:$0xff] %v309
    %478 = vst [vmem:[#allocation2 + $0xf0] sm:$0xff] %v432
    %479 = vst [vmem:[#allocation2 + $0xf8] sm:$0xff] %v434
    %480 = vst [vmem:[#allocation2 + $0x100] sm:$0xff] %v313
    %481 = vst [vmem:[#allocation2 + $0x108] sm:$0xff] %v315
    %482 = vst [vmem:[#allocation2 + $0x110] sm:$0xff] %v438
    %483 = vst [vmem:[#allocation2 + $0x118] sm:$0xff] %v440
    %484 = vst [vmem:[#allocation2 + $0x120] sm:$0xff] %v319
    %485 = vst [vmem:[#allocation2 + $0x128] sm:$0xff] %v321
    %486 = vst [vmem:[#allocation2 + $0x130] sm:$0xff] %v444
    %487 = vst [vmem:[#allocation2 + $0x138] sm:$0xff] %v446
    %v488 = vld [vmem:[#allocation2] sm:$0xff]
    %v489 = vld [vmem:[#allocation2 + $0x8] sm:$0xff]
    %v490 = vld [vmem:[#allocation2 + $0x10] sm:$0xff]
    %v491 = vld [vmem:[#allocation2 + $0x18] sm:$0xff]
    %v492 = vld [vmem:[#allocation4] sm:$0xff]
    %v493 = vld [vmem:[#allocation11] sm:$0xff]
    %v494 = vld [vmem:[#allocation11 + $0x8] sm:$0xff]
    %v495 = vld [vmem:[#allocation11 + $0x10] sm:$0xff]
    %v496 = vld [vmem:[#allocation11 + $0x18] sm:$0xff]
    %v497 = vld [vmem:[#allocation11 + $0x20] sm:$0xff]
    %v498 = vld [vmem:[#allocation11 + $0x28] sm:$0xff]
    %v499 = vld [vmem:[#allocation11 + $0x30] sm:$0xff]
    %v500 = vld [vmem:[#allocation11 + $0x38] sm:$0xff]
    %v501 = vld [vmem:[#allocation11 + $0x40] sm:$0xff]
    %v502 = vld [vmem:[#allocation11 + $0x48] sm:$0xff]
    %v503 = vld [vmem:[#allocation11 + $0x50] sm:$0xff]
    %v504 = vld [vmem:[#allocation11 + $0x58] sm:$0xff]
    %v505 = vld [vmem:[#allocation11 + $0x60] sm:$0xff]
    %v506 = vld [vmem:[#allocation11 + $0x68] sm:$0xff]
    %v507 = vld [vmem:[#allocation11 + $0x70] sm:$0xff]
    %v508 = vld [vmem:[#allocation11 + $0x78] sm:$0xff]
    %v509 = vld [vmem:[#allocation11 + $0x80] sm:$0xff]
    %v510 = vld [vmem:[#allocation11 + $0x88] sm:$0xff]
    %v511 = vld [vmem:[#allocation11 + $0x90] sm:$0xff]
    %v512 = vld [vmem:[#allocation11 + $0x98] sm:$0xff]
    %v513 = vld [vmem:[#allocation11 + $0xa0] sm:$0xff]
    %v514 = vld [vmem:[#allocation11 + $0xa8] sm:$0xff]
    %v515 = vld [vmem:[#allocation11 + $0xb0] sm:$0xff]
    %v516 = vld [vmem:[#allocation11 + $0xb8] sm:$0xff]
    %v517 = vld [vmem:[#allocation11 + $0xc0] sm:$0xff]
    %v518 = vld [vmem:[#allocation11 + $0xc8] sm:$0xff]
    %v519 = vld [vmem:[#allocation11 + $0xd0] sm:$0xff]
    %v520 = vld [vmem:[#allocation11 + $0xd8] sm:$0xff]
    %v521 = vld [vmem:[#allocation11 + $0xe0] sm:$0xff]
    %v522 = vld [vmem:[#allocation11 + $0xe8] sm:$0xff]
    %v523 = vld [vmem:[#allocation11 + $0xf0] sm:$0xff]
    %v524 = vld [vmem:[#allocation11 + $0xf8] sm:$0xff]
    %v525 = vld [vmem:[#allocation11 + $0x100] sm:$0xff]
    %v526 = vld [vmem:[#allocation11 + $0x108] sm:$0xff]
    %v527 = vld [vmem:[#allocation11 + $0x110] sm:$0xff]
    %v528 = vld [vmem:[#allocation11 + $0x118] sm:$0xff]
    %v529 = vld [vmem:[#allocation11 + $0x120] sm:$0xff]
    %v530 = vld [vmem:[#allocation11 + $0x128] sm:$0xff]
    %v531 = vld [vmem:[#allocation11 + $0x130] sm:$0xff]
    %v532 = vld [vmem:[#allocation11 + $0x138] sm:$0xff]
    %v533 = vld [vmem:[#allocation11 + $0x140] sm:$0xff]
    %v534 = vld [vmem:[#allocation11 + $0x148] sm:$0xff]
    %v535 = vld [vmem:[#allocation11 + $0x150] sm:$0xff]
    %v536 = vld [vmem:[#allocation11 + $0x158] sm:$0xff]
    %v537 = vld [vmem:[#allocation11 + $0x160] sm:$0xff]
    %v538 = vld [vmem:[#allocation11 + $0x168] sm:$0xff]
    %v539 = vld [vmem:[#allocation11 + $0x170] sm:$0xff]
    %v540 = vld [vmem:[#allocation11 + $0x178] sm:$0xff]
    %v541 = vld [vmem:[#allocation11 + $0x180] sm:$0xff]
    %v542 = vld [vmem:[#allocation11 + $0x188] sm:$0xff]
    %v543 = vld [vmem:[#allocation11 + $0x190] sm:$0xff]
    %v544 = vld [vmem:[#allocation11 + $0x198] sm:$0xff]
    %v545 = vld [vmem:[#allocation11 + $0x1a0] sm:$0xff]
    %v546 = vld [vmem:[#allocation11 + $0x1a8] sm:$0xff]
    %v547 = vld [vmem:[#allocation11 + $0x1b0] sm:$0xff]
    %v548 = vld [vmem:[#allocation11 + $0x1b8] sm:$0xff]
    %v549 = vld [vmem:[#allocation11 + $0x1c0] sm:$0xff]
    %v550 = vld [vmem:[#allocation11 + $0x1c8] sm:$0xff]
    %v551 = vld [vmem:[#allocation11 + $0x1d0] sm:$0xff]
    %v552 = vld [vmem:[#allocation11 + $0x1d8] sm:$0xff]
    %v553 = vld [vmem:[#allocation11 + $0x1e0] sm:$0xff]
    %v554 = vld [vmem:[#allocation11 + $0x1e8] sm:$0xff]
    %v555 = vld [vmem:[#allocation11 + $0x1f0] sm:$0xff]
    %v556 = vld [vmem:[#allocation11 + $0x1f8] sm:$0xff]
    %557 = vmatprep.subr.mxu0 %v494
    %558 = vmatpush1.msra.mxu0 %v493
    %559 = vmatprep.subr.mxu0 %v498
    %560 = vmatpush1.msra.mxu0 %v497
    %561 = vmatprep.subr.mxu0 %v502
    %562 = vmatpush1.msra.mxu0 %v501
    %563 = vmatprep.subr.mxu0 %v506
    %564 = vmatpush1.msra.mxu0 %v505
    %565 = vmatprep.subr.mxu0 %v510
    %566 = vmatpush1.msra.mxu0 %v509
    %567 = vmatprep.subr.mxu0 %v514
    %568 = vmatpush1.msra.mxu0 %v513
    %569 = vmatprep.subr.mxu0 %v518
    %570 = vmatpush1.msra.mxu0 %v517
    %571 = vmatprep.subr.mxu0 %v522
    %572 = vmatpush1.msra.mxu0 %v521
    %573 = vmatprep.subr.mxu0 %v526
    %574 = vmatpush1.msra.mxu0 %v525
    %575 = vmatprep.subr.mxu0 %v530
    %576 = vmatpush1.msra.mxu0 %v529
    %577 = vmatprep.subr.mxu0 %v534
    %578 = vmatpush1.msra.mxu0 %v533
    %579 = vmatprep.subr.mxu0 %v538
    %580 = vmatpush1.msra.mxu0 %v537
    %581 = vmatprep.subr.mxu0 %v542
    %582 = vmatpush1.msra.mxu0 %v541
    %583 = vmatprep.subr.mxu0 %v546
    %584 = vmatpush1.msra.mxu0 %v545
    %585 = vmatprep.subr.mxu0 %v550
    %586 = vmatpush1.msra.mxu0 %v549
    %587 = vmatprep.subr.mxu0 %v554
    %588 = vmatpush1.msra.mxu0 %v553
    %589 = vmatprep.subr.mxu0 0.0
    %590 = vmatpush1.msra.mxu0 0.0
    %591 = vmatprep.subr.mxu0 0.0
    %592 = vmatpush1.msra.mxu0 0.0
    %593 = vmatprep.subr.mxu0 0.0
    %594 = vmatpush1.msra.mxu0 0.0
    %595 = vmatprep.subr.mxu0 0.0
    %596 = vmatpush1.msra.mxu0 0.0
    %597 = vmatprep.subr.mxu0 0.0
    %598 = vmatpush1.msra.mxu0 0.0
    %599 = vmatprep.subr.mxu0 0.0
    %600 = vmatpush1.msra.mxu0 0.0
    %601 = vmatprep.subr.mxu0 0.0
    %602 = vmatpush1.msra.mxu0 0.0
    %603 = vmatprep.subr.mxu0 0.0
    %604 = vmatpush1.msra.mxu0 0.0
    %605 = vmatprep.subr.mxu0 0.0
    %606 = vmatpush1.msra.mxu0 0.0
    %607 = vmatprep.subr.mxu0 0.0
    %608 = vmatpush1.msra.mxu0 0.0
    %609 = vmatprep.subr.mxu0 0.0
    %610 = vmatpush1.msra.mxu0 0.0
    %611 = vmatprep.subr.mxu0 0.0
    %612 = vmatpush1.msra.mxu0 0.0
    %613 = vmatprep.subr.mxu0 0.0
    %614 = vmatpush1.msra.mxu0 0.0
    %615 = vmatprep.subr.mxu0 0.0
    %616 = vmatpush1.msra.mxu0 0.0
    %617 = vmatprep.subr.mxu0 0.0
    %618 = vmatpush1.msra.mxu0 0.0
    %619 = vmatprep.subr.mxu0 0.0
    %620 = vmatpush1.msra.mxu0 0.0
    %621 = vmatprep.mubr.f32.mxu0 0.0
    %622 = vmatmul.mubr.f32.gmra.mrb[0].mxu0 %v492
    %v623 = vpop.f32.mrb[0].mxu0
    %v624 = vadd.f32 0.0, %v623
    %v625 = vpop.f32.mrb[0].mxu0
    %v626 = vadd.f32 0.0, %v625
    %627 = vdwg.mxu0
    %628 = vmatprep.subr.mxu0 %v496
    %629 = vmatpush1.msra.mxu0 %v495
    %630 = vmatprep.subr.mxu0 %v500
    %631 = vmatpush1.msra.mxu0 %v499
    %632 = vmatprep.subr.mxu0 %v504
    %633 = vmatpush1.msra.mxu0 %v503
    %634 = vmatprep.subr.mxu0 %v508
    %635 = vmatpush1.msra.mxu0 %v507
    %636 = vmatprep.subr.mxu0 %v512
    %637 = vmatpush1.msra.mxu0 %v511
    %638 = vmatprep.subr.mxu0 %v516
    %639 = vmatpush1.msra.mxu0 %v515
    %640 = vmatprep.subr.mxu0 %v520
    %641 = vmatpush1.msra.mxu0 %v519
    %642 = vmatprep.subr.mxu0 %v524
    %643 = vmatpush1.msra.mxu0 %v523
    %644 = vmatprep.subr.mxu0 %v528
    %645 = vmatpush1.msra.mxu0 %v527
    %646 = vmatprep.subr.mxu0 %v532
    %647 = vmatpush1.msra.mxu0 %v531
    %648 = vmatprep.subr.mxu0 %v536
    %649 = vmatpush1.msra.mxu0 %v535
    %650 = vmatprep.subr.mxu0 %v540
    %651 = vmatpush1.msra.mxu0 %v539
    %652 = vmatprep.subr.mxu0 %v544
    %653 = vmatpush1.msra.mxu0 %v543
    %654 = vmatprep.subr.mxu0 %v548
    %655 = vmatpush1.msra.mxu0 %v547
    %656 = vmatprep.subr.mxu0 %v552
    %657 = vmatpush1.msra.mxu0 %v551
    %658 = vmatprep.subr.mxu0 %v556
    %659 = vmatpush1.msra.mxu0 %v555
    %660 = vmatprep.subr.mxu0 0.0
    %661 = vmatpush1.msra.mxu0 0.0
    %662 = vmatprep.subr.mxu0 0.0
    %663 = vmatpush1.msra.mxu0 0.0
    %664 = vmatprep.subr.mxu0 0.0
    %665 = vmatpush1.msra.mxu0 0.0
    %666 = vmatprep.subr.mxu0 0.0
    %667 = vmatpush1.msra.mxu0 0.0
    %668 = vmatprep.subr.mxu0 0.0
    %669 = vmatpush1.msra.mxu0 0.0
    %670 = vmatprep.subr.mxu0 0.0
    %671 = vmatpush1.msra.mxu0 0.0
    %672 = vmatprep.subr.mxu0 0.0
    %673 = vmatpush1.msra.mxu0 0.0
    %674 = vmatprep.subr.mxu0 0.0
    %675 = vmatpush1.msra.mxu0 0.0
    %676 = vmatprep.subr.mxu0 0.0
    %677 = vmatpush1.msra.mxu0 0.0
    %678 = vmatprep.subr.mxu0 0.0
    %679 = vmatpush1.msra.mxu0 0.0
    %680 = vmatprep.subr.mxu0 0.0
    %681 = vmatpush1.msra.mxu0 0.0
    %682 = vmatprep.subr.mxu0 0.0
    %683 = vmatpush1.msra.mxu0 0.0
    %684 = vmatprep.subr.mxu0 0.0
    %685 = vmatpush1.msra.mxu0 0.0
    %686 = vmatprep.subr.mxu0 0.0
    %687 = vmatpush1.msra.mxu0 0.0
    %688 = vmatprep.subr.mxu0 0.0
    %689 = vmatpush1.msra.mxu0 0.0
    %690 = vmatprep.subr.mxu0 0.0
    %691 = vmatpush1.msra.mxu0 0.0
    %692 = vmatprep.mubr.f32.mxu0 0.0
    %693 = vmatmul.mubr.f32.gmra.mrb[0].mxu0 %v492
    %v694 = vpop.f32.mrb[0].mxu0
    %v695 = vadd.f32 0.0, %v694
    %v696 = vpop.f32.mrb[0].mxu0
    %v697 = vadd.f32 0.0, %v696
    %698 = vdwg.mxu0
    %v699 = vadd.f32 %v488, %v624
    %v700 = vadd.f32 %v489, %v626
    %v701 = vadd.f32 %v490, %v695
    %v702 = vadd.f32 %v491, %v697
    %v703 = vld [vmem:[#allocation5] sm:$0xff]
    %v704 = vxor.u32 %v699, 2147483648
    %v705 = vmul.f32 %v704, 1.442695
    %v706 = vpow.pop %v705
    %v707 = vadd.f32 %v706, 1.0
    %v708 = vrcp.pop %v707
    %v709 = vmul.f32 1.0, %v708
    %v710 = vxor.u32 %v700, 2147483648
    %v711 = vmul.f32 %v710, 1.442695
    %v712 = vpow.pop %v711
    %v713 = vadd.f32 %v712, 1.0
    %v714 = vrcp.pop %v713
    %v715 = vmul.f32 1.0, %v714
    %v716 = vtanh.pop %v701
    %v717 = vxor.u32 %v702, 2147483648
    %v718 = vmul.f32 %v717, 1.442695
    %v719 = vpow.pop %v718
    %v720 = vadd.f32 %v719, 1.0
    %v721 = vrcp.pop %v720
    %v722 = vmul.f32 1.0, %v721
    %v723 = vmul.f32 %v715, %v703
    %v724 = vmul.f32 %v709, %v716
    %v725 = vadd.f32 %v723, %v724
    %v726 = vtanh.pop %v725
    %v727 = vmul.f32 %v722, %v726
    %728 = vst [vmem:[#allocation4] sm:$0xff] %v727
    %729 = vst [vmem:[#allocation5] sm:$0xff] %v725
    %s730 = scalar_lea.vmem [#allocation4], 8
    %v731 = vld [vmem:[%s730] sm:$0xff]
    %v732 = vld [vmem:[#allocation12] sm:$0xff]
    %v733 = vld [vmem:[#allocation12 + $0x8] sm:$0xff]
    %v734 = vld [vmem:[#allocation12 + $0x10] sm:$0xff]
    %v735 = vld [vmem:[#allocation12 + $0x18] sm:$0xff]
    %v736 = vld [vmem:[#allocation12 + $0x20] sm:$0xff]
    %v737 = vld [vmem:[#allocation12 + $0x28] sm:$0xff]
    %v738 = vld [vmem:[#allocation12 + $0x30] sm:$0xff]
    %v739 = vld [vmem:[#allocation12 + $0x38] sm:$0xff]
    %v740 = vld [vmem:[#allocation12 + $0x40] sm:$0xff]
    %v741 = vld [vmem:[#allocation12 + $0x48] sm:$0xff]
    %v742 = vld [vmem:[#allocation12 + $0x50] sm:$0xff]
    %v743 = vld [vmem:[#allocation12 + $0x58] sm:$0xff]
    %v744 = vld [vmem:[#allocation12 + $0x60] sm:$0xff]
    %v745 = vld [vmem:[#allocation12 + $0x68] sm:$0xff]
    %v746 = vld [vmem:[#allocation12 + $0x70] sm:$0xff]
    %v747 = vld [vmem:[#allocation12 + $0x78] sm:$0xff]
    %v748 = vld [vmem:[#allocation12 + $0x80] sm:$0xff]
    %v749 = vld [vmem:[#allocation12 + $0x88] sm:$0xff]
    %v750 = vld [vmem:[#allocation12 + $0x90] sm:$0xff]
    %v751 = vld [vmem:[#allocation12 + $0x98] sm:$0xff]
    %v752 = vld [vmem:[#allocation12 + $0xa0] sm:$0xff]
    %v753 = vld [vmem:[#allocation12 + $0xa8] sm:$0xff]
    %v754 = vld [vmem:[#allocation12 + $0xb0] sm:$0xff]
    %v755 = vld [vmem:[#allocation12 + $0xb8] sm:$0xff]
    %v756 = vld [vmem:[#allocation12 + $0xc0] sm:$0xff]
    %v757 = vld [vmem:[#allocation12 + $0xc8] sm:$0xff]
    %v758 = vld [vmem:[#allocation12 + $0xd0] sm:$0xff]
    %v759 = vld [vmem:[#allocation12 + $0xd8] sm:$0xff]
    %v760 = vld [vmem:[#allocation12 + $0xe0] sm:$0xff]
    %v761 = vld [vmem:[#allocation12 + $0xe8] sm:$0xff]
    %v762 = vld [vmem:[#allocation12 + $0xf0] sm:$0xff]
    %v763 = vld [vmem:[#allocation12 + $0xf8] sm:$0xff]
    %v764 = vld [vmem:[#allocation12 + $0x100] sm:$0xff]
    %v765 = vld [vmem:[#allocation12 + $0x108] sm:$0xff]
    %v766 = vld [vmem:[#allocation12 + $0x110] sm:$0xff]
    %v767 = vld [vmem:[#allocation12 + $0x118] sm:$0xff]
    %v768 = vld [vmem:[#allocation12 + $0x120] sm:$0xff]
    %v769 = vld [vmem:[#allocation12 + $0x128] sm:$0xff]
    %v770 = vld [vmem:[#allocation12 + $0x130] sm:$0xff]
    %v771 = vld [vmem:[#allocation12 + $0x138] sm:$0xff]
    %v772 = vld [vmem:[#allocation12 + $0x140] sm:$0xff]
    %v773 = vld [vmem:[#allocation12 + $0x148] sm:$0xff]
    %v774 = vld [vmem:[#allocation12 + $0x150] sm:$0xff]
    %v775 = vld [vmem:[#allocation12 + $0x158] sm:$0xff]
    %v776 = vld [vmem:[#allocation12 + $0x160] sm:$0xff]
    %v777 = vld [vmem:[#allocation12 + $0x168] sm:$0xff]
    %v778 = vld [vmem:[#allocation12 + $0x170] sm:$0xff]
    %v779 = vld [vmem:[#allocation12 + $0x178] sm:$0xff]
    %v780 = vld [vmem:[#allocation12 + $0x180] sm:$0xff]
    %v781 = vld [vmem:[#allocation12 + $0x188] sm:$0xff]
    %v782 = vld [vmem:[#allocation12 + $0x190] sm:$0xff]
    %v783 = vld [vmem:[#allocation12 + $0x198] sm:$0xff]
    %v784 = vld [vmem:[#allocation12 + $0x1a0] sm:$0xff]
    %v785 = vld [vmem:[#allocation12 + $0x1a8] sm:$0xff]
    %v786 = vld [vmem:[#allocation12 + $0x1b0] sm:$0xff]
    %v787 = vld [vmem:[#allocation12 + $0x1b8] sm:$0xff]
    %v788 = vld [vmem:[#allocation12 + $0x1c0] sm:$0xff]
    %v789 = vld [vmem:[#allocation12 + $0x1c8] sm:$0xff]
    %v790 = vld [vmem:[#allocation12 + $0x1d0] sm:$0xff]
    %v791 = vld [vmem:[#allocation12 + $0x1d8] sm:$0xff]
    %v792 = vld [vmem:[#allocation12 + $0x1e0] sm:$0xff]
    %v793 = vld [vmem:[#allocation12 + $0x1e8] sm:$0xff]
    %v794 = vld [vmem:[#allocation12 + $0x1f0] sm:$0xff]
    %v795 = vld [vmem:[#allocation12 + $0x1f8] sm:$0xff]
    %v796 = vld [vmem:[#allocation12 + $0x200] sm:$0xff]
    %v797 = vld [vmem:[#allocation12 + $0x208] sm:$0xff]
    %v798 = vld [vmem:[#allocation12 + $0x210] sm:$0xff]
    %v799 = vld [vmem:[#allocation12 + $0x218] sm:$0xff]
    %v800 = vld [vmem:[#allocation12 + $0x220] sm:$0xff]
    %v801 = vld [vmem:[#allocation12 + $0x228] sm:$0xff]
    %v802 = vld [vmem:[#allocation12 + $0x230] sm:$0xff]
    %v803 = vld [vmem:[#allocation12 + $0x238] sm:$0xff]
    %v804 = vld [vmem:[#allocation12 + $0x240] sm:$0xff]
    %v805 = vld [vmem:[#allocation12 + $0x248] sm:$0xff]
    %v806 = vld [vmem:[#allocation12 + $0x250] sm:$0xff]
    %v807 = vld [vmem:[#allocation12 + $0x258] sm:$0xff]
    %v808 = vld [vmem:[#allocation12 + $0x260] sm:$0xff]
    %v809 = vld [vmem:[#allocation12 + $0x268] sm:$0xff]
    %v810 = vld [vmem:[#allocation12 + $0x270] sm:$0xff]
    %v811 = vld [vmem:[#allocation12 + $0x278] sm:$0xff]
    %v812 = vld [vmem:[#allocation12 + $0x280] sm:$0xff]
    %v813 = vld [vmem:[#allocation12 + $0x288] sm:$0xff]
    %v814 = vld [vmem:[#allocation12 + $0x290] sm:$0xff]
    %v815 = vld [vmem:[#allocation12 + $0x298] sm:$0xff]
    %v816 = vld [vmem:[#allocation12 + $0x2a0] sm:$0xff]
    %v817 = vld [vmem:[#allocation12 + $0x2a8] sm:$0xff]
    %v818 = vld [vmem:[#allocation12 + $0x2b0] sm:$0xff]
    %v819 = vld [vmem:[#allocation12 + $0x2b8] sm:$0xff]
    %v820 = vld [vmem:[#allocation12 + $0x2c0] sm:$0xff]
    %v821 = vld [vmem:[#allocation12 + $0x2c8] sm:$0xff]
    %v822 = vld [vmem:[#allocation12 + $0x2d0] sm:$0xff]
    %v823 = vld [vmem:[#allocation12 + $0x2d8] sm:$0xff]
    %v824 = vld [vmem:[#allocation12 + $0x2e0] sm:$0xff]
    %v825 = vld [vmem:[#allocation12 + $0x2e8] sm:$0xff]
    %v826 = vld [vmem:[#allocation12 + $0x2f0] sm:$0xff]
    %v827 = vld [vmem:[#allocation12 + $0x2f8] sm:$0xff]
    %v828 = vld [vmem:[#allocation12 + $0x300] sm:$0xff]
    %v829 = vld [vmem:[#allocation12 + $0x308] sm:$0xff]
    %v830 = vld [vmem:[#allocation12 + $0x310] sm:$0xff]
    %v831 = vld [vmem:[#allocation12 + $0x318] sm:$0xff]
    %v832 = vld [vmem:[#allocation12 + $0x320] sm:$0xff]
    %v833 = vld [vmem:[#allocation12 + $0x328] sm:$0xff]
    %v834 = vld [vmem:[#allocation12 + $0x330] sm:$0xff]
    %v835 = vld [vmem:[#allocation12 + $0x338] sm:$0xff]
    %v836 = vld [vmem:[#allocation12 + $0x340] sm:$0xff]
    %v837 = vld [vmem:[#allocation12 + $0x348] sm:$0xff]
    %v838 = vld [vmem:[#allocation12 + $0x350] sm:$0xff]
    %v839 = vld [vmem:[#allocation12 + $0x358] sm:$0xff]
    %v840 = vld [vmem:[#allocation12 + $0x360] sm:$0xff]
    %v841 = vld [vmem:[#allocation12 + $0x368] sm:$0xff]
    %v842 = vld [vmem:[#allocation12 + $0x370] sm:$0xff]
    %v843 = vld [vmem:[#allocation12 + $0x378] sm:$0xff]
    %v844 = vld [vmem:[#allocation12 + $0x380] sm:$0xff]
    %v845 = vld [vmem:[#allocation12 + $0x388] sm:$0xff]
    %v846 = vld [vmem:[#allocation12 + $0x390] sm:$0xff]
    %v847 = vld [vmem:[#allocation12 + $0x398] sm:$0xff]
    %v848 = vld [vmem:[#allocation12 + $0x3a0] sm:$0xff]
    %v849 = vld [vmem:[#allocation12 + $0x3a8] sm:$0xff]
    %v850 = vld [vmem:[#allocation12 + $0x3b0] sm:$0xff]
    %v851 = vld [vmem:[#allocation12 + $0x3b8] sm:$0xff]
    %v852 = vld [vmem:[#allocation12 + $0x3c0] sm:$0xff]
    %v853 = vld [vmem:[#allocation12 + $0x3c8] sm:$0xff]
    %v854 = vld [vmem:[#allocation12 + $0x3d0] sm:$0xff]
    %v855 = vld [vmem:[#allocation12 + $0x3d8] sm:$0xff]
    %v856 = vld [vmem:[#allocation12 + $0x3e0] sm:$0xff]
    %v857 = vld [vmem:[#allocation12 + $0x3e8] sm:$0xff]
    %v858 = vld [vmem:[#allocation12 + $0x3f0] sm:$0xff]
    %v859 = vld [vmem:[#allocation12 + $0x3f8] sm:$0xff]
    %v860 = vld [vmem:[%s5] sm:$0xf]
    %v862 = vlaneseq
    %v863 = vshrl.u32 %v862, 7
    %v864 = vsub.s32 0, %v863
    %v865 = vrot.slane %v860, %v864
    %v866 = vlaneseq
    %v867 = vshrl.u32 %v866, 7
    %v868 = vsub.s32 1, %v867
    %v869 = vrot.slane %v860, %v868
    %v870 = vlaneseq
    %v871 = vshrl.u32 %v870, 7
    %v872 = vsub.s32 2, %v871
    %v873 = vrot.slane %v860, %v872
    %v874 = vlaneseq
    %v875 = vshrl.u32 %v874, 7
    %v876 = vsub.s32 3, %v875
    %v877 = vrot.slane %v860, %v876
    %882 = vmatprep.subr.mxu0 %v733
    %883 = vmatpush1.msra.mxu0 %v732
    %884 = vmatprep.subr.mxu0 %v737
    %885 = vmatpush1.msra.mxu0 %v736
    %886 = vmatprep.subr.mxu0 %v741
    %887 = vmatpush1.msra.mxu0 %v740
    %888 = vmatprep.subr.mxu0 %v745
    %889 = vmatpush1.msra.mxu0 %v744
    %890 = vmatprep.subr.mxu0 %v749
    %891 = vmatpush1.msra.mxu0 %v748
    %892 = vmatprep.subr.mxu0 %v753
    %893 = vmatpush1.msra.mxu0 %v752
    %894 = vmatprep.subr.mxu0 %v757
    %895 = vmatpush1.msra.mxu0 %v756
    %896 = vmatprep.subr.mxu0 %v761
    %897 = vmatpush1.msra.mxu0 %v760
    %898 = vmatprep.subr.mxu0 %v765
    %899 = vmatpush1.msra.mxu0 %v764
    %900 = vmatprep.subr.mxu0 %v769
    %901 = vmatpush1.msra.mxu0 %v768
    %902 = vmatprep.subr.mxu0 %v773
    %903 = vmatpush1.msra.mxu0 %v772
    %904 = vmatprep.subr.mxu0 %v777
    %905 = vmatpush1.msra.mxu0 %v776
    %906 = vmatprep.subr.mxu0 %v781
    %907 = vmatpush1.msra.mxu0 %v780
    %908 = vmatprep.subr.mxu0 %v785
    %909 = vmatpush1.msra.mxu0 %v784
    %910 = vmatprep.subr.mxu0 %v789
    %911 = vmatpush1.msra.mxu0 %v788
    %912 = vmatprep.subr.mxu0 %v793
    %913 = vmatpush1.msra.mxu0 %v792
    %914 = vmatprep.subr.mxu0 %v797
    %915 = vmatpush1.msra.mxu0 %v796
    %916 = vmatprep.subr.mxu0 %v801
    %917 = vmatpush1.msra.mxu0 %v800
    %918 = vmatprep.subr.mxu0 %v805
    %919 = vmatpush1.msra.mxu0 %v804
    %920 = vmatprep.subr.mxu0 %v809
    %921 = vmatpush1.msra.mxu0 %v808
    %922 = vmatprep.subr.mxu0 %v813
    %923 = vmatpush1.msra.mxu0 %v812
    %924 = vmatprep.subr.mxu0 %v817
    %925 = vmatpush1.msra.mxu0 %v816
    %926 = vmatprep.subr.mxu0 %v821
    %927 = vmatpush1.msra.mxu0 %v820
    %928 = vmatprep.subr.mxu0 %v825
    %929 = vmatpush1.msra.mxu0 %v824
    %930 = vmatprep.subr.mxu0 %v829
    %931 = vmatpush1.msra.mxu0 %v828
    %932 = vmatprep.subr.mxu0 %v833
    %933 = vmatpush1.msra.mxu0 %v832
    %934 = vmatprep.subr.mxu0 %v837
    %935 = vmatpush1.msra.mxu0 %v836
    %936 = vmatprep.subr.mxu0 %v841
    %937 = vmatpush1.msra.mxu0 %v840
    %938 = vmatprep.subr.mxu0 %v845
    %939 = vmatpush1.msra.mxu0 %v844
    %940 = vmatprep.subr.mxu0 %v849
    %941 = vmatpush1.msra.mxu0 %v848
    %942 = vmatprep.subr.mxu0 %v853
    %943 = vmatpush1.msra.mxu0 %v852
    %944 = vmatprep.subr.mxu0 %v857
    %945 = vmatpush1.msra.mxu0 %v856
    %946 = vmatprep.mubr.f32.mxu0 %v731
    %947 = vmatmul.mubr.f32.gmra.mrb[0].mxu0 %v727
    %v948 = vpop.f32.mrb[0].mxu0
    %v949 = vadd.f32 %v865, %v948
    %v950 = vpop.f32.mrb[0].mxu0
    %v951 = vadd.f32 %v869, %v950
    %952 = vdwg.mxu0
    %953 = vmatprep.subr.mxu0 %v735
    %954 = vmatpush1.msra.mxu0 %v734
    %955 = vmatprep.subr.mxu0 %v739
    %956 = vmatpush1.msra.mxu0 %v738
    %957 = vmatprep.subr.mxu0 %v743
    %958 = vmatpush1.msra.mxu0 %v742
    %959 = vmatprep.subr.mxu0 %v747
    %960 = vmatpush1.msra.mxu0 %v746
    %961 = vmatprep.subr.mxu0 %v751
    %962 = vmatpush1.msra.mxu0 %v750
    %963 = vmatprep.subr.mxu0 %v755
    %964 = vmatpush1.msra.mxu0 %v754
    %965 = vmatprep.subr.mxu0 %v759
    %966 = vmatpush1.msra.mxu0 %v758
    %967 = vmatprep.subr.mxu0 %v763
    %968 = vmatpush1.msra.mxu0 %v762
    %969 = vmatprep.subr.mxu0 %v767
    %970 = vmatpush1.msra.mxu0 %v766
    %971 = vmatprep.subr.mxu0 %v771
    %972 = vmatpush1.msra.mxu0 %v770
    %973 = vmatprep.subr.mxu0 %v775
    %974 = vmatpush1.msra.mxu0 %v774
    %975 = vmatprep.subr.mxu0 %v779
    %976 = vmatpush1.msra.mxu0 %v778
    %977 = vmatprep.subr.mxu0 %v783
    %978 = vmatpush1.msra.mxu0 %v782
    %979 = vmatprep.subr.mxu0 %v787
    %980 = vmatpush1.msra.mxu0 %v786
    %981 = vmatprep.subr.mxu0 %v791
    %982 = vmatpush1.msra.mxu0 %v790
    %983 = vmatprep.subr.mxu0 %v795
    %984 = vmatpush1.msra.mxu0 %v794
    %985 = vmatprep.subr.mxu0 %v799
    %986 = vmatpush1.msra.mxu0 %v798
    %987 = vmatprep.subr.mxu0 %v803
    %988 = vmatpush1.msra.mxu0 %v802
    %989 = vmatprep.subr.mxu0 %v807
    %990 = vmatpush1.msra.mxu0 %v806
    %991 = vmatprep.subr.mxu0 %v811
    %992 = vmatpush1.msra.mxu0 %v810
    %993 = vmatprep.subr.mxu0 %v815
    %994 = vmatpush1.msra.mxu0 %v814
    %995 = vmatprep.subr.mxu0 %v819
    %996 = vmatpush1.msra.mxu0 %v818
    %997 = vmatprep.subr.mxu0 %v823
    %998 = vmatpush1.msra.mxu0 %v822
    %999 = vmatprep.subr.mxu0 %v827
    %1000 = vmatpush1.msra.mxu0 %v826
    %1001 = vmatprep.subr.mxu0 %v831
    %1002 = vmatpush1.msra.mxu0 %v830
    %1003 = vmatprep.subr.mxu0 %v835
    %1004 = vmatpush1.msra.mxu0 %v834
    %1005 = vmatprep.subr.mxu0 %v839
    %1006 = vmatpush1.msra.mxu0 %v838
    %1007 = vmatprep.subr.mxu0 %v843
    %1008 = vmatpush1.msra.mxu0 %v842
    %1009 = vmatprep.subr.mxu0 %v847
    %1010 = vmatpush1.msra.mxu0 %v846
    %1011 = vmatprep.subr.mxu0 %v851
    %1012 = vmatpush1.msra.mxu0 %v850
    %1013 = vmatprep.subr.mxu0 %v855
    %1014 = vmatpush1.msra.mxu0 %v854
    %1015 = vmatprep.subr.mxu0 %v859
    %1016 = vmatpush1.msra.mxu0 %v858
    %1017 = vmatprep.mubr.f32.mxu0 %v731
    %1018 = vmatmul.mubr.f32.gmra.mrb[0].mxu0 %v727
    %v1019 = vpop.f32.mrb[0].mxu0
    %v1020 = vadd.f32 %v873, %v1019
    %v1021 = vpop.f32.mrb[0].mxu0
    %v1022 = vadd.f32 %v877, %v1021
    %1023 = vdwg.mxu0
    %s1024 = scalar_lea.vmem [#allocation5], 8
    %v1025 = vld [vmem:[%s1024] sm:$0xff]
    %v1026 = vxor.u32 %v949, 2147483648
    %v1027 = vmul.f32 %v1026, 1.442695
    %v1028 = vpow.pop %v1027
    %v1029 = vadd.f32 %v1028, 1.0
    %v1030 = vrcp.pop %v1029
    %v1031 = vmul.f32 1.0, %v1030
    %v1032 = vxor.u32 %v951, 2147483648
    %v1033 = vmul.f32 %v1032, 1.442695
    %v1034 = vpow.pop %v1033
    %v1035 = vadd.f32 %v1034, 1.0
    %v1036 = vrcp.pop %v1035
    %v1037 = vmul.f32 1.0, %v1036
    %v1038 = vtanh.pop %v1020
    %v1039 = vxor.u32 %v1022, 2147483648
    %v1040 = vmul.f32 %v1039, 1.442695
    %v1041 = vpow.pop %v1040
    %v1042 = vadd.f32 %v1041, 1.0
    %v1043 = vrcp.pop %v1042
    %v1044 = vmul.f32 1.0, %v1043
    %v1045 = vmul.f32 %v1037, %v1025
    %v1046 = vmul.f32 %v1031, %v1038
    %v1047 = vadd.f32 %v1045, %v1046
    %v1048 = vtanh.pop %v1047
    %v1049 = vmul.f32 %v1044, %v1048
    %1050 = vst [vmem:[%s730] sm:$0xff] %v1049
    %1051 = vst [vmem:[%s1024] sm:$0xff] %v1047
    %1052 = vst [vmem:[#allocation3] sm:$0xff] %v1049
    %s1053 = scalar_lea.vmem [#allocation2], 32
    %v1054 = vld [vmem:[%s1053] sm:$0xff]
    %v1055 = vld [vmem:[%s1053 + $0x8] sm:$0xff]
    %v1056 = vld [vmem:[%s1053 + $0x10] sm:$0xff]
    %v1057 = vld [vmem:[%s1053 + $0x18] sm:$0xff]
    %v1058 = vld [vmem:[#allocation4] sm:$0xff]
    %v1059 = vld [vmem:[#allocation11] sm:$0xff]
    %v1060 = vld [vmem:[#allocation11 + $0x8] sm:$0xff]
    %v1061 = vld [vmem:[#allocation11 + $0x10] sm:$0xff]
    %v1062 = vld [vmem:[#allocation11 + $0x18] sm:$0xff]
    %v1063 = vld [vmem:[#allocation11 + $0x20] sm:$0xff]
    %v1064 = vld [vmem:[#allocation11 + $0x28] sm:$0xff]
    %v1065 = vld [vmem:[#allocation11 + $0x30] sm:$0xff]
    %v1066 = vld [vmem:[#allocation11 + $0x38] sm:$0xff]
    %v1067 = vld [vmem:[#allocation11 + $0x40] sm:$0xff]
    %v1068 = vld [vmem:[#allocation11 + $0x48] sm:$0xff]
    %v1069 = vld [vmem:[#allocation11 + $0x50] sm:$0xff]
    %v1070 = vld [vmem:[#allocation11 + $0x58] sm:$0xff]
    %v1071 = vld [vmem:[#allocation11 + $0x60] sm:$0xff]
    %v1072 = vld [vmem:[#allocation11 + $0x68] sm:$0xff]
    %v1073 = vld [vmem:[#allocation11 + $0x70] sm:$0xff]
    %v1074 = vld [vmem:[#allocation11 + $0x78] sm:$0xff]
    %v1075 = vld [vmem:[#allocation11 + $0x80] sm:$0xff]
    %v1076 = vld [vmem:[#allocation11 + $0x88] sm:$0xff]
    %v1077 = vld [vmem:[#allocation11 + $0x90] sm:$0xff]
    %v1078 = vld [vmem:[#allocation11 + $0x98] sm:$0xff]
    %v1079 = vld [vmem:[#allocation11 + $0xa0] sm:$0xff]
    %v1080 = vld [vmem:[#allocation11 + $0xa8] sm:$0xff]
    %v1081 = vld [vmem:[#allocation11 + $0xb0] sm:$0xff]
    %v1082 = vld [vmem:[#allocation11 + $0xb8] sm:$0xff]
    %v1083 = vld [vmem:[#allocation11 + $0xc0] sm:$0xff]
    %v1084 = vld [vmem:[#allocation11 + $0xc8] sm:$0xff]
    %v1085 = vld [vmem:[#allocation11 + $0xd0] sm:$0xff]
    %v1086 = vld [vmem:[#allocation11 + $0xd8] sm:$0xff]
    %v1087 = vld [vmem:[#allocation11 + $0xe0] sm:$0xff]
    %v1088 = vld [vmem:[#allocation11 + $0xe8] sm:$0xff]
    %v1089 = vld [vmem:[#allocation11 + $0xf0] sm:$0xff]
    %v1090 = vld [vmem:[#allocation11 + $0xf8] sm:$0xff]
    %v1091 = vld [vmem:[#allocation11 + $0x100] sm:$0xff]
    %v1092 = vld [vmem:[#allocation11 + $0x108] sm:$0xff]
    %v1093 = vld [vmem:[#allocation11 + $0x110] sm:$0xff]
    %v1094 = vld [vmem:[#allocation11 + $0x118] sm:$0xff]
    %v1095 = vld [vmem:[#allocation11 + $0x120] sm:$0xff]
    %v1096 = vld [vmem:[#allocation11 + $0x128] sm:$0xff]
    %v1097 = vld [vmem:[#allocation11 + $0x130] sm:$0xff]
    %v1098 = vld [vmem:[#allocation11 + $0x138] sm:$0xff]
    %v1099 = vld [vmem:[#allocation11 + $0x140] sm:$0xff]
    %v1100 = vld [vmem:[#allocation11 + $0x148] sm:$0xff]
    %v1101 = vld [vmem:[#allocation11 + $0x150] sm:$0xff]
    %v1102 = vld [vmem:[#allocation11 + $0x158] sm:$0xff]
    %v1103 = vld [vmem:[#allocation11 + $0x160] sm:$0xff]
    %v1104 = vld [vmem:[#allocation11 + $0x168] sm:$0xff]
    %v1105 = vld [vmem:[#allocation11 + $0x170] sm:$0xff]
    %v1106 = vld [vmem:[#allocation11 + $0x178] sm:$0xff]
    %v1107 = vld [vmem:[#allocation11 + $0x180] sm:$0xff]
    %v1108 = vld [vmem:[#allocation11 + $0x188] sm:$0xff]
    %v1109 = vld [vmem:[#allocation11 + $0x190] sm:$0xff]
    %v1110 = vld [vmem:[#allocation11 + $0x198] sm:$0xff]
    %v1111 = vld [vmem:[#allocation11 + $0x1a0] sm:$0xff]
    %v1112 = vld [vmem:[#allocation11 + $0x1a8] sm:$0xff]
    %v1113 = vld [vmem:[#allocation11 + $0x1b0] sm:$0xff]
    %v1114 = vld [vmem:[#allocation11 + $0x1b8] sm:$0xff]
    %v1115 = vld [vmem:[#allocation11 + $0x1c0] sm:$0xff]
    %v1116 = vld [vmem:[#allocation11 + $0x1c8] sm:$0xff]
    %v1117 = vld [vmem:[#allocation11 + $0x1d0] sm:$0xff]
    %v1118 = vld [vmem:[#allocation11 + $0x1d8] sm:$0xff]
    %v1119 = vld [vmem:[#allocation11 + $0x1e0] sm:$0xff]
    %v1120 = vld [vmem:[#allocation11 + $0x1e8] sm:$0xff]
    %v1121 = vld [vmem:[#allocation11 + $0x1f0] sm:$0xff]
    %v1122 = vld [vmem:[#allocation11 + $0x1f8] sm:$0xff]
    %1123 = vmatprep.subr.mxu0 %v1060
    %1124 = vmatpush1.msra.mxu0 %v1059
    %1125 = vmatprep.subr.mxu0 %v1064
    %1126 = vmatpush1.msra.mxu0 %v1063
    %1127 = vmatprep.subr.mxu0 %v1068
    %1128 = vmatpush1.msra.mxu0 %v1067
    %1129 = vmatprep.subr.mxu0 %v1072
    %1130 = vmatpush1.msra.mxu0 %v1071
    %1131 = vmatprep.subr.mxu0 %v1076
    %1132 = vmatpush1.msra.mxu0 %v1075
    %1133 = vmatprep.subr.mxu0 %v1080
    %1134 = vmatpush1.msra.mxu0 %v1079
    %1135 = vmatprep.subr.mxu0 %v1084
    %1136 = vmatpush1.msra.mxu0 %v1083
    %1137 = vmatprep.subr.mxu0 %v1088
    %1138 = vmatpush1.msra.mxu0 %v1087
    %1139 = vmatprep.subr.mxu0 %v1092
    %1140 = vmatpush1.msra.mxu0 %v1091
    %1141 = vmatprep.subr.mxu0 %v1096
    %1142 = vmatpush1.msra.mxu0 %v1095
    %1143 = vmatprep.subr.mxu0 %v1100
    %1144 = vmatpush1.msra.mxu0 %v1099
    %1145 = vmatprep.subr.mxu0 %v1104
    %1146 = vmatpush1.msra.mxu0 %v1103
    %1147 = vmatprep.subr.mxu0 %v1108
    %1148 = vmatpush1.msra.mxu0 %v1107
    %1149 = vmatprep.subr.mxu0 %v1112
    %1150 = vmatpush1.msra.mxu0 %v1111
    %1151 = vmatprep.subr.mxu0 %v1116
    %1152 = vmatpush1.msra.mxu0 %v1115
    %1153 = vmatprep.subr.mxu0 %v1120
    %1154 = vmatpush1.msra.mxu0 %v1119
    %1155 = vmatprep.subr.mxu0 0.0
    %1156 = vmatpush1.msra.mxu0 0.0
    %1157 = vmatprep.subr.mxu0 0.0
    %1158 = vmatpush1.msra.mxu0 0.0
    %1159 = vmatprep.subr.mxu0 0.0
    %1160 = vmatpush1.msra.mxu0 0.0
    %1161 = vmatprep.subr.mxu0 0.0
    %1162 = vmatpush1.msra.mxu0 0.0
    %1163 = vmatprep.subr.mxu0 0.0
    %1164 = vmatpush1.msra.mxu0 0.0
    %1165 = vmatprep.subr.mxu0 0.0
    %1166 = vmatpush1.msra.mxu0 0.0
    %1167 = vmatprep.subr.mxu0 0.0
    %1168 = vmatpush1.msra.mxu0 0.0
    %1169 = vmatprep.subr.mxu0 0.0
    %1170 = vmatpush1.msra.mxu0 0.0
    %1171 = vmatprep.subr.mxu0 0.0
    %1172 = vmatpush1.msra.mxu0 0.0
    %1173 = vmatprep.subr.mxu0 0.0
    %1174 = vmatpush1.msra.mxu0 0.0
    %1175 = vmatprep.subr.mxu0 0.0
    %1176 = vmatpush1.msra.mxu0 0.0
    %1177 = vmatprep.subr.mxu0 0.0
    %1178 = vmatpush1.msra.mxu0 0.0
    %1179 = vmatprep.subr.mxu0 0.0
    %1180 = vmatpush1.msra.mxu0 0.0
    %1181 = vmatprep.subr.mxu0 0.0
    %1182 = vmatpush1.msra.mxu0 0.0
    %1183 = vmatprep.subr.mxu0 0.0
    %1184 = vmatpush1.msra.mxu0 0.0
    %1185 = vmatprep.subr.mxu0 0.0
    %1186 = vmatpush1.msra.mxu0 0.0
    %1187 = vmatprep.mubr.f32.mxu0 0.0
    %1188 = vmatmul.mubr.f32.gmra.mrb[0].mxu0 %v1058
    %v1189 = vpop.f32.mrb[0].mxu0
    %v1190 = vadd.f32 0.0, %v1189
    %v1191 = vpop.f32.mrb[0].mxu0
    %v1192 = vadd.f32 0.0, %v1191
    %1193 = vdwg.mxu0
    %1194 = vmatprep.subr.mxu0 %v1062
    %1195 = vmatpush1.msra.mxu0 %v1061
    %1196 = vmatprep.subr.mxu0 %v1066
    %1197 = vmatpush1.msra.mxu0 %v1065
    %1198 = vmatprep.subr.mxu0 %v1070
    %1199 = vmatpush1.msra.mxu0 %v1069
    %1200 = vmatprep.subr.mxu0 %v1074
    %1201 = vmatpush1.msra.mxu0 %v1073
    %1202 = vmatprep.subr.mxu0 %v1078
    %1203 = vmatpush1.msra.mxu0 %v1077
    %1204 = vmatprep.subr.mxu0 %v1082
    %1205 = vmatpush1.msra.mxu0 %v1081
    %1206 = vmatprep.subr.mxu0 %v1086
    %1207 = vmatpush1.msra.mxu0 %v1085
    %1208 = vmatprep.subr.mxu0 %v1090
    %1209 = vmatpush1.msra.mxu0 %v1089
    %1210 = vmatprep.subr.mxu0 %v1094
    %1211 = vmatpush1.msra.mxu0 %v1093
    %1212 = vmatprep.subr.mxu0 %v1098
    %1213 = vmatpush1.msra.mxu0 %v1097
    %1214 = vmatprep.subr.mxu0 %v1102
    %1215 = vmatpush1.msra.mxu0 %v1101
    %1216 = vmatprep.subr.mxu0 %v1106
    %1217 = vmatpush1.msra.mxu0 %v1105
    %1218 = vmatprep.subr.mxu0 %v1110
    %1219 = vmatpush1.msra.mxu0 %v1109
    %1220 = vmatprep.subr.mxu0 %v1114
    %1221 = vmatpush1.msra.mxu0 %v1113
    %1222 = vmatprep.subr.mxu0 %v1118
    %1223 = vmatpush1.msra.mxu0 %v1117
    %1224 = vmatprep.subr.mxu0 %v1122
    %1225 = vmatpush1.msra.mxu0 %v1121
    %1226 = vmatprep.subr.mxu0 0.0
    %1227 = vmatpush1.msra.mxu0 0.0
    %1228 = vmatprep.subr.mxu0 0.0
    %1229 = vmatpush1.msra.mxu0 0.0
    %1230 = vmatprep.subr.mxu0 0.0
    %1231 = vmatpush1.msra.mxu0 0.0
    %1232 = vmatprep.subr.mxu0 0.0
    %1233 = vmatpush1.msra.mxu0 0.0
    %1234 = vmatprep.subr.mxu0 0.0
    %1235 = vmatpush1.msra.mxu0 0.0
    %1236 = vmatprep.subr.mxu0 0.0
    %1237 = vmatpush1.msra.mxu0 0.0
    %1238 = vmatprep.subr.mxu0 0.0
    %1239 = vmatpush1.msra.mxu0 0.0
    %1240 = vmatprep.subr.mxu0 0.0
    %1241 = vmatpush1.msra.mxu0 0.0
    %1242 = vmatprep.subr.mxu0 0.0
    %1243 = vmatpush1.msra.mxu0 0.0
    %1244 = vmatprep.subr.mxu0 0.0
    %1245 = vmatpush1.msra.mxu0 0.0
    %1246 = vmatprep.subr.mxu0 0.0
    %1247 = vmatpush1.msra.mxu0 0.0
    %1248 = vmatprep.subr.mxu0 0.0
    %1249 = vmatpush1.msra.mxu0 0.0
    %1250 = vmatprep.subr.mxu0 0.0
    %1251 = vmatpush1.msra.mxu0 0.0
    %1252 = vmatprep.subr.mxu0 0.0
    %1253 = vmatpush1.msra.mxu0 0.0
    %1254 = vmatprep.subr.mxu0 0.0
    %1255 = vmatpush1.msra.mxu0 0.0
    %1256 = vmatprep.subr.mxu0 0.0
    %1257 = vmatpush1.msra.mxu0 0.0
    %1258 = vmatprep.mubr.f32.mxu0 0.0
    %1259 = vmatmul.mubr.f32.gmra.mrb[0].mxu0 %v1058
    %v1260 = vpop.f32.mrb[0].mxu0
    %v1261 = vadd.f32 0.0, %v1260
    %v1262 = vpop.f32.mrb[0].mxu0
    %v1263 = vadd.f32 0.0, %v1262
    %1264 = vdwg.mxu0
    %v1265 = vadd.f32 %v1054, %v1190
    %v1266 = vadd.f32 %v1055, %v1192
    %v1267 = vadd.f32 %v1056, %v1261
    %v1268 = vadd.f32 %v1057, %v1263
    %v1269 = vld [vmem:[#allocation5] sm:$0xff]
    %v1270 = vxor.u32 %v1265, 2147483648
    %v1271 = vmul.f32 %v1270, 1.442695
    %v1272 = vpow.pop %v1271
    %v1273 = vadd.f32 %v1272, 1.0
    %v1274 = vrcp.pop %v1273
    %v1275 = vmul.f32 1.0, %v1274
    %v1276 = vxor.u32 %v1266, 2147483648
    %v1277 = vmul.f32 %v1276, 1.442695
    %v1278 = vpow.pop %v1277
    %v1279 = vadd.f32 %v1278, 1.0
    %v1280 = vrcp.pop %v1279
    %v1281 = vmul.f32 1.0, %v1280
    %v1282 = vtanh.pop %v1267
    %v1283 = vxor.u32 %v1268, 2147483648
    %v1284 = vmul.f32 %v1283, 1.442695
    %v1285 = vpow.pop %v1284
    %v1286 = vadd.f32 %v1285, 1.0
    %v1287 = vrcp.pop %v1286
    %v1288 = vmul.f32 1.0, %v1287
    %v1289 = vmul.f32 %v1281, %v1269
    %v1290 = vmul.f32 %v1275, %v1282
    %v1291 = vadd.f32 %v1289, %v1290
    %v1292 = vtanh.pop %v1291
    %v1293 = vmul.f32 %v1288, %v1292
    %1294 = vst [vmem:[#allocation4] sm:$0xff] %v1293
    %1295 = vst [vmem:[#allocation5] sm:$0xff] %v1291
    %v1296 = vld [vmem:[%s730] sm:$0xff]
    %v1297 = vld [vmem:[#allocation12] sm:$0xff]
    %v1298 = vld [vmem:[#allocation12 + $0x8] sm:$0xff]
    %v1299 = vld [vmem:[#allocation12 + $0x10] sm:$0xff]
    %v1300 = vld [vmem:[#allocation12 + $0x18] sm:$0xff]
    %v1301 = vld [vmem:[#allocation12 + $0x20] sm:$0xff]
    %v1302 = vld [vmem:[#allocation12 + $0x28] sm:$0xff]
    %v1303 = vld [vmem:[#allocation12 + $0x30] sm:$0xff]
    %v1304 = vld [vmem:[#allocation12 + $0x38] sm:$0xff]
    %v1305 = vld [vmem:[#allocation12 + $0x40] sm:$0xff]
    %v1306 = vld [vmem:[#allocation12 + $0x48] sm:$0xff]
    %v1307 = vld [vmem:[#allocation12 + $0x50] sm:$0xff]
    %v1308 = vld [vmem:[#allocation12 + $0x58] sm:$0xff]
    %v1309 = vld [vmem:[#allocation12 + $0x60] sm:$0xff]
    %v1310 = vld [vmem:[#allocation12 + $0x68] sm:$0xff]
    %v1311 = vld [vmem:[#allocation12 + $0x70] sm:$0xff]
    %v1312 = vld [vmem:[#allocation12 + $0x78] sm:$0xff]
    %v1313 = vld [vmem:[#allocation12 + $0x80] sm:$0xff]
    %v1314 = vld [vmem:[#allocation12 + $0x88] sm:$0xff]
    %v1315 = vld [vmem:[#allocation12 + $0x90] sm:$0xff]
    %v1316 = vld [vmem:[#allocation12 + $0x98] sm:$0xff]
    %v1317 = vld [vmem:[#allocation12 + $0xa0] sm:$0xff]
    %v1318 = vld [vmem:[#allocation12 + $0xa8] sm:$0xff]
    %v1319 = vld [vmem:[#allocation12 + $0xb0] sm:$0xff]
    %v1320 = vld [vmem:[#allocation12 + $0xb8] sm:$0xff]
    %v1321 = vld [vmem:[#allocation12 + $0xc0] sm:$0xff]
    %v1322 = vld [vmem:[#allocation12 + $0xc8] sm:$0xff]
    %v1323 = vld [vmem:[#allocation12 + $0xd0] sm:$0xff]
    %v1324 = vld [vmem:[#allocation12 + $0xd8] sm:$0xff]
    %v1325 = vld [vmem:[#allocation12 + $0xe0] sm:$0xff]
    %v1326 = vld [vmem:[#allocation12 + $0xe8] sm:$0xff]
    %v1327 = vld [vmem:[#allocation12 + $0xf0] sm:$0xff]
    %v1328 = vld [vmem:[#allocation12 + $0xf8] sm:$0xff]
    %v1329 = vld [vmem:[#allocation12 + $0x100] sm:$0xff]
    %v1330 = vld [vmem:[#allocation12 + $0x108] sm:$0xff]
    %v1331 = vld [vmem:[#allocation12 + $0x110] sm:$0xff]
    %v1332 = vld [vmem:[#allocation12 + $0x118] sm:$0xff]
    %v1333 = vld [vmem:[#allocation12 + $0x120] sm:$0xff]
    %v1334 = vld [vmem:[#allocation12 + $0x128] sm:$0xff]
    %v1335 = vld [vmem:[#allocation12 + $0x130] sm:$0xff]
    %v1336 = vld [vmem:[#allocation12 + $0x138] sm:$0xff]
    %v1337 = vld [vmem:[#allocation12 + $0x140] sm:$0xff]
    %v1338 = vld [vmem:[#allocation12 + $0x148] sm:$0xff]
    %v1339 = vld [vmem:[#allocation12 + $0x150] sm:$0xff]
    %v1340 = vld [vmem:[#allocation12 + $0x158] sm:$0xff]
    %v1341 = vld [vmem:[#allocation12 + $0x160] sm:$0xff]
    %v1342 = vld [vmem:[#allocation12 + $0x168] sm:$0xff]
    %v1343 = vld [vmem:[#allocation12 + $0x170] sm:$0xff]
    %v1344 = vld [vmem:[#allocation12 + $0x178] sm:$0xff]
    %v1345 = vld [vmem:[#allocation12 + $0x180] sm:$0xff]
    %v1346 = vld [vmem:[#allocation12 + $0x188] sm:$0xff]
    %v1347 = vld [vmem:[#allocation12 + $0x190] sm:$0xff]
    %v1348 = vld [vmem:[#allocation12 + $0x198] sm:$0xff]
    %v1349 = vld [vmem:[#allocation12 + $0x1a0] sm:$0xff]
    %v1350 = vld [vmem:[#allocation12 + $0x1a8] sm:$0xff]
    %v1351 = vld [vmem:[#allocation12 + $0x1b0] sm:$0xff]
    %v1352 = vld [vmem:[#allocation12 + $0x1b8] sm:$0xff]
    %v1353 = vld [vmem:[#allocation12 + $0x1c0] sm:$0xff]
    %v1354 = vld [vmem:[#allocation12 + $0x1c8] sm:$0xff]
    %v1355 = vld [vmem:[#allocation12 + $0x1d0] sm:$0xff]
    %v1356 = vld [vmem:[#allocation12 + $0x1d8] sm:$0xff]
    %v1357 = vld [vmem:[#allocation12 + $0x1e0] sm:$0xff]
    %v1358 = vld [vmem:[#allocation12 + $0x1e8] sm:$0xff]
    %v1359 = vld [vmem:[#allocation12 + $0x1f0] sm:$0xff]
    %v1360 = vld [vmem:[#allocation12 + $0x1f8] sm:$0xff]
    %v1361 = vld [vmem:[#allocation12 + $0x200] sm:$0xff]
    %v1362 = vld [vmem:[#allocation12 + $0x208] sm:$0xff]
    %v1363 = vld [vmem:[#allocation12 + $0x210] sm:$0xff]
    %v1364 = vld [vmem:[#allocation12 + $0x218] sm:$0xff]
    %v1365 = vld [vmem:[#allocation12 + $0x220] sm:$0xff]
    %v1366 = vld [vmem:[#allocation12 + $0x228] sm:$0xff]
    %v1367 = vld [vmem:[#allocation12 + $0x230] sm:$0xff]
    %v1368 = vld [vmem:[#allocation12 + $0x238] sm:$0xff]
    %v1369 = vld [vmem:[#allocation12 + $0x240] sm:$0xff]
    %v1370 = vld [vmem:[#allocation12 + $0x248] sm:$0xff]
    %v1371 = vld [vmem:[#allocation12 + $0x250] sm:$0xff]
    %v1372 = vld [vmem:[#allocation12 + $0x258] sm:$0xff]
    %v1373 = vld [vmem:[#allocation12 + $0x260] sm:$0xff]
    %v1374 = vld [vmem:[#allocation12 + $0x268] sm:$0xff]
    %v1375 = vld [vmem:[#allocation12 + $0x270] sm:$0xff]
    %v1376 = vld [vmem:[#allocation12 + $0x278] sm:$0xff]
    %v1377 = vld [vmem:[#allocation12 + $0x280] sm:$0xff]
    %v1378 = vld [vmem:[#allocation12 + $0x288] sm:$0xff]
    %v1379 = vld [vmem:[#allocation12 + $0x290] sm:$0xff]
    %v1380 = vld [vmem:[#allocation12 + $0x298] sm:$0xff]
    %v1381 = vld [vmem:[#allocation12 + $0x2a0] sm:$0xff]
    %v1382 = vld [vmem:[#allocation12 + $0x2a8] sm:$0xff]
    %v1383 = vld [vmem:[#allocation12 + $0x2b0] sm:$0xff]
    %v1384 = vld [vmem:[#allocation12 + $0x2b8] sm:$0xff]
    %v1385 = vld [vmem:[#allocation12 + $0x2c0] sm:$0xff]
    %v1386 = vld [vmem:[#allocation12 + $0x2c8] sm:$0xff]
    %v1387 = vld [vmem:[#allocation12 + $0x2d0] sm:$0xff]
    %v1388 = vld [vmem:[#allocation12 + $0x2d8] sm:$0xff]
    %v1389 = vld [vmem:[#allocation12 + $0x2e0] sm:$0xff]
    %v1390 = vld [vmem:[#allocation12 + $0x2e8] sm:$0xff]
    %v1391 = vld [vmem:[#allocation12 + $0x2f0] sm:$0xff]
    %v1392 = vld [vmem:[#allocation12 + $0x2f8] sm:$0xff]
    %v1393 = vld [vmem:[#allocation12 + $0x300] sm:$0xff]
    %v1394 = vld [vmem:[#allocation12 + $0x308] sm:$0xff]
    %v1395 = vld [vmem:[#allocation12 + $0x310] sm:$0xff]
    %v1396 = vld [vmem:[#allocation12 + $0x318] sm:$0xff]
    %v1397 = vld [vmem:[#allocation12 + $0x320] sm:$0xff]
    %v1398 = vld [vmem:[#allocation12 + $0x328] sm:$0xff]
    %v1399 = vld [vmem:[#allocation12 + $0x330] sm:$0xff]
    %v1400 = vld [vmem:[#allocation12 + $0x338] sm:$0xff]
    %v1401 = vld [vmem:[#allocation12 + $0x340] sm:$0xff]
    %v1402 = vld [vmem:[#allocation12 + $0x348] sm:$0xff]
    %v1403 = vld [vmem:[#allocation12 + $0x350] sm:$0xff]
    %v1404 = vld [vmem:[#allocation12 + $0x358] sm:$0xff]
    %v1405 = vld [vmem:[#allocation12 + $0x360] sm:$0xff]
    %v1406 = vld [vmem:[#allocation12 + $0x368] sm:$0xff]
    %v1407 = vld [vmem:[#allocation12 + $0x370] sm:$0xff]
    %v1408 = vld [vmem:[#allocation12 + $0x378] sm:$0xff]
    %v1409 = vld [vmem:[#allocation12 + $0x380] sm:$0xff]
    %v1410 = vld [vmem:[#allocation12 + $0x388] sm:$0xff]
    %v1411 = vld [vmem:[#allocation12 + $0x390] sm:$0xff]
    %v1412 = vld [vmem:[#allocation12 + $0x398] sm:$0xff]
    %v1413 = vld [vmem:[#allocation12 + $0x3a0] sm:$0xff]
    %v1414 = vld [vmem:[#allocation12 + $0x3a8] sm:$0xff]
    %v1415 = vld [vmem:[#allocation12 + $0x3b0] sm:$0xff]
    %v1416 = vld [vmem:[#allocation12 + $0x3b8] sm:$0xff]
    %v1417 = vld [vmem:[#allocation12 + $0x3c0] sm:$0xff]
    %v1418 = vld [vmem:[#allocation12 + $0x3c8] sm:$0xff]
    %v1419 = vld [vmem:[#allocation12 + $0x3d0] sm:$0xff]
    %v1420 = vld [vmem:[#allocation12 + $0x3d8] sm:$0xff]
    %v1421 = vld [vmem:[#allocation12 + $0x3e0] sm:$0xff]
    %v1422 = vld [vmem:[#allocation12 + $0x3e8] sm:$0xff]
    %v1423 = vld [vmem:[#allocation12 + $0x3f0] sm:$0xff]
    %v1424 = vld [vmem:[#allocation12 + $0x3f8] sm:$0xff]
    %v1425 = vld [vmem:[%s5] sm:$0xf]
    %v1427 = vlaneseq
    %v1428 = vshrl.u32 %v1427, 7
    %v1429 = vsub.s32 0, %v1428
    %v1430 = vrot.slane %v1425, %v1429
    %v1431 = vlaneseq
    %v1432 = vshrl.u32 %v1431, 7
    %v1433 = vsub.s32 1, %v1432
    %v1434 = vrot.slane %v1425, %v1433
    %v1435 = vlaneseq
    %v1436 = vshrl.u32 %v1435, 7
    %v1437 = vsub.s32 2, %v1436
    %v1438 = vrot.slane %v1425, %v1437
    %v1439 = vlaneseq
    %v1440 = vshrl.u32 %v1439, 7
    %v1441 = vsub.s32 3, %v1440
    %v1442 = vrot.slane %v1425, %v1441
    %1447 = vmatprep.subr.mxu0 %v1298
    %1448 = vmatpush1.msra.mxu0 %v1297
    %1449 = vmatprep.subr.mxu0 %v1302
    %1450 = vmatpush1.msra.mxu0 %v1301
    %1451 = vmatprep.subr.mxu0 %v1306
    %1452 = vmatpush1.msra.mxu0 %v1305
    %1453 = vmatprep.subr.mxu0 %v1310
    %1454 = vmatpush1.msra.mxu0 %v1309
    %1455 = vmatprep.subr.mxu0 %v1314
    %1456 = vmatpush1.msra.mxu0 %v1313
    %1457 = vmatprep.subr.mxu0 %v1318
    %1458 = vmatpush1.msra.mxu0 %v1317
    %1459 = vmatprep.subr.mxu0 %v1322
    %1460 = vmatpush1.msra.mxu0 %v1321
    %1461 = vmatprep.subr.mxu0 %v1326
    %1462 = vmatpush1.msra.mxu0 %v1325
    %1463 = vmatprep.subr.mxu0 %v1330
    %1464 = vmatpush1.msra.mxu0 %v1329
    %1465 = vmatprep.subr.mxu0 %v1334
    %1466 = vmatpush1.msra.mxu0 %v1333
    %1467 = vmatprep.subr.mxu0 %v1338
    %1468 = vmatpush1.msra.mxu0 %v1337
    %1469 = vmatprep.subr.mxu0 %v1342
    %1470 = vmatpush1.msra.mxu0 %v1341
    %1471 = vmatprep.subr.mxu0 %v1346
    %1472 = vmatpush1.msra.mxu0 %v1345
    %1473 = vmatprep.subr.mxu0 %v1350
    %1474 = vmatpush1.msra.mxu0 %v1349
    %1475 = vmatprep.subr.mxu0 %v1354
    %1476 = vmatpush1.msra.mxu0 %v1353
    %1477 = vmatprep.subr.mxu0 %v1358
    %1478 = vmatpush1.msra.mxu0 %v1357
    %1479 = vmatprep.subr.mxu0 %v1362
    %1480 = vmatpush1.msra.mxu0 %v1361
    %1481 = vmatprep.subr.mxu0 %v1366
    %1482 = vmatpush1.msra.mxu0 %v1365
    %1483 = vmatprep.subr.mxu0 %v1370
    %1484 = vmatpush1.msra.mxu0 %v1369
    %1485 = vmatprep.subr.mxu0 %v1374
    %1486 = vmatpush1.msra.mxu0 %v1373
    %1487 = vmatprep.subr.mxu0 %v1378
    %1488 = vmatpush1.msra.mxu0 %v1377
    %1489 = vmatprep.subr.mxu0 %v1382
    %1490 = vmatpush1.msra.mxu0 %v1381
    %1491 = vmatprep.subr.mxu0 %v1386
    %1492 = vmatpush1.msra.mxu0 %v1385
    %1493 = vmatprep.subr.mxu0 %v1390
    %1494 = vmatpush1.msra.mxu0 %v1389
    %1495 = vmatprep.subr.mxu0 %v1394
    %1496 = vmatpush1.msra.mxu0 %v1393
    %1497 = vmatprep.subr.mxu0 %v1398
    %1498 = vmatpush1.msra.mxu0 %v1397
    %1499 = vmatprep.subr.mxu0 %v1402
    %1500 = vmatpush1.msra.mxu0 %v1401
    %1501 = vmatprep.subr.mxu0 %v1406
    %1502 = vmatpush1.msra.mxu0 %v1405
    %1503 = vmatprep.subr.mxu0 %v1410
    %1504 = vmatpush1.msra.mxu0 %v1409
    %1505 = vmatprep.subr.mxu0 %v1414
    %1506 = vmatpush1.msra.mxu0 %v1413
    %1507 = vmatprep.subr.mxu0 %v1418
    %1508 = vmatpush1.msra.mxu0 %v1417
    %1509 = vmatprep.subr.mxu0 %v1422
    %1510 = vmatpush1.msra.mxu0 %v1421
    %1511 = vmatprep.mubr.f32.mxu0 %v1296
    %1512 = vmatmul.mubr.f32.gmra.mrb[0].mxu0 %v1293
    %v1513 = vpop.f32.mrb[0].mxu0
    %v1514 = vadd.f32 %v1430, %v1513
    %v1515 = vpop.f32.mrb[0].mxu0
    %v1516 = vadd.f32 %v1434, %v1515
    %1517 = vdwg.mxu0
    %1518 = vmatprep.subr.mxu0 %v1300
    %1519 = vmatpush1.msra.mxu0 %v1299
    %1520 = vmatprep.subr.mxu0 %v1304
    %1521 = vmatpush1.msra.mxu0 %v1303
    %1522 = vmatprep.subr.mxu0 %v1308
    %1523 = vmatpush1.msra.mxu0 %v1307
    %1524 = vmatprep.subr.mxu0 %v1312
    %1525 = vmatpush1.msra.mxu0 %v1311
    %1526 = vmatprep.subr.mxu0 %v1316
    %1527 = vmatpush1.msra.mxu0 %v1315
    %1528 = vmatprep.subr.mxu0 %v1320
    %1529 = vmatpush1.msra.mxu0 %v1319
    %1530 = vmatprep.subr.mxu0 %v1324
    %1531 = vmatpush1.msra.mxu0 %v1323
    %1532 = vmatprep.subr.mxu0 %v1328
    %1533 = vmatpush1.msra.mxu0 %v1327
    %1534 = vmatprep.subr.mxu0 %v1332
    %1535 = vmatpush1.msra.mxu0 %v1331
    %1536 = vmatprep.subr.mxu0 %v1336
    %1537 = vmatpush1.msra.mxu0 %v1335
    %1538 = vmatprep.subr.mxu0 %v1340
    %1539 = vmatpush1.msra.mxu0 %v1339
    %1540 = vmatprep.subr.mxu0 %v1344
    %1541 = vmatpush1.msra.mxu0 %v1343
    %1542 = vmatprep.subr.mxu0 %v1348
    %1543 = vmatpush1.msra.mxu0 %v1347
    %1544 = vmatprep.subr.mxu0 %v1352
    %1545 = vmatpush1.msra.mxu0 %v1351
    %1546 = vmatprep.subr.mxu0 %v1356
    %1547 = vmatpush1.msra.mxu0 %v1355
    %1548 = vmatprep.subr.mxu0 %v1360
    %1549 = vmatpush1.msra.mxu0 %v1359
    %1550 = vmatprep.subr.mxu0 %v1364
    %1551 = vmatpush1.msra.mxu0 %v1363
    %1552 = vmatprep.subr.mxu0 %v1368
    %1553 = vmatpush1.msra.mxu0 %v1367
    %1554 = vmatprep.subr.mxu0 %v1372
    %1555 = vmatpush1.msra.mxu0 %v1371
    %1556 = vmatprep.subr.mxu0 %v1376
    %1557 = vmatpush1.msra.mxu0 %v1375
    %1558 = vmatprep.subr.mxu0 %v1380
    %1559 = vmatpush1.msra.mxu0 %v1379
    %1560 = vmatprep.subr.mxu0 %v1384
    %1561 = vmatpush1.msra.mxu0 %v1383
    %1562 = vmatprep.subr.mxu0 %v1388
    %1563 = vmatpush1.msra.mxu0 %v1387
    %1564 = vmatprep.subr.mxu0 %v1392
    %1565 = vmatpush1.msra.mxu0 %v1391
    %1566 = vmatprep.subr.mxu0 %v1396
    %1567 = vmatpush1.msra.mxu0 %v1395
    %1568 = vmatprep.subr.mxu0 %v1400
    %1569 = vmatpush1.msra.mxu0 %v1399
    %1570 = vmatprep.subr.mxu0 %v1404
    %1571 = vmatpush1.msra.mxu0 %v1403
    %1572 = vmatprep.subr.mxu0 %v1408
    %1573 = vmatpush1.msra.mxu0 %v1407
    %1574 = vmatprep.subr.mxu0 %v1412
    %1575 = vmatpush1.msra.mxu0 %v1411
    %1576 = vmatprep.subr.mxu0 %v1416
    %1577 = vmatpush1.msra.mxu0 %v1415
    %1578 = vmatprep.subr.mxu0 %v1420
    %1579 = vmatpush1.msra.mxu0 %v1419
    %1580 = vmatprep.subr.mxu0 %v1424
    %1581 = vmatpush1.msra.mxu0 %v1423
    %1582 = vmatprep.mubr.f32.mxu0 %v1296
    %1583 = vmatmul.mubr.f32.gmra.mrb[0].mxu0 %v1293
    %v1584 = vpop.f32.mrb[0].mxu0
    %v1585 = vadd.f32 %v1438, %v1584
    %v1586 = vpop.f32.mrb[0].mxu0
    %v1587 = vadd.f32 %v1442, %v1586
    %1588 = vdwg.mxu0
    %v1589 = vld [vmem:[%s1024] sm:$0xff]
    %v1590 = vxor.u32 %v1514, 2147483648
    %v1591 = vmul.f32 %v1590, 1.442695
    %v1592 = vpow.pop %v1591
    %v1593 = vadd.f32 %v1592, 1.0
    %v1594 = vrcp.pop %v1593
    %v1595 = vmul.f32 1.0, %v1594
    %v1596 = vxor.u32 %v1516, 2147483648
    %v1597 = vmul.f32 %v1596, 1.442695
    %v1598 = vpow.pop %v1597
    %v1599 = vadd.f32 %v1598, 1.0
    %v1600 = vrcp.pop %v1599
    %v1601 = vmul.f32 1.0, %v1600
    %v1602 = vtanh.pop %v1585
    %v1603 = vxor.u32 %v1587, 2147483648
    %v1604 = vmul.f32 %v1603, 1.442695
    %v1605 = vpow.pop %v1604
    %v1606 = vadd.f32 %v1605, 1.0
    %v1607 = vrcp.pop %v1606
    %v1608 = vmul.f32 1.0, %v1607
    %v1609 = vmul.f32 %v1601, %v1589
    %v1610 = vmul.f32 %v1595, %v1602
    %v1611 = vadd.f32 %v1609, %v1610
    %v1612 = vtanh.pop %v1611
    %v1613 = vmul.f32 %v1608, %v1612
    %1614 = vst [vmem:[%s730] sm:$0xff] %v1613
    %1615 = vst [vmem:[%s1024] sm:$0xff] %v1611
    %s1616 = scalar_lea.vmem [#allocation3], 8
    %1617 = vst [vmem:[%s1616] sm:$0xff] %v1613
    %s1618 = scalar_lea.vmem [#allocation2], 64
    %v1619 = vld [vmem:[%s1618] sm:$0xff]
    %v1620 = vld [vmem:[%s1618 + $0x8] sm:$0xff]
    %v1621 = vld [vmem:[%s1618 + $0x10] sm:$0xff]
    %v1622 = vld [vmem:[%s1618 + $0x18] sm:$0xff]
    %v1623 = vld [vmem:[#allocation4] sm:$0xff]
    %v1624 = vld [vmem:[#allocation11] sm:$0xff]
    %v1625 = vld [vmem:[#allocation11 + $0x8] sm:$0xff]
    %v1626 = vld [vmem:[#allocation11 + $0x10] sm:$0xff]
    %v1627 = vld [vmem:[#allocation11 + $0x18] sm:$0xff]
    %v1628 = vld [vmem:[#allocation11 + $0x20] sm:$0xff]
    %v1629 = vld [vmem:[#allocation11 + $0x28] sm:$0xff]
    %v1630 = vld [vmem:[#allocation11 + $0x30] sm:$0xff]
    %v1631 = vld [vmem:[#allocation11 + $0x38] sm:$0xff]
    %v1632 = vld [vmem:[#allocation11 + $0x40] sm:$0xff]
    %v1633 = vld [vmem:[#allocation11 + $0x48] sm:$0xff]
    %v1634 = vld [vmem:[#allocation11 + $0x50] sm:$0xff]
    %v1635 = vld [vmem:[#allocation11 + $0x58] sm:$0xff]
    %v1636 = vld [vmem:[#allocation11 + $0x60] sm:$0xff]
    %v1637 = vld [vmem:[#allocation11 + $0x68] sm:$0xff]
    %v1638 = vld [vmem:[#allocation11 + $0x70] sm:$0xff]
    %v1639 = vld [vmem:[#allocation11 + $0x78] sm:$0xff]
    %v1640 = vld [vmem:[#allocation11 + $0x80] sm:$0xff]
    %v1641 = vld [vmem:[#allocation11 + $0x88] sm:$0xff]
    %v1642 = vld [vmem:[#allocation11 + $0x90] sm:$0xff]
    %v1643 = vld [vmem:[#allocation11 + $0x98] sm:$0xff]
    %v1644 = vld [vmem:[#allocation11 + $0xa0] sm:$0xff]
    %v1645 = vld [vmem:[#allocation11 + $0xa8] sm:$0xff]
    %v1646 = vld [vmem:[#allocation11 + $0xb0] sm:$0xff]
    %v1647 = vld [vmem:[#allocation11 + $0xb8] sm:$0xff]
    %v1648 = vld [vmem:[#allocation11 + $0xc0] sm:$0xff]
    %v1649 = vld [vmem:[#allocation11 + $0xc8] sm:$0xff]
    %v1650 = vld [vmem:[#allocation11 + $0xd0] sm:$0xff]
    %v1651 = vld [vmem:[#allocation11 + $0xd8] sm:$0xff]
    %v1652 = vld [vmem:[#allocation11 + $0xe0] sm:$0xff]
    %v1653 = vld [vmem:[#allocation11 + $0xe8] sm:$0xff]
    %v1654 = vld [vmem:[#allocation11 + $0xf0] sm:$0xff]
    %v1655 = vld [vmem:[#allocation11 + $0xf8] sm:$0xff]
    %v1656 = vld [vmem:[#allocation11 + $0x100] sm:$0xff]
    %v1657 = vld [vmem:[#allocation11 + $0x108] sm:$0xff]
    %v1658 = vld [vmem:[#allocation11 + $0x110] sm:$0xff]
    %v1659 = vld [vmem:[#allocation11 + $0x118] sm:$0xff]
    %v1660 = vld [vmem:[#allocation11 + $0x120] sm:$0xff]
    %v1661 = vld [vmem:[#allocation11 + $0x128] sm:$0xff]
    %v1662 = vld [vmem:[#allocation11 + $0x130] sm:$0xff]
    %v1663 = vld [vmem:[#allocation11 + $0x138] sm:$0xff]
    %v1664 = vld [vmem:[#allocation11 + $0x140] sm:$0xff]
    %v1665 = vld [vmem:[#allocation11 + $0x148] sm:$0xff]
    %v1666 = vld [vmem:[#allocation11 + $0x150] sm:$0xff]
    %v1667 = vld [vmem:[#allocation11 + $0x158] sm:$0xff]
    %v1668 = vld [vmem:[#allocation11 + $0x160] sm:$0xff]
    %v1669 = vld [vmem:[#allocation11 + $0x168] sm:$0xff]
    %v1670 = vld [vmem:[#allocation11 + $0x170] sm:$0xff]
    %v1671 = vld [vmem:[#allocation11 + $0x178] sm:$0xff]
    %v1672 = vld [vmem:[#allocation11 + $0x180] sm:$0xff]
    %v1673 = vld [vmem:[#allocation11 + $0x188] sm:$0xff]
    %v1674 = vld [vmem:[#allocation11 + $0x190] sm:$0xff]
    %v1675 = vld [vmem:[#allocation11 + $0x198] sm:$0xff]
    %v1676 = vld [vmem:[#allocation11 + $0x1a0] sm:$0xff]
    %v1677 = vld [vmem:[#allocation11 + $0x1a8] sm:$0xff]
    %v1678 = vld [vmem:[#allocation11 + $0x1b0] sm:$0xff]
    %v1679 = vld [vmem:[#allocation11 + $0x1b8] sm:$0xff]
    %v1680 = vld [vmem:[#allocation11 + $0x1c0] sm:$0xff]
    %v1681 = vld [vmem:[#allocation11 + $0x1c8] sm:$0xff]
    %v1682 = vld [vmem:[#allocation11 + $0x1d0] sm:$0xff]
    %v1683 = vld [vmem:[#allocation11 + $0x1d8] sm:$0xff]
    %v1684 = vld [vmem:[#allocation11 + $0x1e0] sm:$0xff]
    %v1685 = vld [vmem:[#allocation11 + $0x1e8] sm:$0xff]
    %v1686 = vld [vmem:[#allocation11 + $0x1f0] sm:$0xff]
    %v1687 = vld [vmem:[#allocation11 + $0x1f8] sm:$0xff]
    %1688 = vmatprep.subr.mxu0 %v1625
    %1689 = vmatpush1.msra.mxu0 %v1624
    %1690 = vmatprep.subr.mxu0 %v1629
    %1691 = vmatpush1.msra.mxu0 %v1628
    %1692 = vmatprep.subr.mxu0 %v1633
    %1693 = vmatpush1.msra.mxu0 %v1632
    %1694 = vmatprep.subr.mxu0 %v1637
    %1695 = vmatpush1.msra.mxu0 %v1636
    %1696 = vmatprep.subr.mxu0 %v1641
    %1697 = vmatpush1.msra.mxu0 %v1640
    %1698 = vmatprep.subr.mxu0 %v1645
    %1699 = vmatpush1.msra.mxu0 %v1644
    %1700 = vmatprep.subr.mxu0 %v1649
    %1701 = vmatpush1.msra.mxu0 %v1648
    %1702 = vmatprep.subr.mxu0 %v1653
    %1703 = vmatpush1.msra.mxu0 %v1652
    %1704 = vmatprep.subr.mxu0 %v1657
    %1705 = vmatpush1.msra.mxu0 %v1656
    %1706 = vmatprep.subr.mxu0 %v1661
    %1707 = vmatpush1.msra.mxu0 %v1660
    %1708 = vmatprep.subr.mxu0 %v1665
    %1709 = vmatpush1.msra.mxu0 %v1664
    %1710 = vmatprep.subr.mxu0 %v1669
    %1711 = vmatpush1.msra.mxu0 %v1668
    %1712 = vmatprep.subr.mxu0 %v1673
    %1713 = vmatpush1.msra.mxu0 %v1672
    %1714 = vmatprep.subr.mxu0 %v1677
    %1715 = vmatpush1.msra.mxu0 %v1676
    %1716 = vmatprep.subr.mxu0 %v1681
    %1717 = vmatpush1.msra.mxu0 %v1680
    %1718 = vmatprep.subr.mxu0 %v1685
    %1719 = vmatpush1.msra.mxu0 %v1684
    %1720 = vmatprep.subr.mxu0 0.0
    %1721 = vmatpush1.msra.mxu0 0.0
    %1722 = vmatprep.subr.mxu0 0.0
    %1723 = vmatpush1.msra.mxu0 0.0
    %1724 = vmatprep.subr.mxu0 0.0
    %1725 = vmatpush1.msra.mxu0 0.0
    %1726 = vmatprep.subr.mxu0 0.0
    %1727 = vmatpush1.msra.mxu0 0.0
    %1728 = vmatprep.subr.mxu0 0.0
    %1729 = vmatpush1.msra.mxu0 0.0
    %1730 = vmatprep.subr.mxu0 0.0
    %1731 = vmatpush1.msra.mxu0 0.0
    %1732 = vmatprep.subr.mxu0 0.0
    %1733 = vmatpush1.msra.mxu0 0.0
    %1734 = vmatprep.subr.mxu0 0.0
    %1735 = vmatpush1.msra.mxu0 0.0
    %1736 = vmatprep.subr.mxu0 0.0
    %1737 = vmatpush1.msra.mxu0 0.0
    %1738 = vmatprep.subr.mxu0 0.0
    %1739 = vmatpush1.msra.mxu0 0.0
    %1740 = vmatprep.subr.mxu0 0.0
    %1741 = vmatpush1.msra.mxu0 0.0
    %1742 = vmatprep.subr.mxu0 0.0
    %1743 = vmatpush1.msra.mxu0 0.0
    %1744 = vmatprep.subr.mxu0 0.0
    %1745 = vmatpush1.msra.mxu0 0.0
    %1746 = vmatprep.subr.mxu0 0.0
    %1747 = vmatpush1.msra.mxu0 0.0
    %1748 = vmatprep.subr.mxu0 0.0
    %1749 = vmatpush1.msra.mxu0 0.0
    %1750 = vmatprep.subr.mxu0 0.0
    %1751 = vmatpush1.msra.mxu0 0.0
    %1752 = vmatprep.mubr.f32.mxu0 0.0
    %1753 = vmatmul.mubr.f32.gmra.mrb[0].mxu0 %v1623
    %v1754 = vpop.f32.mrb[0].mxu0
    %v1755 = vadd.f32 0.0, %v1754
    %v1756 = vpop.f32.mrb[0].mxu0
    %v1757 = vadd.f32 0.0, %v1756
    %1758 = vdwg.mxu0
    %1759 = vmatprep.subr.mxu0 %v1627
    %1760 = vmatpush1.msra.mxu0 %v1626
    %1761 = vmatprep.subr.mxu0 %v1631
    %1762 = vmatpush1.msra.mxu0 %v1630
    %1763 = vmatprep.subr.mxu0 %v1635
    %1764 = vmatpush1.msra.mxu0 %v1634
    %1765 = vmatprep.subr.mxu0 %v1639
    %1766 = vmatpush1.msra.mxu0 %v1638
    %1767 = vmatprep.subr.mxu0 %v1643
    %1768 = vmatpush1.msra.mxu0 %v1642
    %1769 = vmatprep.subr.mxu0 %v1647
    %1770 = vmatpush1.msra.mxu0 %v1646
    %1771 = vmatprep.subr.mxu0 %v1651
    %1772 = vmatpush1.msra.mxu0 %v1650
    %1773 = vmatprep.subr.mxu0 %v1655
    %1774 = vmatpush1.msra.mxu0 %v1654
    %1775 = vmatprep.subr.mxu0 %v1659
    %1776 = vmatpush1.msra.mxu0 %v1658
    %1777 = vmatprep.subr.mxu0 %v1663
    %1778 = vmatpush1.msra.mxu0 %v1662
    %1779 = vmatprep.subr.mxu0 %v1667
    %1780 = vmatpush1.msra.mxu0 %v1666
    %1781 = vmatprep.subr.mxu0 %v1671
    %1782 = vmatpush1.msra.mxu0 %v1670
    %1783 = vmatprep.subr.mxu0 %v1675
    %1784 = vmatpush1.msra.mxu0 %v1674
    %1785 = vmatprep.subr.mxu0 %v1679
    %1786 = vmatpush1.msra.mxu0 %v1678
    %1787 = vmatprep.subr.mxu0 %v1683
    %1788 = vmatpush1.msra.mxu0 %v1682
    %1789 = vmatprep.subr.mxu0 %v1687
    %1790 = vmatpush1.msra.mxu0 %v1686
    %1791 = vmatprep.subr.mxu0 0.0
    %1792 = vmatpush1.msra.mxu0 0.0
    %1793 = vmatprep.subr.mxu0 0.0
    %1794 = vmatpush1.msra.mxu0 0.0
    %1795 = vmatprep.subr.mxu0 0.0
    %1796 = vmatpush1.msra.mxu0 0.0
    %1797 = vmatprep.subr.mxu0 0.0
    %1798 = vmatpush1.msra.mxu0 0.0
    %1799 = vmatprep.subr.mxu0 0.0
    %1800 = vmatpush1.msra.mxu0 0.0
    %1801 = vmatprep.subr.mxu0 0.0
    %1802 = vmatpush1.msra.mxu0 0.0
    %1803 = vmatprep.subr.mxu0 0.0
    %1804 = vmatpush1.msra.mxu0 0.0
    %1805 = vmatprep.subr.mxu0 0.0
    %1806 = vmatpush1.msra.mxu0 0.0
    %1807 = vmatprep.subr.mxu0 0.0
    %1808 = vmatpush1.msra.mxu0 0.0
    %1809 = vmatprep.subr.mxu0 0.0
    %1810 = vmatpush1.msra.mxu0 0.0
    %1811 = vmatprep.subr.mxu0 0.0
    %1812 = vmatpush1.msra.mxu0 0.0
    %1813 = vmatprep.subr.mxu0 0.0
    %1814 = vmatpush1.msra.mxu0 0.0
    %1815 = vmatprep.subr.mxu0 0.0
    %1816 = vmatpush1.msra.mxu0 0.0
    %1817 = vmatprep.subr.mxu0 0.0
    %1818 = vmatpush1.msra.mxu0 0.0
    %1819 = vmatprep.subr.mxu0 0.0
    %1820 = vmatpush1.msra.mxu0 0.0
    %1821 = vmatprep.subr.mxu0 0.0
    %1822 = vmatpush1.msra.mxu0 0.0
    %1823 = vmatprep.mubr.f32.mxu0 0.0
    %1824 = vmatmul.mubr.f32.gmra.mrb[0].mxu0 %v1623
    %v1825 = vpop.f32.mrb[0].mxu0
    %v1826 = vadd.f32 0.0, %v1825
    %v1827 = vpop.f32.mrb[0].mxu0
    %v1828 = vadd.f32 0.0, %v1827
    %1829 = vdwg.mxu0
    %v1830 = vadd.f32 %v1619, %v1755
    %v1831 = vadd.f32 %v1620, %v1757
    %v1832 = vadd.f32 %v1621, %v1826
    %v1833 = vadd.f32 %v1622, %v1828
    %v1834 = vld [vmem:[#allocation5] sm:$0xff]
    %v1835 = vxor.u32 %v1830, 2147483648
    %v1836 = vmul.f32 %v1835, 1.442695
    %v1837 = vpow.pop %v1836
    %v1838 = vadd.f32 %v1837, 1.0
    %v1839 = vrcp.pop %v1838
    %v1840 = vmul.f32 1.0, %v1839
    %v1841 = vxor.u32 %v1831, 2147483648
    %v1842 = vmul.f32 %v1841, 1.442695
    %v1843 = vpow.pop %v1842
    %v1844 = vadd.f32 %v1843, 1.0
    %v1845 = vrcp.pop %v1844
    %v1846 = vmul.f32 1.0, %v1845
    %v1847 = vtanh.pop %v1832
    %v1848 = vxor.u32 %v1833, 2147483648
    %v1849 = vmul.f32 %v1848, 1.442695
    %v1850 = vpow.pop %v1849
    %v1851 = vadd.f32 %v1850, 1.0
    %v1852 = vrcp.pop %v1851
    %v1853 = vmul.f32 1.0, %v1852
    %v1854 = vmul.f32 %v1846, %v1834
    %v1855 = vmul.f32 %v1840, %v1847
    %v1856 = vadd.f32 %v1854, %v1855
    %v1857 = vtanh.pop %v1856
    %v1858 = vmul.f32 %v1853, %v1857
    %1859 = vst [vmem:[#allocation4] sm:$0xff] %v1858
    %1860 = vst [vmem:[#allocation5] sm:$0xff] %v1856
    %v1861 = vld [vmem:[%s730] sm:$0xff]
    %v1862 = vld [vmem:[#allocation12] sm:$0xff]
    %v1863 = vld [vmem:[#allocation12 + $0x8] sm:$0xff]
    %v1864 = vld [vmem:[#allocation12 + $0x10] sm:$0xff]
    %v1865 = vld [vmem:[#allocation12 + $0x18] sm:$0xff]
    %v1866 = vld [vmem:[#allocation12 + $0x20] sm:$0xff]
    %v1867 = vld [vmem:[#allocation12 + $0x28] sm:$0xff]
    %v1868 = vld [vmem:[#allocation12 + $0x30] sm:$0xff]
    %v1869 = vld [vmem:[#allocation12 + $0x38] sm:$0xff]
    %v1870 = vld [vmem:[#allocation12 + $0x40] sm:$0xff]
    %v1871 = vld [vmem:[#allocation12 + $0x48] sm:$0xff]
    %v1872 = vld [vmem:[#allocation12 + $0x50] sm:$0xff]
    %v1873 = vld [vmem:[#allocation12 + $0x58] sm:$0xff]
    %v1874 = vld [vmem:[#allocation12 + $0x60] sm:$0xff]
    %v1875 = vld [vmem:[#allocation12 + $0x68] sm:$0xff]
    %v1876 = vld [vmem:[#allocation12 + $0x70] sm:$0xff]
    %v1877 = vld [vmem:[#allocation12 + $0x78] sm:$0xff]
    %v1878 = vld [vmem:[#allocation12 + $0x80] sm:$0xff]
    %v1879 = vld [vmem:[#allocation12 + $0x88] sm:$0xff]
    %v1880 = vld [vmem:[#allocation12 + $0x90] sm:$0xff]
    %v1881 = vld [vmem:[#allocation12 + $0x98] sm:$0xff]
    %v1882 = vld [vmem:[#allocation12 + $0xa0] sm:$0xff]
    %v1883 = vld [vmem:[#allocation12 + $0xa8] sm:$0xff]
    %v1884 = vld [vmem:[#allocation12 + $0xb0] sm:$0xff]
    %v1885 = vld [vmem:[#allocation12 + $0xb8] sm:$0xff]
    %v1886 = vld [vmem:[#allocation12 + $0xc0] sm:$0xff]
    %v1887 = vld [vmem:[#allocation12 + $0xc8] sm:$0xff]
    %v1888 = vld [vmem:[#allocation12 + $0xd0] sm:$0xff]
    %v1889 = vld [vmem:[#allocation12 + $0xd8] sm:$0xff]
    %v1890 = vld [vmem:[#allocation12 + $0xe0] sm:$0xff]
    %v1891 = vld [vmem:[#allocation12 + $0xe8] sm:$0xff]
    %v1892 = vld [vmem:[#allocation12 + $0xf0] sm:$0xff]
    %v1893 = vld [vmem:[#allocation12 + $0xf8] sm:$0xff]
    %v1894 = vld [vmem:[#allocation12 + $0x100] sm:$0xff]
    %v1895 = vld [vmem:[#allocation12 + $0x108] sm:$0xff]
    %v1896 = vld [vmem:[#allocation12 + $0x110] sm:$0xff]
    %v1897 = vld [vmem:[#allocation12 + $0x118] sm:$0xff]
    %v1898 = vld [vmem:[#allocation12 + $0x120] sm:$0xff]
    %v1899 = vld [vmem:[#allocation12 + $0x128] sm:$0xff]
    %v1900 = vld [vmem:[#allocation12 + $0x130] sm:$0xff]
    %v1901 = vld [vmem:[#allocation12 + $0x138] sm:$0xff]
    %v1902 = vld [vmem:[#allocation12 + $0x140] sm:$0xff]
    %v1903 = vld [vmem:[#allocation12 + $0x148] sm:$0xff]
    %v1904 = vld [vmem:[#allocation12 + $0x150] sm:$0xff]
    %v1905 = vld [vmem:[#allocation12 + $0x158] sm:$0xff]
    %v1906 = vld [vmem:[#allocation12 + $0x160] sm:$0xff]
    %v1907 = vld [vmem:[#allocation12 + $0x168] sm:$0xff]
    %v1908 = vld [vmem:[#allocation12 + $0x170] sm:$0xff]
    %v1909 = vld [vmem:[#allocation12 + $0x178] sm:$0xff]
    %v1910 = vld [vmem:[#allocation12 + $0x180] sm:$0xff]
    %v1911 = vld [vmem:[#allocation12 + $0x188] sm:$0xff]
    %v1912 = vld [vmem:[#allocation12 + $0x190] sm:$0xff]
    %v1913 = vld [vmem:[#allocation12 + $0x198] sm:$0xff]
    %v1914 = vld [vmem:[#allocation12 + $0x1a0] sm:$0xff]
    %v1915 = vld [vmem:[#allocation12 + $0x1a8] sm:$0xff]
    %v1916 = vld [vmem:[#allocation12 + $0x1b0] sm:$0xff]
    %v1917 = vld [vmem:[#allocation12 + $0x1b8] sm:$0xff]
    %v1918 = vld [vmem:[#allocation12 + $0x1c0] sm:$0xff]
    %v1919 = vld [vmem:[#allocation12 + $0x1c8] sm:$0xff]
    %v1920 = vld [vmem:[#allocation12 + $0x1d0] sm:$0xff]
    %v1921 = vld [vmem:[#allocation12 + $0x1d8] sm:$0xff]
    %v1922 = vld [vmem:[#allocation12 + $0x1e0] sm:$0xff]
    %v1923 = vld [vmem:[#allocation12 + $0x1e8] sm:$0xff]
    %v1924 = vld [vmem:[#allocation12 + $0x1f0] sm:$0xff]
    %v1925 = vld [vmem:[#allocation12 + $0x1f8] sm:$0xff]
    %v1926 = vld [vmem:[#allocation12 + $0x200] sm:$0xff]
    %v1927 = vld [vmem:[#allocation12 + $0x208] sm:$0xff]
    %v1928 = vld [vmem:[#allocation12 + $0x210] sm:$0xff]
    %v1929 = vld [vmem:[#allocation12 + $0x218] sm:$0xff]
    %v1930 = vld [vmem:[#allocation12 + $0x220] sm:$0xff]
    %v1931 = vld [vmem:[#allocation12 + $0x228] sm:$0xff]
    %v1932 = vld [vmem:[#allocation12 + $0x230] sm:$0xff]
    %v1933 = vld [vmem:[#allocation12 + $0x238] sm:$0xff]
    %v1934 = vld [vmem:[#allocation12 + $0x240] sm:$0xff]
    %v1935 = vld [vmem:[#allocation12 + $0x248] sm:$0xff]
    %v1936 = vld [vmem:[#allocation12 + $0x250] sm:$0xff]
    %v1937 = vld [vmem:[#allocation12 + $0x258] sm:$0xff]
    %v1938 = vld [vmem:[#allocation12 + $0x260] sm:$0xff]
    %v1939 = vld [vmem:[#allocation12 + $0x268] sm:$0xff]
    %v1940 = vld [vmem:[#allocation12 + $0x270] sm:$0xff]
    %v1941 = vld [vmem:[#allocation12 + $0x278] sm:$0xff]
    %v1942 = vld [vmem:[#allocation12 + $0x280] sm:$0xff]
    %v1943 = vld [vmem:[#allocation12 + $0x288] sm:$0xff]
    %v1944 = vld [vmem:[#allocation12 + $0x290] sm:$0xff]
    %v1945 = vld [vmem:[#allocation12 + $0x298] sm:$0xff]
    %v1946 = vld [vmem:[#allocation12 + $0x2a0] sm:$0xff]
    %v1947 = vld [vmem:[#allocation12 + $0x2a8] sm:$0xff]
    %v1948 = vld [vmem:[#allocation12 + $0x2b0] sm:$0xff]
    %v1949 = vld [vmem:[#allocation12 + $0x2b8] sm:$0xff]
    %v1950 = vld [vmem:[#allocation12 + $0x2c0] sm:$0xff]
    %v1951 = vld [vmem:[#allocation12 + $0x2c8] sm:$0xff]
    %v1952 = vld [vmem:[#allocation12 + $0x2d0] sm:$0xff]
    %v1953 = vld [vmem:[#allocation12 + $0x2d8] sm:$0xff]
    %v1954 = vld [vmem:[#allocation12 + $0x2e0] sm:$0xff]
    %v1955 = vld [vmem:[#allocation12 + $0x2e8] sm:$0xff]
    %v1956 = vld [vmem:[#allocation12 + $0x2f0] sm:$0xff]
    %v1957 = vld [vmem:[#allocation12 + $0x2f8] sm:$0xff]
    %v1958 = vld [vmem:[#allocation12 + $0x300] sm:$0xff]
    %v1959 = vld [vmem:[#allocation12 + $0x308] sm:$0xff]
    %v1960 = vld [vmem:[#allocation12 + $0x310] sm:$0xff]
    %v1961 = vld [vmem:[#allocation12 + $0x318] sm:$0xff]
    %v1962 = vld [vmem:[#allocation12 + $0x320] sm:$0xff]
    %v1963 = vld [vmem:[#allocation12 + $0x328] sm:$0xff]
    %v1964 = vld [vmem:[#allocation12 + $0x330] sm:$0xff]
    %v1965 = vld [vmem:[#allocation12 + $0x338] sm:$0xff]
    %v1966 = vld [vmem:[#allocation12 + $0x340] sm:$0xff]
    %v1967 = vld [vmem:[#allocation12 + $0x348] sm:$0xff]
    %v1968 = vld [vmem:[#allocation12 + $0x350] sm:$0xff]
    %v1969 = vld [vmem:[#allocation12 + $0x358] sm:$0xff]
    %v1970 = vld [vmem:[#allocation12 + $0x360] sm:$0xff]
    %v1971 = vld [vmem:[#allocation12 + $0x368] sm:$0xff]
    %v1972 = vld [vmem:[#allocation12 + $0x370] sm:$0xff]
    %v1973 = vld [vmem:[#allocation12 + $0x378] sm:$0xff]
    %v1974 = vld [vmem:[#allocation12 + $0x380] sm:$0xff]
    %v1975 = vld [vmem:[#allocation12 + $0x388] sm:$0xff]
    %v1976 = vld [vmem:[#allocation12 + $0x390] sm:$0xff]
    %v1977 = vld [vmem:[#allocation12 + $0x398] sm:$0xff]
    %v1978 = vld [vmem:[#allocation12 + $0x3a0] sm:$0xff]
    %v1979 = vld [vmem:[#allocation12 + $0x3a8] sm:$0xff]
    %v1980 = vld [vmem:[#allocation12 + $0x3b0] sm:$0xff]
    %v1981 = vld [vmem:[#allocation12 + $0x3b8] sm:$0xff]
    %v1982 = vld [vmem:[#allocation12 + $0x3c0] sm:$0xff]
    %v1983 = vld [vmem:[#allocation12 + $0x3c8] sm:$0xff]
    %v1984 = vld [vmem:[#allocation12 + $0x3d0] sm:$0xff]
    %v1985 = vld [vmem:[#allocation12 + $0x3d8] sm:$0xff]
    %v1986 = vld [vmem:[#allocation12 + $0x3e0] sm:$0xff]
    %v1987 = vld [vmem:[#allocation12 + $0x3e8] sm:$0xff]
    %v1988 = vld [vmem:[#allocation12 + $0x3f0] sm:$0xff]
    %v1989 = vld [vmem:[#allocation12 + $0x3f8] sm:$0xff]
    %v1990 = vld [vmem:[%s5] sm:$0xf]
    %v1992 = vlaneseq
    %v1993 = vshrl.u32 %v1992, 7
    %v1994 = vsub.s32 0, %v1993
    %v1995 = vrot.slane %v1990, %v1994
    %v1996 = vlaneseq
    %v1997 = vshrl.u32 %v1996, 7
    %v1998 = vsub.s32 1, %v1997
    %v1999 = vrot.slane %v1990, %v1998
    %v2000 = vlaneseq
    %v2001 = vshrl.u32 %v2000, 7
    %v2002 = vsub.s32 2, %v2001
    %v2003 = vrot.slane %v1990, %v2002
    %v2004 = vlaneseq
    %v2005 = vshrl.u32 %v2004, 7
    %v2006 = vsub.s32 3, %v2005
    %v2007 = vrot.slane %v1990, %v2006
    %2012 = vmatprep.subr.mxu0 %v1863
    %2013 = vmatpush1.msra.mxu0 %v1862
    %2014 = vmatprep.subr.mxu0 %v1867
    %2015 = vmatpush1.msra.mxu0 %v1866
    %2016 = vmatprep.subr.mxu0 %v1871
    %2017 = vmatpush1.msra.mxu0 %v1870
    %2018 = vmatprep.subr.mxu0 %v1875
    %2019 = vmatpush1.msra.mxu0 %v1874
    %2020 = vmatprep.subr.mxu0 %v1879
    %2021 = vmatpush1.msra.mxu0 %v1878
    %2022 = vmatprep.subr.mxu0 %v1883
    %2023 = vmatpush1.msra.mxu0 %v1882
    %2024 = vmatprep.subr.mxu0 %v1887
    %2025 = vmatpush1.msra.mxu0 %v1886
    %2026 = vmatprep.subr.mxu0 %v1891
    %2027 = vmatpush1.msra.mxu0 %v1890
    %2028 = vmatprep.subr.mxu0 %v1895
    %2029 = vmatpush1.msra.mxu0 %v1894
    %2030 = vmatprep.subr.mxu0 %v1899
    %2031 = vmatpush1.msra.mxu0 %v1898
    %2032 = vmatprep.subr.mxu0 %v1903
    %2033 = vmatpush1.msra.mxu0 %v1902
    %2034 = vmatprep.subr.mxu0 %v1907
    %2035 = vmatpush1.msra.mxu0 %v1906
    %2036 = vmatprep.subr.mxu0 %v1911
    %2037 = vmatpush1.msra.mxu0 %v1910
    %2038 = vmatprep.subr.mxu0 %v1915
    %2039 = vmatpush1.msra.mxu0 %v1914
    %2040 = vmatprep.subr.mxu0 %v1919
    %2041 = vmatpush1.msra.mxu0 %v1918
    %2042 = vmatprep.subr.mxu0 %v1923
    %2043 = vmatpush1.msra.mxu0 %v1922
    %2044 = vmatprep.subr.mxu0 %v1927
    %2045 = vmatpush1.msra.mxu0 %v1926
    %2046 = vmatprep.subr.mxu0 %v1931
    %2047 = vmatpush1.msra.mxu0 %v1930
    %2048 = vmatprep.subr.mxu0 %v1935
    %2049 = vmatpush1.msra.mxu0 %v1934
    %2050 = vmatprep.subr.mxu0 %v1939
    %2051 = vmatpush1.msra.mxu0 %v1938
    %2052 = vmatprep.subr.mxu0 %v1943
    %2053 = vmatpush1.msra.mxu0 %v1942
    %2054 = vmatprep.subr.mxu0 %v1947
    %2055 = vmatpush1.msra.mxu0 %v1946
    %2056 = vmatprep.subr.mxu0 %v1951
    %2057 = vmatpush1.msra.mxu0 %v1950
    %2058 = vmatprep.subr.mxu0 %v1955
    %2059 = vmatpush1.msra.mxu0 %v1954
    %2060 = vmatprep.subr.mxu0 %v1959
    %2061 = vmatpush1.msra.mxu0 %v1958
    %2062 = vmatprep.subr.mxu0 %v1963
    %2063 = vmatpush1.msra.mxu0 %v1962
    %2064 = vmatprep.subr.mxu0 %v1967
    %2065 = vmatpush1.msra.mxu0 %v1966
    %2066 = vmatprep.subr.mxu0 %v1971
    %2067 = vmatpush1.msra.mxu0 %v1970
    %2068 = vmatprep.subr.mxu0 %v1975
    %2069 = vmatpush1.msra.mxu0 %v1974
    %2070 = vmatprep.subr.mxu0 %v1979
    %2071 = vmatpush1.msra.mxu0 %v1978
    %2072 = vmatprep.subr.mxu0 %v1983
    %2073 = vmatpush1.msra.mxu0 %v1982
    %2074 = vmatprep.subr.mxu0 %v1987
    %2075 = vmatpush1.msra.mxu0 %v1986
    %2076 = vmatprep.mubr.f32.mxu0 %v1861
    %2077 = vmatmul.mubr.f32.gmra.mrb[0].mxu0 %v1858
    %v2078 = vpop.f32.mrb[0].mxu0
    %v2079 = vadd.f32 %v1995, %v2078
    %v2080 = vpop.f32.mrb[0].mxu0
    %v2081 = vadd.f32 %v1999, %v2080
    %2082 = vdwg.mxu0
    %2083 = vmatprep.subr.mxu0 %v1865
    %2084 = vmatpush1.msra.mxu0 %v1864
    %2085 = vmatprep.subr.mxu0 %v1869
    %2086 = vmatpush1.msra.mxu0 %v1868
    %2087 = vmatprep.subr.mxu0 %v1873
    %2088 = vmatpush1.msra.mxu0 %v1872
    %2089 = vmatprep.subr.mxu0 %v1877
    %2090 = vmatpush1.msra.mxu0 %v1876
    %2091 = vmatprep.subr.mxu0 %v1881
    %2092 = vmatpush1.msra.mxu0 %v1880
    %2093 = vmatprep.subr.mxu0 %v1885
    %2094 = vmatpush1.msra.mxu0 %v1884
    %2095 = vmatprep.subr.mxu0 %v1889
    %2096 = vmatpush1.msra.mxu0 %v1888
    %2097 = vmatprep.subr.mxu0 %v1893
    %2098 = vmatpush1.msra.mxu0 %v1892
    %2099 = vmatprep.subr.mxu0 %v1897
    %2100 = vmatpush1.msra.mxu0 %v1896
    %2101 = vmatprep.subr.mxu0 %v1901
    %2102 = vmatpush1.msra.mxu0 %v1900
    %2103 = vmatprep.subr.mxu0 %v1905
    %2104 = vmatpush1.msra.mxu0 %v1904
    %2105 = vmatprep.subr.mxu0 %v1909
    %2106 = vmatpush1.msra.mxu0 %v1908
    %2107 = vmatprep.subr.mxu0 %v1913
    %2108 = vmatpush1.msra.mxu0 %v1912
    %2109 = vmatprep.subr.mxu0 %v1917
    %2110 = vmatpush1.msra.mxu0 %v1916
    %2111 = vmatprep.subr.mxu0 %v1921
    %2112 = vmatpush1.msra.mxu0 %v1920
    %2113 = vmatprep.subr.mxu0 %v1925
    %2114 = vmatpush1.msra.mxu0 %v1924
    %2115 = vmatprep.subr.mxu0 %v1929
    %2116 = vmatpush1.msra.mxu0 %v1928
    %2117 = vmatprep.subr.mxu0 %v1933
    %2118 = vmatpush1.msra.mxu0 %v1932
    %2119 = vmatprep.subr.mxu0 %v1937
    %2120 = vmatpush1.msra.mxu0 %v1936
    %2121 = vmatprep.subr.mxu0 %v1941
    %2122 = vmatpush1.msra.mxu0 %v1940
    %2123 = vmatprep.subr.mxu0 %v1945
    %2124 = vmatpush1.msra.mxu0 %v1944
    %2125 = vmatprep.subr.mxu0 %v1949
    %2126 = vmatpush1.msra.mxu0 %v1948
    %2127 = vmatprep.subr.mxu0 %v1953
    %2128 = vmatpush1.msra.mxu0 %v1952
    %2129 = vmatprep.subr.mxu0 %v1957
    %2130 = vmatpush1.msra.mxu0 %v1956
    %2131 = vmatprep.subr.mxu0 %v1961
    %2132 = vmatpush1.msra.mxu0 %v1960
    %2133 = vmatprep.subr.mxu0 %v1965
    %2134 = vmatpush1.msra.mxu0 %v1964
    %2135 = vmatprep.subr.mxu0 %v1969
    %2136 = vmatpush1.msra.mxu0 %v1968
    %2137 = vmatprep.subr.mxu0 %v1973
    %2138 = vmatpush1.msra.mxu0 %v1972
    %2139 = vmatprep.subr.mxu0 %v1977
    %2140 = vmatpush1.msra.mxu0 %v1976
    %2141 = vmatprep.subr.mxu0 %v1981
    %2142 = vmatpush1.msra.mxu0 %v1980
    %2143 = vmatprep.subr.mxu0 %v1985
    %2144 = vmatpush1.msra.mxu0 %v1984
    %2145 = vmatprep.subr.mxu0 %v1989
    %2146 = vmatpush1.msra.mxu0 %v1988
    %2147 = vmatprep.mubr.f32.mxu0 %v1861
    %2148 = vmatmul.mubr.f32.gmra.mrb[0].mxu0 %v1858
    %v2149 = vpop.f32.mrb[0].mxu0
    %v2150 = vadd.f32 %v2003, %v2149
    %v2151 = vpop.f32.mrb[0].mxu0
    %v2152 = vadd.f32 %v2007, %v2151
    %2153 = vdwg.mxu0
    %v2154 = vld [vmem:[%s1024] sm:$0xff]
    %v2155 = vxor.u32 %v2079, 2147483648
    %v2156 = vmul.f32 %v2155, 1.442695
    %v2157 = vpow.pop %v2156
    %v2158 = vadd.f32 %v2157, 1.0
    %v2159 = vrcp.pop %v2158
    %v2160 = vmul.f32 1.0, %v2159
    %v2161 = vxor.u32 %v2081, 2147483648
    %v2162 = vmul.f32 %v2161, 1.442695
    %v2163 = vpow.pop %v2162
    %v2164 = vadd.f32 %v2163, 1.0
    %v2165 = vrcp.pop %v2164
    %v2166 = vmul.f32 1.0, %v2165
    %v2167 = vtanh.pop %v2150
    %v2168 = vxor.u32 %v2152, 2147483648
    %v2169 = vmul.f32 %v2168, 1.442695
    %v2170 = vpow.pop %v2169
    %v2171 = vadd.f32 %v2170, 1.0
    %v2172 = vrcp.pop %v2171
    %v2173 = vmul.f32 1.0, %v2172
    %v2174 = vmul.f32 %v2166, %v2154
    %v2175 = vmul.f32 %v2160, %v2167
    %v2176 = vadd.f32 %v2174, %v2175
    %v2177 = vtanh.pop %v2176
    %v2178 = vmul.f32 %v2173, %v2177
    %2179 = vst [vmem:[%s730] sm:$0xff] %v2178
    %2180 = vst [vmem:[%s1024] sm:$0xff] %v2176
    %s2181 = scalar_lea.vmem [#allocation3], 16
    %2182 = vst [vmem:[%s2181] sm:$0xff] %v2178
    %s2183 = scalar_lea.vmem [#allocation2], 96
    %v2184 = vld [vmem:[%s2183] sm:$0xff]
    %v2185 = vld [vmem:[%s2183 + $0x8] sm:$0xff]
    %v2186 = vld [vmem:[%s2183 + $0x10] sm:$0xff]
    %v2187 = vld [vmem:[%s2183 + $0x18] sm:$0xff]
    %v2188 = vld [vmem:[#allocation4] sm:$0xff]
    %v2189 = vld [vmem:[#allocation11] sm:$0xff]
    %v2190 = vld [vmem:[#allocation11 + $0x8] sm:$0xff]
    %v2191 = vld [vmem:[#allocation11 + $0x10] sm:$0xff]
    %v2192 = vld [vmem:[#allocation11 + $0x18] sm:$0xff]
    %v2193 = vld [vmem:[#allocation11 + $0x20] sm:$0xff]
    %v2194 = vld [vmem:[#allocation11 + $0x28] sm:$0xff]
    %v2195 = vld [vmem:[#allocation11 + $0x30] sm:$0xff]
    %v2196 = vld [vmem:[#allocation11 + $0x38] sm:$0xff]
    %v2197 = vld [vmem:[#allocation11 + $0x40] sm:$0xff]
    %v2198 = vld [vmem:[#allocation11 + $0x48] sm:$0xff]
    %v2199 = vld [vmem:[#allocation11 + $0x50] sm:$0xff]
    %v2200 = vld [vmem:[#allocation11 + $0x58] sm:$0xff]
    %v2201 = vld [vmem:[#allocation11 + $0x60] sm:$0xff]
    %v2202 = vld [vmem:[#allocation11 + $0x68] sm:$0xff]
    %v2203 = vld [vmem:[#allocation11 + $0x70] sm:$0xff]
    %v2204 = vld [vmem:[#allocation11 + $0x78] sm:$0xff]
    %v2205 = vld [vmem:[#allocation11 + $0x80] sm:$0xff]
    %v2206 = vld [vmem:[#allocation11 + $0x88] sm:$0xff]
    %v2207 = vld [vmem:[#allocation11 + $0x90] sm:$0xff]
    %v2208 = vld [vmem:[#allocation11 + $0x98] sm:$0xff]
    %v2209 = vld [vmem:[#allocation11 + $0xa0] sm:$0xff]
    %v2210 = vld [vmem:[#allocation11 + $0xa8] sm:$0xff]
    %v2211 = vld [vmem:[#allocation11 + $0xb0] sm:$0xff]
    %v2212 = vld [vmem:[#allocation11 + $0xb8] sm:$0xff]
    %v2213 = vld [vmem:[#allocation11 + $0xc0] sm:$0xff]
    %v2214 = vld [vmem:[#allocation11 + $0xc8] sm:$0xff]
    %v2215 = vld [vmem:[#allocation11 + $0xd0] sm:$0xff]
    %v2216 = vld [vmem:[#allocation11 + $0xd8] sm:$0xff]
    %v2217 = vld [vmem:[#allocation11 + $0xe0] sm:$0xff]
    %v2218 = vld [vmem:[#allocation11 + $0xe8] sm:$0xff]
    %v2219 = vld [vmem:[#allocation11 + $0xf0] sm:$0xff]
    %v2220 = vld [vmem:[#allocation11 + $0xf8] sm:$0xff]
    %v2221 = vld [vmem:[#allocation11 + $0x100] sm:$0xff]
    %v2222 = vld [vmem:[#allocation11 + $0x108] sm:$0xff]
    %v2223 = vld [vmem:[#allocation11 + $0x110] sm:$0xff]
    %v2224 = vld [vmem:[#allocation11 + $0x118] sm:$0xff]
    %v2225 = vld [vmem:[#allocation11 + $0x120] sm:$0xff]
    %v2226 = vld [vmem:[#allocation11 + $0x128] sm:$0xff]
    %v2227 = vld [vmem:[#allocation11 + $0x130] sm:$0xff]
    %v2228 = vld [vmem:[#allocation11 + $0x138] sm:$0xff]
    %v2229 = vld [vmem:[#allocation11 + $0x140] sm:$0xff]
    %v2230 = vld [vmem:[#allocation11 + $0x148] sm:$0xff]
    %v2231 = vld [vmem:[#allocation11 + $0x150] sm:$0xff]
    %v2232 = vld [vmem:[#allocation11 + $0x158] sm:$0xff]
    %v2233 = vld [vmem:[#allocation11 + $0x160] sm:$0xff]
    %v2234 = vld [vmem:[#allocation11 + $0x168] sm:$0xff]
    %v2235 = vld [vmem:[#allocation11 + $0x170] sm:$0xff]
    %v2236 = vld [vmem:[#allocation11 + $0x178] sm:$0xff]
    %v2237 = vld [vmem:[#allocation11 + $0x180] sm:$0xff]
    %v2238 = vld [vmem:[#allocation11 + $0x188] sm:$0xff]
    %v2239 = vld [vmem:[#allocation11 + $0x190] sm:$0xff]
    %v2240 = vld [vmem:[#allocation11 + $0x198] sm:$0xff]
    %v2241 = vld [vmem:[#allocation11 + $0x1a0] sm:$0xff]
    %v2242 = vld [vmem:[#allocation11 + $0x1a8] sm:$0xff]
    %v2243 = vld [vmem:[#allocation11 + $0x1b0] sm:$0xff]
    %v2244 = vld [vmem:[#allocation11 + $0x1b8] sm:$0xff]
    %v2245 = vld [vmem:[#allocation11 + $0x1c0] sm:$0xff]
    %v2246 = vld [vmem:[#allocation11 + $0x1c8] sm:$0xff]
    %v2247 = vld [vmem:[#allocation11 + $0x1d0] sm:$0xff]
    %v2248 = vld [vmem:[#allocation11 + $0x1d8] sm:$0xff]
    %v2249 = vld [vmem:[#allocation11 + $0x1e0] sm:$0xff]
    %v2250 = vld [vmem:[#allocation11 + $0x1e8] sm:$0xff]
    %v2251 = vld [vmem:[#allocation11 + $0x1f0] sm:$0xff]
    %v2252 = vld [vmem:[#allocation11 + $0x1f8] sm:$0xff]
    %2253 = vmatprep.subr.mxu0 %v2190
    %2254 = vmatpush1.msra.mxu0 %v2189
    %2255 = vmatprep.subr.mxu0 %v2194
    %2256 = vmatpush1.msra.mxu0 %v2193
    %2257 = vmatprep.subr.mxu0 %v2198
    %2258 = vmatpush1.msra.mxu0 %v2197
    %2259 = vmatprep.subr.mxu0 %v2202
    %2260 = vmatpush1.msra.mxu0 %v2201
    %2261 = vmatprep.subr.mxu0 %v2206
    %2262 = vmatpush1.msra.mxu0 %v2205
    %2263 = vmatprep.subr.mxu0 %v2210
    %2264 = vmatpush1.msra.mxu0 %v2209
    %2265 = vmatprep.subr.mxu0 %v2214
    %2266 = vmatpush1.msra.mxu0 %v2213
    %2267 = vmatprep.subr.mxu0 %v2218
    %2268 = vmatpush1.msra.mxu0 %v2217
    %2269 = vmatprep.subr.mxu0 %v2222
    %2270 = vmatpush1.msra.mxu0 %v2221
    %2271 = vmatprep.subr.mxu0 %v2226
    %2272 = vmatpush1.msra.mxu0 %v2225
    %2273 = vmatprep.subr.mxu0 %v2230
    %2274 = vmatpush1.msra.mxu0 %v2229
    %2275 = vmatprep.subr.mxu0 %v2234
    %2276 = vmatpush1.msra.mxu0 %v2233
    %2277 = vmatprep.subr.mxu0 %v2238
    %2278 = vmatpush1.msra.mxu0 %v2237
    %2279 = vmatprep.subr.mxu0 %v2242
    %2280 = vmatpush1.msra.mxu0 %v2241
    %2281 = vmatprep.subr.mxu0 %v2246
    %2282 = vmatpush1.msra.mxu0 %v2245
    %2283 = vmatprep.subr.mxu0 %v2250
    %2284 = vmatpush1.msra.mxu0 %v2249
    %2285 = vmatprep.subr.mxu0 0.0
    %2286 = vmatpush1.msra.mxu0 0.0
    %2287 = vmatprep.subr.mxu0 0.0
    %2288 = vmatpush1.msra.mxu0 0.0
    %2289 = vmatprep.subr.mxu0 0.0
    %2290 = vmatpush1.msra.mxu0 0.0
    %2291 = vmatprep.subr.mxu0 0.0
    %2292 = vmatpush1.msra.mxu0 0.0
    %2293 = vmatprep.subr.mxu0 0.0
    %2294 = vmatpush1.msra.mxu0 0.0
    %2295 = vmatprep.subr.mxu0 0.0
    %2296 = vmatpush1.msra.mxu0 0.0
    %2297 = vmatprep.subr.mxu0 0.0
    %2298 = vmatpush1.msra.mxu0 0.0
    %2299 = vmatprep.subr.mxu0 0.0
    %2300 = vmatpush1.msra.mxu0 0.0
    %2301 = vmatprep.subr.mxu0 0.0
    %2302 = vmatpush1.msra.mxu0 0.0
    %2303 = vmatprep.subr.mxu0 0.0
    %2304 = vmatpush1.msra.mxu0 0.0
    %2305 = vmatprep.subr.mxu0 0.0
    %2306 = vmatpush1.msra.mxu0 0.0
    %2307 = vmatprep.subr.mxu0 0.0
    %2308 = vmatpush1.msra.mxu0 0.0
    %2309 = vmatprep.subr.mxu0 0.0
    %2310 = vmatpush1.msra.mxu0 0.0
    %2311 = vmatprep.subr.mxu0 0.0
    %2312 = vmatpush1.msra.mxu0 0.0
    %2313 = vmatprep.subr.mxu0 0.0
    %2314 = vmatpush1.msra.mxu0 0.0
    %2315 = vmatprep.subr.mxu0 0.0
    %2316 = vmatpush1.msra.mxu0 0.0
    %2317 = vmatprep.mubr.f32.mxu0 0.0
    %2318 = vmatmul.mubr.f32.gmra.mrb[0].mxu0 %v2188
    %v2319 = vpop.f32.mrb[0].mxu0
    %v2320 = vadd.f32 0.0, %v2319
    %v2321 = vpop.f32.mrb[0].mxu0
    %v2322 = vadd.f32 0.0, %v2321
    %2323 = vdwg.mxu0
    %2324 = vmatprep.subr.mxu0 %v2192
    %2325 = vmatpush1.msra.mxu0 %v2191
    %2326 = vmatprep.subr.mxu0 %v2196
    %2327 = vmatpush1.msra.mxu0 %v2195
    %2328 = vmatprep.subr.mxu0 %v2200
    %2329 = vmatpush1.msra.mxu0 %v2199
    %2330 = vmatprep.subr.mxu0 %v2204
    %2331 = vmatpush1.msra.mxu0 %v2203
    %2332 = vmatprep.subr.mxu0 %v2208
    %2333 = vmatpush1.msra.mxu0 %v2207
    %2334 = vmatprep.subr.mxu0 %v2212
    %2335 = vmatpush1.msra.mxu0 %v2211
    %2336 = vmatprep.subr.mxu0 %v2216
    %2337 = vmatpush1.msra.mxu0 %v2215
    %2338 = vmatprep.subr.mxu0 %v2220
    %2339 = vmatpush1.msra.mxu0 %v2219
    %2340 = vmatprep.subr.mxu0 %v2224
    %2341 = vmatpush1.msra.mxu0 %v2223
    %2342 = vmatprep.subr.mxu0 %v2228
    %2343 = vmatpush1.msra.mxu0 %v2227
    %2344 = vmatprep.subr.mxu0 %v2232
    %2345 = vmatpush1.msra.mxu0 %v2231
    %2346 = vmatprep.subr.mxu0 %v2236
    %2347 = vmatpush1.msra.mxu0 %v2235
    %2348 = vmatprep.subr.mxu0 %v2240
    %2349 = vmatpush1.msra.mxu0 %v2239
    %2350 = vmatprep.subr.mxu0 %v2244
    %2351 = vmatpush1.msra.mxu0 %v2243
    %2352 = vmatprep.subr.mxu0 %v2248
    %2353 = vmatpush1.msra.mxu0 %v2247
    %2354 = vmatprep.subr.mxu0 %v2252
    %2355 = vmatpush1.msra.mxu0 %v2251
    %2356 = vmatprep.subr.mxu0 0.0
    %2357 = vmatpush1.msra.mxu0 0.0
    %2358 = vmatprep.subr.mxu0 0.0
    %2359 = vmatpush1.msra.mxu0 0.0
    %2360 = vmatprep.subr.mxu0 0.0
    %2361 = vmatpush1.msra.mxu0 0.0
    %2362 = vmatprep.subr.mxu0 0.0
    %2363 = vmatpush1.msra.mxu0 0.0
    %2364 = vmatprep.subr.mxu0 0.0
    %2365 = vmatpush1.msra.mxu0 0.0
    %2366 = vmatprep.subr.mxu0 0.0
    %2367 = vmatpush1.msra.mxu0 0.0
    %2368 = vmatprep.subr.mxu0 0.0
    %2369 = vmatpush1.msra.mxu0 0.0
    %2370 = vmatprep.subr.mxu0 0.0
    %2371 = vmatpush1.msra.mxu0 0.0
    %2372 = vmatprep.subr.mxu0 0.0
    %2373 = vmatpush1.msra.mxu0 0.0
    %2374 = vmatprep.subr.mxu0 0.0
    %2375 = vmatpush1.msra.mxu0 0.0
    %2376 = vmatprep.subr.mxu0 0.0
    %2377 = vmatpush1.msra.mxu0 0.0
    %2378 = vmatprep.subr.mxu0 0.0
    %2379 = vmatpush1.msra.mxu0 0.0
    %2380 = vmatprep.subr.mxu0 0.0
    %2381 = vmatpush1.msra.mxu0 0.0
    %2382 = vmatprep.subr.mxu0 0.0
    %2383 = vmatpush1.msra.mxu0 0.0
    %2384 = vmatprep.subr.mxu0 0.0
    %2385 = vmatpush1.msra.mxu0 0.0
    %2386 = vmatprep.subr.mxu0 0.0
    %2387 = vmatpush1.msra.mxu0 0.0
    %2388 = vmatprep.mubr.f32.mxu0 0.0
    %2389 = vmatmul.mubr.f32.gmra.mrb[0].mxu0 %v2188
    %v2390 = vpop.f32.mrb[0].mxu0
    %v2391 = vadd.f32 0.0, %v2390
    %v2392 = vpop.f32.mrb[0].mxu0
    %v2393 = vadd.f32 0.0, %v2392
    %2394 = vdwg.mxu0
    %v2395 = vadd.f32 %v2184, %v2320
    %v2396 = vadd.f32 %v2185, %v2322
    %v2397 = vadd.f32 %v2186, %v2391
    %v2398 = vadd.f32 %v2187, %v2393
    %v2399 = vld [vmem:[#allocation5] sm:$0xff]
    %v2400 = vxor.u32 %v2395, 2147483648
    %v2401 = vmul.f32 %v2400, 1.442695
    %v2402 = vpow.pop %v2401
    %v2403 = vadd.f32 %v2402, 1.0
    %v2404 = vrcp.pop %v2403
    %v2405 = vmul.f32 1.0, %v2404
    %v2406 = vxor.u32 %v2396, 2147483648
    %v2407 = vmul.f32 %v2406, 1.442695
    %v2408 = vpow.pop %v2407
    %v2409 = vadd.f32 %v2408, 1.0
    %v2410 = vrcp.pop %v2409
    %v2411 = vmul.f32 1.0, %v2410
    %v2412 = vtanh.pop %v2397
    %v2413 = vxor.u32 %v2398, 2147483648
    %v2414 = vmul.f32 %v2413, 1.442695
    %v2415 = vpow.pop %v2414
    %v2416 = vadd.f32 %v2415, 1.0
    %v2417 = vrcp.pop %v2416
    %v2418 = vmul.f32 1.0, %v2417
    %v2419 = vmul.f32 %v2411, %v2399
    %v2420 = vmul.f32 %v2405, %v2412
    %v2421 = vadd.f32 %v2419, %v2420
    %v2422 = vtanh.pop %v2421
    %v2423 = vmul.f32 %v2418, %v2422
    %2424 = vst [vmem:[#allocation4] sm:$0xff] %v2423
    %2425 = vst [vmem:[#allocation5] sm:$0xff] %v2421
    %v2426 = vld [vmem:[%s730] sm:$0xff]
    %v2427 = vld [vmem:[#allocation12] sm:$0xff]
    %v2428 = vld [vmem:[#allocation12 + $0x8] sm:$0xff]
    %v2429 = vld [vmem:[#allocation12 + $0x10] sm:$0xff]
    %v2430 = vld [vmem:[#allocation12 + $0x18] sm:$0xff]
    %v2431 = vld [vmem:[#allocation12 + $0x20] sm:$0xff]
    %v2432 = vld [vmem:[#allocation12 + $0x28] sm:$0xff]
    %v2433 = vld [vmem:[#allocation12 + $0x30] sm:$0xff]
    %v2434 = vld [vmem:[#allocation12 + $0x38] sm:$0xff]
    %v2435 = vld [vmem:[#allocation12 + $0x40] sm:$0xff]
    %v2436 = vld [vmem:[#allocation12 + $0x48] sm:$0xff]
    %v2437 = vld [vmem:[#allocation12 + $0x50] sm:$0xff]
    %v2438 = vld [vmem:[#allocation12 + $0x58] sm:$0xff]
    %v2439 = vld [vmem:[#allocation12 + $0x60] sm:$0xff]
    %v2440 = vld [vmem:[#allocation12 + $0x68] sm:$0xff]
    %v2441 = vld [vmem:[#allocation12 + $0x70] sm:$0xff]
    %v2442 = vld [vmem:[#allocation12 + $0x78] sm:$0xff]
    %v2443 = vld [vmem:[#allocation12 + $0x80] sm:$0xff]
    %v2444 = vld [vmem:[#allocation12 + $0x88] sm:$0xff]
    %v2445 = vld [vmem:[#allocation12 + $0x90] sm:$0xff]
    %v2446 = vld [vmem:[#allocation12 + $0x98] sm:$0xff]
    %v2447 = vld [vmem:[#allocation12 + $0xa0] sm:$0xff]
    %v2448 = vld [vmem:[#allocation12 + $0xa8] sm:$0xff]
    %v2449 = vld [vmem:[#allocation12 + $0xb0] sm:$0xff]
    %v2450 = vld [vmem:[#allocation12 + $0xb8] sm:$0xff]
    %v2451 = vld [vmem:[#allocation12 + $0xc0] sm:$0xff]
    %v2452 = vld [vmem:[#allocation12 + $0xc8] sm:$0xff]
    %v2453 = vld [vmem:[#allocation12 + $0xd0] sm:$0xff]
    %v2454 = vld [vmem:[#allocation12 + $0xd8] sm:$0xff]
    %v2455 = vld [vmem:[#allocation12 + $0xe0] sm:$0xff]
    %v2456 = vld [vmem:[#allocation12 + $0xe8] sm:$0xff]
    %v2457 = vld [vmem:[#allocation12 + $0xf0] sm:$0xff]
    %v2458 = vld [vmem:[#allocation12 + $0xf8] sm:$0xff]
    %v2459 = vld [vmem:[#allocation12 + $0x100] sm:$0xff]
    %v2460 = vld [vmem:[#allocation12 + $0x108] sm:$0xff]
    %v2461 = vld [vmem:[#allocation12 + $0x110] sm:$0xff]
    %v2462 = vld [vmem:[#allocation12 + $0x118] sm:$0xff]
    %v2463 = vld [vmem:[#allocation12 + $0x120] sm:$0xff]
    %v2464 = vld [vmem:[#allocation12 + $0x128] sm:$0xff]
    %v2465 = vld [vmem:[#allocation12 + $0x130] sm:$0xff]
    %v2466 = vld [vmem:[#allocation12 + $0x138] sm:$0xff]
    %v2467 = vld [vmem:[#allocation12 + $0x140] sm:$0xff]
    %v2468 = vld [vmem:[#allocation12 + $0x148] sm:$0xff]
    %v2469 = vld [vmem:[#allocation12 + $0x150] sm:$0xff]
    %v2470 = vld [vmem:[#allocation12 + $0x158] sm:$0xff]
    %v2471 = vld [vmem:[#allocation12 + $0x160] sm:$0xff]
    %v2472 = vld [vmem:[#allocation12 + $0x168] sm:$0xff]
    %v2473 = vld [vmem:[#allocation12 + $0x170] sm:$0xff]
    %v2474 = vld [vmem:[#allocation12 + $0x178] sm:$0xff]
    %v2475 = vld [vmem:[#allocation12 + $0x180] sm:$0xff]
    %v2476 = vld [vmem:[#allocation12 + $0x188] sm:$0xff]
    %v2477 = vld [vmem:[#allocation12 + $0x190] sm:$0xff]
    %v2478 = vld [vmem:[#allocation12 + $0x198] sm:$0xff]
    %v2479 = vld [vmem:[#allocation12 + $0x1a0] sm:$0xff]
    %v2480 = vld [vmem:[#allocation12 + $0x1a8] sm:$0xff]
    %v2481 = vld [vmem:[#allocation12 + $0x1b0] sm:$0xff]
    %v2482 = vld [vmem:[#allocation12 + $0x1b8] sm:$0xff]
    %v2483 = vld [vmem:[#allocation12 + $0x1c0] sm:$0xff]
    %v2484 = vld [vmem:[#allocation12 + $0x1c8] sm:$0xff]
    %v2485 = vld [vmem:[#allocation12 + $0x1d0] sm:$0xff]
    %v2486 = vld [vmem:[#allocation12 + $0x1d8] sm:$0xff]
    %v2487 = vld [vmem:[#allocation12 + $0x1e0] sm:$0xff]
    %v2488 = vld [vmem:[#allocation12 + $0x1e8] sm:$0xff]
    %v2489 = vld [vmem:[#allocation12 + $0x1f0] sm:$0xff]
    %v2490 = vld [vmem:[#allocation12 + $0x1f8] sm:$0xff]
    %v2491 = vld [vmem:[#allocation12 + $0x200] sm:$0xff]
    %v2492 = vld [vmem:[#allocation12 + $0x208] sm:$0xff]
    %v2493 = vld [vmem:[#allocation12 + $0x210] sm:$0xff]
    %v2494 = vld [vmem:[#allocation12 + $0x218] sm:$0xff]
    %v2495 = vld [vmem:[#allocation12 + $0x220] sm:$0xff]
    %v2496 = vld [vmem:[#allocation12 + $0x228] sm:$0xff]
    %v2497 = vld [vmem:[#allocation12 + $0x230] sm:$0xff]
    %v2498 = vld [vmem:[#allocation12 + $0x238] sm:$0xff]
    %v2499 = vld [vmem:[#allocation12 + $0x240] sm:$0xff]
    %v2500 = vld [vmem:[#allocation12 + $0x248] sm:$0xff]
    %v2501 = vld [vmem:[#allocation12 + $0x250] sm:$0xff]
    %v2502 = vld [vmem:[#allocation12 + $0x258] sm:$0xff]
    %v2503 = vld [vmem:[#allocation12 + $0x260] sm:$0xff]
    %v2504 = vld [vmem:[#allocation12 + $0x268] sm:$0xff]
    %v2505 = vld [vmem:[#allocation12 + $0x270] sm:$0xff]
    %v2506 = vld [vmem:[#allocation12 + $0x278] sm:$0xff]
    %v2507 = vld [vmem:[#allocation12 + $0x280] sm:$0xff]
    %v2508 = vld [vmem:[#allocation12 + $0x288] sm:$0xff]
    %v2509 = vld [vmem:[#allocation12 + $0x290] sm:$0xff]
    %v2510 = vld [vmem:[#allocation12 + $0x298] sm:$0xff]
    %v2511 = vld [vmem:[#allocation12 + $0x2a0] sm:$0xff]
    %v2512 = vld [vmem:[#allocation12 + $0x2a8] sm:$0xff]
    %v2513 = vld [vmem:[#allocation12 + $0x2b0] sm:$0xff]
    %v2514 = vld [vmem:[#allocation12 + $0x2b8] sm:$0xff]
    %v2515 = vld [vmem:[#allocation12 + $0x2c0] sm:$0xff]
    %v2516 = vld [vmem:[#allocation12 + $0x2c8] sm:$0xff]
    %v2517 = vld [vmem:[#allocation12 + $0x2d0] sm:$0xff]
    %v2518 = vld [vmem:[#allocation12 + $0x2d8] sm:$0xff]
    %v2519 = vld [vmem:[#allocation12 + $0x2e0] sm:$0xff]
    %v2520 = vld [vmem:[#allocation12 + $0x2e8] sm:$0xff]
    %v2521 = vld [vmem:[#allocation12 + $0x2f0] sm:$0xff]
    %v2522 = vld [vmem:[#allocation12 + $0x2f8] sm:$0xff]
    %v2523 = vld [vmem:[#allocation12 + $0x300] sm:$0xff]
    %v2524 = vld [vmem:[#allocation12 + $0x308] sm:$0xff]
    %v2525 = vld [vmem:[#allocation12 + $0x310] sm:$0xff]
    %v2526 = vld [vmem:[#allocation12 + $0x318] sm:$0xff]
    %v2527 = vld [vmem:[#allocation12 + $0x320] sm:$0xff]
    %v2528 = vld [vmem:[#allocation12 + $0x328] sm:$0xff]
    %v2529 = vld [vmem:[#allocation12 + $0x330] sm:$0xff]
    %v2530 = vld [vmem:[#allocation12 + $0x338] sm:$0xff]
    %v2531 = vld [vmem:[#allocation12 + $0x340] sm:$0xff]
    %v2532 = vld [vmem:[#allocation12 + $0x348] sm:$0xff]
    %v2533 = vld [vmem:[#allocation12 + $0x350] sm:$0xff]
    %v2534 = vld [vmem:[#allocation12 + $0x358] sm:$0xff]
    %v2535 = vld [vmem:[#allocation12 + $0x360] sm:$0xff]
    %v2536 = vld [vmem:[#allocation12 + $0x368] sm:$0xff]
    %v2537 = vld [vmem:[#allocation12 + $0x370] sm:$0xff]
    %v2538 = vld [vmem:[#allocation12 + $0x378] sm:$0xff]
    %v2539 = vld [vmem:[#allocation12 + $0x380] sm:$0xff]
    %v2540 = vld [vmem:[#allocation12 + $0x388] sm:$0xff]
    %v2541 = vld [vmem:[#allocation12 + $0x390] sm:$0xff]
    %v2542 = vld [vmem:[#allocation12 + $0x398] sm:$0xff]
    %v2543 = vld [vmem:[#allocation12 + $0x3a0] sm:$0xff]
    %v2544 = vld [vmem:[#allocation12 + $0x3a8] sm:$0xff]
    %v2545 = vld [vmem:[#allocation12 + $0x3b0] sm:$0xff]
    %v2546 = vld [vmem:[#allocation12 + $0x3b8] sm:$0xff]
    %v2547 = vld [vmem:[#allocation12 + $0x3c0] sm:$0xff]
    %v2548 = vld [vmem:[#allocation12 + $0x3c8] sm:$0xff]
    %v2549 = vld [vmem:[#allocation12 + $0x3d0] sm:$0xff]
    %v2550 = vld [vmem:[#allocation12 + $0x3d8] sm:$0xff]
    %v2551 = vld [vmem:[#allocation12 + $0x3e0] sm:$0xff]
    %v2552 = vld [vmem:[#allocation12 + $0x3e8] sm:$0xff]
    %v2553 = vld [vmem:[#allocation12 + $0x3f0] sm:$0xff]
    %v2554 = vld [vmem:[#allocation12 + $0x3f8] sm:$0xff]
    %v2555 = vld [vmem:[%s5] sm:$0xf]
    %v2557 = vlaneseq
    %v2558 = vshrl.u32 %v2557, 7
    %v2559 = vsub.s32 0, %v2558
    %v2560 = vrot.slane %v2555, %v2559
    %v2561 = vlaneseq
    %v2562 = vshrl.u32 %v2561, 7
    %v2563 = vsub.s32 1, %v2562
    %v2564 = vrot.slane %v2555, %v2563
    %v2565 = vlaneseq
    %v2566 = vshrl.u32 %v2565, 7
    %v2567 = vsub.s32 2, %v2566
    %v2568 = vrot.slane %v2555, %v2567
    %v2569 = vlaneseq
    %v2570 = vshrl.u32 %v2569, 7
    %v2571 = vsub.s32 3, %v2570
    %v2572 = vrot.slane %v2555, %v2571
    %2577 = vmatprep.subr.mxu0 %v2428
    %2578 = vmatpush1.msra.mxu0 %v2427
    %2579 = vmatprep.subr.mxu0 %v2432
    %2580 = vmatpush1.msra.mxu0 %v2431
    %2581 = vmatprep.subr.mxu0 %v2436
    %2582 = vmatpush1.msra.mxu0 %v2435
    %2583 = vmatprep.subr.mxu0 %v2440
    %2584 = vmatpush1.msra.mxu0 %v2439
    %2585 = vmatprep.subr.mxu0 %v2444
    %2586 = vmatpush1.msra.mxu0 %v2443
    %2587 = vmatprep.subr.mxu0 %v2448
    %2588 = vmatpush1.msra.mxu0 %v2447
    %2589 = vmatprep.subr.mxu0 %v2452
    %2590 = vmatpush1.msra.mxu0 %v2451
    %2591 = vmatprep.subr.mxu0 %v2456
    %2592 = vmatpush1.msra.mxu0 %v2455
    %2593 = vmatprep.subr.mxu0 %v2460
    %2594 = vmatpush1.msra.mxu0 %v2459
    %2595 = vmatprep.subr.mxu0 %v2464
    %2596 = vmatpush1.msra.mxu0 %v2463
    %2597 = vmatprep.subr.mxu0 %v2468
    %2598 = vmatpush1.msra.mxu0 %v2467
    %2599 = vmatprep.subr.mxu0 %v2472
    %2600 = vmatpush1.msra.mxu0 %v2471
    %2601 = vmatprep.subr.mxu0 %v2476
    %2602 = vmatpush1.msra.mxu0 %v2475
    %2603 = vmatprep.subr.mxu0 %v2480
    %2604 = vmatpush1.msra.mxu0 %v2479
    %2605 = vmatprep.subr.mxu0 %v2484
    %2606 = vmatpush1.msra.mxu0 %v2483
    %2607 = vmatprep.subr.mxu0 %v2488
    %2608 = vmatpush1.msra.mxu0 %v2487
    %2609 = vmatprep.subr.mxu0 %v2492
    %2610 = vmatpush1.msra.mxu0 %v2491
    %2611 = vmatprep.subr.mxu0 %v2496
    %2612 = vmatpush1.msra.mxu0 %v2495
    %2613 = vmatprep.subr.mxu0 %v2500
    %2614 = vmatpush1.msra.mxu0 %v2499
    %2615 = vmatprep.subr.mxu0 %v2504
    %2616 = vmatpush1.msra.mxu0 %v2503
    %2617 = vmatprep.subr.mxu0 %v2508
    %2618 = vmatpush1.msra.mxu0 %v2507
    %2619 = vmatprep.subr.mxu0 %v2512
    %2620 = vmatpush1.msra.mxu0 %v2511
    %2621 = vmatprep.subr.mxu0 %v2516
    %2622 = vmatpush1.msra.mxu0 %v2515
    %2623 = vmatprep.subr.mxu0 %v2520
    %2624 = vmatpush1.msra.mxu0 %v2519
    %2625 = vmatprep.subr.mxu0 %v2524
    %2626 = vmatpush1.msra.mxu0 %v2523
    %2627 = vmatprep.subr.mxu0 %v2528
    %2628 = vmatpush1.msra.mxu0 %v2527
    %2629 = vmatprep.subr.mxu0 %v2532
    %2630 = vmatpush1.msra.mxu0 %v2531
    %2631 = vmatprep.subr.mxu0 %v2536
    %2632 = vmatpush1.msra.mxu0 %v2535
    %2633 = vmatprep.subr.mxu0 %v2540
    %2634 = vmatpush1.msra.mxu0 %v2539
    %2635 = vmatprep.subr.mxu0 %v2544
    %2636 = vmatpush1.msra.mxu0 %v2543
    %2637 = vmatprep.subr.mxu0 %v2548
    %2638 = vmatpush1.msra.mxu0 %v2547
    %2639 = vmatprep.subr.mxu0 %v2552
    %2640 = vmatpush1.msra.mxu0 %v2551
    %2641 = vmatprep.mubr.f32.mxu0 %v2426
    %2642 = vmatmul.mubr.f32.gmra.mrb[0].mxu0 %v2423
    %v2643 = vpop.f32.mrb[0].mxu0
    %v2644 = vadd.f32 %v2560, %v2643
    %v2645 = vpop.f32.mrb[0].mxu0
    %v2646 = vadd.f32 %v2564, %v2645
    %2647 = vdwg.mxu0
    %2648 = vmatprep.subr.mxu0 %v2430
    %2649 = vmatpush1.msra.mxu0 %v2429
    %2650 = vmatprep.subr.mxu0 %v2434
    %2651 = vmatpush1.msra.mxu0 %v2433
    %2652 = vmatprep.subr.mxu0 %v2438
    %2653 = vmatpush1.msra.mxu0 %v2437
    %2654 = vmatprep.subr.mxu0 %v2442
    %2655 = vmatpush1.msra.mxu0 %v2441
    %2656 = vmatprep.subr.mxu0 %v2446
    %2657 = vmatpush1.msra.mxu0 %v2445
    %2658 = vmatprep.subr.mxu0 %v2450
    %2659 = vmatpush1.msra.mxu0 %v2449
    %2660 = vmatprep.subr.mxu0 %v2454
    %2661 = vmatpush1.msra.mxu0 %v2453
    %2662 = vmatprep.subr.mxu0 %v2458
    %2663 = vmatpush1.msra.mxu0 %v2457
    %2664 = vmatprep.subr.mxu0 %v2462
    %2665 = vmatpush1.msra.mxu0 %v2461
    %2666 = vmatprep.subr.mxu0 %v2466
    %2667 = vmatpush1.msra.mxu0 %v2465
    %2668 = vmatprep.subr.mxu0 %v2470
    %2669 = vmatpush1.msra.mxu0 %v2469
    %2670 = vmatprep.subr.mxu0 %v2474
    %2671 = vmatpush1.msra.mxu0 %v2473
    %2672 = vmatprep.subr.mxu0 %v2478
    %2673 = vmatpush1.msra.mxu0 %v2477
    %2674 = vmatprep.subr.mxu0 %v2482
    %2675 = vmatpush1.msra.mxu0 %v2481
    %2676 = vmatprep.subr.mxu0 %v2486
    %2677 = vmatpush1.msra.mxu0 %v2485
    %2678 = vmatprep.subr.mxu0 %v2490
    %2679 = vmatpush1.msra.mxu0 %v2489
    %2680 = vmatprep.subr.mxu0 %v2494
    %2681 = vmatpush1.msra.mxu0 %v2493
    %2682 = vmatprep.subr.mxu0 %v2498
    %2683 = vmatpush1.msra.mxu0 %v2497
    %2684 = vmatprep.subr.mxu0 %v2502
    %2685 = vmatpush1.msra.mxu0 %v2501
    %2686 = vmatprep.subr.mxu0 %v2506
    %2687 = vmatpush1.msra.mxu0 %v2505
    %2688 = vmatprep.subr.mxu0 %v2510
    %2689 = vmatpush1.msra.mxu0 %v2509
    %2690 = vmatprep.subr.mxu0 %v2514
    %2691 = vmatpush1.msra.mxu0 %v2513
    %2692 = vmatprep.subr.mxu0 %v2518
    %2693 = vmatpush1.msra.mxu0 %v2517
    %2694 = vmatprep.subr.mxu0 %v2522
    %2695 = vmatpush1.msra.mxu0 %v2521
    %2696 = vmatprep.subr.mxu0 %v2526
    %2697 = vmatpush1.msra.mxu0 %v2525
    %2698 = vmatprep.subr.mxu0 %v2530
    %2699 = vmatpush1.msra.mxu0 %v2529
    %2700 = vmatprep.subr.mxu0 %v2534
    %2701 = vmatpush1.msra.mxu0 %v2533
    %2702 = vmatprep.subr.mxu0 %v2538
    %2703 = vmatpush1.msra.mxu0 %v2537
    %2704 = vmatprep.subr.mxu0 %v2542
    %2705 = vmatpush1.msra.mxu0 %v2541
    %2706 = vmatprep.subr.mxu0 %v2546
    %2707 = vmatpush1.msra.mxu0 %v2545
    %2708 = vmatprep.subr.mxu0 %v2550
    %2709 = vmatpush1.msra.mxu0 %v2549
    %2710 = vmatprep.subr.mxu0 %v2554
    %2711 = vmatpush1.msra.mxu0 %v2553
    %2712 = vmatprep.mubr.f32.mxu0 %v2426
    %2713 = vmatmul.mubr.f32.gmra.mrb[0].mxu0 %v2423
    %v2714 = vpop.f32.mrb[0].mxu0
    %v2715 = vadd.f32 %v2568, %v2714
    %v2716 = vpop.f32.mrb[0].mxu0
    %v2717 = vadd.f32 %v2572, %v2716
    %2718 = vdwg.mxu0
    %v2719 = vld [vmem:[%s1024] sm:$0xff]
    %v2720 = vxor.u32 %v2644, 2147483648
    %v2721 = vmul.f32 %v2720, 1.442695
    %v2722 = vpow.pop %v2721
    %v2723 = vadd.f32 %v2722, 1.0
    %v2724 = vrcp.pop %v2723
    %v2725 = vmul.f32 1.0, %v2724
    %v2726 = vxor.u32 %v2646, 2147483648
    %v2727 = vmul.f32 %v2726, 1.442695
    %v2728 = vpow.pop %v2727
    %v2729 = vadd.f32 %v2728, 1.0
    %v2730 = vrcp.pop %v2729
    %v2731 = vmul.f32 1.0, %v2730
    %v2732 = vtanh.pop %v2715
    %v2733 = vxor.u32 %v2717, 2147483648
    %v2734 = vmul.f32 %v2733, 1.442695
    %v2735 = vpow.pop %v2734
    %v2736 = vadd.f32 %v2735, 1.0
    %v2737 = vrcp.pop %v2736
    %v2738 = vmul.f32 1.0, %v2737
    %v2739 = vmul.f32 %v2731, %v2719
    %v2740 = vmul.f32 %v2725, %v2732
    %v2741 = vadd.f32 %v2739, %v2740
    %v2742 = vtanh.pop %v2741
    %v2743 = vmul.f32 %v2738, %v2742
    %2744 = vst [vmem:[%s730] sm:$0xff] %v2743
    %2745 = vst [vmem:[%s1024] sm:$0xff] %v2741
    %s2746 = scalar_lea.vmem [#allocation3], 24
    %2747 = vst [vmem:[%s2746] sm:$0xff] %v2743
    %s2748 = scalar_lea.vmem [#allocation2], 128
    %v2749 = vld [vmem:[%s2748] sm:$0xff]
    %v2750 = vld [vmem:[%s2748 + $0x8] sm:$0xff]
    %v2751 = vld [vmem:[%s2748 + $0x10] sm:$0xff]
    %v2752 = vld [vmem:[%s2748 + $0x18] sm:$0xff]
    %v2753 = vld [vmem:[#allocation4] sm:$0xff]
    %v2754 = vld [vmem:[#allocation11] sm:$0xff]
    %v2755 = vld [vmem:[#allocation11 + $0x8] sm:$0xff]
    %v2756 = vld [vmem:[#allocation11 + $0x10] sm:$0xff]
    %v2757 = vld [vmem:[#allocation11 + $0x18] sm:$0xff]
    %v2758 = vld [vmem:[#allocation11 + $0x20] sm:$0xff]
    %v2759 = vld [vmem:[#allocation11 + $0x28] sm:$0xff]
    %v2760 = vld [vmem:[#allocation11 + $0x30] sm:$0xff]
    %v2761 = vld [vmem:[#allocation11 + $0x38] sm:$0xff]
    %v2762 = vld [vmem:[#allocation11 + $0x40] sm:$0xff]
    %v2763 = vld [vmem:[#allocation11 + $0x48] sm:$0xff]
    %v2764 = vld [vmem:[#allocation11 + $0x50] sm:$0xff]
    %v2765 = vld [vmem:[#allocation11 + $0x58] sm:$0xff]
    %v2766 = vld [vmem:[#allocation11 + $0x60] sm:$0xff]
    %v2767 = vld [vmem:[#allocation11 + $0x68] sm:$0xff]
    %v2768 = vld [vmem:[#allocation11 + $0x70] sm:$0xff]
    %v2769 = vld [vmem:[#allocation11 + $0x78] sm:$0xff]
    %v2770 = vld [vmem:[#allocation11 + $0x80] sm:$0xff]
    %v2771 = vld [vmem:[#allocation11 + $0x88] sm:$0xff]
    %v2772 = vld [vmem:[#allocation11 + $0x90] sm:$0xff]
    %v2773 = vld [vmem:[#allocation11 + $0x98] sm:$0xff]
    %v2774 = vld [vmem:[#allocation11 + $0xa0] sm:$0xff]
    %v2775 = vld [vmem:[#allocation11 + $0xa8] sm:$0xff]
    %v2776 = vld [vmem:[#allocation11 + $0xb0] sm:$0xff]
    %v2777 = vld [vmem:[#allocation11 + $0xb8] sm:$0xff]
    %v2778 = vld [vmem:[#allocation11 + $0xc0] sm:$0xff]
    %v2779 = vld [vmem:[#allocation11 + $0xc8] sm:$0xff]
    %v2780 = vld [vmem:[#allocation11 + $0xd0] sm:$0xff]
    %v2781 = vld [vmem:[#allocation11 + $0xd8] sm:$0xff]
    %v2782 = vld [vmem:[#allocation11 + $0xe0] sm:$0xff]
    %v2783 = vld [vmem:[#allocation11 + $0xe8] sm:$0xff]
    %v2784 = vld [vmem:[#allocation11 + $0xf0] sm:$0xff]
    %v2785 = vld [vmem:[#allocation11 + $0xf8] sm:$0xff]
    %v2786 = vld [vmem:[#allocation11 + $0x100] sm:$0xff]
    %v2787 = vld [vmem:[#allocation11 + $0x108] sm:$0xff]
    %v2788 = vld [vmem:[#allocation11 + $0x110] sm:$0xff]
    %v2789 = vld [vmem:[#allocation11 + $0x118] sm:$0xff]
    %v2790 = vld [vmem:[#allocation11 + $0x120] sm:$0xff]
    %v2791 = vld [vmem:[#allocation11 + $0x128] sm:$0xff]
    %v2792 = vld [vmem:[#allocation11 + $0x130] sm:$0xff]
    %v2793 = vld [vmem:[#allocation11 + $0x138] sm:$0xff]
    %v2794 = vld [vmem:[#allocation11 + $0x140] sm:$0xff]
    %v2795 = vld [vmem:[#allocation11 + $0x148] sm:$0xff]
    %v2796 = vld [vmem:[#allocation11 + $0x150] sm:$0xff]
    %v2797 = vld [vmem:[#allocation11 + $0x158] sm:$0xff]
    %v2798 = vld [vmem:[#allocation11 + $0x160] sm:$0xff]
    %v2799 = vld [vmem:[#allocation11 + $0x168] sm:$0xff]
    %v2800 = vld [vmem:[#allocation11 + $0x170] sm:$0xff]
    %v2801 = vld [vmem:[#allocation11 + $0x178] sm:$0xff]
    %v2802 = vld [vmem:[#allocation11 + $0x180] sm:$0xff]
    %v2803 = vld [vmem:[#allocation11 + $0x188] sm:$0xff]
    %v2804 = vld [vmem:[#allocation11 + $0x190] sm:$0xff]
    %v2805 = vld [vmem:[#allocation11 + $0x198] sm:$0xff]
    %v2806 = vld [vmem:[#allocation11 + $0x1a0] sm:$0xff]
    %v2807 = vld [vmem:[#allocation11 + $0x1a8] sm:$0xff]
    %v2808 = vld [vmem:[#allocation11 + $0x1b0] sm:$0xff]
    %v2809 = vld [vmem:[#allocation11 + $0x1b8] sm:$0xff]
    %v2810 = vld [vmem:[#allocation11 + $0x1c0] sm:$0xff]
    %v2811 = vld [vmem:[#allocation11 + $0x1c8] sm:$0xff]
    %v2812 = vld [vmem:[#allocation11 + $0x1d0] sm:$0xff]
    %v2813 = vld [vmem:[#allocation11 + $0x1d8] sm:$0xff]
    %v2814 = vld [vmem:[#allocation11 + $0x1e0] sm:$0xff]
    %v2815 = vld [vmem:[#allocation11 + $0x1e8] sm:$0xff]
    %v2816 = vld [vmem:[#allocation11 + $0x1f0] sm:$0xff]
    %v2817 = vld [vmem:[#allocation11 + $0x1f8] sm:$0xff]
    %2818 = vmatprep.subr.mxu0 %v2755
    %2819 = vmatpush1.msra.mxu0 %v2754
    %2820 = vmatprep.subr.mxu0 %v2759
    %2821 = vmatpush1.msra.mxu0 %v2758
    %2822 = vmatprep.subr.mxu0 %v2763
    %2823 = vmatpush1.msra.mxu0 %v2762
    %2824 = vmatprep.subr.mxu0 %v2767
    %2825 = vmatpush1.msra.mxu0 %v2766
    %2826 = vmatprep.subr.mxu0 %v2771
    %2827 = vmatpush1.msra.mxu0 %v2770
    %2828 = vmatprep.subr.mxu0 %v2775
    %2829 = vmatpush1.msra.mxu0 %v2774
    %2830 = vmatprep.subr.mxu0 %v2779
    %2831 = vmatpush1.msra.mxu0 %v2778
    %2832 = vmatprep.subr.mxu0 %v2783
    %2833 = vmatpush1.msra.mxu0 %v2782
    %2834 = vmatprep.subr.mxu0 %v2787
    %2835 = vmatpush1.msra.mxu0 %v2786
    %2836 = vmatprep.subr.mxu0 %v2791
    %2837 = vmatpush1.msra.mxu0 %v2790
    %2838 = vmatprep.subr.mxu0 %v2795
    %2839 = vmatpush1.msra.mxu0 %v2794
    %2840 = vmatprep.subr.mxu0 %v2799
    %2841 = vmatpush1.msra.mxu0 %v2798
    %2842 = vmatprep.subr.mxu0 %v2803
    %2843 = vmatpush1.msra.mxu0 %v2802
    %2844 = vmatprep.subr.mxu0 %v2807
    %2845 = vmatpush1.msra.mxu0 %v2806
    %2846 = vmatprep.subr.mxu0 %v2811
    %2847 = vmatpush1.msra.mxu0 %v2810
    %2848 = vmatprep.subr.mxu0 %v2815
    %2849 = vmatpush1.msra.mxu0 %v2814
    %2850 = vmatprep.subr.mxu0 0.0
    %2851 = vmatpush1.msra.mxu0 0.0
    %2852 = vmatprep.subr.mxu0 0.0
    %2853 = vmatpush1.msra.mxu0 0.0
    %2854 = vmatprep.subr.mxu0 0.0
    %2855 = vmatpush1.msra.mxu0 0.0
    %2856 = vmatprep.subr.mxu0 0.0
    %2857 = vmatpush1.msra.mxu0 0.0
    %2858 = vmatprep.subr.mxu0 0.0
    %2859 = vmatpush1.msra.mxu0 0.0
    %2860 = vmatprep.subr.mxu0 0.0
    %2861 = vmatpush1.msra.mxu0 0.0
    %2862 = vmatprep.subr.mxu0 0.0
    %2863 = vmatpush1.msra.mxu0 0.0
    %2864 = vmatprep.subr.mxu0 0.0
    %2865 = vmatpush1.msra.mxu0 0.0
    %2866 = vmatprep.subr.mxu0 0.0
    %2867 = vmatpush1.msra.mxu0 0.0
    %2868 = vmatprep.subr.mxu0 0.0
    %2869 = vmatpush1.msra.mxu0 0.0
    %2870 = vmatprep.subr.mxu0 0.0
    %2871 = vmatpush1.msra.mxu0 0.0
    %2872 = vmatprep.subr.mxu0 0.0
    %2873 = vmatpush1.msra.mxu0 0.0
    %2874 = vmatprep.subr.mxu0 0.0
    %2875 = vmatpush1.msra.mxu0 0.0
    %2876 = vmatprep.subr.mxu0 0.0
    %2877 = vmatpush1.msra.mxu0 0.0
    %2878 = vmatprep.subr.mxu0 0.0
    %2879 = vmatpush1.msra.mxu0 0.0
    %2880 = vmatprep.subr.mxu0 0.0
    %2881 = vmatpush1.msra.mxu0 0.0
    %2882 = vmatprep.mubr.f32.mxu0 0.0
    %2883 = vmatmul.mubr.f32.gmra.mrb[0].mxu0 %v2753
    %v2884 = vpop.f32.mrb[0].mxu0
    %v2885 = vadd.f32 0.0, %v2884
    %v2886 = vpop.f32.mrb[0].mxu0
    %v2887 = vadd.f32 0.0, %v2886
    %2888 = vdwg.mxu0
    %2889 = vmatprep.subr.mxu0 %v2757
    %2890 = vmatpush1.msra.mxu0 %v2756
    %2891 = vmatprep.subr.mxu0 %v2761
    %2892 = vmatpush1.msra.mxu0 %v2760
    %2893 = vmatprep.subr.mxu0 %v2765
    %2894 = vmatpush1.msra.mxu0 %v2764
    %2895 = vmatprep.subr.mxu0 %v2769
    %2896 = vmatpush1.msra.mxu0 %v2768
    %2897 = vmatprep.subr.mxu0 %v2773
    %2898 = vmatpush1.msra.mxu0 %v2772
    %2899 = vmatprep.subr.mxu0 %v2777
    %2900 = vmatpush1.msra.mxu0 %v2776
    %2901 = vmatprep.subr.mxu0 %v2781
    %2902 = vmatpush1.msra.mxu0 %v2780
    %2903 = vmatprep.subr.mxu0 %v2785
    %2904 = vmatpush1.msra.mxu0 %v2784
    %2905 = vmatprep.subr.mxu0 %v2789
    %2906 = vmatpush1.msra.mxu0 %v2788
    %2907 = vmatprep.subr.mxu0 %v2793
    %2908 = vmatpush1.msra.mxu0 %v2792
    %2909 = vmatprep.subr.mxu0 %v2797
    %2910 = vmatpush1.msra.mxu0 %v2796
    %2911 = vmatprep.subr.mxu0 %v2801
    %2912 = vmatpush1.msra.mxu0 %v2800
    %2913 = vmatprep.subr.mxu0 %v2805
    %2914 = vmatpush1.msra.mxu0 %v2804
    %2915 = vmatprep.subr.mxu0 %v2809
    %2916 = vmatpush1.msra.mxu0 %v2808
    %2917 = vmatprep.subr.mxu0 %v2813
    %2918 = vmatpush1.msra.mxu0 %v2812
    %2919 = vmatprep.subr.mxu0 %v2817
    %2920 = vmatpush1.msra.mxu0 %v2816
    %2921 = vmatprep.subr.mxu0 0.0
    %2922 = vmatpush1.msra.mxu0 0.0
    %2923 = vmatprep.subr.mxu0 0.0
    %2924 = vmatpush1.msra.mxu0 0.0
    %2925 = vmatprep.subr.mxu0 0.0
    %2926 = vmatpush1.msra.mxu0 0.0
    %2927 = vmatprep.subr.mxu0 0.0
    %2928 = vmatpush1.msra.mxu0 0.0
    %2929 = vmatprep.subr.mxu0 0.0
    %2930 = vmatpush1.msra.mxu0 0.0
    %2931 = vmatprep.subr.mxu0 0.0
    %2932 = vmatpush1.msra.mxu0 0.0
    %2933 = vmatprep.subr.mxu0 0.0
    %2934 = vmatpush1.msra.mxu0 0.0
    %2935 = vmatprep.subr.mxu0 0.0
    %2936 = vmatpush1.msra.mxu0 0.0
    %2937 = vmatprep.subr.mxu0 0.0
    %2938 = vmatpush1.msra.mxu0 0.0
    %2939 = vmatprep.subr.mxu0 0.0
    %2940 = vmatpush1.msra.mxu0 0.0
    %2941 = vmatprep.subr.mxu0 0.0
    %2942 = vmatpush1.msra.mxu0 0.0
    %2943 = vmatprep.subr.mxu0 0.0
    %2944 = vmatpush1.msra.mxu0 0.0
    %2945 = vmatprep.subr.mxu0 0.0
    %2946 = vmatpush1.msra.mxu0 0.0
    %2947 = vmatprep.subr.mxu0 0.0
    %2948 = vmatpush1.msra.mxu0 0.0
    %2949 = vmatprep.subr.mxu0 0.0
    %2950 = vmatpush1.msra.mxu0 0.0
    %2951 = vmatprep.subr.mxu0 0.0
    %2952 = vmatpush1.msra.mxu0 0.0
    %2953 = vmatprep.mubr.f32.mxu0 0.0
    %2954 = vmatmul.mubr.f32.gmra.mrb[0].mxu0 %v2753
    %v2955 = vpop.f32.mrb[0].mxu0
    %v2956 = vadd.f32 0.0, %v2955
    %v2957 = vpop.f32.mrb[0].mxu0
    %v2958 = vadd.f32 0.0, %v2957
    %2959 = vdwg.mxu0
    %v2960 = vadd.f32 %v2749, %v2885
    %v2961 = vadd.f32 %v2750, %v2887
    %v2962 = vadd.f32 %v2751, %v2956
    %v2963 = vadd.f32 %v2752, %v2958
    %v2964 = vld [vmem:[#allocation5] sm:$0xff]
    %v2965 = vxor.u32 %v2960, 2147483648
    %v2966 = vmul.f32 %v2965, 1.442695
    %v2967 = vpow.pop %v2966
    %v2968 = vadd.f32 %v2967, 1.0
    %v2969 = vrcp.pop %v2968
    %v2970 = vmul.f32 1.0, %v2969
    %v2971 = vxor.u32 %v2961, 2147483648
    %v2972 = vmul.f32 %v2971, 1.442695
    %v2973 = vpow.pop %v2972
    %v2974 = vadd.f32 %v2973, 1.0
    %v2975 = vrcp.pop %v2974
    %v2976 = vmul.f32 1.0, %v2975
    %v2977 = vtanh.pop %v2962
    %v2978 = vxor.u32 %v2963, 2147483648
    %v2979 = vmul.f32 %v2978, 1.442695
    %v2980 = vpow.pop %v2979
    %v2981 = vadd.f32 %v2980, 1.0
    %v2982 = vrcp.pop %v2981
    %v2983 = vmul.f32 1.0, %v2982
    %v2984 = vmul.f32 %v2976, %v2964
    %v2985 = vmul.f32 %v2970, %v2977
    %v2986 = vadd.f32 %v2984, %v2985
    %v2987 = vtanh.pop %v2986
    %v2988 = vmul.f32 %v2983, %v2987
    %2989 = vst [vmem:[#allocation4] sm:$0xff] %v2988
    %2990 = vst [vmem:[#allocation5] sm:$0xff] %v2986
    %v2991 = vld [vmem:[%s730] sm:$0xff]
    %v2992 = vld [vmem:[#allocation12] sm:$0xff]
    %v2993 = vld [vmem:[#allocation12 + $0x8] sm:$0xff]
    %v2994 = vld [vmem:[#allocation12 + $0x10] sm:$0xff]
    %v2995 = vld [vmem:[#allocation12 + $0x18] sm:$0xff]
    %v2996 = vld [vmem:[#allocation12 + $0x20] sm:$0xff]
    %v2997 = vld [vmem:[#allocation12 + $0x28] sm:$0xff]
    %v2998 = vld [vmem:[#allocation12 + $0x30] sm:$0xff]
    %v2999 = vld [vmem:[#allocation12 + $0x38] sm:$0xff]
    %v3000 = vld [vmem:[#allocation12 + $0x40] sm:$0xff]
    %v3001 = vld [vmem:[#allocation12 + $0x48] sm:$0xff]
    %v3002 = vld [vmem:[#allocation12 + $0x50] sm:$0xff]
    %v3003 = vld [vmem:[#allocation12 + $0x58] sm:$0xff]
    %v3004 = vld [vmem:[#allocation12 + $0x60] sm:$0xff]
    %v3005 = vld [vmem:[#allocation12 + $0x68] sm:$0xff]
    %v3006 = vld [vmem:[#allocation12 + $0x70] sm:$0xff]
    %v3007 = vld [vmem:[#allocation12 + $0x78] sm:$0xff]
    %v3008 = vld [vmem:[#allocation12 + $0x80] sm:$0xff]
    %v3009 = vld [vmem:[#allocation12 + $0x88] sm:$0xff]
    %v3010 = vld [vmem:[#allocation12 + $0x90] sm:$0xff]
    %v3011 = vld [vmem:[#allocation12 + $0x98] sm:$0xff]
    %v3012 = vld [vmem:[#allocation12 + $0xa0] sm:$0xff]
    %v3013 = vld [vmem:[#allocation12 + $0xa8] sm:$0xff]
    %v3014 = vld [vmem:[#allocation12 + $0xb0] sm:$0xff]
    %v3015 = vld [vmem:[#allocation12 + $0xb8] sm:$0xff]
    %v3016 = vld [vmem:[#allocation12 + $0xc0] sm:$0xff]
    %v3017 = vld [vmem:[#allocation12 + $0xc8] sm:$0xff]
    %v3018 = vld [vmem:[#allocation12 + $0xd0] sm:$0xff]
    %v3019 = vld [vmem:[#allocation12 + $0xd8] sm:$0xff]
    %v3020 = vld [vmem:[#allocation12 + $0xe0] sm:$0xff]
    %v3021 = vld [vmem:[#allocation12 + $0xe8] sm:$0xff]
    %v3022 = vld [vmem:[#allocation12 + $0xf0] sm:$0xff]
    %v3023 = vld [vmem:[#allocation12 + $0xf8] sm:$0xff]
    %v3024 = vld [vmem:[#allocation12 + $0x100] sm:$0xff]
    %v3025 = vld [vmem:[#allocation12 + $0x108] sm:$0xff]
    %v3026 = vld [vmem:[#allocation12 + $0x110] sm:$0xff]
    %v3027 = vld [vmem:[#allocation12 + $0x118] sm:$0xff]
    %v3028 = vld [vmem:[#allocation12 + $0x120] sm:$0xff]
    %v3029 = vld [vmem:[#allocation12 + $0x128] sm:$0xff]
    %v3030 = vld [vmem:[#allocation12 + $0x130] sm:$0xff]
    %v3031 = vld [vmem:[#allocation12 + $0x138] sm:$0xff]
    %v3032 = vld [vmem:[#allocation12 + $0x140] sm:$0xff]
    %v3033 = vld [vmem:[#allocation12 + $0x148] sm:$0xff]
    %v3034 = vld [vmem:[#allocation12 + $0x150] sm:$0xff]
    %v3035 = vld [vmem:[#allocation12 + $0x158] sm:$0xff]
    %v3036 = vld [vmem:[#allocation12 + $0x160] sm:$0xff]
    %v3037 = vld [vmem:[#allocation12 + $0x168] sm:$0xff]
    %v3038 = vld [vmem:[#allocation12 + $0x170] sm:$0xff]
    %v3039 = vld [vmem:[#allocation12 + $0x178] sm:$0xff]
    %v3040 = vld [vmem:[#allocation12 + $0x180] sm:$0xff]
    %v3041 = vld [vmem:[#allocation12 + $0x188] sm:$0xff]
    %v3042 = vld [vmem:[#allocation12 + $0x190] sm:$0xff]
    %v3043 = vld [vmem:[#allocation12 + $0x198] sm:$0xff]
    %v3044 = vld [vmem:[#allocation12 + $0x1a0] sm:$0xff]
    %v3045 = vld [vmem:[#allocation12 + $0x1a8] sm:$0xff]
    %v3046 = vld [vmem:[#allocation12 + $0x1b0] sm:$0xff]
    %v3047 = vld [vmem:[#allocation12 + $0x1b8] sm:$0xff]
    %v3048 = vld [vmem:[#allocation12 + $0x1c0] sm:$0xff]
    %v3049 = vld [vmem:[#allocation12 + $0x1c8] sm:$0xff]
    %v3050 = vld [vmem:[#allocation12 + $0x1d0] sm:$0xff]
    %v3051 = vld [vmem:[#allocation12 + $0x1d8] sm:$0xff]
    %v3052 = vld [vmem:[#allocation12 + $0x1e0] sm:$0xff]
    %v3053 = vld [vmem:[#allocation12 + $0x1e8] sm:$0xff]
    %v3054 = vld [vmem:[#allocation12 + $0x1f0] sm:$0xff]
    %v3055 = vld [vmem:[#allocation12 + $0x1f8] sm:$0xff]
    %v3056 = vld [vmem:[#allocation12 + $0x200] sm:$0xff]
    %v3057 = vld [vmem:[#allocation12 + $0x208] sm:$0xff]
    %v3058 = vld [vmem:[#allocation12 + $0x210] sm:$0xff]
    %v3059 = vld [vmem:[#allocation12 + $0x218] sm:$0xff]
    %v3060 = vld [vmem:[#allocation12 + $0x220] sm:$0xff]
    %v3061 = vld [vmem:[#allocation12 + $0x228] sm:$0xff]
    %v3062 = vld [vmem:[#allocation12 + $0x230] sm:$0xff]
    %v3063 = vld [vmem:[#allocation12 + $0x238] sm:$0xff]
    %v3064 = vld [vmem:[#allocation12 + $0x240] sm:$0xff]
    %v3065 = vld [vmem:[#allocation12 + $0x248] sm:$0xff]
    %v3066 = vld [vmem:[#allocation12 + $0x250] sm:$0xff]
    %v3067 = vld [vmem:[#allocation12 + $0x258] sm:$0xff]
    %v3068 = vld [vmem:[#allocation12 + $0x260] sm:$0xff]
    %v3069 = vld [vmem:[#allocation12 + $0x268] sm:$0xff]
    %v3070 = vld [vmem:[#allocation12 + $0x270] sm:$0xff]
    %v3071 = vld [vmem:[#allocation12 + $0x278] sm:$0xff]
    %v3072 = vld [vmem:[#allocation12 + $0x280] sm:$0xff]
    %v3073 = vld [vmem:[#allocation12 + $0x288] sm:$0xff]
    %v3074 = vld [vmem:[#allocation12 + $0x290] sm:$0xff]
    %v3075 = vld [vmem:[#allocation12 + $0x298] sm:$0xff]
    %v3076 = vld [vmem:[#allocation12 + $0x2a0] sm:$0xff]
    %v3077 = vld [vmem:[#allocation12 + $0x2a8] sm:$0xff]
    %v3078 = vld [vmem:[#allocation12 + $0x2b0] sm:$0xff]
    %v3079 = vld [vmem:[#allocation12 + $0x2b8] sm:$0xff]
    %v3080 = vld [vmem:[#allocation12 + $0x2c0] sm:$0xff]
    %v3081 = vld [vmem:[#allocation12 + $0x2c8] sm:$0xff]
    %v3082 = vld [vmem:[#allocation12 + $0x2d0] sm:$0xff]
    %v3083 = vld [vmem:[#allocation12 + $0x2d8] sm:$0xff]
    %v3084 = vld [vmem:[#allocation12 + $0x2e0] sm:$0xff]
    %v3085 = vld [vmem:[#allocation12 + $0x2e8] sm:$0xff]
    %v3086 = vld [vmem:[#allocation12 + $0x2f0] sm:$0xff]
    %v3087 = vld [vmem:[#allocation12 + $0x2f8] sm:$0xff]
    %v3088 = vld [vmem:[#allocation12 + $0x300] sm:$0xff]
    %v3089 = vld [vmem:[#allocation12 + $0x308] sm:$0xff]
    %v3090 = vld [vmem:[#allocation12 + $0x310] sm:$0xff]
    %v3091 = vld [vmem:[#allocation12 + $0x318] sm:$0xff]
    %v3092 = vld [vmem:[#allocation12 + $0x320] sm:$0xff]
    %v3093 = vld [vmem:[#allocation12 + $0x328] sm:$0xff]
    %v3094 = vld [vmem:[#allocation12 + $0x330] sm:$0xff]
    %v3095 = vld [vmem:[#allocation12 + $0x338] sm:$0xff]
    %v3096 = vld [vmem:[#allocation12 + $0x340] sm:$0xff]
    %v3097 = vld [vmem:[#allocation12 + $0x348] sm:$0xff]
    %v3098 = vld [vmem:[#allocation12 + $0x350] sm:$0xff]
    %v3099 = vld [vmem:[#allocation12 + $0x358] sm:$0xff]
    %v3100 = vld [vmem:[#allocation12 + $0x360] sm:$0xff]
    %v3101 = vld [vmem:[#allocation12 + $0x368] sm:$0xff]
    %v3102 = vld [vmem:[#allocation12 + $0x370] sm:$0xff]
    %v3103 = vld [vmem:[#allocation12 + $0x378] sm:$0xff]
    %v3104 = vld [vmem:[#allocation12 + $0x380] sm:$0xff]
    %v3105 = vld [vmem:[#allocation12 + $0x388] sm:$0xff]
    %v3106 = vld [vmem:[#allocation12 + $0x390] sm:$0xff]
    %v3107 = vld [vmem:[#allocation12 + $0x398] sm:$0xff]
    %v3108 = vld [vmem:[#allocation12 + $0x3a0] sm:$0xff]
    %v3109 = vld [vmem:[#allocation12 + $0x3a8] sm:$0xff]
    %v3110 = vld [vmem:[#allocation12 + $0x3b0] sm:$0xff]
    %v3111 = vld [vmem:[#allocation12 + $0x3b8] sm:$0xff]
    %v3112 = vld [vmem:[#allocation12 + $0x3c0] sm:$0xff]
    %v3113 = vld [vmem:[#allocation12 + $0x3c8] sm:$0xff]
    %v3114 = vld [vmem:[#allocation12 + $0x3d0] sm:$0xff]
    %v3115 = vld [vmem:[#allocation12 + $0x3d8] sm:$0xff]
    %v3116 = vld [vmem:[#allocation12 + $0x3e0] sm:$0xff]
    %v3117 = vld [vmem:[#allocation12 + $0x3e8] sm:$0xff]
    %v3118 = vld [vmem:[#allocation12 + $0x3f0] sm:$0xff]
    %v3119 = vld [vmem:[#allocation12 + $0x3f8] sm:$0xff]
    %v3120 = vld [vmem:[%s5] sm:$0xf]
    %v3122 = vlaneseq
    %v3123 = vshrl.u32 %v3122, 7
    %v3124 = vsub.s32 0, %v3123
    %v3125 = vrot.slane %v3120, %v3124
    %v3126 = vlaneseq
    %v3127 = vshrl.u32 %v3126, 7
    %v3128 = vsub.s32 1, %v3127
    %v3129 = vrot.slane %v3120, %v3128
    %v3130 = vlaneseq
    %v3131 = vshrl.u32 %v3130, 7
    %v3132 = vsub.s32 2, %v3131
    %v3133 = vrot.slane %v3120, %v3132
    %v3134 = vlaneseq
    %v3135 = vshrl.u32 %v3134, 7
    %v3136 = vsub.s32 3, %v3135
    %v3137 = vrot.slane %v3120, %v3136
    %3142 = vmatprep.subr.mxu0 %v2993
    %3143 = vmatpush1.msra.mxu0 %v2992
    %3144 = vmatprep.subr.mxu0 %v2997
    %3145 = vmatpush1.msra.mxu0 %v2996
    %3146 = vmatprep.subr.mxu0 %v3001
    %3147 = vmatpush1.msra.mxu0 %v3000
    %3148 = vmatprep.subr.mxu0 %v3005
    %3149 = vmatpush1.msra.mxu0 %v3004
    %3150 = vmatprep.subr.mxu0 %v3009
    %3151 = vmatpush1.msra.mxu0 %v3008
    %3152 = vmatprep.subr.mxu0 %v3013
    %3153 = vmatpush1.msra.mxu0 %v3012
    %3154 = vmatprep.subr.mxu0 %v3017
    %3155 = vmatpush1.msra.mxu0 %v3016
    %3156 = vmatprep.subr.mxu0 %v3021
    %3157 = vmatpush1.msra.mxu0 %v3020
    %3158 = vmatprep.subr.mxu0 %v3025
    %3159 = vmatpush1.msra.mxu0 %v3024
    %3160 = vmatprep.subr.mxu0 %v3029
    %3161 = vmatpush1.msra.mxu0 %v3028
    %3162 = vmatprep.subr.mxu0 %v3033
    %3163 = vmatpush1.msra.mxu0 %v3032
    %3164 = vmatprep.subr.mxu0 %v3037
    %3165 = vmatpush1.msra.mxu0 %v3036
    %3166 = vmatprep.subr.mxu0 %v3041
    %3167 = vmatpush1.msra.mxu0 %v3040
    %3168 = vmatprep.subr.mxu0 %v3045
    %3169 = vmatpush1.msra.mxu0 %v3044
    %3170 = vmatprep.subr.mxu0 %v3049
    %3171 = vmatpush1.msra.mxu0 %v3048
    %3172 = vmatprep.subr.mxu0 %v3053
    %3173 = vmatpush1.msra.mxu0 %v3052
    %3174 = vmatprep.subr.mxu0 %v3057
    %3175 = vmatpush1.msra.mxu0 %v3056
    %3176 = vmatprep.subr.mxu0 %v3061
    %3177 = vmatpush1.msra.mxu0 %v3060
    %3178 = vmatprep.subr.mxu0 %v3065
    %3179 = vmatpush1.msra.mxu0 %v3064
    %3180 = vmatprep.subr.mxu0 %v3069
    %3181 = vmatpush1.msra.mxu0 %v3068
    %3182 = vmatprep.subr.mxu0 %v3073
    %3183 = vmatpush1.msra.mxu0 %v3072
    %3184 = vmatprep.subr.mxu0 %v3077
    %3185 = vmatpush1.msra.mxu0 %v3076
    %3186 = vmatprep.subr.mxu0 %v3081
    %3187 = vmatpush1.msra.mxu0 %v3080
    %3188 = vmatprep.subr.mxu0 %v3085
    %3189 = vmatpush1.msra.mxu0 %v3084
    %3190 = vmatprep.subr.mxu0 %v3089
    %3191 = vmatpush1.msra.mxu0 %v3088
    %3192 = vmatprep.subr.mxu0 %v3093
    %3193 = vmatpush1.msra.mxu0 %v3092
    %3194 = vmatprep.subr.mxu0 %v3097
    %3195 = vmatpush1.msra.mxu0 %v3096
    %3196 = vmatprep.subr.mxu0 %v3101
    %3197 = vmatpush1.msra.mxu0 %v3100
    %3198 = vmatprep.subr.mxu0 %v3105
    %3199 = vmatpush1.msra.mxu0 %v3104
    %3200 = vmatprep.subr.mxu0 %v3109
    %3201 = vmatpush1.msra.mxu0 %v3108
    %3202 = vmatprep.subr.mxu0 %v3113
    %3203 = vmatpush1.msra.mxu0 %v3112
    %3204 = vmatprep.subr.mxu0 %v3117
    %3205 = vmatpush1.msra.mxu0 %v3116
    %3206 = vmatprep.mubr.f32.mxu0 %v2991
    %3207 = vmatmul.mubr.f32.gmra.mrb[0].mxu0 %v2988
    %v3208 = vpop.f32.mrb[0].mxu0
    %v3209 = vadd.f32 %v3125, %v3208
    %v3210 = vpop.f32.mrb[0].mxu0
    %v3211 = vadd.f32 %v3129, %v3210
    %3212 = vdwg.mxu0
    %3213 = vmatprep.subr.mxu0 %v2995
    %3214 = vmatpush1.msra.mxu0 %v2994
    %3215 = vmatprep.subr.mxu0 %v2999
    %3216 = vmatpush1.msra.mxu0 %v2998
    %3217 = vmatprep.subr.mxu0 %v3003
    %3218 = vmatpush1.msra.mxu0 %v3002
    %3219 = vmatprep.subr.mxu0 %v3007
    %3220 = vmatpush1.msra.mxu0 %v3006
    %3221 = vmatprep.subr.mxu0 %v3011
    %3222 = vmatpush1.msra.mxu0 %v3010
    %3223 = vmatprep.subr.mxu0 %v3015
    %3224 = vmatpush1.msra.mxu0 %v3014
    %3225 = vmatprep.subr.mxu0 %v3019
    %3226 = vmatpush1.msra.mxu0 %v3018
    %3227 = vmatprep.subr.mxu0 %v3023
    %3228 = vmatpush1.msra.mxu0 %v3022
    %3229 = vmatprep.subr.mxu0 %v3027
    %3230 = vmatpush1.msra.mxu0 %v3026
    %3231 = vmatprep.subr.mxu0 %v3031
    %3232 = vmatpush1.msra.mxu0 %v3030
    %3233 = vmatprep.subr.mxu0 %v3035
    %3234 = vmatpush1.msra.mxu0 %v3034
    %3235 = vmatprep.subr.mxu0 %v3039
    %3236 = vmatpush1.msra.mxu0 %v3038
    %3237 = vmatprep.subr.mxu0 %v3043
    %3238 = vmatpush1.msra.mxu0 %v3042
    %3239 = vmatprep.subr.mxu0 %v3047
    %3240 = vmatpush1.msra.mxu0 %v3046
    %3241 = vmatprep.subr.mxu0 %v3051
    %3242 = vmatpush1.msra.mxu0 %v3050
    %3243 = vmatprep.subr.mxu0 %v3055
    %3244 = vmatpush1.msra.mxu0 %v3054
    %3245 = vmatprep.subr.mxu0 %v3059
    %3246 = vmatpush1.msra.mxu0 %v3058
    %3247 = vmatprep.subr.mxu0 %v3063
    %3248 = vmatpush1.msra.mxu0 %v3062
    %3249 = vmatprep.subr.mxu0 %v3067
    %3250 = vmatpush1.msra.mxu0 %v3066
    %3251 = vmatprep.subr.mxu0 %v3071
    %3252 = vmatpush1.msra.mxu0 %v3070
    %3253 = vmatprep.subr.mxu0 %v3075
    %3254 = vmatpush1.msra.mxu0 %v3074
    %3255 = vmatprep.subr.mxu0 %v3079
    %3256 = vmatpush1.msra.mxu0 %v3078
    %3257 = vmatprep.subr.mxu0 %v3083
    %3258 = vmatpush1.msra.mxu0 %v3082
    %3259 = vmatprep.subr.mxu0 %v3087
    %3260 = vmatpush1.msra.mxu0 %v3086
    %3261 = vmatprep.subr.mxu0 %v3091
    %3262 = vmatpush1.msra.mxu0 %v3090
    %3263 = vmatprep.subr.mxu0 %v3095
    %3264 = vmatpush1.msra.mxu0 %v3094
    %3265 = vmatprep.subr.mxu0 %v3099
    %3266 = vmatpush1.msra.mxu0 %v3098
    %3267 = vmatprep.subr.mxu0 %v3103
    %3268 = vmatpush1.msra.mxu0 %v3102
    %3269 = vmatprep.subr.mxu0 %v3107
    %3270 = vmatpush1.msra.mxu0 %v3106
    %3271 = vmatprep.subr.mxu0 %v3111
    %3272 = vmatpush1.msra.mxu0 %v3110
    %3273 = vmatprep.subr.mxu0 %v3115
    %3274 = vmatpush1.msra.mxu0 %v3114
    %3275 = vmatprep.subr.mxu0 %v3119
    %3276 = vmatpush1.msra.mxu0 %v3118
    %3277 = vmatprep.mubr.f32.mxu0 %v2991
    %3278 = vmatmul.mubr.f32.gmra.mrb[0].mxu0 %v2988
    %v3279 = vpop.f32.mrb[0].mxu0
    %v3280 = vadd.f32 %v3133, %v3279
    %v3281 = vpop.f32.mrb[0].mxu0
    %v3282 = vadd.f32 %v3137, %v3281
    %3283 = vdwg.mxu0
    %v3284 = vld [vmem:[%s1024] sm:$0xff]
    %v3285 = vxor.u32 %v3209, 2147483648
    %v3286 = vmul.f32 %v3285, 1.442695
    %v3287 = vpow.pop %v3286
    %v3288 = vadd.f32 %v3287, 1.0
    %v3289 = vrcp.pop %v3288
    %v3290 = vmul.f32 1.0, %v3289
    %v3291 = vxor.u32 %v3211, 2147483648
    %v3292 = vmul.f32 %v3291, 1.442695
    %v3293 = vpow.pop %v3292
    %v3294 = vadd.f32 %v3293, 1.0
    %v3295 = vrcp.pop %v3294
    %v3296 = vmul.f32 1.0, %v3295
    %v3297 = vtanh.pop %v3280
    %v3298 = vxor.u32 %v3282, 2147483648
    %v3299 = vmul.f32 %v3298, 1.442695
    %v3300 = vpow.pop %v3299
    %v3301 = vadd.f32 %v3300, 1.0
    %v3302 = vrcp.pop %v3301
    %v3303 = vmul.f32 1.0, %v3302
    %v3304 = vmul.f32 %v3296, %v3284
    %v3305 = vmul.f32 %v3290, %v3297
    %v3306 = vadd.f32 %v3304, %v3305
    %v3307 = vtanh.pop %v3306
    %v3308 = vmul.f32 %v3303, %v3307
    %3309 = vst [vmem:[%s730] sm:$0xff] %v3308
    %3310 = vst [vmem:[%s1024] sm:$0xff] %v3306
    %s3311 = scalar_lea.vmem [#allocation3], 32
    %3312 = vst [vmem:[%s3311] sm:$0xff] %v3308
    %s3313 = scalar_lea.vmem [#allocation2], 160
    %v3314 = vld [vmem:[%s3313] sm:$0xff]
    %v3315 = vld [vmem:[%s3313 + $0x8] sm:$0xff]
    %v3316 = vld [vmem:[%s3313 + $0x10] sm:$0xff]
    %v3317 = vld [vmem:[%s3313 + $0x18] sm:$0xff]
    %v3318 = vld [vmem:[#allocation4] sm:$0xff]
    %v3319 = vld [vmem:[#allocation11] sm:$0xff]
    %v3320 = vld [vmem:[#allocation11 + $0x8] sm:$0xff]
    %v3321 = vld [vmem:[#allocation11 + $0x10] sm:$0xff]
    %v3322 = vld [vmem:[#allocation11 + $0x18] sm:$0xff]
    %v3323 = vld [vmem:[#allocation11 + $0x20] sm:$0xff]
    %v3324 = vld [vmem:[#allocation11 + $0x28] sm:$0xff]
    %v3325 = vld [vmem:[#allocation11 + $0x30] sm:$0xff]
    %v3326 = vld [vmem:[#allocation11 + $0x38] sm:$0xff]
    %v3327 = vld [vmem:[#allocation11 + $0x40] sm:$0xff]
    %v3328 = vld [vmem:[#allocation11 + $0x48] sm:$0xff]
    %v3329 = vld [vmem:[#allocation11 + $0x50] sm:$0xff]
    %v3330 = vld [vmem:[#allocation11 + $0x58] sm:$0xff]
    %v3331 = vld [vmem:[#allocation11 + $0x60] sm:$0xff]
    %v3332 = vld [vmem:[#allocation11 + $0x68] sm:$0xff]
    %v3333 = vld [vmem:[#allocation11 + $0x70] sm:$0xff]
    %v3334 = vld [vmem:[#allocation11 + $0x78] sm:$0xff]
    %v3335 = vld [vmem:[#allocation11 + $0x80] sm:$0xff]
    %v3336 = vld [vmem:[#allocation11 + $0x88] sm:$0xff]
    %v3337 = vld [vmem:[#allocation11 + $0x90] sm:$0xff]
    %v3338 = vld [vmem:[#allocation11 + $0x98] sm:$0xff]
    %v3339 = vld [vmem:[#allocation11 + $0xa0] sm:$0xff]
    %v3340 = vld [vmem:[#allocation11 + $0xa8] sm:$0xff]
    %v3341 = vld [vmem:[#allocation11 + $0xb0] sm:$0xff]
    %v3342 = vld [vmem:[#allocation11 + $0xb8] sm:$0xff]
    %v3343 = vld [vmem:[#allocation11 + $0xc0] sm:$0xff]
    %v3344 = vld [vmem:[#allocation11 + $0xc8] sm:$0xff]
    %v3345 = vld [vmem:[#allocation11 + $0xd0] sm:$0xff]
    %v3346 = vld [vmem:[#allocation11 + $0xd8] sm:$0xff]
    %v3347 = vld [vmem:[#allocation11 + $0xe0] sm:$0xff]
    %v3348 = vld [vmem:[#allocation11 + $0xe8] sm:$0xff]
    %v3349 = vld [vmem:[#allocation11 + $0xf0] sm:$0xff]
    %v3350 = vld [vmem:[#allocation11 + $0xf8] sm:$0xff]
    %v3351 = vld [vmem:[#allocation11 + $0x100] sm:$0xff]
    %v3352 = vld [vmem:[#allocation11 + $0x108] sm:$0xff]
    %v3353 = vld [vmem:[#allocation11 + $0x110] sm:$0xff]
    %v3354 = vld [vmem:[#allocation11 + $0x118] sm:$0xff]
    %v3355 = vld [vmem:[#allocation11 + $0x120] sm:$0xff]
    %v3356 = vld [vmem:[#allocation11 + $0x128] sm:$0xff]
    %v3357 = vld [vmem:[#allocation11 + $0x130] sm:$0xff]
    %v3358 = vld [vmem:[#allocation11 + $0x138] sm:$0xff]
    %v3359 = vld [vmem:[#allocation11 + $0x140] sm:$0xff]
    %v3360 = vld [vmem:[#allocation11 + $0x148] sm:$0xff]
    %v3361 = vld [vmem:[#allocation11 + $0x150] sm:$0xff]
    %v3362 = vld [vmem:[#allocation11 + $0x158] sm:$0xff]
    %v3363 = vld [vmem:[#allocation11 + $0x160] sm:$0xff]
    %v3364 = vld [vmem:[#allocation11 + $0x168] sm:$0xff]
    %v3365 = vld [vmem:[#allocation11 + $0x170] sm:$0xff]
    %v3366 = vld [vmem:[#allocation11 + $0x178] sm:$0xff]
    %v3367 = vld [vmem:[#allocation11 + $0x180] sm:$0xff]
    %v3368 = vld [vmem:[#allocation11 + $0x188] sm:$0xff]
    %v3369 = vld [vmem:[#allocation11 + $0x190] sm:$0xff]
    %v3370 = vld [vmem:[#allocation11 + $0x198] sm:$0xff]
    %v3371 = vld [vmem:[#allocation11 + $0x1a0] sm:$0xff]
    %v3372 = vld [vmem:[#allocation11 + $0x1a8] sm:$0xff]
    %v3373 = vld [vmem:[#allocation11 + $0x1b0] sm:$0xff]
    %v3374 = vld [vmem:[#allocation11 + $0x1b8] sm:$0xff]
    %v3375 = vld [vmem:[#allocation11 + $0x1c0] sm:$0xff]
    %v3376 = vld [vmem:[#allocation11 + $0x1c8] sm:$0xff]
    %v3377 = vld [vmem:[#allocation11 + $0x1d0] sm:$0xff]
    %v3378 = vld [vmem:[#allocation11 + $0x1d8] sm:$0xff]
    %v3379 = vld [vmem:[#allocation11 + $0x1e0] sm:$0xff]
    %v3380 = vld [vmem:[#allocation11 + $0x1e8] sm:$0xff]
    %v3381 = vld [vmem:[#allocation11 + $0x1f0] sm:$0xff]
    %v3382 = vld [vmem:[#allocation11 + $0x1f8] sm:$0xff]
    %3383 = vmatprep.subr.mxu0 %v3320
    %3384 = vmatpush1.msra.mxu0 %v3319
    %3385 = vmatprep.subr.mxu0 %v3324
    %3386 = vmatpush1.msra.mxu0 %v3323
    %3387 = vmatprep.subr.mxu0 %v3328
    %3388 = vmatpush1.msra.mxu0 %v3327
    %3389 = vmatprep.subr.mxu0 %v3332
    %3390 = vmatpush1.msra.mxu0 %v3331
    %3391 = vmatprep.subr.mxu0 %v3336
    %3392 = vmatpush1.msra.mxu0 %v3335
    %3393 = vmatprep.subr.mxu0 %v3340
    %3394 = vmatpush1.msra.mxu0 %v3339
    %3395 = vmatprep.subr.mxu0 %v3344
    %3396 = vmatpush1.msra.mxu0 %v3343
    %3397 = vmatprep.subr.mxu0 %v3348
    %3398 = vmatpush1.msra.mxu0 %v3347
    %3399 = vmatprep.subr.mxu0 %v3352
    %3400 = vmatpush1.msra.mxu0 %v3351
    %3401 = vmatprep.subr.mxu0 %v3356
    %3402 = vmatpush1.msra.mxu0 %v3355
    %3403 = vmatprep.subr.mxu0 %v3360
    %3404 = vmatpush1.msra.mxu0 %v3359
    %3405 = vmatprep.subr.mxu0 %v3364
    %3406 = vmatpush1.msra.mxu0 %v3363
    %3407 = vmatprep.subr.mxu0 %v3368
    %3408 = vmatpush1.msra.mxu0 %v3367
    %3409 = vmatprep.subr.mxu0 %v3372
    %3410 = vmatpush1.msra.mxu0 %v3371
    %3411 = vmatprep.subr.mxu0 %v3376
    %3412 = vmatpush1.msra.mxu0 %v3375
    %3413 = vmatprep.subr.mxu0 %v3380
    %3414 = vmatpush1.msra.mxu0 %v3379
    %3415 = vmatprep.subr.mxu0 0.0
    %3416 = vmatpush1.msra.mxu0 0.0
    %3417 = vmatprep.subr.mxu0 0.0
    %3418 = vmatpush1.msra.mxu0 0.0
    %3419 = vmatprep.subr.mxu0 0.0
    %3420 = vmatpush1.msra.mxu0 0.0
    %3421 = vmatprep.subr.mxu0 0.0
    %3422 = vmatpush1.msra.mxu0 0.0
    %3423 = vmatprep.subr.mxu0 0.0
    %3424 = vmatpush1.msra.mxu0 0.0
    %3425 = vmatprep.subr.mxu0 0.0
    %3426 = vmatpush1.msra.mxu0 0.0
    %3427 = vmatprep.subr.mxu0 0.0
    %3428 = vmatpush1.msra.mxu0 0.0
    %3429 = vmatprep.subr.mxu0 0.0
    %3430 = vmatpush1.msra.mxu0 0.0
    %3431 = vmatprep.subr.mxu0 0.0
    %3432 = vmatpush1.msra.mxu0 0.0
    %3433 = vmatprep.subr.mxu0 0.0
    %3434 = vmatpush1.msra.mxu0 0.0
    %3435 = vmatprep.subr.mxu0 0.0
    %3436 = vmatpush1.msra.mxu0 0.0
    %3437 = vmatprep.subr.mxu0 0.0
    %3438 = vmatpush1.msra.mxu0 0.0
    %3439 = vmatprep.subr.mxu0 0.0
    %3440 = vmatpush1.msra.mxu0 0.0
    %3441 = vmatprep.subr.mxu0 0.0
    %3442 = vmatpush1.msra.mxu0 0.0
    %3443 = vmatprep.subr.mxu0 0.0
    %3444 = vmatpush1.msra.mxu0 0.0
    %3445 = vmatprep.subr.mxu0 0.0
    %3446 = vmatpush1.msra.mxu0 0.0
    %3447 = vmatprep.mubr.f32.mxu0 0.0
    %3448 = vmatmul.mubr.f32.gmra.mrb[0].mxu0 %v3318
    %v3449 = vpop.f32.mrb[0].mxu0
    %v3450 = vadd.f32 0.0, %v3449
    %v3451 = vpop.f32.mrb[0].mxu0
    %v3452 = vadd.f32 0.0, %v3451
    %3453 = vdwg.mxu0
    %3454 = vmatprep.subr.mxu0 %v3322
    %3455 = vmatpush1.msra.mxu0 %v3321
    %3456 = vmatprep.subr.mxu0 %v3326
    %3457 = vmatpush1.msra.mxu0 %v3325
    %3458 = vmatprep.subr.mxu0 %v3330
    %3459 = vmatpush1.msra.mxu0 %v3329
    %3460 = vmatprep.subr.mxu0 %v3334
    %3461 = vmatpush1.msra.mxu0 %v3333
    %3462 = vmatprep.subr.mxu0 %v3338
    %3463 = vmatpush1.msra.mxu0 %v3337
    %3464 = vmatprep.subr.mxu0 %v3342
    %3465 = vmatpush1.msra.mxu0 %v3341
    %3466 = vmatprep.subr.mxu0 %v3346
    %3467 = vmatpush1.msra.mxu0 %v3345
    %3468 = vmatprep.subr.mxu0 %v3350
    %3469 = vmatpush1.msra.mxu0 %v3349
    %3470 = vmatprep.subr.mxu0 %v3354
    %3471 = vmatpush1.msra.mxu0 %v3353
    %3472 = vmatprep.subr.mxu0 %v3358
    %3473 = vmatpush1.msra.mxu0 %v3357
    %3474 = vmatprep.subr.mxu0 %v3362
    %3475 = vmatpush1.msra.mxu0 %v3361
    %3476 = vmatprep.subr.mxu0 %v3366
    %3477 = vmatpush1.msra.mxu0 %v3365
    %3478 = vmatprep.subr.mxu0 %v3370
    %3479 = vmatpush1.msra.mxu0 %v3369
    %3480 = vmatprep.subr.mxu0 %v3374
    %3481 = vmatpush1.msra.mxu0 %v3373
    %3482 = vmatprep.subr.mxu0 %v3378
    %3483 = vmatpush1.msra.mxu0 %v3377
    %3484 = vmatprep.subr.mxu0 %v3382
    %3485 = vmatpush1.msra.mxu0 %v3381
    %3486 = vmatprep.subr.mxu0 0.0
    %3487 = vmatpush1.msra.mxu0 0.0
    %3488 = vmatprep.subr.mxu0 0.0
    %3489 = vmatpush1.msra.mxu0 0.0
    %3490 = vmatprep.subr.mxu0 0.0
    %3491 = vmatpush1.msra.mxu0 0.0
    %3492 = vmatprep.subr.mxu0 0.0
    %3493 = vmatpush1.msra.mxu0 0.0
    %3494 = vmatprep.subr.mxu0 0.0
    %3495 = vmatpush1.msra.mxu0 0.0
    %3496 = vmatprep.subr.mxu0 0.0
    %3497 = vmatpush1.msra.mxu0 0.0
    %3498 = vmatprep.subr.mxu0 0.0
    %3499 = vmatpush1.msra.mxu0 0.0
    %3500 = vmatprep.subr.mxu0 0.0
    %3501 = vmatpush1.msra.mxu0 0.0
    %3502 = vmatprep.subr.mxu0 0.0
    %3503 = vmatpush1.msra.mxu0 0.0
    %3504 = vmatprep.subr.mxu0 0.0
    %3505 = vmatpush1.msra.mxu0 0.0
    %3506 = vmatprep.subr.mxu0 0.0
    %3507 = vmatpush1.msra.mxu0 0.0
    %3508 = vmatprep.subr.mxu0 0.0
    %3509 = vmatpush1.msra.mxu0 0.0
    %3510 = vmatprep.subr.mxu0 0.0
    %3511 = vmatpush1.msra.mxu0 0.0
    %3512 = vmatprep.subr.mxu0 0.0
    %3513 = vmatpush1.msra.mxu0 0.0
    %3514 = vmatprep.subr.mxu0 0.0
    %3515 = vmatpush1.msra.mxu0 0.0
    %3516 = vmatprep.subr.mxu0 0.0
    %3517 = vmatpush1.msra.mxu0 0.0
    %3518 = vmatprep.mubr.f32.mxu0 0.0
    %3519 = vmatmul.mubr.f32.gmra.mrb[0].mxu0 %v3318
    %v3520 = vpop.f32.mrb[0].mxu0
    %v3521 = vadd.f32 0.0, %v3520
    %v3522 = vpop.f32.mrb[0].mxu0
    %v3523 = vadd.f32 0.0, %v3522
    %3524 = vdwg.mxu0
    %v3525 = vadd.f32 %v3314, %v3450
    %v3526 = vadd.f32 %v3315, %v3452
    %v3527 = vadd.f32 %v3316, %v3521
    %v3528 = vadd.f32 %v3317, %v3523
    %v3529 = vld [vmem:[#allocation5] sm:$0xff]
    %v3530 = vxor.u32 %v3525, 2147483648
    %v3531 = vmul.f32 %v3530, 1.442695
    %v3532 = vpow.pop %v3531
    %v3533 = vadd.f32 %v3532, 1.0
    %v3534 = vrcp.pop %v3533
    %v3535 = vmul.f32 1.0, %v3534
    %v3536 = vxor.u32 %v3526, 2147483648
    %v3537 = vmul.f32 %v3536, 1.442695
    %v3538 = vpow.pop %v3537
    %v3539 = vadd.f32 %v3538, 1.0
    %v3540 = vrcp.pop %v3539
    %v3541 = vmul.f32 1.0, %v3540
    %v3542 = vtanh.pop %v3527
    %v3543 = vxor.u32 %v3528, 2147483648
    %v3544 = vmul.f32 %v3543, 1.442695
    %v3545 = vpow.pop %v3544
    %v3546 = vadd.f32 %v3545, 1.0
    %v3547 = vrcp.pop %v3546
    %v3548 = vmul.f32 1.0, %v3547
    %v3549 = vmul.f32 %v3541, %v3529
    %v3550 = vmul.f32 %v3535, %v3542
    %v3551 = vadd.f32 %v3549, %v3550
    %v3552 = vtanh.pop %v3551
    %v3553 = vmul.f32 %v3548, %v3552
    %3554 = vst [vmem:[#allocation4] sm:$0xff] %v3553
    %3555 = vst [vmem:[#allocation5] sm:$0xff] %v3551
    %v3556 = vld [vmem:[%s730] sm:$0xff]
    %v3557 = vld [vmem:[#allocation12] sm:$0xff]
    %v3558 = vld [vmem:[#allocation12 + $0x8] sm:$0xff]
    %v3559 = vld [vmem:[#allocation12 + $0x10] sm:$0xff]
    %v3560 = vld [vmem:[#allocation12 + $0x18] sm:$0xff]
    %v3561 = vld [vmem:[#allocation12 + $0x20] sm:$0xff]
    %v3562 = vld [vmem:[#allocation12 + $0x28] sm:$0xff]
    %v3563 = vld [vmem:[#allocation12 + $0x30] sm:$0xff]
    %v3564 = vld [vmem:[#allocation12 + $0x38] sm:$0xff]
    %v3565 = vld [vmem:[#allocation12 + $0x40] sm:$0xff]
    %v3566 = vld [vmem:[#allocation12 + $0x48] sm:$0xff]
    %v3567 = vld [vmem:[#allocation12 + $0x50] sm:$0xff]
    %v3568 = vld [vmem:[#allocation12 + $0x58] sm:$0xff]
    %v3569 = vld [vmem:[#allocation12 + $0x60] sm:$0xff]
    %v3570 = vld [vmem:[#allocation12 + $0x68] sm:$0xff]
    %v3571 = vld [vmem:[#allocation12 + $0x70] sm:$0xff]
    %v3572 = vld [vmem:[#allocation12 + $0x78] sm:$0xff]
    %v3573 = vld [vmem:[#allocation12 + $0x80] sm:$0xff]
    %v3574 = vld [vmem:[#allocation12 + $0x88] sm:$0xff]
    %v3575 = vld [vmem:[#allocation12 + $0x90] sm:$0xff]
    %v3576 = vld [vmem:[#allocation12 + $0x98] sm:$0xff]
    %v3577 = vld [vmem:[#allocation12 + $0xa0] sm:$0xff]
    %v3578 = vld [vmem:[#allocation12 + $0xa8] sm:$0xff]
    %v3579 = vld [vmem:[#allocation12 + $0xb0] sm:$0xff]
    %v3580 = vld [vmem:[#allocation12 + $0xb8] sm:$0xff]
    %v3581 = vld [vmem:[#allocation12 + $0xc0] sm:$0xff]
    %v3582 = vld [vmem:[#allocation12 + $0xc8] sm:$0xff]
    %v3583 = vld [vmem:[#allocation12 + $0xd0] sm:$0xff]
    %v3584 = vld [vmem:[#allocation12 + $0xd8] sm:$0xff]
    %v3585 = vld [vmem:[#allocation12 + $0xe0] sm:$0xff]
    %v3586 = vld [vmem:[#allocation12 + $0xe8] sm:$0xff]
    %v3587 = vld [vmem:[#allocation12 + $0xf0] sm:$0xff]
    %v3588 = vld [vmem:[#allocation12 + $0xf8] sm:$0xff]
    %v3589 = vld [vmem:[#allocation12 + $0x100] sm:$0xff]
    %v3590 = vld [vmem:[#allocation12 + $0x108] sm:$0xff]
    %v3591 = vld [vmem:[#allocation12 + $0x110] sm:$0xff]
    %v3592 = vld [vmem:[#allocation12 + $0x118] sm:$0xff]
    %v3593 = vld [vmem:[#allocation12 + $0x120] sm:$0xff]
    %v3594 = vld [vmem:[#allocation12 + $0x128] sm:$0xff]
    %v3595 = vld [vmem:[#allocation12 + $0x130] sm:$0xff]
    %v3596 = vld [vmem:[#allocation12 + $0x138] sm:$0xff]
    %v3597 = vld [vmem:[#allocation12 + $0x140] sm:$0xff]
    %v3598 = vld [vmem:[#allocation12 + $0x148] sm:$0xff]
    %v3599 = vld [vmem:[#allocation12 + $0x150] sm:$0xff]
    %v3600 = vld [vmem:[#allocation12 + $0x158] sm:$0xff]
    %v3601 = vld [vmem:[#allocation12 + $0x160] sm:$0xff]
    %v3602 = vld [vmem:[#allocation12 + $0x168] sm:$0xff]
    %v3603 = vld [vmem:[#allocation12 + $0x170] sm:$0xff]
    %v3604 = vld [vmem:[#allocation12 + $0x178] sm:$0xff]
    %v3605 = vld [vmem:[#allocation12 + $0x180] sm:$0xff]
    %v3606 = vld [vmem:[#allocation12 + $0x188] sm:$0xff]
    %v3607 = vld [vmem:[#allocation12 + $0x190] sm:$0xff]
    %v3608 = vld [vmem:[#allocation12 + $0x198] sm:$0xff]
    %v3609 = vld [vmem:[#allocation12 + $0x1a0] sm:$0xff]
    %v3610 = vld [vmem:[#allocation12 + $0x1a8] sm:$0xff]
    %v3611 = vld [vmem:[#allocation12 + $0x1b0] sm:$0xff]
    %v3612 = vld [vmem:[#allocation12 + $0x1b8] sm:$0xff]
    %v3613 = vld [vmem:[#allocation12 + $0x1c0] sm:$0xff]
    %v3614 = vld [vmem:[#allocation12 + $0x1c8] sm:$0xff]
    %v3615 = vld [vmem:[#allocation12 + $0x1d0] sm:$0xff]
    %v3616 = vld [vmem:[#allocation12 + $0x1d8] sm:$0xff]
    %v3617 = vld [vmem:[#allocation12 + $0x1e0] sm:$0xff]
    %v3618 = vld [vmem:[#allocation12 + $0x1e8] sm:$0xff]
    %v3619 = vld [vmem:[#allocation12 + $0x1f0] sm:$0xff]
    %v3620 = vld [vmem:[#allocation12 + $0x1f8] sm:$0xff]
    %v3621 = vld [vmem:[#allocation12 + $0x200] sm:$0xff]
    %v3622 = vld [vmem:[#allocation12 + $0x208] sm:$0xff]
    %v3623 = vld [vmem:[#allocation12 + $0x210] sm:$0xff]
    %v3624 = vld [vmem:[#allocation12 + $0x218] sm:$0xff]
    %v3625 = vld [vmem:[#allocation12 + $0x220] sm:$0xff]
    %v3626 = vld [vmem:[#allocation12 + $0x228] sm:$0xff]
    %v3627 = vld [vmem:[#allocation12 + $0x230] sm:$0xff]
    %v3628 = vld [vmem:[#allocation12 + $0x238] sm:$0xff]
    %v3629 = vld [vmem:[#allocation12 + $0x240] sm:$0xff]
    %v3630 = vld [vmem:[#allocation12 + $0x248] sm:$0xff]
    %v3631 = vld [vmem:[#allocation12 + $0x250] sm:$0xff]
    %v3632 = vld [vmem:[#allocation12 + $0x258] sm:$0xff]
    %v3633 = vld [vmem:[#allocation12 + $0x260] sm:$0xff]
    %v3634 = vld [vmem:[#allocation12 + $0x268] sm:$0xff]
    %v3635 = vld [vmem:[#allocation12 + $0x270] sm:$0xff]
    %v3636 = vld [vmem:[#allocation12 + $0x278] sm:$0xff]
    %v3637 = vld [vmem:[#allocation12 + $0x280] sm:$0xff]
    %v3638 = vld [vmem:[#allocation12 + $0x288] sm:$0xff]
    %v3639 = vld [vmem:[#allocation12 + $0x290] sm:$0xff]
    %v3640 = vld [vmem:[#allocation12 + $0x298] sm:$0xff]
    %v3641 = vld [vmem:[#allocation12 + $0x2a0] sm:$0xff]
    %v3642 = vld [vmem:[#allocation12 + $0x2a8] sm:$0xff]
    %v3643 = vld [vmem:[#allocation12 + $0x2b0] sm:$0xff]
    %v3644 = vld [vmem:[#allocation12 + $0x2b8] sm:$0xff]
    %v3645 = vld [vmem:[#allocation12 + $0x2c0] sm:$0xff]
    %v3646 = vld [vmem:[#allocation12 + $0x2c8] sm:$0xff]
    %v3647 = vld [vmem:[#allocation12 + $0x2d0] sm:$0xff]
    %v3648 = vld [vmem:[#allocation12 + $0x2d8] sm:$0xff]
    %v3649 = vld [vmem:[#allocation12 + $0x2e0] sm:$0xff]
    %v3650 = vld [vmem:[#allocation12 + $0x2e8] sm:$0xff]
    %v3651 = vld [vmem:[#allocation12 + $0x2f0] sm:$0xff]
    %v3652 = vld [vmem:[#allocation12 + $0x2f8] sm:$0xff]
    %v3653 = vld [vmem:[#allocation12 + $0x300] sm:$0xff]
    %v3654 = vld [vmem:[#allocation12 + $0x308] sm:$0xff]
    %v3655 = vld [vmem:[#allocation12 + $0x310] sm:$0xff]
    %v3656 = vld [vmem:[#allocation12 + $0x318] sm:$0xff]
    %v3657 = vld [vmem:[#allocation12 + $0x320] sm:$0xff]
    %v3658 = vld [vmem:[#allocation12 + $0x328] sm:$0xff]
    %v3659 = vld [vmem:[#allocation12 + $0x330] sm:$0xff]
    %v3660 = vld [vmem:[#allocation12 + $0x338] sm:$0xff]
    %v3661 = vld [vmem:[#allocation12 + $0x340] sm:$0xff]
    %v3662 = vld [vmem:[#allocation12 + $0x348] sm:$0xff]
    %v3663 = vld [vmem:[#allocation12 + $0x350] sm:$0xff]
    %v3664 = vld [vmem:[#allocation12 + $0x358] sm:$0xff]
    %v3665 = vld [vmem:[#allocation12 + $0x360] sm:$0xff]
    %v3666 = vld [vmem:[#allocation12 + $0x368] sm:$0xff]
    %v3667 = vld [vmem:[#allocation12 + $0x370] sm:$0xff]
    %v3668 = vld [vmem:[#allocation12 + $0x378] sm:$0xff]
    %v3669 = vld [vmem:[#allocation12 + $0x380] sm:$0xff]
    %v3670 = vld [vmem:[#allocation12 + $0x388] sm:$0xff]
    %v3671 = vld [vmem:[#allocation12 + $0x390] sm:$0xff]
    %v3672 = vld [vmem:[#allocation12 + $0x398] sm:$0xff]
    %v3673 = vld [vmem:[#allocation12 + $0x3a0] sm:$0xff]
    %v3674 = vld [vmem:[#allocation12 + $0x3a8] sm:$0xff]
    %v3675 = vld [vmem:[#allocation12 + $0x3b0] sm:$0xff]
    %v3676 = vld [vmem:[#allocation12 + $0x3b8] sm:$0xff]
    %v3677 = vld [vmem:[#allocation12 + $0x3c0] sm:$0xff]
    %v3678 = vld [vmem:[#allocation12 + $0x3c8] sm:$0xff]
    %v3679 = vld [vmem:[#allocation12 + $0x3d0] sm:$0xff]
    %v3680 = vld [vmem:[#allocation12 + $0x3d8] sm:$0xff]
    %v3681 = vld [vmem:[#allocation12 + $0x3e0] sm:$0xff]
    %v3682 = vld [vmem:[#allocation12 + $0x3e8] sm:$0xff]
    %v3683 = vld [vmem:[#allocation12 + $0x3f0] sm:$0xff]
    %v3684 = vld [vmem:[#allocation12 + $0x3f8] sm:$0xff]
    %v3685 = vld [vmem:[%s5] sm:$0xf]
    %v3687 = vlaneseq
    %v3688 = vshrl.u32 %v3687, 7
    %v3689 = vsub.s32 0, %v3688
    %v3690 = vrot.slane %v3685, %v3689
    %v3691 = vlaneseq
    %v3692 = vshrl.u32 %v3691, 7
    %v3693 = vsub.s32 1, %v3692
    %v3694 = vrot.slane %v3685, %v3693
    %v3695 = vlaneseq
    %v3696 = vshrl.u32 %v3695, 7
    %v3697 = vsub.s32 2, %v3696
    %v3698 = vrot.slane %v3685, %v3697
    %v3699 = vlaneseq
    %v3700 = vshrl.u32 %v3699, 7
    %v3701 = vsub.s32 3, %v3700
    %v3702 = vrot.slane %v3685, %v3701
    %3707 = vmatprep.subr.mxu0 %v3558
    %3708 = vmatpush1.msra.mxu0 %v3557
    %3709 = vmatprep.subr.mxu0 %v3562
    %3710 = vmatpush1.msra.mxu0 %v3561
    %3711 = vmatprep.subr.mxu0 %v3566
    %3712 = vmatpush1.msra.mxu0 %v3565
    %3713 = vmatprep.subr.mxu0 %v3570
    %3714 = vmatpush1.msra.mxu0 %v3569
    %3715 = vmatprep.subr.mxu0 %v3574
    %3716 = vmatpush1.msra.mxu0 %v3573
    %3717 = vmatprep.subr.mxu0 %v3578
    %3718 = vmatpush1.msra.mxu0 %v3577
    %3719 = vmatprep.subr.mxu0 %v3582
    %3720 = vmatpush1.msra.mxu0 %v3581
    %3721 = vmatprep.subr.mxu0 %v3586
    %3722 = vmatpush1.msra.mxu0 %v3585
    %3723 = vmatprep.subr.mxu0 %v3590
    %3724 = vmatpush1.msra.mxu0 %v3589
    %3725 = vmatprep.subr.mxu0 %v3594
    %3726 = vmatpush1.msra.mxu0 %v3593
    %3727 = vmatprep.subr.mxu0 %v3598
    %3728 = vmatpush1.msra.mxu0 %v3597
    %3729 = vmatprep.subr.mxu0 %v3602
    %3730 = vmatpush1.msra.mxu0 %v3601
    %3731 = vmatprep.subr.mxu0 %v3606
    %3732 = vmatpush1.msra.mxu0 %v3605
    %3733 = vmatprep.subr.mxu0 %v3610
    %3734 = vmatpush1.msra.mxu0 %v3609
    %3735 = vmatprep.subr.mxu0 %v3614
    %3736 = vmatpush1.msra.mxu0 %v3613
    %3737 = vmatprep.subr.mxu0 %v3618
    %3738 = vmatpush1.msra.mxu0 %v3617
    %3739 = vmatprep.subr.mxu0 %v3622
    %3740 = vmatpush1.msra.mxu0 %v3621
    %3741 = vmatprep.subr.mxu0 %v3626
    %3742 = vmatpush1.msra.mxu0 %v3625
    %3743 = vmatprep.subr.mxu0 %v3630
    %3744 = vmatpush1.msra.mxu0 %v3629
    %3745 = vmatprep.subr.mxu0 %v3634
    %3746 = vmatpush1.msra.mxu0 %v3633
    %3747 = vmatprep.subr.mxu0 %v3638
    %3748 = vmatpush1.msra.mxu0 %v3637
    %3749 = vmatprep.subr.mxu0 %v3642
    %3750 = vmatpush1.msra.mxu0 %v3641
    %3751 = vmatprep.subr.mxu0 %v3646
    %3752 = vmatpush1.msra.mxu0 %v3645
    %3753 = vmatprep.subr.mxu0 %v3650
    %3754 = vmatpush1.msra.mxu0 %v3649
    %3755 = vmatprep.subr.mxu0 %v3654
    %3756 = vmatpush1.msra.mxu0 %v3653
    %3757 = vmatprep.subr.mxu0 %v3658
    %3758 = vmatpush1.msra.mxu0 %v3657
    %3759 = vmatprep.subr.mxu0 %v3662
    %3760 = vmatpush1.msra.mxu0 %v3661
    %3761 = vmatprep.subr.mxu0 %v3666
    %3762 = vmatpush1.msra.mxu0 %v3665
    %3763 = vmatprep.subr.mxu0 %v3670
    %3764 = vmatpush1.msra.mxu0 %v3669
    %3765 = vmatprep.subr.mxu0 %v3674
    %3766 = vmatpush1.msra.mxu0 %v3673
    %3767 = vmatprep.subr.mxu0 %v3678
    %3768 = vmatpush1.msra.mxu0 %v3677
    %3769 = vmatprep.subr.mxu0 %v3682
    %3770 = vmatpush1.msra.mxu0 %v3681
    %3771 = vmatprep.mubr.f32.mxu0 %v3556
    %3772 = vmatmul.mubr.f32.gmra.mrb[0].mxu0 %v3553
    %v3773 = vpop.f32.mrb[0].mxu0
    %v3774 = vadd.f32 %v3690, %v3773
    %v3775 = vpop.f32.mrb[0].mxu0
    %v3776 = vadd.f32 %v3694, %v3775
    %3777 = vdwg.mxu0
    %3778 = vmatprep.subr.mxu0 %v3560
    %3779 = vmatpush1.msra.mxu0 %v3559
    %3780 = vmatprep.subr.mxu0 %v3564
    %3781 = vmatpush1.msra.mxu0 %v3563
    %3782 = vmatprep.subr.mxu0 %v3568
    %3783 = vmatpush1.msra.mxu0 %v3567
    %3784 = vmatprep.subr.mxu0 %v3572
    %3785 = vmatpush1.msra.mxu0 %v3571
    %3786 = vmatprep.subr.mxu0 %v3576
    %3787 = vmatpush1.msra.mxu0 %v3575
    %3788 = vmatprep.subr.mxu0 %v3580
    %3789 = vmatpush1.msra.mxu0 %v3579
    %3790 = vmatprep.subr.mxu0 %v3584
    %3791 = vmatpush1.msra.mxu0 %v3583
    %3792 = vmatprep.subr.mxu0 %v3588
    %3793 = vmatpush1.msra.mxu0 %v3587
    %3794 = vmatprep.subr.mxu0 %v3592
    %3795 = vmatpush1.msra.mxu0 %v3591
    %3796 = vmatprep.subr.mxu0 %v3596
    %3797 = vmatpush1.msra.mxu0 %v3595
    %3798 = vmatprep.subr.mxu0 %v3600
    %3799 = vmatpush1.msra.mxu0 %v3599
    %3800 = vmatprep.subr.mxu0 %v3604
    %3801 = vmatpush1.msra.mxu0 %v3603
    %3802 = vmatprep.subr.mxu0 %v3608
    %3803 = vmatpush1.msra.mxu0 %v3607
    %3804 = vmatprep.subr.mxu0 %v3612
    %3805 = vmatpush1.msra.mxu0 %v3611
    %3806 = vmatprep.subr.mxu0 %v3616
    %3807 = vmatpush1.msra.mxu0 %v3615
    %3808 = vmatprep.subr.mxu0 %v3620
    %3809 = vmatpush1.msra.mxu0 %v3619
    %3810 = vmatprep.subr.mxu0 %v3624
    %3811 = vmatpush1.msra.mxu0 %v3623
    %3812 = vmatprep.subr.mxu0 %v3628
    %3813 = vmatpush1.msra.mxu0 %v3627
    %3814 = vmatprep.subr.mxu0 %v3632
    %3815 = vmatpush1.msra.mxu0 %v3631
    %3816 = vmatprep.subr.mxu0 %v3636
    %3817 = vmatpush1.msra.mxu0 %v3635
    %3818 = vmatprep.subr.mxu0 %v3640
    %3819 = vmatpush1.msra.mxu0 %v3639
    %3820 = vmatprep.subr.mxu0 %v3644
    %3821 = vmatpush1.msra.mxu0 %v3643
    %3822 = vmatprep.subr.mxu0 %v3648
    %3823 = vmatpush1.msra.mxu0 %v3647
    %3824 = vmatprep.subr.mxu0 %v3652
    %3825 = vmatpush1.msra.mxu0 %v3651
    %3826 = vmatprep.subr.mxu0 %v3656
    %3827 = vmatpush1.msra.mxu0 %v3655
    %3828 = vmatprep.subr.mxu0 %v3660
    %3829 = vmatpush1.msra.mxu0 %v3659
    %3830 = vmatprep.subr.mxu0 %v3664
    %3831 = vmatpush1.msra.mxu0 %v3663
    %3832 = vmatprep.subr.mxu0 %v3668
    %3833 = vmatpush1.msra.mxu0 %v3667
    %3834 = vmatprep.subr.mxu0 %v3672
    %3835 = vmatpush1.msra.mxu0 %v3671
    %3836 = vmatprep.subr.mxu0 %v3676
    %3837 = vmatpush1.msra.mxu0 %v3675
    %3838 = vmatprep.subr.mxu0 %v3680
    %3839 = vmatpush1.msra.mxu0 %v3679
    %3840 = vmatprep.subr.mxu0 %v3684
    %3841 = vmatpush1.msra.mxu0 %v3683
    %3842 = vmatprep.mubr.f32.mxu0 %v3556
    %3843 = vmatmul.mubr.f32.gmra.mrb[0].mxu0 %v3553
    %v3844 = vpop.f32.mrb[0].mxu0
    %v3845 = vadd.f32 %v3698, %v3844
    %v3846 = vpop.f32.mrb[0].mxu0
    %v3847 = vadd.f32 %v3702, %v3846
    %3848 = vdwg.mxu0
    %v3849 = vld [vmem:[%s1024] sm:$0xff]
    %v3850 = vxor.u32 %v3774, 2147483648
    %v3851 = vmul.f32 %v3850, 1.442695
    %v3852 = vpow.pop %v3851
    %v3853 = vadd.f32 %v3852, 1.0
    %v3854 = vrcp.pop %v3853
    %v3855 = vmul.f32 1.0, %v3854
    %v3856 = vxor.u32 %v3776, 2147483648
    %v3857 = vmul.f32 %v3856, 1.442695
    %v3858 = vpow.pop %v3857
    %v3859 = vadd.f32 %v3858, 1.0
    %v3860 = vrcp.pop %v3859
    %v3861 = vmul.f32 1.0, %v3860
    %v3862 = vtanh.pop %v3845
    %v3863 = vxor.u32 %v3847, 2147483648
    %v3864 = vmul.f32 %v3863, 1.442695
    %v3865 = vpow.pop %v3864
    %v3866 = vadd.f32 %v3865, 1.0
    %v3867 = vrcp.pop %v3866
    %v3868 = vmul.f32 1.0, %v3867
    %v3869 = vmul.f32 %v3861, %v3849
    %v3870 = vmul.f32 %v3855, %v3862
    %v3871 = vadd.f32 %v3869, %v3870
    %v3872 = vtanh.pop %v3871
    %v3873 = vmul.f32 %v3868, %v3872
    %3874 = vst [vmem:[%s730] sm:$0xff] %v3873
    %3875 = vst [vmem:[%s1024] sm:$0xff] %v3871
    %s3876 = scalar_lea.vmem [#allocation3], 40
    %3877 = vst [vmem:[%s3876] sm:$0xff] %v3873
    %s3878 = scalar_lea.vmem [#allocation2], 192
    %v3879 = vld [vmem:[%s3878] sm:$0xff]
    %v3880 = vld [vmem:[%s3878 + $0x8] sm:$0xff]
    %v3881 = vld [vmem:[%s3878 + $0x10] sm:$0xff]
    %v3882 = vld [vmem:[%s3878 + $0x18] sm:$0xff]
    %v3883 = vld [vmem:[#allocation4] sm:$0xff]
    %v3884 = vld [vmem:[#allocation11] sm:$0xff]
    %v3885 = vld [vmem:[#allocation11 + $0x8] sm:$0xff]
    %v3886 = vld [vmem:[#allocation11 + $0x10] sm:$0xff]
    %v3887 = vld [vmem:[#allocation11 + $0x18] sm:$0xff]
    %v3888 = vld [vmem:[#allocation11 + $0x20] sm:$0xff]
    %v3889 = vld [vmem:[#allocation11 + $0x28] sm:$0xff]
    %v3890 = vld [vmem:[#allocation11 + $0x30] sm:$0xff]
    %v3891 = vld [vmem:[#allocation11 + $0x38] sm:$0xff]
    %v3892 = vld [vmem:[#allocation11 + $0x40] sm:$0xff]
    %v3893 = vld [vmem:[#allocation11 + $0x48] sm:$0xff]
    %v3894 = vld [vmem:[#allocation11 + $0x50] sm:$0xff]
    %v3895 = vld [vmem:[#allocation11 + $0x58] sm:$0xff]
    %v3896 = vld [vmem:[#allocation11 + $0x60] sm:$0xff]
    %v3897 = vld [vmem:[#allocation11 + $0x68] sm:$0xff]
    %v3898 = vld [vmem:[#allocation11 + $0x70] sm:$0xff]
    %v3899 = vld [vmem:[#allocation11 + $0x78] sm:$0xff]
    %v3900 = vld [vmem:[#allocation11 + $0x80] sm:$0xff]
    %v3901 = vld [vmem:[#allocation11 + $0x88] sm:$0xff]
    %v3902 = vld [vmem:[#allocation11 + $0x90] sm:$0xff]
    %v3903 = vld [vmem:[#allocation11 + $0x98] sm:$0xff]
    %v3904 = vld [vmem:[#allocation11 + $0xa0] sm:$0xff]
    %v3905 = vld [vmem:[#allocation11 + $0xa8] sm:$0xff]
    %v3906 = vld [vmem:[#allocation11 + $0xb0] sm:$0xff]
    %v3907 = vld [vmem:[#allocation11 + $0xb8] sm:$0xff]
    %v3908 = vld [vmem:[#allocation11 + $0xc0] sm:$0xff]
    %v3909 = vld [vmem:[#allocation11 + $0xc8] sm:$0xff]
    %v3910 = vld [vmem:[#allocation11 + $0xd0] sm:$0xff]
    %v3911 = vld [vmem:[#allocation11 + $0xd8] sm:$0xff]
    %v3912 = vld [vmem:[#allocation11 + $0xe0] sm:$0xff]
    %v3913 = vld [vmem:[#allocation11 + $0xe8] sm:$0xff]
    %v3914 = vld [vmem:[#allocation11 + $0xf0] sm:$0xff]
    %v3915 = vld [vmem:[#allocation11 + $0xf8] sm:$0xff]
    %v3916 = vld [vmem:[#allocation11 + $0x100] sm:$0xff]
    %v3917 = vld [vmem:[#allocation11 + $0x108] sm:$0xff]
    %v3918 = vld [vmem:[#allocation11 + $0x110] sm:$0xff]
    %v3919 = vld [vmem:[#allocation11 + $0x118] sm:$0xff]
    %v3920 = vld [vmem:[#allocation11 + $0x120] sm:$0xff]
    %v3921 = vld [vmem:[#allocation11 + $0x128] sm:$0xff]
    %v3922 = vld [vmem:[#allocation11 + $0x130] sm:$0xff]
    %v3923 = vld [vmem:[#allocation11 + $0x138] sm:$0xff]
    %v3924 = vld [vmem:[#allocation11 + $0x140] sm:$0xff]
    %v3925 = vld [vmem:[#allocation11 + $0x148] sm:$0xff]
    %v3926 = vld [vmem:[#allocation11 + $0x150] sm:$0xff]
    %v3927 = vld [vmem:[#allocation11 + $0x158] sm:$0xff]
    %v3928 = vld [vmem:[#allocation11 + $0x160] sm:$0xff]
    %v3929 = vld [vmem:[#allocation11 + $0x168] sm:$0xff]
    %v3930 = vld [vmem:[#allocation11 + $0x170] sm:$0xff]
    %v3931 = vld [vmem:[#allocation11 + $0x178] sm:$0xff]
    %v3932 = vld [vmem:[#allocation11 + $0x180] sm:$0xff]
    %v3933 = vld [vmem:[#allocation11 + $0x188] sm:$0xff]
    %v3934 = vld [vmem:[#allocation11 + $0x190] sm:$0xff]
    %v3935 = vld [vmem:[#allocation11 + $0x198] sm:$0xff]
    %v3936 = vld [vmem:[#allocation11 + $0x1a0] sm:$0xff]
    %v3937 = vld [vmem:[#allocation11 + $0x1a8] sm:$0xff]
    %v3938 = vld [vmem:[#allocation11 + $0x1b0] sm:$0xff]
    %v3939 = vld [vmem:[#allocation11 + $0x1b8] sm:$0xff]
    %v3940 = vld [vmem:[#allocation11 + $0x1c0] sm:$0xff]
    %v3941 = vld [vmem:[#allocation11 + $0x1c8] sm:$0xff]
    %v3942 = vld [vmem:[#allocation11 + $0x1d0] sm:$0xff]
    %v3943 = vld [vmem:[#allocation11 + $0x1d8] sm:$0xff]
    %v3944 = vld [vmem:[#allocation11 + $0x1e0] sm:$0xff]
    %v3945 = vld [vmem:[#allocation11 + $0x1e8] sm:$0xff]
    %v3946 = vld [vmem:[#allocation11 + $0x1f0] sm:$0xff]
    %v3947 = vld [vmem:[#allocation11 + $0x1f8] sm:$0xff]
    %3948 = vmatprep.subr.mxu0 %v3885
    %3949 = vmatpush1.msra.mxu0 %v3884
    %3950 = vmatprep.subr.mxu0 %v3889
    %3951 = vmatpush1.msra.mxu0 %v3888
    %3952 = vmatprep.subr.mxu0 %v3893
    %3953 = vmatpush1.msra.mxu0 %v3892
    %3954 = vmatprep.subr.mxu0 %v3897
    %3955 = vmatpush1.msra.mxu0 %v3896
    %3956 = vmatprep.subr.mxu0 %v3901
    %3957 = vmatpush1.msra.mxu0 %v3900
    %3958 = vmatprep.subr.mxu0 %v3905
    %3959 = vmatpush1.msra.mxu0 %v3904
    %3960 = vmatprep.subr.mxu0 %v3909
    %3961 = vmatpush1.msra.mxu0 %v3908
    %3962 = vmatprep.subr.mxu0 %v3913
    %3963 = vmatpush1.msra.mxu0 %v3912
    %3964 = vmatprep.subr.mxu0 %v3917
    %3965 = vmatpush1.msra.mxu0 %v3916
    %3966 = vmatprep.subr.mxu0 %v3921
    %3967 = vmatpush1.msra.mxu0 %v3920
    %3968 = vmatprep.subr.mxu0 %v3925
    %3969 = vmatpush1.msra.mxu0 %v3924
    %3970 = vmatprep.subr.mxu0 %v3929
    %3971 = vmatpush1.msra.mxu0 %v3928
    %3972 = vmatprep.subr.mxu0 %v3933
    %3973 = vmatpush1.msra.mxu0 %v3932
    %3974 = vmatprep.subr.mxu0 %v3937
    %3975 = vmatpush1.msra.mxu0 %v3936
    %3976 = vmatprep.subr.mxu0 %v3941
    %3977 = vmatpush1.msra.mxu0 %v3940
    %3978 = vmatprep.subr.mxu0 %v3945
    %3979 = vmatpush1.msra.mxu0 %v3944
    %3980 = vmatprep.subr.mxu0 0.0
    %3981 = vmatpush1.msra.mxu0 0.0
    %3982 = vmatprep.subr.mxu0 0.0
    %3983 = vmatpush1.msra.mxu0 0.0
    %3984 = vmatprep.subr.mxu0 0.0
    %3985 = vmatpush1.msra.mxu0 0.0
    %3986 = vmatprep.subr.mxu0 0.0
    %3987 = vmatpush1.msra.mxu0 0.0
    %3988 = vmatprep.subr.mxu0 0.0
    %3989 = vmatpush1.msra.mxu0 0.0
    %3990 = vmatprep.subr.mxu0 0.0
    %3991 = vmatpush1.msra.mxu0 0.0
    %3992 = vmatprep.subr.mxu0 0.0
    %3993 = vmatpush1.msra.mxu0 0.0
    %3994 = vmatprep.subr.mxu0 0.0
    %3995 = vmatpush1.msra.mxu0 0.0
    %3996 = vmatprep.subr.mxu0 0.0
    %3997 = vmatpush1.msra.mxu0 0.0
    %3998 = vmatprep.subr.mxu0 0.0
    %3999 = vmatpush1.msra.mxu0 0.0
    %4000 = vmatprep.subr.mxu0 0.0
    %4001 = vmatpush1.msra.mxu0 0.0
    %4002 = vmatprep.subr.mxu0 0.0
    %4003 = vmatpush1.msra.mxu0 0.0
    %4004 = vmatprep.subr.mxu0 0.0
    %4005 = vmatpush1.msra.mxu0 0.0
    %4006 = vmatprep.subr.mxu0 0.0
    %4007 = vmatpush1.msra.mxu0 0.0
    %4008 = vmatprep.subr.mxu0 0.0
    %4009 = vmatpush1.msra.mxu0 0.0
    %4010 = vmatprep.subr.mxu0 0.0
    %4011 = vmatpush1.msra.mxu0 0.0
    %4012 = vmatprep.mubr.f32.mxu0 0.0
    %4013 = vmatmul.mubr.f32.gmra.mrb[0].mxu0 %v3883
    %v4014 = vpop.f32.mrb[0].mxu0
    %v4015 = vadd.f32 0.0, %v4014
    %v4016 = vpop.f32.mrb[0].mxu0
    %v4017 = vadd.f32 0.0, %v4016
    %4018 = vdwg.mxu0
    %4019 = vmatprep.subr.mxu0 %v3887
    %4020 = vmatpush1.msra.mxu0 %v3886
    %4021 = vmatprep.subr.mxu0 %v3891
    %4022 = vmatpush1.msra.mxu0 %v3890
    %4023 = vmatprep.subr.mxu0 %v3895
    %4024 = vmatpush1.msra.mxu0 %v3894
    %4025 = vmatprep.subr.mxu0 %v3899
    %4026 = vmatpush1.msra.mxu0 %v3898
    %4027 = vmatprep.subr.mxu0 %v3903
    %4028 = vmatpush1.msra.mxu0 %v3902
    %4029 = vmatprep.subr.mxu0 %v3907
    %4030 = vmatpush1.msra.mxu0 %v3906
    %4031 = vmatprep.subr.mxu0 %v3911
    %4032 = vmatpush1.msra.mxu0 %v3910
    %4033 = vmatprep.subr.mxu0 %v3915
    %4034 = vmatpush1.msra.mxu0 %v3914
    %4035 = vmatprep.subr.mxu0 %v3919
    %4036 = vmatpush1.msra.mxu0 %v3918
    %4037 = vmatprep.subr.mxu0 %v3923
    %4038 = vmatpush1.msra.mxu0 %v3922
    %4039 = vmatprep.subr.mxu0 %v3927
    %4040 = vmatpush1.msra.mxu0 %v3926
    %4041 = vmatprep.subr.mxu0 %v3931
    %4042 = vmatpush1.msra.mxu0 %v3930
    %4043 = vmatprep.subr.mxu0 %v3935
    %4044 = vmatpush1.msra.mxu0 %v3934
    %4045 = vmatprep.subr.mxu0 %v3939
    %4046 = vmatpush1.msra.mxu0 %v3938
    %4047 = vmatprep.subr.mxu0 %v3943
    %4048 = vmatpush1.msra.mxu0 %v3942
    %4049 = vmatprep.subr.mxu0 %v3947
    %4050 = vmatpush1.msra.mxu0 %v3946
    %4051 = vmatprep.subr.mxu0 0.0
    %4052 = vmatpush1.msra.mxu0 0.0
    %4053 = vmatprep.subr.mxu0 0.0
    %4054 = vmatpush1.msra.mxu0 0.0
    %4055 = vmatprep.subr.mxu0 0.0
    %4056 = vmatpush1.msra.mxu0 0.0
    %4057 = vmatprep.subr.mxu0 0.0
    %4058 = vmatpush1.msra.mxu0 0.0
    %4059 = vmatprep.subr.mxu0 0.0
    %4060 = vmatpush1.msra.mxu0 0.0
    %4061 = vmatprep.subr.mxu0 0.0
    %4062 = vmatpush1.msra.mxu0 0.0
    %4063 = vmatprep.subr.mxu0 0.0
    %4064 = vmatpush1.msra.mxu0 0.0
    %4065 = vmatprep.subr.mxu0 0.0
    %4066 = vmatpush1.msra.mxu0 0.0
    %4067 = vmatprep.subr.mxu0 0.0
    %4068 = vmatpush1.msra.mxu0 0.0
    %4069 = vmatprep.subr.mxu0 0.0
    %4070 = vmatpush1.msra.mxu0 0.0
    %4071 = vmatprep.subr.mxu0 0.0
    %4072 = vmatpush1.msra.mxu0 0.0
    %4073 = vmatprep.subr.mxu0 0.0
    %4074 = vmatpush1.msra.mxu0 0.0
    %4075 = vmatprep.subr.mxu0 0.0
    %4076 = vmatpush1.msra.mxu0 0.0
    %4077 = vmatprep.subr.mxu0 0.0
    %4078 = vmatpush1.msra.mxu0 0.0
    %4079 = vmatprep.subr.mxu0 0.0
    %4080 = vmatpush1.msra.mxu0 0.0
    %4081 = vmatprep.subr.mxu0 0.0
    %4082 = vmatpush1.msra.mxu0 0.0
    %4083 = vmatprep.mubr.f32.mxu0 0.0
    %4084 = vmatmul.mubr.f32.gmra.mrb[0].mxu0 %v3883
    %v4085 = vpop.f32.mrb[0].mxu0
    %v4086 = vadd.f32 0.0, %v4085
    %v4087 = vpop.f32.mrb[0].mxu0
    %v4088 = vadd.f32 0.0, %v4087
    %4089 = vdwg.mxu0
    %v4090 = vadd.f32 %v3879, %v4015
    %v4091 = vadd.f32 %v3880, %v4017
    %v4092 = vadd.f32 %v3881, %v4086
    %v4093 = vadd.f32 %v3882, %v4088
    %v4094 = vld [vmem:[#allocation5] sm:$0xff]
    %v4095 = vxor.u32 %v4090, 2147483648
    %v4096 = vmul.f32 %v4095, 1.442695
    %v4097 = vpow.pop %v4096
    %v4098 = vadd.f32 %v4097, 1.0
    %v4099 = vrcp.pop %v4098
    %v4100 = vmul.f32 1.0, %v4099
    %v4101 = vxor.u32 %v4091, 2147483648
    %v4102 = vmul.f32 %v4101, 1.442695
    %v4103 = vpow.pop %v4102
    %v4104 = vadd.f32 %v4103, 1.0
    %v4105 = vrcp.pop %v4104
    %v4106 = vmul.f32 1.0, %v4105
    %v4107 = vtanh.pop %v4092
    %v4108 = vxor.u32 %v4093, 2147483648
    %v4109 = vmul.f32 %v4108, 1.442695
    %v4110 = vpow.pop %v4109
    %v4111 = vadd.f32 %v4110, 1.0
    %v4112 = vrcp.pop %v4111
    %v4113 = vmul.f32 1.0, %v4112
    %v4114 = vmul.f32 %v4106, %v4094
    %v4115 = vmul.f32 %v4100, %v4107
    %v4116 = vadd.f32 %v4114, %v4115
    %v4117 = vtanh.pop %v4116
    %v4118 = vmul.f32 %v4113, %v4117
    %4119 = vst [vmem:[#allocation4] sm:$0xff] %v4118
    %4120 = vst [vmem:[#allocation5] sm:$0xff] %v4116
    %v4121 = vld [vmem:[%s730] sm:$0xff]
    %v4122 = vld [vmem:[#allocation12] sm:$0xff]
    %v4123 = vld [vmem:[#allocation12 + $0x8] sm:$0xff]
    %v4124 = vld [vmem:[#allocation12 + $0x10] sm:$0xff]
    %v4125 = vld [vmem:[#allocation12 + $0x18] sm:$0xff]
    %v4126 = vld [vmem:[#allocation12 + $0x20] sm:$0xff]
    %v4127 = vld [vmem:[#allocation12 + $0x28] sm:$0xff]
    %v4128 = vld [vmem:[#allocation12 + $0x30] sm:$0xff]
    %v4129 = vld [vmem:[#allocation12 + $0x38] sm:$0xff]
    %v4130 = vld [vmem:[#allocation12 + $0x40] sm:$0xff]
    %v4131 = vld [vmem:[#allocation12 + $0x48] sm:$0xff]
    %v4132 = vld [vmem:[#allocation12 + $0x50] sm:$0xff]
    %v4133 = vld [vmem:[#allocation12 + $0x58] sm:$0xff]
    %v4134 = vld [vmem:[#allocation12 + $0x60] sm:$0xff]
    %v4135 = vld [vmem:[#allocation12 + $0x68] sm:$0xff]
    %v4136 = vld [vmem:[#allocation12 + $0x70] sm:$0xff]
    %v4137 = vld [vmem:[#allocation12 + $0x78] sm:$0xff]
    %v4138 = vld [vmem:[#allocation12 + $0x80] sm:$0xff]
    %v4139 = vld [vmem:[#allocation12 + $0x88] sm:$0xff]
    %v4140 = vld [vmem:[#allocation12 + $0x90] sm:$0xff]
    %v4141 = vld [vmem:[#allocation12 + $0x98] sm:$0xff]
    %v4142 = vld [vmem:[#allocation12 + $0xa0] sm:$0xff]
    %v4143 = vld [vmem:[#allocation12 + $0xa8] sm:$0xff]
    %v4144 = vld [vmem:[#allocation12 + $0xb0] sm:$0xff]
    %v4145 = vld [vmem:[#allocation12 + $0xb8] sm:$0xff]
    %v4146 = vld [vmem:[#allocation12 + $0xc0] sm:$0xff]
    %v4147 = vld [vmem:[#allocation12 + $0xc8] sm:$0xff]
    %v4148 = vld [vmem:[#allocation12 + $0xd0] sm:$0xff]
    %v4149 = vld [vmem:[#allocation12 + $0xd8] sm:$0xff]
    %v4150 = vld [vmem:[#allocation12 + $0xe0] sm:$0xff]
    %v4151 = vld [vmem:[#allocation12 + $0xe8] sm:$0xff]
    %v4152 = vld [vmem:[#allocation12 + $0xf0] sm:$0xff]
    %v4153 = vld [vmem:[#allocation12 + $0xf8] sm:$0xff]
    %v4154 = vld [vmem:[#allocation12 + $0x100] sm:$0xff]
    %v4155 = vld [vmem:[#allocation12 + $0x108] sm:$0xff]
    %v4156 = vld [vmem:[#allocation12 + $0x110] sm:$0xff]
    %v4157 = vld [vmem:[#allocation12 + $0x118] sm:$0xff]
    %v4158 = vld [vmem:[#allocation12 + $0x120] sm:$0xff]
    %v4159 = vld [vmem:[#allocation12 + $0x128] sm:$0xff]
    %v4160 = vld [vmem:[#allocation12 + $0x130] sm:$0xff]
    %v4161 = vld [vmem:[#allocation12 + $0x138] sm:$0xff]
    %v4162 = vld [vmem:[#allocation12 + $0x140] sm:$0xff]
    %v4163 = vld [vmem:[#allocation12 + $0x148] sm:$0xff]
    %v4164 = vld [vmem:[#allocation12 + $0x150] sm:$0xff]
    %v4165 = vld [vmem:[#allocation12 + $0x158] sm:$0xff]
    %v4166 = vld [vmem:[#allocation12 + $0x160] sm:$0xff]
    %v4167 = vld [vmem:[#allocation12 + $0x168] sm:$0xff]
    %v4168 = vld [vmem:[#allocation12 + $0x170] sm:$0xff]
    %v4169 = vld [vmem:[#allocation12 + $0x178] sm:$0xff]
    %v4170 = vld [vmem:[#allocation12 + $0x180] sm:$0xff]
    %v4171 = vld [vmem:[#allocation12 + $0x188] sm:$0xff]
    %v4172 = vld [vmem:[#allocation12 + $0x190] sm:$0xff]
    %v4173 = vld [vmem:[#allocation12 + $0x198] sm:$0xff]
    %v4174 = vld [vmem:[#allocation12 + $0x1a0] sm:$0xff]
    %v4175 = vld [vmem:[#allocation12 + $0x1a8] sm:$0xff]
    %v4176 = vld [vmem:[#allocation12 + $0x1b0] sm:$0xff]
    %v4177 = vld [vmem:[#allocation12 + $0x1b8] sm:$0xff]
    %v4178 = vld [vmem:[#allocation12 + $0x1c0] sm:$0xff]
    %v4179 = vld [vmem:[#allocation12 + $0x1c8] sm:$0xff]
    %v4180 = vld [vmem:[#allocation12 + $0x1d0] sm:$0xff]
    %v4181 = vld [vmem:[#allocation12 + $0x1d8] sm:$0xff]
    %v4182 = vld [vmem:[#allocation12 + $0x1e0] sm:$0xff]
    %v4183 = vld [vmem:[#allocation12 + $0x1e8] sm:$0xff]
    %v4184 = vld [vmem:[#allocation12 + $0x1f0] sm:$0xff]
    %v4185 = vld [vmem:[#allocation12 + $0x1f8] sm:$0xff]
    %v4186 = vld [vmem:[#allocation12 + $0x200] sm:$0xff]
    %v4187 = vld [vmem:[#allocation12 + $0x208] sm:$0xff]
    %v4188 = vld [vmem:[#allocation12 + $0x210] sm:$0xff]
    %v4189 = vld [vmem:[#allocation12 + $0x218] sm:$0xff]
    %v4190 = vld [vmem:[#allocation12 + $0x220] sm:$0xff]
    %v4191 = vld [vmem:[#allocation12 + $0x228] sm:$0xff]
    %v4192 = vld [vmem:[#allocation12 + $0x230] sm:$0xff]
    %v4193 = vld [vmem:[#allocation12 + $0x238] sm:$0xff]
    %v4194 = vld [vmem:[#allocation12 + $0x240] sm:$0xff]
    %v4195 = vld [vmem:[#allocation12 + $0x248] sm:$0xff]
    %v4196 = vld [vmem:[#allocation12 + $0x250] sm:$0xff]
    %v4197 = vld [vmem:[#allocation12 + $0x258] sm:$0xff]
    %v4198 = vld [vmem:[#allocation12 + $0x260] sm:$0xff]
    %v4199 = vld [vmem:[#allocation12 + $0x268] sm:$0xff]
    %v4200 = vld [vmem:[#allocation12 + $0x270] sm:$0xff]
    %v4201 = vld [vmem:[#allocation12 + $0x278] sm:$0xff]
    %v4202 = vld [vmem:[#allocation12 + $0x280] sm:$0xff]
    %v4203 = vld [vmem:[#allocation12 + $0x288] sm:$0xff]
    %v4204 = vld [vmem:[#allocation12 + $0x290] sm:$0xff]
    %v4205 = vld [vmem:[#allocation12 + $0x298] sm:$0xff]
    %v4206 = vld [vmem:[#allocation12 + $0x2a0] sm:$0xff]
    %v4207 = vld [vmem:[#allocation12 + $0x2a8] sm:$0xff]
    %v4208 = vld [vmem:[#allocation12 + $0x2b0] sm:$0xff]
    %v4209 = vld [vmem:[#allocation12 + $0x2b8] sm:$0xff]
    %v4210 = vld [vmem:[#allocation12 + $0x2c0] sm:$0xff]
    %v4211 = vld [vmem:[#allocation12 + $0x2c8] sm:$0xff]
    %v4212 = vld [vmem:[#allocation12 + $0x2d0] sm:$0xff]
    %v4213 = vld [vmem:[#allocation12 + $0x2d8] sm:$0xff]
    %v4214 = vld [vmem:[#allocation12 + $0x2e0] sm:$0xff]
    %v4215 = vld [vmem:[#allocation12 + $0x2e8] sm:$0xff]
    %v4216 = vld [vmem:[#allocation12 + $0x2f0] sm:$0xff]
    %v4217 = vld [vmem:[#allocation12 + $0x2f8] sm:$0xff]
    %v4218 = vld [vmem:[#allocation12 + $0x300] sm:$0xff]
    %v4219 = vld [vmem:[#allocation12 + $0x308] sm:$0xff]
    %v4220 = vld [vmem:[#allocation12 + $0x310] sm:$0xff]
    %v4221 = vld [vmem:[#allocation12 + $0x318] sm:$0xff]
    %v4222 = vld [vmem:[#allocation12 + $0x320] sm:$0xff]
    %v4223 = vld [vmem:[#allocation12 + $0x328] sm:$0xff]
    %v4224 = vld [vmem:[#allocation12 + $0x330] sm:$0xff]
    %v4225 = vld [vmem:[#allocation12 + $0x338] sm:$0xff]
    %v4226 = vld [vmem:[#allocation12 + $0x340] sm:$0xff]
    %v4227 = vld [vmem:[#allocation12 + $0x348] sm:$0xff]
    %v4228 = vld [vmem:[#allocation12 + $0x350] sm:$0xff]
    %v4229 = vld [vmem:[#allocation12 + $0x358] sm:$0xff]
    %v4230 = vld [vmem:[#allocation12 + $0x360] sm:$0xff]
    %v4231 = vld [vmem:[#allocation12 + $0x368] sm:$0xff]
    %v4232 = vld [vmem:[#allocation12 + $0x370] sm:$0xff]
    %v4233 = vld [vmem:[#allocation12 + $0x378] sm:$0xff]
    %v4234 = vld [vmem:[#allocation12 + $0x380] sm:$0xff]
    %v4235 = vld [vmem:[#allocation12 + $0x388] sm:$0xff]
    %v4236 = vld [vmem:[#allocation12 + $0x390] sm:$0xff]
    %v4237 = vld [vmem:[#allocation12 + $0x398] sm:$0xff]
    %v4238 = vld [vmem:[#allocation12 + $0x3a0] sm:$0xff]
    %v4239 = vld [vmem:[#allocation12 + $0x3a8] sm:$0xff]
    %v4240 = vld [vmem:[#allocation12 + $0x3b0] sm:$0xff]
    %v4241 = vld [vmem:[#allocation12 + $0x3b8] sm:$0xff]
    %v4242 = vld [vmem:[#allocation12 + $0x3c0] sm:$0xff]
    %v4243 = vld [vmem:[#allocation12 + $0x3c8] sm:$0xff]
    %v4244 = vld [vmem:[#allocation12 + $0x3d0] sm:$0xff]
    %v4245 = vld [vmem:[#allocation12 + $0x3d8] sm:$0xff]
    %v4246 = vld [vmem:[#allocation12 + $0x3e0] sm:$0xff]
    %v4247 = vld [vmem:[#allocation12 + $0x3e8] sm:$0xff]
    %v4248 = vld [vmem:[#allocation12 + $0x3f0] sm:$0xff]
    %v4249 = vld [vmem:[#allocation12 + $0x3f8] sm:$0xff]
    %v4250 = vld [vmem:[%s5] sm:$0xf]
    %v4252 = vlaneseq
    %v4253 = vshrl.u32 %v4252, 7
    %v4254 = vsub.s32 0, %v4253
    %v4255 = vrot.slane %v4250, %v4254
    %v4256 = vlaneseq
    %v4257 = vshrl.u32 %v4256, 7
    %v4258 = vsub.s32 1, %v4257
    %v4259 = vrot.slane %v4250, %v4258
    %v4260 = vlaneseq
    %v4261 = vshrl.u32 %v4260, 7
    %v4262 = vsub.s32 2, %v4261
    %v4263 = vrot.slane %v4250, %v4262
    %v4264 = vlaneseq
    %v4265 = vshrl.u32 %v4264, 7
    %v4266 = vsub.s32 3, %v4265
    %v4267 = vrot.slane %v4250, %v4266
    %4272 = vmatprep.subr.mxu0 %v4123
    %4273 = vmatpush1.msra.mxu0 %v4122
    %4274 = vmatprep.subr.mxu0 %v4127
    %4275 = vmatpush1.msra.mxu0 %v4126
    %4276 = vmatprep.subr.mxu0 %v4131
    %4277 = vmatpush1.msra.mxu0 %v4130
    %4278 = vmatprep.subr.mxu0 %v4135
    %4279 = vmatpush1.msra.mxu0 %v4134
    %4280 = vmatprep.subr.mxu0 %v4139
    %4281 = vmatpush1.msra.mxu0 %v4138
    %4282 = vmatprep.subr.mxu0 %v4143
    %4283 = vmatpush1.msra.mxu0 %v4142
    %4284 = vmatprep.subr.mxu0 %v4147
    %4285 = vmatpush1.msra.mxu0 %v4146
    %4286 = vmatprep.subr.mxu0 %v4151
    %4287 = vmatpush1.msra.mxu0 %v4150
    %4288 = vmatprep.subr.mxu0 %v4155
    %4289 = vmatpush1.msra.mxu0 %v4154
    %4290 = vmatprep.subr.mxu0 %v4159
    %4291 = vmatpush1.msra.mxu0 %v4158
    %4292 = vmatprep.subr.mxu0 %v4163
    %4293 = vmatpush1.msra.mxu0 %v4162
    %4294 = vmatprep.subr.mxu0 %v4167
    %4295 = vmatpush1.msra.mxu0 %v4166
    %4296 = vmatprep.subr.mxu0 %v4171
    %4297 = vmatpush1.msra.mxu0 %v4170
    %4298 = vmatprep.subr.mxu0 %v4175
    %4299 = vmatpush1.msra.mxu0 %v4174
    %4300 = vmatprep.subr.mxu0 %v4179
    %4301 = vmatpush1.msra.mxu0 %v4178
    %4302 = vmatprep.subr.mxu0 %v4183
    %4303 = vmatpush1.msra.mxu0 %v4182
    %4304 = vmatprep.subr.mxu0 %v4187
    %4305 = vmatpush1.msra.mxu0 %v4186
    %4306 = vmatprep.subr.mxu0 %v4191
    %4307 = vmatpush1.msra.mxu0 %v4190
    %4308 = vmatprep.subr.mxu0 %v4195
    %4309 = vmatpush1.msra.mxu0 %v4194
    %4310 = vmatprep.subr.mxu0 %v4199
    %4311 = vmatpush1.msra.mxu0 %v4198
    %4312 = vmatprep.subr.mxu0 %v4203
    %4313 = vmatpush1.msra.mxu0 %v4202
    %4314 = vmatprep.subr.mxu0 %v4207
    %4315 = vmatpush1.msra.mxu0 %v4206
    %4316 = vmatprep.subr.mxu0 %v4211
    %4317 = vmatpush1.msra.mxu0 %v4210
    %4318 = vmatprep.subr.mxu0 %v4215
    %4319 = vmatpush1.msra.mxu0 %v4214
    %4320 = vmatprep.subr.mxu0 %v4219
    %4321 = vmatpush1.msra.mxu0 %v4218
    %4322 = vmatprep.subr.mxu0 %v4223
    %4323 = vmatpush1.msra.mxu0 %v4222
    %4324 = vmatprep.subr.mxu0 %v4227
    %4325 = vmatpush1.msra.mxu0 %v4226
    %4326 = vmatprep.subr.mxu0 %v4231
    %4327 = vmatpush1.msra.mxu0 %v4230
    %4328 = vmatprep.subr.mxu0 %v4235
    %4329 = vmatpush1.msra.mxu0 %v4234
    %4330 = vmatprep.subr.mxu0 %v4239
    %4331 = vmatpush1.msra.mxu0 %v4238
    %4332 = vmatprep.subr.mxu0 %v4243
    %4333 = vmatpush1.msra.mxu0 %v4242
    %4334 = vmatprep.subr.mxu0 %v4247
    %4335 = vmatpush1.msra.mxu0 %v4246
    %4336 = vmatprep.mubr.f32.mxu0 %v4121
    %4337 = vmatmul.mubr.f32.gmra.mrb[0].mxu0 %v4118
    %v4338 = vpop.f32.mrb[0].mxu0
    %v4339 = vadd.f32 %v4255, %v4338
    %v4340 = vpop.f32.mrb[0].mxu0
    %v4341 = vadd.f32 %v4259, %v4340
    %4342 = vdwg.mxu0
    %4343 = vmatprep.subr.mxu0 %v4125
    %4344 = vmatpush1.msra.mxu0 %v4124
    %4345 = vmatprep.subr.mxu0 %v4129
    %4346 = vmatpush1.msra.mxu0 %v4128
    %4347 = vmatprep.subr.mxu0 %v4133
    %4348 = vmatpush1.msra.mxu0 %v4132
    %4349 = vmatprep.subr.mxu0 %v4137
    %4350 = vmatpush1.msra.mxu0 %v4136
    %4351 = vmatprep.subr.mxu0 %v4141
    %4352 = vmatpush1.msra.mxu0 %v4140
    %4353 = vmatprep.subr.mxu0 %v4145
    %4354 = vmatpush1.msra.mxu0 %v4144
    %4355 = vmatprep.subr.mxu0 %v4149
    %4356 = vmatpush1.msra.mxu0 %v4148
    %4357 = vmatprep.subr.mxu0 %v4153
    %4358 = vmatpush1.msra.mxu0 %v4152
    %4359 = vmatprep.subr.mxu0 %v4157
    %4360 = vmatpush1.msra.mxu0 %v4156
    %4361 = vmatprep.subr.mxu0 %v4161
    %4362 = vmatpush1.msra.mxu0 %v4160
    %4363 = vmatprep.subr.mxu0 %v4165
    %4364 = vmatpush1.msra.mxu0 %v4164
    %4365 = vmatprep.subr.mxu0 %v4169
    %4366 = vmatpush1.msra.mxu0 %v4168
    %4367 = vmatprep.subr.mxu0 %v4173
    %4368 = vmatpush1.msra.mxu0 %v4172
    %4369 = vmatprep.subr.mxu0 %v4177
    %4370 = vmatpush1.msra.mxu0 %v4176
    %4371 = vmatprep.subr.mxu0 %v4181
    %4372 = vmatpush1.msra.mxu0 %v4180
    %4373 = vmatprep.subr.mxu0 %v4185
    %4374 = vmatpush1.msra.mxu0 %v4184
    %4375 = vmatprep.subr.mxu0 %v4189
    %4376 = vmatpush1.msra.mxu0 %v4188
    %4377 = vmatprep.subr.mxu0 %v4193
    %4378 = vmatpush1.msra.mxu0 %v4192
    %4379 = vmatprep.subr.mxu0 %v4197
    %4380 = vmatpush1.msra.mxu0 %v4196
    %4381 = vmatprep.subr.mxu0 %v4201
    %4382 = vmatpush1.msra.mxu0 %v4200
    %4383 = vmatprep.subr.mxu0 %v4205
    %4384 = vmatpush1.msra.mxu0 %v4204
    %4385 = vmatprep.subr.mxu0 %v4209
    %4386 = vmatpush1.msra.mxu0 %v4208
    %4387 = vmatprep.subr.mxu0 %v4213
    %4388 = vmatpush1.msra.mxu0 %v4212
    %4389 = vmatprep.subr.mxu0 %v4217
    %4390 = vmatpush1.msra.mxu0 %v4216
    %4391 = vmatprep.subr.mxu0 %v4221
    %4392 = vmatpush1.msra.mxu0 %v4220
    %4393 = vmatprep.subr.mxu0 %v4225
    %4394 = vmatpush1.msra.mxu0 %v4224
    %4395 = vmatprep.subr.mxu0 %v4229
    %4396 = vmatpush1.msra.mxu0 %v4228
    %4397 = vmatprep.subr.mxu0 %v4233
    %4398 = vmatpush1.msra.mxu0 %v4232
    %4399 = vmatprep.subr.mxu0 %v4237
    %4400 = vmatpush1.msra.mxu0 %v4236
    %4401 = vmatprep.subr.mxu0 %v4241
    %4402 = vmatpush1.msra.mxu0 %v4240
    %4403 = vmatprep.subr.mxu0 %v4245
    %4404 = vmatpush1.msra.mxu0 %v4244
    %4405 = vmatprep.subr.mxu0 %v4249
    %4406 = vmatpush1.msra.mxu0 %v4248
    %4407 = vmatprep.mubr.f32.mxu0 %v4121
    %4408 = vmatmul.mubr.f32.gmra.mrb[0].mxu0 %v4118
    %v4409 = vpop.f32.mrb[0].mxu0
    %v4410 = vadd.f32 %v4263, %v4409
    %v4411 = vpop.f32.mrb[0].mxu0
    %v4412 = vadd.f32 %v4267, %v4411
    %4413 = vdwg.mxu0
    %v4414 = vld [vmem:[%s1024] sm:$0xff]
    %v4415 = vxor.u32 %v4339, 2147483648
    %v4416 = vmul.f32 %v4415, 1.442695
    %v4417 = vpow.pop %v4416
    %v4418 = vadd.f32 %v4417, 1.0
    %v4419 = vrcp.pop %v4418
    %v4420 = vmul.f32 1.0, %v4419
    %v4421 = vxor.u32 %v4341, 2147483648
    %v4422 = vmul.f32 %v4421, 1.442695
    %v4423 = vpow.pop %v4422
    %v4424 = vadd.f32 %v4423, 1.0
    %v4425 = vrcp.pop %v4424
    %v4426 = vmul.f32 1.0, %v4425
    %v4427 = vtanh.pop %v4410
    %v4428 = vxor.u32 %v4412, 2147483648
    %v4429 = vmul.f32 %v4428, 1.442695
    %v4430 = vpow.pop %v4429
    %v4431 = vadd.f32 %v4430, 1.0
    %v4432 = vrcp.pop %v4431
    %v4433 = vmul.f32 1.0, %v4432
    %v4434 = vmul.f32 %v4426, %v4414
    %v4435 = vmul.f32 %v4420, %v4427
    %v4436 = vadd.f32 %v4434, %v4435
    %v4437 = vtanh.pop %v4436
    %v4438 = vmul.f32 %v4433, %v4437
    %4439 = vst [vmem:[%s730] sm:$0xff] %v4438
    %4440 = vst [vmem:[%s1024] sm:$0xff] %v4436
    %s4441 = scalar_lea.vmem [#allocation3], 48
    %4442 = vst [vmem:[%s4441] sm:$0xff] %v4438
    %s4443 = scalar_lea.vmem [#allocation2], 224
    %v4444 = vld [vmem:[%s4443] sm:$0xff]
    %v4445 = vld [vmem:[%s4443 + $0x8] sm:$0xff]
    %v4446 = vld [vmem:[%s4443 + $0x10] sm:$0xff]
    %v4447 = vld [vmem:[%s4443 + $0x18] sm:$0xff]
    %v4448 = vld [vmem:[#allocation4] sm:$0xff]
    %v4449 = vld [vmem:[#allocation11] sm:$0xff]
    %v4450 = vld [vmem:[#allocation11 + $0x8] sm:$0xff]
    %v4451 = vld [vmem:[#allocation11 + $0x10] sm:$0xff]
    %v4452 = vld [vmem:[#allocation11 + $0x18] sm:$0xff]
    %v4453 = vld [vmem:[#allocation11 + $0x20] sm:$0xff]
    %v4454 = vld [vmem:[#allocation11 + $0x28] sm:$0xff]
    %v4455 = vld [vmem:[#allocation11 + $0x30] sm:$0xff]
    %v4456 = vld [vmem:[#allocation11 + $0x38] sm:$0xff]
    %v4457 = vld [vmem:[#allocation11 + $0x40] sm:$0xff]
    %v4458 = vld [vmem:[#allocation11 + $0x48] sm:$0xff]
    %v4459 = vld [vmem:[#allocation11 + $0x50] sm:$0xff]
    %v4460 = vld [vmem:[#allocation11 + $0x58] sm:$0xff]
    %v4461 = vld [vmem:[#allocation11 + $0x60] sm:$0xff]
    %v4462 = vld [vmem:[#allocation11 + $0x68] sm:$0xff]
    %v4463 = vld [vmem:[#allocation11 + $0x70] sm:$0xff]
    %v4464 = vld [vmem:[#allocation11 + $0x78] sm:$0xff]
    %v4465 = vld [vmem:[#allocation11 + $0x80] sm:$0xff]
    %v4466 = vld [vmem:[#allocation11 + $0x88] sm:$0xff]
    %v4467 = vld [vmem:[#allocation11 + $0x90] sm:$0xff]
    %v4468 = vld [vmem:[#allocation11 + $0x98] sm:$0xff]
    %v4469 = vld [vmem:[#allocation11 + $0xa0] sm:$0xff]
    %v4470 = vld [vmem:[#allocation11 + $0xa8] sm:$0xff]
    %v4471 = vld [vmem:[#allocation11 + $0xb0] sm:$0xff]
    %v4472 = vld [vmem:[#allocation11 + $0xb8] sm:$0xff]
    %v4473 = vld [vmem:[#allocation11 + $0xc0] sm:$0xff]
    %v4474 = vld [vmem:[#allocation11 + $0xc8] sm:$0xff]
    %v4475 = vld [vmem:[#allocation11 + $0xd0] sm:$0xff]
    %v4476 = vld [vmem:[#allocation11 + $0xd8] sm:$0xff]
    %v4477 = vld [vmem:[#allocation11 + $0xe0] sm:$0xff]
    %v4478 = vld [vmem:[#allocation11 + $0xe8] sm:$0xff]
    %v4479 = vld [vmem:[#allocation11 + $0xf0] sm:$0xff]
    %v4480 = vld [vmem:[#allocation11 + $0xf8] sm:$0xff]
    %v4481 = vld [vmem:[#allocation11 + $0x100] sm:$0xff]
    %v4482 = vld [vmem:[#allocation11 + $0x108] sm:$0xff]
    %v4483 = vld [vmem:[#allocation11 + $0x110] sm:$0xff]
    %v4484 = vld [vmem:[#allocation11 + $0x118] sm:$0xff]
    %v4485 = vld [vmem:[#allocation11 + $0x120] sm:$0xff]
    %v4486 = vld [vmem:[#allocation11 + $0x128] sm:$0xff]
    %v4487 = vld [vmem:[#allocation11 + $0x130] sm:$0xff]
    %v4488 = vld [vmem:[#allocation11 + $0x138] sm:$0xff]
    %v4489 = vld [vmem:[#allocation11 + $0x140] sm:$0xff]
    %v4490 = vld [vmem:[#allocation11 + $0x148] sm:$0xff]
    %v4491 = vld [vmem:[#allocation11 + $0x150] sm:$0xff]
    %v4492 = vld [vmem:[#allocation11 + $0x158] sm:$0xff]
    %v4493 = vld [vmem:[#allocation11 + $0x160] sm:$0xff]
    %v4494 = vld [vmem:[#allocation11 + $0x168] sm:$0xff]
    %v4495 = vld [vmem:[#allocation11 + $0x170] sm:$0xff]
    %v4496 = vld [vmem:[#allocation11 + $0x178] sm:$0xff]
    %v4497 = vld [vmem:[#allocation11 + $0x180] sm:$0xff]
    %v4498 = vld [vmem:[#allocation11 + $0x188] sm:$0xff]
    %v4499 = vld [vmem:[#allocation11 + $0x190] sm:$0xff]
    %v4500 = vld [vmem:[#allocation11 + $0x198] sm:$0xff]
    %v4501 = vld [vmem:[#allocation11 + $0x1a0] sm:$0xff]
    %v4502 = vld [vmem:[#allocation11 + $0x1a8] sm:$0xff]
    %v4503 = vld [vmem:[#allocation11 + $0x1b0] sm:$0xff]
    %v4504 = vld [vmem:[#allocation11 + $0x1b8] sm:$0xff]
    %v4505 = vld [vmem:[#allocation11 + $0x1c0] sm:$0xff]
    %v4506 = vld [vmem:[#allocation11 + $0x1c8] sm:$0xff]
    %v4507 = vld [vmem:[#allocation11 + $0x1d0] sm:$0xff]
    %v4508 = vld [vmem:[#allocation11 + $0x1d8] sm:$0xff]
    %v4509 = vld [vmem:[#allocation11 + $0x1e0] sm:$0xff]
    %v4510 = vld [vmem:[#allocation11 + $0x1e8] sm:$0xff]
    %v4511 = vld [vmem:[#allocation11 + $0x1f0] sm:$0xff]
    %v4512 = vld [vmem:[#allocation11 + $0x1f8] sm:$0xff]
    %4513 = vmatprep.subr.mxu0 %v4450
    %4514 = vmatpush1.msra.mxu0 %v4449
    %4515 = vmatprep.subr.mxu0 %v4454
    %4516 = vmatpush1.msra.mxu0 %v4453
    %4517 = vmatprep.subr.mxu0 %v4458
    %4518 = vmatpush1.msra.mxu0 %v4457
    %4519 = vmatprep.subr.mxu0 %v4462
    %4520 = vmatpush1.msra.mxu0 %v4461
    %4521 = vmatprep.subr.mxu0 %v4466
    %4522 = vmatpush1.msra.mxu0 %v4465
    %4523 = vmatprep.subr.mxu0 %v4470
    %4524 = vmatpush1.msra.mxu0 %v4469
    %4525 = vmatprep.subr.mxu0 %v4474
    %4526 = vmatpush1.msra.mxu0 %v4473
    %4527 = vmatprep.subr.mxu0 %v4478
    %4528 = vmatpush1.msra.mxu0 %v4477
    %4529 = vmatprep.subr.mxu0 %v4482
    %4530 = vmatpush1.msra.mxu0 %v4481
    %4531 = vmatprep.subr.mxu0 %v4486
    %4532 = vmatpush1.msra.mxu0 %v4485
    %4533 = vmatprep.subr.mxu0 %v4490
    %4534 = vmatpush1.msra.mxu0 %v4489
    %4535 = vmatprep.subr.mxu0 %v4494
    %4536 = vmatpush1.msra.mxu0 %v4493
    %4537 = vmatprep.subr.mxu0 %v4498
    %4538 = vmatpush1.msra.mxu0 %v4497
    %4539 = vmatprep.subr.mxu0 %v4502
    %4540 = vmatpush1.msra.mxu0 %v4501
    %4541 = vmatprep.subr.mxu0 %v4506
    %4542 = vmatpush1.msra.mxu0 %v4505
    %4543 = vmatprep.subr.mxu0 %v4510
    %4544 = vmatpush1.msra.mxu0 %v4509
    %4545 = vmatprep.subr.mxu0 0.0
    %4546 = vmatpush1.msra.mxu0 0.0
    %4547 = vmatprep.subr.mxu0 0.0
    %4548 = vmatpush1.msra.mxu0 0.0
    %4549 = vmatprep.subr.mxu0 0.0
    %4550 = vmatpush1.msra.mxu0 0.0
    %4551 = vmatprep.subr.mxu0 0.0
    %4552 = vmatpush1.msra.mxu0 0.0
    %4553 = vmatprep.subr.mxu0 0.0
    %4554 = vmatpush1.msra.mxu0 0.0
    %4555 = vmatprep.subr.mxu0 0.0
    %4556 = vmatpush1.msra.mxu0 0.0
    %4557 = vmatprep.subr.mxu0 0.0
    %4558 = vmatpush1.msra.mxu0 0.0
    %4559 = vmatprep.subr.mxu0 0.0
    %4560 = vmatpush1.msra.mxu0 0.0
    %4561 = vmatprep.subr.mxu0 0.0
    %4562 = vmatpush1.msra.mxu0 0.0
    %4563 = vmatprep.subr.mxu0 0.0
    %4564 = vmatpush1.msra.mxu0 0.0
    %4565 = vmatprep.subr.mxu0 0.0
    %4566 = vmatpush1.msra.mxu0 0.0
    %4567 = vmatprep.subr.mxu0 0.0
    %4568 = vmatpush1.msra.mxu0 0.0
    %4569 = vmatprep.subr.mxu0 0.0
    %4570 = vmatpush1.msra.mxu0 0.0
    %4571 = vmatprep.subr.mxu0 0.0
    %4572 = vmatpush1.msra.mxu0 0.0
    %4573 = vmatprep.subr.mxu0 0.0
    %4574 = vmatpush1.msra.mxu0 0.0
    %4575 = vmatprep.subr.mxu0 0.0
    %4576 = vmatpush1.msra.mxu0 0.0
    %4577 = vmatprep.mubr.f32.mxu0 0.0
    %4578 = vmatmul.mubr.f32.gmra.mrb[0].mxu0 %v4448
    %v4579 = vpop.f32.mrb[0].mxu0
    %v4580 = vadd.f32 0.0, %v4579
    %v4581 = vpop.f32.mrb[0].mxu0
    %v4582 = vadd.f32 0.0, %v4581
    %4583 = vdwg.mxu0
    %4584 = vmatprep.subr.mxu0 %v4452
    %4585 = vmatpush1.msra.mxu0 %v4451
    %4586 = vmatprep.subr.mxu0 %v4456
    %4587 = vmatpush1.msra.mxu0 %v4455
    %4588 = vmatprep.subr.mxu0 %v4460
    %4589 = vmatpush1.msra.mxu0 %v4459
    %4590 = vmatprep.subr.mxu0 %v4464
    %4591 = vmatpush1.msra.mxu0 %v4463
    %4592 = vmatprep.subr.mxu0 %v4468
    %4593 = vmatpush1.msra.mxu0 %v4467
    %4594 = vmatprep.subr.mxu0 %v4472
    %4595 = vmatpush1.msra.mxu0 %v4471
    %4596 = vmatprep.subr.mxu0 %v4476
    %4597 = vmatpush1.msra.mxu0 %v4475
    %4598 = vmatprep.subr.mxu0 %v4480
    %4599 = vmatpush1.msra.mxu0 %v4479
    %4600 = vmatprep.subr.mxu0 %v4484
    %4601 = vmatpush1.msra.mxu0 %v4483
    %4602 = vmatprep.subr.mxu0 %v4488
    %4603 = vmatpush1.msra.mxu0 %v4487
    %4604 = vmatprep.subr.mxu0 %v4492
    %4605 = vmatpush1.msra.mxu0 %v4491
    %4606 = vmatprep.subr.mxu0 %v4496
    %4607 = vmatpush1.msra.mxu0 %v4495
    %4608 = vmatprep.subr.mxu0 %v4500
    %4609 = vmatpush1.msra.mxu0 %v4499
    %4610 = vmatprep.subr.mxu0 %v4504
    %4611 = vmatpush1.msra.mxu0 %v4503
    %4612 = vmatprep.subr.mxu0 %v4508
    %4613 = vmatpush1.msra.mxu0 %v4507
    %4614 = vmatprep.subr.mxu0 %v4512
    %4615 = vmatpush1.msra.mxu0 %v4511
    %4616 = vmatprep.subr.mxu0 0.0
    %4617 = vmatpush1.msra.mxu0 0.0
    %4618 = vmatprep.subr.mxu0 0.0
    %4619 = vmatpush1.msra.mxu0 0.0
    %4620 = vmatprep.subr.mxu0 0.0
    %4621 = vmatpush1.msra.mxu0 0.0
    %4622 = vmatprep.subr.mxu0 0.0
    %4623 = vmatpush1.msra.mxu0 0.0
    %4624 = vmatprep.subr.mxu0 0.0
    %4625 = vmatpush1.msra.mxu0 0.0
    %4626 = vmatprep.subr.mxu0 0.0
    %4627 = vmatpush1.msra.mxu0 0.0
    %4628 = vmatprep.subr.mxu0 0.0
    %4629 = vmatpush1.msra.mxu0 0.0
    %4630 = vmatprep.subr.mxu0 0.0
    %4631 = vmatpush1.msra.mxu0 0.0
    %4632 = vmatprep.subr.mxu0 0.0
    %4633 = vmatpush1.msra.mxu0 0.0
    %4634 = vmatprep.subr.mxu0 0.0
    %4635 = vmatpush1.msra.mxu0 0.0
    %4636 = vmatprep.subr.mxu0 0.0
    %4637 = vmatpush1.msra.mxu0 0.0
    %4638 = vmatprep.subr.mxu0 0.0
    %4639 = vmatpush1.msra.mxu0 0.0
    %4640 = vmatprep.subr.mxu0 0.0
    %4641 = vmatpush1.msra.mxu0 0.0
    %4642 = vmatprep.subr.mxu0 0.0
    %4643 = vmatpush1.msra.mxu0 0.0
    %4644 = vmatprep.subr.mxu0 0.0
    %4645 = vmatpush1.msra.mxu0 0.0
    %4646 = vmatprep.subr.mxu0 0.0
    %4647 = vmatpush1.msra.mxu0 0.0
    %4648 = vmatprep.mubr.f32.mxu0 0.0
    %4649 = vmatmul.mubr.f32.gmra.mrb[0].mxu0 %v4448
    %v4650 = vpop.f32.mrb[0].mxu0
    %v4651 = vadd.f32 0.0, %v4650
    %v4652 = vpop.f32.mrb[0].mxu0
    %v4653 = vadd.f32 0.0, %v4652
    %4654 = vdwg.mxu0
    %v4655 = vadd.f32 %v4444, %v4580
    %v4656 = vadd.f32 %v4445, %v4582
    %v4657 = vadd.f32 %v4446, %v4651
    %v4658 = vadd.f32 %v4447, %v4653
    %v4659 = vld [vmem:[#allocation5] sm:$0xff]
    %v4660 = vxor.u32 %v4655, 2147483648
    %v4661 = vmul.f32 %v4660, 1.442695
    %v4662 = vpow.pop %v4661
    %v4663 = vadd.f32 %v4662, 1.0
    %v4664 = vrcp.pop %v4663
    %v4665 = vmul.f32 1.0, %v4664
    %v4666 = vxor.u32 %v4656, 2147483648
    %v4667 = vmul.f32 %v4666, 1.442695
    %v4668 = vpow.pop %v4667
    %v4669 = vadd.f32 %v4668, 1.0
    %v4670 = vrcp.pop %v4669
    %v4671 = vmul.f32 1.0, %v4670
    %v4672 = vtanh.pop %v4657
    %v4673 = vxor.u32 %v4658, 2147483648
    %v4674 = vmul.f32 %v4673, 1.442695
    %v4675 = vpow.pop %v4674
    %v4676 = vadd.f32 %v4675, 1.0
    %v4677 = vrcp.pop %v4676
    %v4678 = vmul.f32 1.0, %v4677
    %v4679 = vmul.f32 %v4671, %v4659
    %v4680 = vmul.f32 %v4665, %v4672
    %v4681 = vadd.f32 %v4679, %v4680
    %v4682 = vtanh.pop %v4681
    %v4683 = vmul.f32 %v4678, %v4682
    %4684 = vst [vmem:[#allocation4] sm:$0xff] %v4683
    %4685 = vst [vmem:[#allocation5] sm:$0xff] %v4681
    %v4686 = vld [vmem:[%s730] sm:$0xff]
    %v4687 = vld [vmem:[#allocation12] sm:$0xff]
    %v4688 = vld [vmem:[#allocation12 + $0x8] sm:$0xff]
    %v4689 = vld [vmem:[#allocation12 + $0x10] sm:$0xff]
    %v4690 = vld [vmem:[#allocation12 + $0x18] sm:$0xff]
    %v4691 = vld [vmem:[#allocation12 + $0x20] sm:$0xff]
    %v4692 = vld [vmem:[#allocation12 + $0x28] sm:$0xff]
    %v4693 = vld [vmem:[#allocation12 + $0x30] sm:$0xff]
    %v4694 = vld [vmem:[#allocation12 + $0x38] sm:$0xff]
    %v4695 = vld [vmem:[#allocation12 + $0x40] sm:$0xff]
    %v4696 = vld [vmem:[#allocation12 + $0x48] sm:$0xff]
    %v4697 = vld [vmem:[#allocation12 + $0x50] sm:$0xff]
    %v4698 = vld [vmem:[#allocation12 + $0x58] sm:$0xff]
    %v4699 = vld [vmem:[#allocation12 + $0x60] sm:$0xff]
    %v4700 = vld [vmem:[#allocation12 + $0x68] sm:$0xff]
    %v4701 = vld [vmem:[#allocation12 + $0x70] sm:$0xff]
    %v4702 = vld [vmem:[#allocation12 + $0x78] sm:$0xff]
    %v4703 = vld [vmem:[#allocation12 + $0x80] sm:$0xff]
    %v4704 = vld [vmem:[#allocation12 + $0x88] sm:$0xff]
    %v4705 = vld [vmem:[#allocation12 + $0x90] sm:$0xff]
    %v4706 = vld [vmem:[#allocation12 + $0x98] sm:$0xff]
    %v4707 = vld [vmem:[#allocation12 + $0xa0] sm:$0xff]
    %v4708 = vld [vmem:[#allocation12 + $0xa8] sm:$0xff]
    %v4709 = vld [vmem:[#allocation12 + $0xb0] sm:$0xff]
    %v4710 = vld [vmem:[#allocation12 + $0xb8] sm:$0xff]
    %v4711 = vld [vmem:[#allocation12 + $0xc0] sm:$0xff]
    %v4712 = vld [vmem:[#allocation12 + $0xc8] sm:$0xff]
    %v4713 = vld [vmem:[#allocation12 + $0xd0] sm:$0xff]
    %v4714 = vld [vmem:[#allocation12 + $0xd8] sm:$0xff]
    %v4715 = vld [vmem:[#allocation12 + $0xe0] sm:$0xff]
    %v4716 = vld [vmem:[#allocation12 + $0xe8] sm:$0xff]
    %v4717 = vld [vmem:[#allocation12 + $0xf0] sm:$0xff]
    %v4718 = vld [vmem:[#allocation12 + $0xf8] sm:$0xff]
    %v4719 = vld [vmem:[#allocation12 + $0x100] sm:$0xff]
    %v4720 = vld [vmem:[#allocation12 + $0x108] sm:$0xff]
    %v4721 = vld [vmem:[#allocation12 + $0x110] sm:$0xff]
    %v4722 = vld [vmem:[#allocation12 + $0x118] sm:$0xff]
    %v4723 = vld [vmem:[#allocation12 + $0x120] sm:$0xff]
    %v4724 = vld [vmem:[#allocation12 + $0x128] sm:$0xff]
    %v4725 = vld [vmem:[#allocation12 + $0x130] sm:$0xff]
    %v4726 = vld [vmem:[#allocation12 + $0x138] sm:$0xff]
    %v4727 = vld [vmem:[#allocation12 + $0x140] sm:$0xff]
    %v4728 = vld [vmem:[#allocation12 + $0x148] sm:$0xff]
    %v4729 = vld [vmem:[#allocation12 + $0x150] sm:$0xff]
    %v4730 = vld [vmem:[#allocation12 + $0x158] sm:$0xff]
    %v4731 = vld [vmem:[#allocation12 + $0x160] sm:$0xff]
    %v4732 = vld [vmem:[#allocation12 + $0x168] sm:$0xff]
    %v4733 = vld [vmem:[#allocation12 + $0x170] sm:$0xff]
    %v4734 = vld [vmem:[#allocation12 + $0x178] sm:$0xff]
    %v4735 = vld [vmem:[#allocation12 + $0x180] sm:$0xff]
    %v4736 = vld [vmem:[#allocation12 + $0x188] sm:$0xff]
    %v4737 = vld [vmem:[#allocation12 + $0x190] sm:$0xff]
    %v4738 = vld [vmem:[#allocation12 + $0x198] sm:$0xff]
    %v4739 = vld [vmem:[#allocation12 + $0x1a0] sm:$0xff]
    %v4740 = vld [vmem:[#allocation12 + $0x1a8] sm:$0xff]
    %v4741 = vld [vmem:[#allocation12 + $0x1b0] sm:$0xff]
    %v4742 = vld [vmem:[#allocation12 + $0x1b8] sm:$0xff]
    %v4743 = vld [vmem:[#allocation12 + $0x1c0] sm:$0xff]
    %v4744 = vld [vmem:[#allocation12 + $0x1c8] sm:$0xff]
    %v4745 = vld [vmem:[#allocation12 + $0x1d0] sm:$0xff]
    %v4746 = vld [vmem:[#allocation12 + $0x1d8] sm:$0xff]
    %v4747 = vld [vmem:[#allocation12 + $0x1e0] sm:$0xff]
    %v4748 = vld [vmem:[#allocation12 + $0x1e8] sm:$0xff]
    %v4749 = vld [vmem:[#allocation12 + $0x1f0] sm:$0xff]
    %v4750 = vld [vmem:[#allocation12 + $0x1f8] sm:$0xff]
    %v4751 = vld [vmem:[#allocation12 + $0x200] sm:$0xff]
    %v4752 = vld [vmem:[#allocation12 + $0x208] sm:$0xff]
    %v4753 = vld [vmem:[#allocation12 + $0x210] sm:$0xff]
    %v4754 = vld [vmem:[#allocation12 + $0x218] sm:$0xff]
    %v4755 = vld [vmem:[#allocation12 + $0x220] sm:$0xff]
    %v4756 = vld [vmem:[#allocation12 + $0x228] sm:$0xff]
    %v4757 = vld [vmem:[#allocation12 + $0x230] sm:$0xff]
    %v4758 = vld [vmem:[#allocation12 + $0x238] sm:$0xff]
    %v4759 = vld [vmem:[#allocation12 + $0x240] sm:$0xff]
    %v4760 = vld [vmem:[#allocation12 + $0x248] sm:$0xff]
    %v4761 = vld [vmem:[#allocation12 + $0x250] sm:$0xff]
    %v4762 = vld [vmem:[#allocation12 + $0x258] sm:$0xff]
    %v4763 = vld [vmem:[#allocation12 + $0x260] sm:$0xff]
    %v4764 = vld [vmem:[#allocation12 + $0x268] sm:$0xff]
    %v4765 = vld [vmem:[#allocation12 + $0x270] sm:$0xff]
    %v4766 = vld [vmem:[#allocation12 + $0x278] sm:$0xff]
    %v4767 = vld [vmem:[#allocation12 + $0x280] sm:$0xff]
    %v4768 = vld [vmem:[#allocation12 + $0x288] sm:$0xff]
    %v4769 = vld [vmem:[#allocation12 + $0x290] sm:$0xff]
    %v4770 = vld [vmem:[#allocation12 + $0x298] sm:$0xff]
    %v4771 = vld [vmem:[#allocation12 + $0x2a0] sm:$0xff]
    %v4772 = vld [vmem:[#allocation12 + $0x2a8] sm:$0xff]
    %v4773 = vld [vmem:[#allocation12 + $0x2b0] sm:$0xff]
    %v4774 = vld [vmem:[#allocation12 + $0x2b8] sm:$0xff]
    %v4775 = vld [vmem:[#allocation12 + $0x2c0] sm:$0xff]
    %v4776 = vld [vmem:[#allocation12 + $0x2c8] sm:$0xff]
    %v4777 = vld [vmem:[#allocation12 + $0x2d0] sm:$0xff]
    %v4778 = vld [vmem:[#allocation12 + $0x2d8] sm:$0xff]
    %v4779 = vld [vmem:[#allocation12 + $0x2e0] sm:$0xff]
    %v4780 = vld [vmem:[#allocation12 + $0x2e8] sm:$0xff]
    %v4781 = vld [vmem:[#allocation12 + $0x2f0] sm:$0xff]
    %v4782 = vld [vmem:[#allocation12 + $0x2f8] sm:$0xff]
    %v4783 = vld [vmem:[#allocation12 + $0x300] sm:$0xff]
    %v4784 = vld [vmem:[#allocation12 + $0x308] sm:$0xff]
    %v4785 = vld [vmem:[#allocation12 + $0x310] sm:$0xff]
    %v4786 = vld [vmem:[#allocation12 + $0x318] sm:$0xff]
    %v4787 = vld [vmem:[#allocation12 + $0x320] sm:$0xff]
    %v4788 = vld [vmem:[#allocation12 + $0x328] sm:$0xff]
    %v4789 = vld [vmem:[#allocation12 + $0x330] sm:$0xff]
    %v4790 = vld [vmem:[#allocation12 + $0x338] sm:$0xff]
    %v4791 = vld [vmem:[#allocation12 + $0x340] sm:$0xff]
    %v4792 = vld [vmem:[#allocation12 + $0x348] sm:$0xff]
    %v4793 = vld [vmem:[#allocation12 + $0x350] sm:$0xff]
    %v4794 = vld [vmem:[#allocation12 + $0x358] sm:$0xff]
    %v4795 = vld [vmem:[#allocation12 + $0x360] sm:$0xff]
    %v4796 = vld [vmem:[#allocation12 + $0x368] sm:$0xff]
    %v4797 = vld [vmem:[#allocation12 + $0x370] sm:$0xff]
    %v4798 = vld [vmem:[#allocation12 + $0x378] sm:$0xff]
    %v4799 = vld [vmem:[#allocation12 + $0x380] sm:$0xff]
    %v4800 = vld [vmem:[#allocation12 + $0x388] sm:$0xff]
    %v4801 = vld [vmem:[#allocation12 + $0x390] sm:$0xff]
    %v4802 = vld [vmem:[#allocation12 + $0x398] sm:$0xff]
    %v4803 = vld [vmem:[#allocation12 + $0x3a0] sm:$0xff]
    %v4804 = vld [vmem:[#allocation12 + $0x3a8] sm:$0xff]
    %v4805 = vld [vmem:[#allocation12 + $0x3b0] sm:$0xff]
    %v4806 = vld [vmem:[#allocation12 + $0x3b8] sm:$0xff]
    %v4807 = vld [vmem:[#allocation12 + $0x3c0] sm:$0xff]
    %v4808 = vld [vmem:[#allocation12 + $0x3c8] sm:$0xff]
    %v4809 = vld [vmem:[#allocation12 + $0x3d0] sm:$0xff]
    %v4810 = vld [vmem:[#allocation12 + $0x3d8] sm:$0xff]
    %v4811 = vld [vmem:[#allocation12 + $0x3e0] sm:$0xff]
    %v4812 = vld [vmem:[#allocation12 + $0x3e8] sm:$0xff]
    %v4813 = vld [vmem:[#allocation12 + $0x3f0] sm:$0xff]
    %v4814 = vld [vmem:[#allocation12 + $0x3f8] sm:$0xff]
    %v4815 = vld [vmem:[%s5] sm:$0xf]
    %v4817 = vlaneseq
    %v4818 = vshrl.u32 %v4817, 7
    %v4819 = vsub.s32 0, %v4818
    %v4820 = vrot.slane %v4815, %v4819
    %v4821 = vlaneseq
    %v4822 = vshrl.u32 %v4821, 7
    %v4823 = vsub.s32 1, %v4822
    %v4824 = vrot.slane %v4815, %v4823
    %v4825 = vlaneseq
    %v4826 = vshrl.u32 %v4825, 7
    %v4827 = vsub.s32 2, %v4826
    %v4828 = vrot.slane %v4815, %v4827
    %v4829 = vlaneseq
    %v4830 = vshrl.u32 %v4829, 7
    %v4831 = vsub.s32 3, %v4830
    %v4832 = vrot.slane %v4815, %v4831
    %4837 = vmatprep.subr.mxu0 %v4688
    %4838 = vmatpush1.msra.mxu0 %v4687
    %4839 = vmatprep.subr.mxu0 %v4692
    %4840 = vmatpush1.msra.mxu0 %v4691
    %4841 = vmatprep.subr.mxu0 %v4696
    %4842 = vmatpush1.msra.mxu0 %v4695
    %4843 = vmatprep.subr.mxu0 %v4700
    %4844 = vmatpush1.msra.mxu0 %v4699
    %4845 = vmatprep.subr.mxu0 %v4704
    %4846 = vmatpush1.msra.mxu0 %v4703
    %4847 = vmatprep.subr.mxu0 %v4708
    %4848 = vmatpush1.msra.mxu0 %v4707
    %4849 = vmatprep.subr.mxu0 %v4712
    %4850 = vmatpush1.msra.mxu0 %v4711
    %4851 = vmatprep.subr.mxu0 %v4716
    %4852 = vmatpush1.msra.mxu0 %v4715
    %4853 = vmatprep.subr.mxu0 %v4720
    %4854 = vmatpush1.msra.mxu0 %v4719
    %4855 = vmatprep.subr.mxu0 %v4724
    %4856 = vmatpush1.msra.mxu0 %v4723
    %4857 = vmatprep.subr.mxu0 %v4728
    %4858 = vmatpush1.msra.mxu0 %v4727
    %4859 = vmatprep.subr.mxu0 %v4732
    %4860 = vmatpush1.msra.mxu0 %v4731
    %4861 = vmatprep.subr.mxu0 %v4736
    %4862 = vmatpush1.msra.mxu0 %v4735
    %4863 = vmatprep.subr.mxu0 %v4740
    %4864 = vmatpush1.msra.mxu0 %v4739
    %4865 = vmatprep.subr.mxu0 %v4744
    %4866 = vmatpush1.msra.mxu0 %v4743
    %4867 = vmatprep.subr.mxu0 %v4748
    %4868 = vmatpush1.msra.mxu0 %v4747
    %4869 = vmatprep.subr.mxu0 %v4752
    %4870 = vmatpush1.msra.mxu0 %v4751
    %4871 = vmatprep.subr.mxu0 %v4756
    %4872 = vmatpush1.msra.mxu0 %v4755
    %4873 = vmatprep.subr.mxu0 %v4760
    %4874 = vmatpush1.msra.mxu0 %v4759
    %4875 = vmatprep.subr.mxu0 %v4764
    %4876 = vmatpush1.msra.mxu0 %v4763
    %4877 = vmatprep.subr.mxu0 %v4768
    %4878 = vmatpush1.msra.mxu0 %v4767
    %4879 = vmatprep.subr.mxu0 %v4772
    %4880 = vmatpush1.msra.mxu0 %v4771
    %4881 = vmatprep.subr.mxu0 %v4776
    %4882 = vmatpush1.msra.mxu0 %v4775
    %4883 = vmatprep.subr.mxu0 %v4780
    %4884 = vmatpush1.msra.mxu0 %v4779
    %4885 = vmatprep.subr.mxu0 %v4784
    %4886 = vmatpush1.msra.mxu0 %v4783
    %4887 = vmatprep.subr.mxu0 %v4788
    %4888 = vmatpush1.msra.mxu0 %v4787
    %4889 = vmatprep.subr.mxu0 %v4792
    %4890 = vmatpush1.msra.mxu0 %v4791
    %4891 = vmatprep.subr.mxu0 %v4796
    %4892 = vmatpush1.msra.mxu0 %v4795
    %4893 = vmatprep.subr.mxu0 %v4800
    %4894 = vmatpush1.msra.mxu0 %v4799
    %4895 = vmatprep.subr.mxu0 %v4804
    %4896 = vmatpush1.msra.mxu0 %v4803
    %4897 = vmatprep.subr.mxu0 %v4808
    %4898 = vmatpush1.msra.mxu0 %v4807
    %4899 = vmatprep.subr.mxu0 %v4812
    %4900 = vmatpush1.msra.mxu0 %v4811
    %4901 = vmatprep.mubr.f32.mxu0 %v4686
    %4902 = vmatmul.mubr.f32.gmra.mrb[0].mxu0 %v4683
    %v4903 = vpop.f32.mrb[0].mxu0
    %v4904 = vadd.f32 %v4820, %v4903
    %v4905 = vpop.f32.mrb[0].mxu0
    %v4906 = vadd.f32 %v4824, %v4905
    %4907 = vdwg.mxu0
    %4908 = vmatprep.subr.mxu0 %v4690
    %4909 = vmatpush1.msra.mxu0 %v4689
    %4910 = vmatprep.subr.mxu0 %v4694
    %4911 = vmatpush1.msra.mxu0 %v4693
    %4912 = vmatprep.subr.mxu0 %v4698
    %4913 = vmatpush1.msra.mxu0 %v4697
    %4914 = vmatprep.subr.mxu0 %v4702
    %4915 = vmatpush1.msra.mxu0 %v4701
    %4916 = vmatprep.subr.mxu0 %v4706
    %4917 = vmatpush1.msra.mxu0 %v4705
    %4918 = vmatprep.subr.mxu0 %v4710
    %4919 = vmatpush1.msra.mxu0 %v4709
    %4920 = vmatprep.subr.mxu0 %v4714
    %4921 = vmatpush1.msra.mxu0 %v4713
    %4922 = vmatprep.subr.mxu0 %v4718
    %4923 = vmatpush1.msra.mxu0 %v4717
    %4924 = vmatprep.subr.mxu0 %v4722
    %4925 = vmatpush1.msra.mxu0 %v4721
    %4926 = vmatprep.subr.mxu0 %v4726
    %4927 = vmatpush1.msra.mxu0 %v4725
    %4928 = vmatprep.subr.mxu0 %v4730
    %4929 = vmatpush1.msra.mxu0 %v4729
    %4930 = vmatprep.subr.mxu0 %v4734
    %4931 = vmatpush1.msra.mxu0 %v4733
    %4932 = vmatprep.subr.mxu0 %v4738
    %4933 = vmatpush1.msra.mxu0 %v4737
    %4934 = vmatprep.subr.mxu0 %v4742
    %4935 = vmatpush1.msra.mxu0 %v4741
    %4936 = vmatprep.subr.mxu0 %v4746
    %4937 = vmatpush1.msra.mxu0 %v4745
    %4938 = vmatprep.subr.mxu0 %v4750
    %4939 = vmatpush1.msra.mxu0 %v4749
    %4940 = vmatprep.subr.mxu0 %v4754
    %4941 = vmatpush1.msra.mxu0 %v4753
    %4942 = vmatprep.subr.mxu0 %v4758
    %4943 = vmatpush1.msra.mxu0 %v4757
    %4944 = vmatprep.subr.mxu0 %v4762
    %4945 = vmatpush1.msra.mxu0 %v4761
    %4946 = vmatprep.subr.mxu0 %v4766
    %4947 = vmatpush1.msra.mxu0 %v4765
    %4948 = vmatprep.subr.mxu0 %v4770
    %4949 = vmatpush1.msra.mxu0 %v4769
    %4950 = vmatprep.subr.mxu0 %v4774
    %4951 = vmatpush1.msra.mxu0 %v4773
    %4952 = vmatprep.subr.mxu0 %v4778
    %4953 = vmatpush1.msra.mxu0 %v4777
    %4954 = vmatprep.subr.mxu0 %v4782
    %4955 = vmatpush1.msra.mxu0 %v4781
    %4956 = vmatprep.subr.mxu0 %v4786
    %4957 = vmatpush1.msra.mxu0 %v4785
    %4958 = vmatprep.subr.mxu0 %v4790
    %4959 = vmatpush1.msra.mxu0 %v4789
    %4960 = vmatprep.subr.mxu0 %v4794
    %4961 = vmatpush1.msra.mxu0 %v4793
    %4962 = vmatprep.subr.mxu0 %v4798
    %4963 = vmatpush1.msra.mxu0 %v4797
    %4964 = vmatprep.subr.mxu0 %v4802
    %4965 = vmatpush1.msra.mxu0 %v4801
    %4966 = vmatprep.subr.mxu0 %v4806
    %4967 = vmatpush1.msra.mxu0 %v4805
    %4968 = vmatprep.subr.mxu0 %v4810
    %4969 = vmatpush1.msra.mxu0 %v4809
    %4970 = vmatprep.subr.mxu0 %v4814
    %4971 = vmatpush1.msra.mxu0 %v4813
    %4972 = vmatprep.mubr.f32.mxu0 %v4686
    %4973 = vmatmul.mubr.f32.gmra.mrb[0].mxu0 %v4683
    %v4974 = vpop.f32.mrb[0].mxu0
    %v4975 = vadd.f32 %v4828, %v4974
    %v4976 = vpop.f32.mrb[0].mxu0
    %v4977 = vadd.f32 %v4832, %v4976
    %4978 = vdwg.mxu0
    %v4979 = vld [vmem:[%s1024] sm:$0xff]
    %v4980 = vxor.u32 %v4904, 2147483648
    %v4981 = vmul.f32 %v4980, 1.442695
    %v4982 = vpow.pop %v4981
    %v4983 = vadd.f32 %v4982, 1.0
    %v4984 = vrcp.pop %v4983
    %v4985 = vmul.f32 1.0, %v4984
    %v4986 = vxor.u32 %v4906, 2147483648
    %v4987 = vmul.f32 %v4986, 1.442695
    %v4988 = vpow.pop %v4987
    %v4989 = vadd.f32 %v4988, 1.0
    %v4990 = vrcp.pop %v4989
    %v4991 = vmul.f32 1.0, %v4990
    %v4992 = vtanh.pop %v4975
    %v4993 = vxor.u32 %v4977, 2147483648
    %v4994 = vmul.f32 %v4993, 1.442695
    %v4995 = vpow.pop %v4994
    %v4996 = vadd.f32 %v4995, 1.0
    %v4997 = vrcp.pop %v4996
    %v4998 = vmul.f32 1.0, %v4997
    %v4999 = vmul.f32 %v4991, %v4979
    %v5000 = vmul.f32 %v4985, %v4992
    %v5001 = vadd.f32 %v4999, %v5000
    %v5002 = vtanh.pop %v5001
    %v5003 = vmul.f32 %v4998, %v5002
    %5004 = vst [vmem:[%s730] sm:$0xff] %v5003
    %5005 = vst [vmem:[%s1024] sm:$0xff] %v5001
    %s5006 = scalar_lea.vmem [#allocation3], 56
    %5007 = vst [vmem:[%s5006] sm:$0xff] %v5003
    %s5008 = scalar_lea.vmem [#allocation2], 256
    %v5009 = vld [vmem:[%s5008] sm:$0xff]
    %v5010 = vld [vmem:[%s5008 + $0x8] sm:$0xff]
    %v5011 = vld [vmem:[%s5008 + $0x10] sm:$0xff]
    %v5012 = vld [vmem:[%s5008 + $0x18] sm:$0xff]
    %v5013 = vld [vmem:[#allocation4] sm:$0xff]
    %v5014 = vld [vmem:[#allocation11] sm:$0xff]
    %v5015 = vld [vmem:[#allocation11 + $0x8] sm:$0xff]
    %v5016 = vld [vmem:[#allocation11 + $0x10] sm:$0xff]
    %v5017 = vld [vmem:[#allocation11 + $0x18] sm:$0xff]
    %v5018 = vld [vmem:[#allocation11 + $0x20] sm:$0xff]
    %v5019 = vld [vmem:[#allocation11 + $0x28] sm:$0xff]
    %v5020 = vld [vmem:[#allocation11 + $0x30] sm:$0xff]
    %v5021 = vld [vmem:[#allocation11 + $0x38] sm:$0xff]
    %v5022 = vld [vmem:[#allocation11 + $0x40] sm:$0xff]
    %v5023 = vld [vmem:[#allocation11 + $0x48] sm:$0xff]
    %v5024 = vld [vmem:[#allocation11 + $0x50] sm:$0xff]
    %v5025 = vld [vmem:[#allocation11 + $0x58] sm:$0xff]
    %v5026 = vld [vmem:[#allocation11 + $0x60] sm:$0xff]
    %v5027 = vld [vmem:[#allocation11 + $0x68] sm:$0xff]
    %v5028 = vld [vmem:[#allocation11 + $0x70] sm:$0xff]
    %v5029 = vld [vmem:[#allocation11 + $0x78] sm:$0xff]
    %v5030 = vld [vmem:[#allocation11 + $0x80] sm:$0xff]
    %v5031 = vld [vmem:[#allocation11 + $0x88] sm:$0xff]
    %v5032 = vld [vmem:[#allocation11 + $0x90] sm:$0xff]
    %v5033 = vld [vmem:[#allocation11 + $0x98] sm:$0xff]
    %v5034 = vld [vmem:[#allocation11 + $0xa0] sm:$0xff]
    %v5035 = vld [vmem:[#allocation11 + $0xa8] sm:$0xff]
    %v5036 = vld [vmem:[#allocation11 + $0xb0] sm:$0xff]
    %v5037 = vld [vmem:[#allocation11 + $0xb8] sm:$0xff]
    %v5038 = vld [vmem:[#allocation11 + $0xc0] sm:$0xff]
    %v5039 = vld [vmem:[#allocation11 + $0xc8] sm:$0xff]
    %v5040 = vld [vmem:[#allocation11 + $0xd0] sm:$0xff]
    %v5041 = vld [vmem:[#allocation11 + $0xd8] sm:$0xff]
    %v5042 = vld [vmem:[#allocation11 + $0xe0] sm:$0xff]
    %v5043 = vld [vmem:[#allocation11 + $0xe8] sm:$0xff]
    %v5044 = vld [vmem:[#allocation11 + $0xf0] sm:$0xff]
    %v5045 = vld [vmem:[#allocation11 + $0xf8] sm:$0xff]
    %v5046 = vld [vmem:[#allocation11 + $0x100] sm:$0xff]
    %v5047 = vld [vmem:[#allocation11 + $0x108] sm:$0xff]
    %v5048 = vld [vmem:[#allocation11 + $0x110] sm:$0xff]
    %v5049 = vld [vmem:[#allocation11 + $0x118] sm:$0xff]
    %v5050 = vld [vmem:[#allocation11 + $0x120] sm:$0xff]
    %v5051 = vld [vmem:[#allocation11 + $0x128] sm:$0xff]
    %v5052 = vld [vmem:[#allocation11 + $0x130] sm:$0xff]
    %v5053 = vld [vmem:[#allocation11 + $0x138] sm:$0xff]
    %v5054 = vld [vmem:[#allocation11 + $0x140] sm:$0xff]
    %v5055 = vld [vmem:[#allocation11 + $0x148] sm:$0xff]
    %v5056 = vld [vmem:[#allocation11 + $0x150] sm:$0xff]
    %v5057 = vld [vmem:[#allocation11 + $0x158] sm:$0xff]
    %v5058 = vld [vmem:[#allocation11 + $0x160] sm:$0xff]
    %v5059 = vld [vmem:[#allocation11 + $0x168] sm:$0xff]
    %v5060 = vld [vmem:[#allocation11 + $0x170] sm:$0xff]
    %v5061 = vld [vmem:[#allocation11 + $0x178] sm:$0xff]
    %v5062 = vld [vmem:[#allocation11 + $0x180] sm:$0xff]
    %v5063 = vld [vmem:[#allocation11 + $0x188] sm:$0xff]
    %v5064 = vld [vmem:[#allocation11 + $0x190] sm:$0xff]
    %v5065 = vld [vmem:[#allocation11 + $0x198] sm:$0xff]
    %v5066 = vld [vmem:[#allocation11 + $0x1a0] sm:$0xff]
    %v5067 = vld [vmem:[#allocation11 + $0x1a8] sm:$0xff]
    %v5068 = vld [vmem:[#allocation11 + $0x1b0] sm:$0xff]
    %v5069 = vld [vmem:[#allocation11 + $0x1b8] sm:$0xff]
    %v5070 = vld [vmem:[#allocation11 + $0x1c0] sm:$0xff]
    %v5071 = vld [vmem:[#allocation11 + $0x1c8] sm:$0xff]
    %v5072 = vld [vmem:[#allocation11 + $0x1d0] sm:$0xff]
    %v5073 = vld [vmem:[#allocation11 + $0x1d8] sm:$0xff]
    %v5074 = vld [vmem:[#allocation11 + $0x1e0] sm:$0xff]
    %v5075 = vld [vmem:[#allocation11 + $0x1e8] sm:$0xff]
    %v5076 = vld [vmem:[#allocation11 + $0x1f0] sm:$0xff]
    %v5077 = vld [vmem:[#allocation11 + $0x1f8] sm:$0xff]
    %5078 = vmatprep.subr.mxu0 %v5015
    %5079 = vmatpush1.msra.mxu0 %v5014
    %5080 = vmatprep.subr.mxu0 %v5019
    %5081 = vmatpush1.msra.mxu0 %v5018
    %5082 = vmatprep.subr.mxu0 %v5023
    %5083 = vmatpush1.msra.mxu0 %v5022
    %5084 = vmatprep.subr.mxu0 %v5027
    %5085 = vmatpush1.msra.mxu0 %v5026
    %5086 = vmatprep.subr.mxu0 %v5031
    %5087 = vmatpush1.msra.mxu0 %v5030
    %5088 = vmatprep.subr.mxu0 %v5035
    %5089 = vmatpush1.msra.mxu0 %v5034
    %5090 = vmatprep.subr.mxu0 %v5039
    %5091 = vmatpush1.msra.mxu0 %v5038
    %5092 = vmatprep.subr.mxu0 %v5043
    %5093 = vmatpush1.msra.mxu0 %v5042
    %5094 = vmatprep.subr.mxu0 %v5047
    %5095 = vmatpush1.msra.mxu0 %v5046
    %5096 = vmatprep.subr.mxu0 %v5051
    %5097 = vmatpush1.msra.mxu0 %v5050
    %5098 = vmatprep.subr.mxu0 %v5055
    %5099 = vmatpush1.msra.mxu0 %v5054
    %5100 = vmatprep.subr.mxu0 %v5059
    %5101 = vmatpush1.msra.mxu0 %v5058
    %5102 = vmatprep.subr.mxu0 %v5063
    %5103 = vmatpush1.msra.mxu0 %v5062
    %5104 = vmatprep.subr.mxu0 %v5067
    %5105 = vmatpush1.msra.mxu0 %v5066
    %5106 = vmatprep.subr.mxu0 %v5071
    %5107 = vmatpush1.msra.mxu0 %v5070
    %5108 = vmatprep.subr.mxu0 %v5075
    %5109 = vmatpush1.msra.mxu0 %v5074
    %5110 = vmatprep.subr.mxu0 0.0
    %5111 = vmatpush1.msra.mxu0 0.0
    %5112 = vmatprep.subr.mxu0 0.0
    %5113 = vmatpush1.msra.mxu0 0.0
    %5114 = vmatprep.subr.mxu0 0.0
    %5115 = vmatpush1.msra.mxu0 0.0
    %5116 = vmatprep.subr.mxu0 0.0
    %5117 = vmatpush1.msra.mxu0 0.0
    %5118 = vmatprep.subr.mxu0 0.0
    %5119 = vmatpush1.msra.mxu0 0.0
    %5120 = vmatprep.subr.mxu0 0.0
    %5121 = vmatpush1.msra.mxu0 0.0
    %5122 = vmatprep.subr.mxu0 0.0
    %5123 = vmatpush1.msra.mxu0 0.0
    %5124 = vmatprep.subr.mxu0 0.0
    %5125 = vmatpush1.msra.mxu0 0.0
    %5126 = vmatprep.subr.mxu0 0.0
    %5127 = vmatpush1.msra.mxu0 0.0
    %5128 = vmatprep.subr.mxu0 0.0
    %5129 = vmatpush1.msra.mxu0 0.0
    %5130 = vmatprep.subr.mxu0 0.0
    %5131 = vmatpush1.msra.mxu0 0.0
    %5132 = vmatprep.subr.mxu0 0.0
    %5133 = vmatpush1.msra.mxu0 0.0
    %5134 = vmatprep.subr.mxu0 0.0
    %5135 = vmatpush1.msra.mxu0 0.0
    %5136 = vmatprep.subr.mxu0 0.0
    %5137 = vmatpush1.msra.mxu0 0.0
    %5138 = vmatprep.subr.mxu0 0.0
    %5139 = vmatpush1.msra.mxu0 0.0
    %5140 = vmatprep.subr.mxu0 0.0
    %5141 = vmatpush1.msra.mxu0 0.0
    %5142 = vmatprep.mubr.f32.mxu0 0.0
    %5143 = vmatmul.mubr.f32.gmra.mrb[0].mxu0 %v5013
    %v5144 = vpop.f32.mrb[0].mxu0
    %v5145 = vadd.f32 0.0, %v5144
    %v5146 = vpop.f32.mrb[0].mxu0
    %v5147 = vadd.f32 0.0, %v5146
    %5148 = vdwg.mxu0
    %5149 = vmatprep.subr.mxu0 %v5017
    %5150 = vmatpush1.msra.mxu0 %v5016
    %5151 = vmatprep.subr.mxu0 %v5021
    %5152 = vmatpush1.msra.mxu0 %v5020
    %5153 = vmatprep.subr.mxu0 %v5025
    %5154 = vmatpush1.msra.mxu0 %v5024
    %5155 = vmatprep.subr.mxu0 %v5029
    %5156 = vmatpush1.msra.mxu0 %v5028
    %5157 = vmatprep.subr.mxu0 %v5033
    %5158 = vmatpush1.msra.mxu0 %v5032
    %5159 = vmatprep.subr.mxu0 %v5037
    %5160 = vmatpush1.msra.mxu0 %v5036
    %5161 = vmatprep.subr.mxu0 %v5041
    %5162 = vmatpush1.msra.mxu0 %v5040
    %5163 = vmatprep.subr.mxu0 %v5045
    %5164 = vmatpush1.msra.mxu0 %v5044
    %5165 = vmatprep.subr.mxu0 %v5049
    %5166 = vmatpush1.msra.mxu0 %v5048
    %5167 = vmatprep.subr.mxu0 %v5053
    %5168 = vmatpush1.msra.mxu0 %v5052
    %5169 = vmatprep.subr.mxu0 %v5057
    %5170 = vmatpush1.msra.mxu0 %v5056
    %5171 = vmatprep.subr.mxu0 %v5061
    %5172 = vmatpush1.msra.mxu0 %v5060
    %5173 = vmatprep.subr.mxu0 %v5065
    %5174 = vmatpush1.msra.mxu0 %v5064
    %5175 = vmatprep.subr.mxu0 %v5069
    %5176 = vmatpush1.msra.mxu0 %v5068
    %5177 = vmatprep.subr.mxu0 %v5073
    %5178 = vmatpush1.msra.mxu0 %v5072
    %5179 = vmatprep.subr.mxu0 %v5077
    %5180 = vmatpush1.msra.mxu0 %v5076
    %5181 = vmatprep.subr.mxu0 0.0
    %5182 = vmatpush1.msra.mxu0 0.0
    %5183 = vmatprep.subr.mxu0 0.0
    %5184 = vmatpush1.msra.mxu0 0.0
    %5185 = vmatprep.subr.mxu0 0.0
    %5186 = vmatpush1.msra.mxu0 0.0
    %5187 = vmatprep.subr.mxu0 0.0
    %5188 = vmatpush1.msra.mxu0 0.0
    %5189 = vmatprep.subr.mxu0 0.0
    %5190 = vmatpush1.msra.mxu0 0.0
    %5191 = vmatprep.subr.mxu0 0.0
    %5192 = vmatpush1.msra.mxu0 0.0
    %5193 = vmatprep.subr.mxu0 0.0
    %5194 = vmatpush1.msra.mxu0 0.0
    %5195 = vmatprep.subr.mxu0 0.0
    %5196 = vmatpush1.msra.mxu0 0.0
    %5197 = vmatprep.subr.mxu0 0.0
    %5198 = vmatpush1.msra.mxu0 0.0
    %5199 = vmatprep.subr.mxu0 0.0
    %5200 = vmatpush1.msra.mxu0 0.0
    %5201 = vmatprep.subr.mxu0 0.0
    %5202 = vmatpush1.msra.mxu0 0.0
    %5203 = vmatprep.subr.mxu0 0.0
    %5204 = vmatpush1.msra.mxu0 0.0
    %5205 = vmatprep.subr.mxu0 0.0
    %5206 = vmatpush1.msra.mxu0 0.0
    %5207 = vmatprep.subr.mxu0 0.0
    %5208 = vmatpush1.msra.mxu0 0.0
    %5209 = vmatprep.subr.mxu0 0.0
    %5210 = vmatpush1.msra.mxu0 0.0
    %5211 = vmatprep.subr.mxu0 0.0
    %5212 = vmatpush1.msra.mxu0 0.0
    %5213 = vmatprep.mubr.f32.mxu0 0.0
    %5214 = vmatmul.mubr.f32.gmra.mrb[0].mxu0 %v5013
    %v5215 = vpop.f32.mrb[0].mxu0
    %v5216 = vadd.f32 0.0, %v5215
    %v5217 = vpop.f32.mrb[0].mxu0
    %v5218 = vadd.f32 0.0, %v5217
    %5219 = vdwg.mxu0
    %v5220 = vadd.f32 %v5009, %v5145
    %v5221 = vadd.f32 %v5010, %v5147
    %v5222 = vadd.f32 %v5011, %v5216
    %v5223 = vadd.f32 %v5012, %v5218
    %v5224 = vld [vmem:[#allocation5] sm:$0xff]
    %v5225 = vxor.u32 %v5220, 2147483648
    %v5226 = vmul.f32 %v5225, 1.442695
    %v5227 = vpow.pop %v5226
    %v5228 = vadd.f32 %v5227, 1.0
    %v5229 = vrcp.pop %v5228
    %v5230 = vmul.f32 1.0, %v5229
    %v5231 = vxor.u32 %v5221, 2147483648
    %v5232 = vmul.f32 %v5231, 1.442695
    %v5233 = vpow.pop %v5232
    %v5234 = vadd.f32 %v5233, 1.0
    %v5235 = vrcp.pop %v5234
    %v5236 = vmul.f32 1.0, %v5235
    %v5237 = vtanh.pop %v5222
    %v5238 = vxor.u32 %v5223, 2147483648
    %v5239 = vmul.f32 %v5238, 1.442695
    %v5240 = vpow.pop %v5239
    %v5241 = vadd.f32 %v5240, 1.0
    %v5242 = vrcp.pop %v5241
    %v5243 = vmul.f32 1.0, %v5242
    %v5244 = vmul.f32 %v5236, %v5224
    %v5245 = vmul.f32 %v5230, %v5237
    %v5246 = vadd.f32 %v5244, %v5245
    %v5247 = vtanh.pop %v5246
    %v5248 = vmul.f32 %v5243, %v5247
    %5249 = vst [vmem:[#allocation4] sm:$0xff] %v5248
    %5250 = vst [vmem:[#allocation5] sm:$0xff] %v5246
    %v5251 = vld [vmem:[%s730] sm:$0xff]
    %v5252 = vld [vmem:[#allocation12] sm:$0xff]
    %v5253 = vld [vmem:[#allocation12 + $0x8] sm:$0xff]
    %v5254 = vld [vmem:[#allocation12 + $0x10] sm:$0xff]
    %v5255 = vld [vmem:[#allocation12 + $0x18] sm:$0xff]
    %v5256 = vld [vmem:[#allocation12 + $0x20] sm:$0xff]
    %v5257 = vld [vmem:[#allocation12 + $0x28] sm:$0xff]
    %v5258 = vld [vmem:[#allocation12 + $0x30] sm:$0xff]
    %v5259 = vld [vmem:[#allocation12 + $0x38] sm:$0xff]
    %v5260 = vld [vmem:[#allocation12 + $0x40] sm:$0xff]
    %v5261 = vld [vmem:[#allocation12 + $0x48] sm:$0xff]
    %v5262 = vld [vmem:[#allocation12 + $0x50] sm:$0xff]
    %v5263 = vld [vmem:[#allocation12 + $0x58] sm:$0xff]
    %v5264 = vld [vmem:[#allocation12 + $0x60] sm:$0xff]
    %v5265 = vld [vmem:[#allocation12 + $0x68] sm:$0xff]
    %v5266 = vld [vmem:[#allocation12 + $0x70] sm:$0xff]
    %v5267 = vld [vmem:[#allocation12 + $0x78] sm:$0xff]
    %v5268 = vld [vmem:[#allocation12 + $0x80] sm:$0xff]
    %v5269 = vld [vmem:[#allocation12 + $0x88] sm:$0xff]
    %v5270 = vld [vmem:[#allocation12 + $0x90] sm:$0xff]
    %v5271 = vld [vmem:[#allocation12 + $0x98] sm:$0xff]
    %v5272 = vld [vmem:[#allocation12 + $0xa0] sm:$0xff]
    %v5273 = vld [vmem:[#allocation12 + $0xa8] sm:$0xff]
    %v5274 = vld [vmem:[#allocation12 + $0xb0] sm:$0xff]
    %v5275 = vld [vmem:[#allocation12 + $0xb8] sm:$0xff]
    %v5276 = vld [vmem:[#allocation12 + $0xc0] sm:$0xff]
    %v5277 = vld [vmem:[#allocation12 + $0xc8] sm:$0xff]
    %v5278 = vld [vmem:[#allocation12 + $0xd0] sm:$0xff]
    %v5279 = vld [vmem:[#allocation12 + $0xd8] sm:$0xff]
    %v5280 = vld [vmem:[#allocation12 + $0xe0] sm:$0xff]
    %v5281 = vld [vmem:[#allocation12 + $0xe8] sm:$0xff]
    %v5282 = vld [vmem:[#allocation12 + $0xf0] sm:$0xff]
    %v5283 = vld [vmem:[#allocation12 + $0xf8] sm:$0xff]
    %v5284 = vld [vmem:[#allocation12 + $0x100] sm:$0xff]
    %v5285 = vld [vmem:[#allocation12 + $0x108] sm:$0xff]
    %v5286 = vld [vmem:[#allocation12 + $0x110] sm:$0xff]
    %v5287 = vld [vmem:[#allocation12 + $0x118] sm:$0xff]
    %v5288 = vld [vmem:[#allocation12 + $0x120] sm:$0xff]
    %v5289 = vld [vmem:[#allocation12 + $0x128] sm:$0xff]
    %v5290 = vld [vmem:[#allocation12 + $0x130] sm:$0xff]
    %v5291 = vld [vmem:[#allocation12 + $0x138] sm:$0xff]
    %v5292 = vld [vmem:[#allocation12 + $0x140] sm:$0xff]
    %v5293 = vld [vmem:[#allocation12 + $0x148] sm:$0xff]
    %v5294 = vld [vmem:[#allocation12 + $0x150] sm:$0xff]
    %v5295 = vld [vmem:[#allocation12 + $0x158] sm:$0xff]
    %v5296 = vld [vmem:[#allocation12 + $0x160] sm:$0xff]
    %v5297 = vld [vmem:[#allocation12 + $0x168] sm:$0xff]
    %v5298 = vld [vmem:[#allocation12 + $0x170] sm:$0xff]
    %v5299 = vld [vmem:[#allocation12 + $0x178] sm:$0xff]
    %v5300 = vld [vmem:[#allocation12 + $0x180] sm:$0xff]
    %v5301 = vld [vmem:[#allocation12 + $0x188] sm:$0xff]
    %v5302 = vld [vmem:[#allocation12 + $0x190] sm:$0xff]
    %v5303 = vld [vmem:[#allocation12 + $0x198] sm:$0xff]
    %v5304 = vld [vmem:[#allocation12 + $0x1a0] sm:$0xff]
    %v5305 = vld [vmem:[#allocation12 + $0x1a8] sm:$0xff]
    %v5306 = vld [vmem:[#allocation12 + $0x1b0] sm:$0xff]
    %v5307 = vld [vmem:[#allocation12 + $0x1b8] sm:$0xff]
    %v5308 = vld [vmem:[#allocation12 + $0x1c0] sm:$0xff]
    %v5309 = vld [vmem:[#allocation12 + $0x1c8] sm:$0xff]
    %v5310 = vld [vmem:[#allocation12 + $0x1d0] sm:$0xff]
    %v5311 = vld [vmem:[#allocation12 + $0x1d8] sm:$0xff]
    %v5312 = vld [vmem:[#allocation12 + $0x1e0] sm:$0xff]
    %v5313 = vld [vmem:[#allocation12 + $0x1e8] sm:$0xff]
    %v5314 = vld [vmem:[#allocation12 + $0x1f0] sm:$0xff]
    %v5315 = vld [vmem:[#allocation12 + $0x1f8] sm:$0xff]
    %v5316 = vld [vmem:[#allocation12 + $0x200] sm:$0xff]
    %v5317 = vld [vmem:[#allocation12 + $0x208] sm:$0xff]
    %v5318 = vld [vmem:[#allocation12 + $0x210] sm:$0xff]
    %v5319 = vld [vmem:[#allocation12 + $0x218] sm:$0xff]
    %v5320 = vld [vmem:[#allocation12 + $0x220] sm:$0xff]
    %v5321 = vld [vmem:[#allocation12 + $0x228] sm:$0xff]
    %v5322 = vld [vmem:[#allocation12 + $0x230] sm:$0xff]
    %v5323 = vld [vmem:[#allocation12 + $0x238] sm:$0xff]
    %v5324 = vld [vmem:[#allocation12 + $0x240] sm:$0xff]
    %v5325 = vld [vmem:[#allocation12 + $0x248] sm:$0xff]
    %v5326 = vld [vmem:[#allocation12 + $0x250] sm:$0xff]
    %v5327 = vld [vmem:[#allocation12 + $0x258] sm:$0xff]
    %v5328 = vld [vmem:[#allocation12 + $0x260] sm:$0xff]
    %v5329 = vld [vmem:[#allocation12 + $0x268] sm:$0xff]
    %v5330 = vld [vmem:[#allocation12 + $0x270] sm:$0xff]
    %v5331 = vld [vmem:[#allocation12 + $0x278] sm:$0xff]
    %v5332 = vld [vmem:[#allocation12 + $0x280] sm:$0xff]
    %v5333 = vld [vmem:[#allocation12 + $0x288] sm:$0xff]
    %v5334 = vld [vmem:[#allocation12 + $0x290] sm:$0xff]
    %v5335 = vld [vmem:[#allocation12 + $0x298] sm:$0xff]
    %v5336 = vld [vmem:[#allocation12 + $0x2a0] sm:$0xff]
    %v5337 = vld [vmem:[#allocation12 + $0x2a8] sm:$0xff]
    %v5338 = vld [vmem:[#allocation12 + $0x2b0] sm:$0xff]
    %v5339 = vld [vmem:[#allocation12 + $0x2b8] sm:$0xff]
    %v5340 = vld [vmem:[#allocation12 + $0x2c0] sm:$0xff]
    %v5341 = vld [vmem:[#allocation12 + $0x2c8] sm:$0xff]
    %v5342 = vld [vmem:[#allocation12 + $0x2d0] sm:$0xff]
    %v5343 = vld [vmem:[#allocation12 + $0x2d8] sm:$0xff]
    %v5344 = vld [vmem:[#allocation12 + $0x2e0] sm:$0xff]
    %v5345 = vld [vmem:[#allocation12 + $0x2e8] sm:$0xff]
    %v5346 = vld [vmem:[#allocation12 + $0x2f0] sm:$0xff]
    %v5347 = vld [vmem:[#allocation12 + $0x2f8] sm:$0xff]
    %v5348 = vld [vmem:[#allocation12 + $0x300] sm:$0xff]
    %v5349 = vld [vmem:[#allocation12 + $0x308] sm:$0xff]
    %v5350 = vld [vmem:[#allocation12 + $0x310] sm:$0xff]
    %v5351 = vld [vmem:[#allocation12 + $0x318] sm:$0xff]
    %v5352 = vld [vmem:[#allocation12 + $0x320] sm:$0xff]
    %v5353 = vld [vmem:[#allocation12 + $0x328] sm:$0xff]
    %v5354 = vld [vmem:[#allocation12 + $0x330] sm:$0xff]
    %v5355 = vld [vmem:[#allocation12 + $0x338] sm:$0xff]
    %v5356 = vld [vmem:[#allocation12 + $0x340] sm:$0xff]
    %v5357 = vld [vmem:[#allocation12 + $0x348] sm:$0xff]
    %v5358 = vld [vmem:[#allocation12 + $0x350] sm:$0xff]
    %v5359 = vld [vmem:[#allocation12 + $0x358] sm:$0xff]
    %v5360 = vld [vmem:[#allocation12 + $0x360] sm:$0xff]
    %v5361 = vld [vmem:[#allocation12 + $0x368] sm:$0xff]
    %v5362 = vld [vmem:[#allocation12 + $0x370] sm:$0xff]
    %v5363 = vld [vmem:[#allocation12 + $0x378] sm:$0xff]
    %v5364 = vld [vmem:[#allocation12 + $0x380] sm:$0xff]
    %v5365 = vld [vmem:[#allocation12 + $0x388] sm:$0xff]
    %v5366 = vld [vmem:[#allocation12 + $0x390] sm:$0xff]
    %v5367 = vld [vmem:[#allocation12 + $0x398] sm:$0xff]
    %v5368 = vld [vmem:[#allocation12 + $0x3a0] sm:$0xff]
    %v5369 = vld [vmem:[#allocation12 + $0x3a8] sm:$0xff]
    %v5370 = vld [vmem:[#allocation12 + $0x3b0] sm:$0xff]
    %v5371 = vld [vmem:[#allocation12 + $0x3b8] sm:$0xff]
    %v5372 = vld [vmem:[#allocation12 + $0x3c0] sm:$0xff]
    %v5373 = vld [vmem:[#allocation12 + $0x3c8] sm:$0xff]
    %v5374 = vld [vmem:[#allocation12 + $0x3d0] sm:$0xff]
    %v5375 = vld [vmem:[#allocation12 + $0x3d8] sm:$0xff]
    %v5376 = vld [vmem:[#allocation12 + $0x3e0] sm:$0xff]
    %v5377 = vld [vmem:[#allocation12 + $0x3e8] sm:$0xff]
    %v5378 = vld [vmem:[#allocation12 + $0x3f0] sm:$0xff]
    %v5379 = vld [vmem:[#allocation12 + $0x3f8] sm:$0xff]
    %v5380 = vld [vmem:[%s5] sm:$0xf]
    %v5382 = vlaneseq
    %v5383 = vshrl.u32 %v5382, 7
    %v5384 = vsub.s32 0, %v5383
    %v5385 = vrot.slane %v5380, %v5384
    %v5386 = vlaneseq
    %v5387 = vshrl.u32 %v5386, 7
    %v5388 = vsub.s32 1, %v5387
    %v5389 = vrot.slane %v5380, %v5388
    %v5390 = vlaneseq
    %v5391 = vshrl.u32 %v5390, 7
    %v5392 = vsub.s32 2, %v5391
    %v5393 = vrot.slane %v5380, %v5392
    %v5394 = vlaneseq
    %v5395 = vshrl.u32 %v5394, 7
    %v5396 = vsub.s32 3, %v5395
    %v5397 = vrot.slane %v5380, %v5396
    %5402 = vmatprep.subr.mxu0 %v5253
    %5403 = vmatpush1.msra.mxu0 %v5252
    %5404 = vmatprep.subr.mxu0 %v5257
    %5405 = vmatpush1.msra.mxu0 %v5256
    %5406 = vmatprep.subr.mxu0 %v5261
    %5407 = vmatpush1.msra.mxu0 %v5260
    %5408 = vmatprep.subr.mxu0 %v5265
    %5409 = vmatpush1.msra.mxu0 %v5264
    %5410 = vmatprep.subr.mxu0 %v5269
    %5411 = vmatpush1.msra.mxu0 %v5268
    %5412 = vmatprep.subr.mxu0 %v5273
    %5413 = vmatpush1.msra.mxu0 %v5272
    %5414 = vmatprep.subr.mxu0 %v5277
    %5415 = vmatpush1.msra.mxu0 %v5276
    %5416 = vmatprep.subr.mxu0 %v5281
    %5417 = vmatpush1.msra.mxu0 %v5280
    %5418 = vmatprep.subr.mxu0 %v5285
    %5419 = vmatpush1.msra.mxu0 %v5284
    %5420 = vmatprep.subr.mxu0 %v5289
    %5421 = vmatpush1.msra.mxu0 %v5288
    %5422 = vmatprep.subr.mxu0 %v5293
    %5423 = vmatpush1.msra.mxu0 %v5292
    %5424 = vmatprep.subr.mxu0 %v5297
    %5425 = vmatpush1.msra.mxu0 %v5296
    %5426 = vmatprep.subr.mxu0 %v5301
    %5427 = vmatpush1.msra.mxu0 %v5300
    %5428 = vmatprep.subr.mxu0 %v5305
    %5429 = vmatpush1.msra.mxu0 %v5304
    %5430 = vmatprep.subr.mxu0 %v5309
    %5431 = vmatpush1.msra.mxu0 %v5308
    %5432 = vmatprep.subr.mxu0 %v5313
    %5433 = vmatpush1.msra.mxu0 %v5312
    %5434 = vmatprep.subr.mxu0 %v5317
    %5435 = vmatpush1.msra.mxu0 %v5316
    %5436 = vmatprep.subr.mxu0 %v5321
    %5437 = vmatpush1.msra.mxu0 %v5320
    %5438 = vmatprep.subr.mxu0 %v5325
    %5439 = vmatpush1.msra.mxu0 %v5324
    %5440 = vmatprep.subr.mxu0 %v5329
    %5441 = vmatpush1.msra.mxu0 %v5328
    %5442 = vmatprep.subr.mxu0 %v5333
    %5443 = vmatpush1.msra.mxu0 %v5332
    %5444 = vmatprep.subr.mxu0 %v5337
    %5445 = vmatpush1.msra.mxu0 %v5336
    %5446 = vmatprep.subr.mxu0 %v5341
    %5447 = vmatpush1.msra.mxu0 %v5340
    %5448 = vmatprep.subr.mxu0 %v5345
    %5449 = vmatpush1.msra.mxu0 %v5344
    %5450 = vmatprep.subr.mxu0 %v5349
    %5451 = vmatpush1.msra.mxu0 %v5348
    %5452 = vmatprep.subr.mxu0 %v5353
    %5453 = vmatpush1.msra.mxu0 %v5352
    %5454 = vmatprep.subr.mxu0 %v5357
    %5455 = vmatpush1.msra.mxu0 %v5356
    %5456 = vmatprep.subr.mxu0 %v5361
    %5457 = vmatpush1.msra.mxu0 %v5360
    %5458 = vmatprep.subr.mxu0 %v5365
    %5459 = vmatpush1.msra.mxu0 %v5364
    %5460 = vmatprep.subr.mxu0 %v5369
    %5461 = vmatpush1.msra.mxu0 %v5368
    %5462 = vmatprep.subr.mxu0 %v5373
    %5463 = vmatpush1.msra.mxu0 %v5372
    %5464 = vmatprep.subr.mxu0 %v5377
    %5465 = vmatpush1.msra.mxu0 %v5376
    %5466 = vmatprep.mubr.f32.mxu0 %v5251
    %5467 = vmatmul.mubr.f32.gmra.mrb[0].mxu0 %v5248
    %v5468 = vpop.f32.mrb[0].mxu0
    %v5469 = vadd.f32 %v5385, %v5468
    %v5470 = vpop.f32.mrb[0].mxu0
    %v5471 = vadd.f32 %v5389, %v5470
    %5472 = vdwg.mxu0
    %5473 = vmatprep.subr.mxu0 %v5255
    %5474 = vmatpush1.msra.mxu0 %v5254
    %5475 = vmatprep.subr.mxu0 %v5259
    %5476 = vmatpush1.msra.mxu0 %v5258
    %5477 = vmatprep.subr.mxu0 %v5263
    %5478 = vmatpush1.msra.mxu0 %v5262
    %5479 = vmatprep.subr.mxu0 %v5267
    %5480 = vmatpush1.msra.mxu0 %v5266
    %5481 = vmatprep.subr.mxu0 %v5271
    %5482 = vmatpush1.msra.mxu0 %v5270
    %5483 = vmatprep.subr.mxu0 %v5275
    %5484 = vmatpush1.msra.mxu0 %v5274
    %5485 = vmatprep.subr.mxu0 %v5279
    %5486 = vmatpush1.msra.mxu0 %v5278
    %5487 = vmatprep.subr.mxu0 %v5283
    %5488 = vmatpush1.msra.mxu0 %v5282
    %5489 = vmatprep.subr.mxu0 %v5287
    %5490 = vmatpush1.msra.mxu0 %v5286
    %5491 = vmatprep.subr.mxu0 %v5291
    %5492 = vmatpush1.msra.mxu0 %v5290
    %5493 = vmatprep.subr.mxu0 %v5295
    %5494 = vmatpush1.msra.mxu0 %v5294
    %5495 = vmatprep.subr.mxu0 %v5299
    %5496 = vmatpush1.msra.mxu0 %v5298
    %5497 = vmatprep.subr.mxu0 %v5303
    %5498 = vmatpush1.msra.mxu0 %v5302
    %5499 = vmatprep.subr.mxu0 %v5307
    %5500 = vmatpush1.msra.mxu0 %v5306
    %5501 = vmatprep.subr.mxu0 %v5311
    %5502 = vmatpush1.msra.mxu0 %v5310
    %5503 = vmatprep.subr.mxu0 %v5315
    %5504 = vmatpush1.msra.mxu0 %v5314
    %5505 = vmatprep.subr.mxu0 %v5319
    %5506 = vmatpush1.msra.mxu0 %v5318
    %5507 = vmatprep.subr.mxu0 %v5323
    %5508 = vmatpush1.msra.mxu0 %v5322
    %5509 = vmatprep.subr.mxu0 %v5327
    %5510 = vmatpush1.msra.mxu0 %v5326
    %5511 = vmatprep.subr.mxu0 %v5331
    %5512 = vmatpush1.msra.mxu0 %v5330
    %5513 = vmatprep.subr.mxu0 %v5335
    %5514 = vmatpush1.msra.mxu0 %v5334
    %5515 = vmatprep.subr.mxu0 %v5339
    %5516 = vmatpush1.msra.mxu0 %v5338
    %5517 = vmatprep.subr.mxu0 %v5343
    %5518 = vmatpush1.msra.mxu0 %v5342
    %5519 = vmatprep.subr.mxu0 %v5347
    %5520 = vmatpush1.msra.mxu0 %v5346
    %5521 = vmatprep.subr.mxu0 %v5351
    %5522 = vmatpush1.msra.mxu0 %v5350
    %5523 = vmatprep.subr.mxu0 %v5355
    %5524 = vmatpush1.msra.mxu0 %v5354
    %5525 = vmatprep.subr.mxu0 %v5359
    %5526 = vmatpush1.msra.mxu0 %v5358
    %5527 = vmatprep.subr.mxu0 %v5363
    %5528 = vmatpush1.msra.mxu0 %v5362
    %5529 = vmatprep.subr.mxu0 %v5367
    %5530 = vmatpush1.msra.mxu0 %v5366
    %5531 = vmatprep.subr.mxu0 %v5371
    %5532 = vmatpush1.msra.mxu0 %v5370
    %5533 = vmatprep.subr.mxu0 %v5375
    %5534 = vmatpush1.msra.mxu0 %v5374
    %5535 = vmatprep.subr.mxu0 %v5379
    %5536 = vmatpush1.msra.mxu0 %v5378
    %5537 = vmatprep.mubr.f32.mxu0 %v5251
    %5538 = vmatmul.mubr.f32.gmra.mrb[0].mxu0 %v5248
    %v5539 = vpop.f32.mrb[0].mxu0
    %v5540 = vadd.f32 %v5393, %v5539
    %v5541 = vpop.f32.mrb[0].mxu0
    %v5542 = vadd.f32 %v5397, %v5541
    %5543 = vdwg.mxu0
    %v5544 = vld [vmem:[%s1024] sm:$0xff]
    %v5545 = vxor.u32 %v5469, 2147483648
    %v5546 = vmul.f32 %v5545, 1.442695
    %v5547 = vpow.pop %v5546
    %v5548 = vadd.f32 %v5547, 1.0
    %v5549 = vrcp.pop %v5548
    %v5550 = vmul.f32 1.0, %v5549
    %v5551 = vxor.u32 %v5471, 2147483648
    %v5552 = vmul.f32 %v5551, 1.442695
    %v5553 = vpow.pop %v5552
    %v5554 = vadd.f32 %v5553, 1.0
    %v5555 = vrcp.pop %v5554
    %v5556 = vmul.f32 1.0, %v5555
    %v5557 = vtanh.pop %v5540
    %v5558 = vxor.u32 %v5542, 2147483648
    %v5559 = vmul.f32 %v5558, 1.442695
    %v5560 = vpow.pop %v5559
    %v5561 = vadd.f32 %v5560, 1.0
    %v5562 = vrcp.pop %v5561
    %v5563 = vmul.f32 1.0, %v5562
    %v5564 = vmul.f32 %v5556, %v5544
    %v5565 = vmul.f32 %v5550, %v5557
    %v5566 = vadd.f32 %v5564, %v5565
    %v5567 = vtanh.pop %v5566
    %v5568 = vmul.f32 %v5563, %v5567
    %5569 = vst [vmem:[%s730] sm:$0xff] %v5568
    %5570 = vst [vmem:[%s1024] sm:$0xff] %v5566
    %s5571 = scalar_lea.vmem [#allocation3], 64
    %5572 = vst [vmem:[%s5571] sm:$0xff] %v5568
    %s5573 = scalar_lea.vmem [#allocation2], 288
    %v5574 = vld [vmem:[%s5573] sm:$0xff]
    %v5575 = vld [vmem:[%s5573 + $0x8] sm:$0xff]
    %v5576 = vld [vmem:[%s5573 + $0x10] sm:$0xff]
    %v5577 = vld [vmem:[%s5573 + $0x18] sm:$0xff]
    %v5578 = vld [vmem:[#allocation4] sm:$0xff]
    %v5579 = vld [vmem:[#allocation11] sm:$0xff]
    %v5580 = vld [vmem:[#allocation11 + $0x8] sm:$0xff]
    %v5581 = vld [vmem:[#allocation11 + $0x10] sm:$0xff]
    %v5582 = vld [vmem:[#allocation11 + $0x18] sm:$0xff]
    %v5583 = vld [vmem:[#allocation11 + $0x20] sm:$0xff]
    %v5584 = vld [vmem:[#allocation11 + $0x28] sm:$0xff]
    %v5585 = vld [vmem:[#allocation11 + $0x30] sm:$0xff]
    %v5586 = vld [vmem:[#allocation11 + $0x38] sm:$0xff]
    %v5587 = vld [vmem:[#allocation11 + $0x40] sm:$0xff]
    %v5588 = vld [vmem:[#allocation11 + $0x48] sm:$0xff]
    %v5589 = vld [vmem:[#allocation11 + $0x50] sm:$0xff]
    %v5590 = vld [vmem:[#allocation11 + $0x58] sm:$0xff]
    %v5591 = vld [vmem:[#allocation11 + $0x60] sm:$0xff]
    %v5592 = vld [vmem:[#allocation11 + $0x68] sm:$0xff]
    %v5593 = vld [vmem:[#allocation11 + $0x70] sm:$0xff]
    %v5594 = vld [vmem:[#allocation11 + $0x78] sm:$0xff]
    %v5595 = vld [vmem:[#allocation11 + $0x80] sm:$0xff]
    %v5596 = vld [vmem:[#allocation11 + $0x88] sm:$0xff]
    %v5597 = vld [vmem:[#allocation11 + $0x90] sm:$0xff]
    %v5598 = vld [vmem:[#allocation11 + $0x98] sm:$0xff]
    %v5599 = vld [vmem:[#allocation11 + $0xa0] sm:$0xff]
    %v5600 = vld [vmem:[#allocation11 + $0xa8] sm:$0xff]
    %v5601 = vld [vmem:[#allocation11 + $0xb0] sm:$0xff]
    %v5602 = vld [vmem:[#allocation11 + $0xb8] sm:$0xff]
    %v5603 = vld [vmem:[#allocation11 + $0xc0] sm:$0xff]
    %v5604 = vld [vmem:[#allocation11 + $0xc8] sm:$0xff]
    %v5605 = vld [vmem:[#allocation11 + $0xd0] sm:$0xff]
    %v5606 = vld [vmem:[#allocation11 + $0xd8] sm:$0xff]
    %v5607 = vld [vmem:[#allocation11 + $0xe0] sm:$0xff]
    %v5608 = vld [vmem:[#allocation11 + $0xe8] sm:$0xff]
    %v5609 = vld [vmem:[#allocation11 + $0xf0] sm:$0xff]
    %v5610 = vld [vmem:[#allocation11 + $0xf8] sm:$0xff]
    %v5611 = vld [vmem:[#allocation11 + $0x100] sm:$0xff]
    %v5612 = vld [vmem:[#allocation11 + $0x108] sm:$0xff]
    %v5613 = vld [vmem:[#allocation11 + $0x110] sm:$0xff]
    %v5614 = vld [vmem:[#allocation11 + $0x118] sm:$0xff]
    %v5615 = vld [vmem:[#allocation11 + $0x120] sm:$0xff]
    %v5616 = vld [vmem:[#allocation11 + $0x128] sm:$0xff]
    %v5617 = vld [vmem:[#allocation11 + $0x130] sm:$0xff]
    %v5618 = vld [vmem:[#allocation11 + $0x138] sm:$0xff]
    %v5619 = vld [vmem:[#allocation11 + $0x140] sm:$0xff]
    %v5620 = vld [vmem:[#allocation11 + $0x148] sm:$0xff]
    %v5621 = vld [vmem:[#allocation11 + $0x150] sm:$0xff]
    %v5622 = vld [vmem:[#allocation11 + $0x158] sm:$0xff]
    %v5623 = vld [vmem:[#allocation11 + $0x160] sm:$0xff]
    %v5624 = vld [vmem:[#allocation11 + $0x168] sm:$0xff]
    %v5625 = vld [vmem:[#allocation11 + $0x170] sm:$0xff]
    %v5626 = vld [vmem:[#allocation11 + $0x178] sm:$0xff]
    %v5627 = vld [vmem:[#allocation11 + $0x180] sm:$0xff]
    %v5628 = vld [vmem:[#allocation11 + $0x188] sm:$0xff]
    %v5629 = vld [vmem:[#allocation11 + $0x190] sm:$0xff]
    %v5630 = vld [vmem:[#allocation11 + $0x198] sm:$0xff]
    %v5631 = vld [vmem:[#allocation11 + $0x1a0] sm:$0xff]
    %v5632 = vld [vmem:[#allocation11 + $0x1a8] sm:$0xff]
    %v5633 = vld [vmem:[#allocation11 + $0x1b0] sm:$0xff]
    %v5634 = vld [vmem:[#allocation11 + $0x1b8] sm:$0xff]
    %v5635 = vld [vmem:[#allocation11 + $0x1c0] sm:$0xff]
    %v5636 = vld [vmem:[#allocation11 + $0x1c8] sm:$0xff]
    %v5637 = vld [vmem:[#allocation11 + $0x1d0] sm:$0xff]
    %v5638 = vld [vmem:[#allocation11 + $0x1d8] sm:$0xff]
    %v5639 = vld [vmem:[#allocation11 + $0x1e0] sm:$0xff]
    %v5640 = vld [vmem:[#allocation11 + $0x1e8] sm:$0xff]
    %v5641 = vld [vmem:[#allocation11 + $0x1f0] sm:$0xff]
    %v5642 = vld [vmem:[#allocation11 + $0x1f8] sm:$0xff]
    %5643 = vmatprep.subr.mxu0 %v5580
    %5644 = vmatpush1.msra.mxu0 %v5579
    %5645 = vmatprep.subr.mxu0 %v5584
    %5646 = vmatpush1.msra.mxu0 %v5583
    %5647 = vmatprep.subr.mxu0 %v5588
    %5648 = vmatpush1.msra.mxu0 %v5587
    %5649 = vmatprep.subr.mxu0 %v5592
    %5650 = vmatpush1.msra.mxu0 %v5591
    %5651 = vmatprep.subr.mxu0 %v5596
    %5652 = vmatpush1.msra.mxu0 %v5595
    %5653 = vmatprep.subr.mxu0 %v5600
    %5654 = vmatpush1.msra.mxu0 %v5599
    %5655 = vmatprep.subr.mxu0 %v5604
    %5656 = vmatpush1.msra.mxu0 %v5603
    %5657 = vmatprep.subr.mxu0 %v5608
    %5658 = vmatpush1.msra.mxu0 %v5607
    %5659 = vmatprep.subr.mxu0 %v5612
    %5660 = vmatpush1.msra.mxu0 %v5611
    %5661 = vmatprep.subr.mxu0 %v5616
    %5662 = vmatpush1.msra.mxu0 %v5615
    %5663 = vmatprep.subr.mxu0 %v5620
    %5664 = vmatpush1.msra.mxu0 %v5619
    %5665 = vmatprep.subr.mxu0 %v5624
    %5666 = vmatpush1.msra.mxu0 %v5623
    %5667 = vmatprep.subr.mxu0 %v5628
    %5668 = vmatpush1.msra.mxu0 %v5627
    %5669 = vmatprep.subr.mxu0 %v5632
    %5670 = vmatpush1.msra.mxu0 %v5631
    %5671 = vmatprep.subr.mxu0 %v5636
    %5672 = vmatpush1.msra.mxu0 %v5635
    %5673 = vmatprep.subr.mxu0 %v5640
    %5674 = vmatpush1.msra.mxu0 %v5639
    %5675 = vmatprep.subr.mxu0 0.0
    %5676 = vmatpush1.msra.mxu0 0.0
    %5677 = vmatprep.subr.mxu0 0.0
    %5678 = vmatpush1.msra.mxu0 0.0
    %5679 = vmatprep.subr.mxu0 0.0
    %5680 = vmatpush1.msra.mxu0 0.0
    %5681 = vmatprep.subr.mxu0 0.0
    %5682 = vmatpush1.msra.mxu0 0.0
    %5683 = vmatprep.subr.mxu0 0.0
    %5684 = vmatpush1.msra.mxu0 0.0
    %5685 = vmatprep.subr.mxu0 0.0
    %5686 = vmatpush1.msra.mxu0 0.0
    %5687 = vmatprep.subr.mxu0 0.0
    %5688 = vmatpush1.msra.mxu0 0.0
    %5689 = vmatprep.subr.mxu0 0.0
    %5690 = vmatpush1.msra.mxu0 0.0
    %5691 = vmatprep.subr.mxu0 0.0
    %5692 = vmatpush1.msra.mxu0 0.0
    %5693 = vmatprep.subr.mxu0 0.0
    %5694 = vmatpush1.msra.mxu0 0.0
    %5695 = vmatprep.subr.mxu0 0.0
    %5696 = vmatpush1.msra.mxu0 0.0
    %5697 = vmatprep.subr.mxu0 0.0
    %5698 = vmatpush1.msra.mxu0 0.0
    %5699 = vmatprep.subr.mxu0 0.0
    %5700 = vmatpush1.msra.mxu0 0.0
    %5701 = vmatprep.subr.mxu0 0.0
    %5702 = vmatpush1.msra.mxu0 0.0
    %5703 = vmatprep.subr.mxu0 0.0
    %5704 = vmatpush1.msra.mxu0 0.0
    %5705 = vmatprep.subr.mxu0 0.0
    %5706 = vmatpush1.msra.mxu0 0.0
    %5707 = vmatprep.mubr.f32.mxu0 0.0
    %5708 = vmatmul.mubr.f32.gmra.mrb[0].mxu0 %v5578
    %v5709 = vpop.f32.mrb[0].mxu0
    %v5710 = vadd.f32 0.0, %v5709
    %v5711 = vpop.f32.mrb[0].mxu0
    %v5712 = vadd.f32 0.0, %v5711
    %5713 = vdwg.mxu0
    %5714 = vmatprep.subr.mxu0 %v5582
    %5715 = vmatpush1.msra.mxu0 %v5581
    %5716 = vmatprep.subr.mxu0 %v5586
    %5717 = vmatpush1.msra.mxu0 %v5585
    %5718 = vmatprep.subr.mxu0 %v5590
    %5719 = vmatpush1.msra.mxu0 %v5589
    %5720 = vmatprep.subr.mxu0 %v5594
    %5721 = vmatpush1.msra.mxu0 %v5593
    %5722 = vmatprep.subr.mxu0 %v5598
    %5723 = vmatpush1.msra.mxu0 %v5597
    %5724 = vmatprep.subr.mxu0 %v5602
    %5725 = vmatpush1.msra.mxu0 %v5601
    %5726 = vmatprep.subr.mxu0 %v5606
    %5727 = vmatpush1.msra.mxu0 %v5605
    %5728 = vmatprep.subr.mxu0 %v5610
    %5729 = vmatpush1.msra.mxu0 %v5609
    %5730 = vmatprep.subr.mxu0 %v5614
    %5731 = vmatpush1.msra.mxu0 %v5613
    %5732 = vmatprep.subr.mxu0 %v5618
    %5733 = vmatpush1.msra.mxu0 %v5617
    %5734 = vmatprep.subr.mxu0 %v5622
    %5735 = vmatpush1.msra.mxu0 %v5621
    %5736 = vmatprep.subr.mxu0 %v5626
    %5737 = vmatpush1.msra.mxu0 %v5625
    %5738 = vmatprep.subr.mxu0 %v5630
    %5739 = vmatpush1.msra.mxu0 %v5629
    %5740 = vmatprep.subr.mxu0 %v5634
    %5741 = vmatpush1.msra.mxu0 %v5633
    %5742 = vmatprep.subr.mxu0 %v5638
    %5743 = vmatpush1.msra.mxu0 %v5637
    %5744 = vmatprep.subr.mxu0 %v5642
    %5745 = vmatpush1.msra.mxu0 %v5641
    %5746 = vmatprep.subr.mxu0 0.0
    %5747 = vmatpush1.msra.mxu0 0.0
    %5748 = vmatprep.subr.mxu0 0.0
    %5749 = vmatpush1.msra.mxu0 0.0
    %5750 = vmatprep.subr.mxu0 0.0
    %5751 = vmatpush1.msra.mxu0 0.0
    %5752 = vmatprep.subr.mxu0 0.0
    %5753 = vmatpush1.msra.mxu0 0.0
    %5754 = vmatprep.subr.mxu0 0.0
    %5755 = vmatpush1.msra.mxu0 0.0
    %5756 = vmatprep.subr.mxu0 0.0
    %5757 = vmatpush1.msra.mxu0 0.0
    %5758 = vmatprep.subr.mxu0 0.0
    %5759 = vmatpush1.msra.mxu0 0.0
    %5760 = vmatprep.subr.mxu0 0.0
    %5761 = vmatpush1.msra.mxu0 0.0
    %5762 = vmatprep.subr.mxu0 0.0
    %5763 = vmatpush1.msra.mxu0 0.0
    %5764 = vmatprep.subr.mxu0 0.0
    %5765 = vmatpush1.msra.mxu0 0.0
    %5766 = vmatprep.subr.mxu0 0.0
    %5767 = vmatpush1.msra.mxu0 0.0
    %5768 = vmatprep.subr.mxu0 0.0
    %5769 = vmatpush1.msra.mxu0 0.0
    %5770 = vmatprep.subr.mxu0 0.0
    %5771 = vmatpush1.msra.mxu0 0.0
    %5772 = vmatprep.subr.mxu0 0.0
    %5773 = vmatpush1.msra.mxu0 0.0
    %5774 = vmatprep.subr.mxu0 0.0
    %5775 = vmatpush1.msra.mxu0 0.0
    %5776 = vmatprep.subr.mxu0 0.0
    %5777 = vmatpush1.msra.mxu0 0.0
    %5778 = vmatprep.mubr.f32.mxu0 0.0
    %5779 = vmatmul.mubr.f32.gmra.mrb[0].mxu0 %v5578
    %v5780 = vpop.f32.mrb[0].mxu0
    %v5781 = vadd.f32 0.0, %v5780
    %v5782 = vpop.f32.mrb[0].mxu0
    %v5783 = vadd.f32 0.0, %v5782
    %5784 = vdwg.mxu0
    %v5785 = vadd.f32 %v5574, %v5710
    %v5786 = vadd.f32 %v5575, %v5712
    %v5787 = vadd.f32 %v5576, %v5781
    %v5788 = vadd.f32 %v5577, %v5783
    %v5789 = vld [vmem:[#allocation5] sm:$0xff]
    %v5790 = vxor.u32 %v5785, 2147483648
    %v5791 = vmul.f32 %v5790, 1.442695
    %v5792 = vpow.pop %v5791
    %v5793 = vadd.f32 %v5792, 1.0
    %v5794 = vrcp.pop %v5793
    %v5795 = vmul.f32 1.0, %v5794
    %v5796 = vxor.u32 %v5786, 2147483648
    %v5797 = vmul.f32 %v5796, 1.442695
    %v5798 = vpow.pop %v5797
    %v5799 = vadd.f32 %v5798, 1.0
    %v5800 = vrcp.pop %v5799
    %v5801 = vmul.f32 1.0, %v5800
    %v5802 = vtanh.pop %v5787
    %v5803 = vxor.u32 %v5788, 2147483648
    %v5804 = vmul.f32 %v5803, 1.442695
    %v5805 = vpow.pop %v5804
    %v5806 = vadd.f32 %v5805, 1.0
    %v5807 = vrcp.pop %v5806
    %v5808 = vmul.f32 1.0, %v5807
    %v5809 = vmul.f32 %v5801, %v5789
    %v5810 = vmul.f32 %v5795, %v5802
    %v5811 = vadd.f32 %v5809, %v5810
    %v5812 = vtanh.pop %v5811
    %v5813 = vmul.f32 %v5808, %v5812
    %5814 = vst [vmem:[#allocation4] sm:$0xff] %v5813
    %5815 = vst [vmem:[#allocation5] sm:$0xff] %v5811
    %v5816 = vld [vmem:[%s730] sm:$0xff]
    %v5817 = vld [vmem:[#allocation12] sm:$0xff]
    %v5818 = vld [vmem:[#allocation12 + $0x8] sm:$0xff]
    %v5819 = vld [vmem:[#allocation12 + $0x10] sm:$0xff]
    %v5820 = vld [vmem:[#allocation12 + $0x18] sm:$0xff]
    %v5821 = vld [vmem:[#allocation12 + $0x20] sm:$0xff]
    %v5822 = vld [vmem:[#allocation12 + $0x28] sm:$0xff]
    %v5823 = vld [vmem:[#allocation12 + $0x30] sm:$0xff]
    %v5824 = vld [vmem:[#allocation12 + $0x38] sm:$0xff]
    %v5825 = vld [vmem:[#allocation12 + $0x40] sm:$0xff]
    %v5826 = vld [vmem:[#allocation12 + $0x48] sm:$0xff]
    %v5827 = vld [vmem:[#allocation12 + $0x50] sm:$0xff]
    %v5828 = vld [vmem:[#allocation12 + $0x58] sm:$0xff]
    %v5829 = vld [vmem:[#allocation12 + $0x60] sm:$0xff]
    %v5830 = vld [vmem:[#allocation12 + $0x68] sm:$0xff]
    %v5831 = vld [vmem:[#allocation12 + $0x70] sm:$0xff]
    %v5832 = vld [vmem:[#allocation12 + $0x78] sm:$0xff]
    %v5833 = vld [vmem:[#allocation12 + $0x80] sm:$0xff]
    %v5834 = vld [vmem:[#allocation12 + $0x88] sm:$0xff]
    %v5835 = vld [vmem:[#allocation12 + $0x90] sm:$0xff]
    %v5836 = vld [vmem:[#allocation12 + $0x98] sm:$0xff]
    %v5837 = vld [vmem:[#allocation12 + $0xa0] sm:$0xff]
    %v5838 = vld [vmem:[#allocation12 + $0xa8] sm:$0xff]
    %v5839 = vld [vmem:[#allocation12 + $0xb0] sm:$0xff]
    %v5840 = vld [vmem:[#allocation12 + $0xb8] sm:$0xff]
    %v5841 = vld [vmem:[#allocation12 + $0xc0] sm:$0xff]
    %v5842 = vld [vmem:[#allocation12 + $0xc8] sm:$0xff]
    %v5843 = vld [vmem:[#allocation12 + $0xd0] sm:$0xff]
    %v5844 = vld [vmem:[#allocation12 + $0xd8] sm:$0xff]
    %v5845 = vld [vmem:[#allocation12 + $0xe0] sm:$0xff]
    %v5846 = vld [vmem:[#allocation12 + $0xe8] sm:$0xff]
    %v5847 = vld [vmem:[#allocation12 + $0xf0] sm:$0xff]
    %v5848 = vld [vmem:[#allocation12 + $0xf8] sm:$0xff]
    %v5849 = vld [vmem:[#allocation12 + $0x100] sm:$0xff]
    %v5850 = vld [vmem:[#allocation12 + $0x108] sm:$0xff]
    %v5851 = vld [vmem:[#allocation12 + $0x110] sm:$0xff]
    %v5852 = vld [vmem:[#allocation12 + $0x118] sm:$0xff]
    %v5853 = vld [vmem:[#allocation12 + $0x120] sm:$0xff]
    %v5854 = vld [vmem:[#allocation12 + $0x128] sm:$0xff]
    %v5855 = vld [vmem:[#allocation12 + $0x130] sm:$0xff]
    %v5856 = vld [vmem:[#allocation12 + $0x138] sm:$0xff]
    %v5857 = vld [vmem:[#allocation12 + $0x140] sm:$0xff]
    %v5858 = vld [vmem:[#allocation12 + $0x148] sm:$0xff]
    %v5859 = vld [vmem:[#allocation12 + $0x150] sm:$0xff]
    %v5860 = vld [vmem:[#allocation12 + $0x158] sm:$0xff]
    %v5861 = vld [vmem:[#allocation12 + $0x160] sm:$0xff]
    %v5862 = vld [vmem:[#allocation12 + $0x168] sm:$0xff]
    %v5863 = vld [vmem:[#allocation12 + $0x170] sm:$0xff]
    %v5864 = vld [vmem:[#allocation12 + $0x178] sm:$0xff]
    %v5865 = vld [vmem:[#allocation12 + $0x180] sm:$0xff]
    %v5866 = vld [vmem:[#allocation12 + $0x188] sm:$0xff]
    %v5867 = vld [vmem:[#allocation12 + $0x190] sm:$0xff]
    %v5868 = vld [vmem:[#allocation12 + $0x198] sm:$0xff]
    %v5869 = vld [vmem:[#allocation12 + $0x1a0] sm:$0xff]
    %v5870 = vld [vmem:[#allocation12 + $0x1a8] sm:$0xff]
    %v5871 = vld [vmem:[#allocation12 + $0x1b0] sm:$0xff]
    %v5872 = vld [vmem:[#allocation12 + $0x1b8] sm:$0xff]
    %v5873 = vld [vmem:[#allocation12 + $0x1c0] sm:$0xff]
    %v5874 = vld [vmem:[#allocation12 + $0x1c8] sm:$0xff]
    %v5875 = vld [vmem:[#allocation12 + $0x1d0] sm:$0xff]
    %v5876 = vld [vmem:[#allocation12 + $0x1d8] sm:$0xff]
    %v5877 = vld [vmem:[#allocation12 + $0x1e0] sm:$0xff]
    %v5878 = vld [vmem:[#allocation12 + $0x1e8] sm:$0xff]
    %v5879 = vld [vmem:[#allocation12 + $0x1f0] sm:$0xff]
    %v5880 = vld [vmem:[#allocation12 + $0x1f8] sm:$0xff]
    %v5881 = vld [vmem:[#allocation12 + $0x200] sm:$0xff]
    %v5882 = vld [vmem:[#allocation12 + $0x208] sm:$0xff]
    %v5883 = vld [vmem:[#allocation12 + $0x210] sm:$0xff]
    %v5884 = vld [vmem:[#allocation12 + $0x218] sm:$0xff]
    %v5885 = vld [vmem:[#allocation12 + $0x220] sm:$0xff]
    %v5886 = vld [vmem:[#allocation12 + $0x228] sm:$0xff]
    %v5887 = vld [vmem:[#allocation12 + $0x230] sm:$0xff]
    %v5888 = vld [vmem:[#allocation12 + $0x238] sm:$0xff]
    %v5889 = vld [vmem:[#allocation12 + $0x240] sm:$0xff]
    %v5890 = vld [vmem:[#allocation12 + $0x248] sm:$0xff]
    %v5891 = vld [vmem:[#allocation12 + $0x250] sm:$0xff]
    %v5892 = vld [vmem:[#allocation12 + $0x258] sm:$0xff]
    %v5893 = vld [vmem:[#allocation12 + $0x260] sm:$0xff]
    %v5894 = vld [vmem:[#allocation12 + $0x268] sm:$0xff]
    %v5895 = vld [vmem:[#allocation12 + $0x270] sm:$0xff]
    %v5896 = vld [vmem:[#allocation12 + $0x278] sm:$0xff]
    %v5897 = vld [vmem:[#allocation12 + $0x280] sm:$0xff]
    %v5898 = vld [vmem:[#allocation12 + $0x288] sm:$0xff]
    %v5899 = vld [vmem:[#allocation12 + $0x290] sm:$0xff]
    %v5900 = vld [vmem:[#allocation12 + $0x298] sm:$0xff]
    %v5901 = vld [vmem:[#allocation12 + $0x2a0] sm:$0xff]
    %v5902 = vld [vmem:[#allocation12 + $0x2a8] sm:$0xff]
    %v5903 = vld [vmem:[#allocation12 + $0x2b0] sm:$0xff]
    %v5904 = vld [vmem:[#allocation12 + $0x2b8] sm:$0xff]
    %v5905 = vld [vmem:[#allocation12 + $0x2c0] sm:$0xff]
    %v5906 = vld [vmem:[#allocation12 + $0x2c8] sm:$0xff]
    %v5907 = vld [vmem:[#allocation12 + $0x2d0] sm:$0xff]
    %v5908 = vld [vmem:[#allocation12 + $0x2d8] sm:$0xff]
    %v5909 = vld [vmem:[#allocation12 + $0x2e0] sm:$0xff]
    %v5910 = vld [vmem:[#allocation12 + $0x2e8] sm:$0xff]
    %v5911 = vld [vmem:[#allocation12 + $0x2f0] sm:$0xff]
    %v5912 = vld [vmem:[#allocation12 + $0x2f8] sm:$0xff]
    %v5913 = vld [vmem:[#allocation12 + $0x300] sm:$0xff]
    %v5914 = vld [vmem:[#allocation12 + $0x308] sm:$0xff]
    %v5915 = vld [vmem:[#allocation12 + $0x310] sm:$0xff]
    %v5916 = vld [vmem:[#allocation12 + $0x318] sm:$0xff]
    %v5917 = vld [vmem:[#allocation12 + $0x320] sm:$0xff]
    %v5918 = vld [vmem:[#allocation12 + $0x328] sm:$0xff]
    %v5919 = vld [vmem:[#allocation12 + $0x330] sm:$0xff]
    %v5920 = vld [vmem:[#allocation12 + $0x338] sm:$0xff]
    %v5921 = vld [vmem:[#allocation12 + $0x340] sm:$0xff]
    %v5922 = vld [vmem:[#allocation12 + $0x348] sm:$0xff]
    %v5923 = vld [vmem:[#allocation12 + $0x350] sm:$0xff]
    %v5924 = vld [vmem:[#allocation12 + $0x358] sm:$0xff]
    %v5925 = vld [vmem:[#allocation12 + $0x360] sm:$0xff]
    %v5926 = vld [vmem:[#allocation12 + $0x368] sm:$0xff]
    %v5927 = vld [vmem:[#allocation12 + $0x370] sm:$0xff]
    %v5928 = vld [vmem:[#allocation12 + $0x378] sm:$0xff]
    %v5929 = vld [vmem:[#allocation12 + $0x380] sm:$0xff]
    %v5930 = vld [vmem:[#allocation12 + $0x388] sm:$0xff]
    %v5931 = vld [vmem:[#allocation12 + $0x390] sm:$0xff]
    %v5932 = vld [vmem:[#allocation12 + $0x398] sm:$0xff]
    %v5933 = vld [vmem:[#allocation12 + $0x3a0] sm:$0xff]
    %v5934 = vld [vmem:[#allocation12 + $0x3a8] sm:$0xff]
    %v5935 = vld [vmem:[#allocation12 + $0x3b0] sm:$0xff]
    %v5936 = vld [vmem:[#allocation12 + $0x3b8] sm:$0xff]
    %v5937 = vld [vmem:[#allocation12 + $0x3c0] sm:$0xff]
    %v5938 = vld [vmem:[#allocation12 + $0x3c8] sm:$0xff]
    %v5939 = vld [vmem:[#allocation12 + $0x3d0] sm:$0xff]
    %v5940 = vld [vmem:[#allocation12 + $0x3d8] sm:$0xff]
    %v5941 = vld [vmem:[#allocation12 + $0x3e0] sm:$0xff]
    %v5942 = vld [vmem:[#allocation12 + $0x3e8] sm:$0xff]
    %v5943 = vld [vmem:[#allocation12 + $0x3f0] sm:$0xff]
    %v5944 = vld [vmem:[#allocation12 + $0x3f8] sm:$0xff]
    %v5945 = vld [vmem:[%s5] sm:$0xf]
    %v5947 = vlaneseq
    %v5948 = vshrl.u32 %v5947, 7
    %v5949 = vsub.s32 0, %v5948
    %v5950 = vrot.slane %v5945, %v5949
    %v5951 = vlaneseq
    %v5952 = vshrl.u32 %v5951, 7
    %v5953 = vsub.s32 1, %v5952
    %v5954 = vrot.slane %v5945, %v5953
    %v5955 = vlaneseq
    %v5956 = vshrl.u32 %v5955, 7
    %v5957 = vsub.s32 2, %v5956
    %v5958 = vrot.slane %v5945, %v5957
    %v5959 = vlaneseq
    %v5960 = vshrl.u32 %v5959, 7
    %v5961 = vsub.s32 3, %v5960
    %v5962 = vrot.slane %v5945, %v5961
    %5967 = vmatprep.subr.mxu0 %v5818
    %5968 = vmatpush1.msra.mxu0 %v5817
    %5969 = vmatprep.subr.mxu0 %v5822
    %5970 = vmatpush1.msra.mxu0 %v5821
    %5971 = vmatprep.subr.mxu0 %v5826
    %5972 = vmatpush1.msra.mxu0 %v5825
    %5973 = vmatprep.subr.mxu0 %v5830
    %5974 = vmatpush1.msra.mxu0 %v5829
    %5975 = vmatprep.subr.mxu0 %v5834
    %5976 = vmatpush1.msra.mxu0 %v5833
    %5977 = vmatprep.subr.mxu0 %v5838
    %5978 = vmatpush1.msra.mxu0 %v5837
    %5979 = vmatprep.subr.mxu0 %v5842
    %5980 = vmatpush1.msra.mxu0 %v5841
    %5981 = vmatprep.subr.mxu0 %v5846
    %5982 = vmatpush1.msra.mxu0 %v5845
    %5983 = vmatprep.subr.mxu0 %v5850
    %5984 = vmatpush1.msra.mxu0 %v5849
    %5985 = vmatprep.subr.mxu0 %v5854
    %5986 = vmatpush1.msra.mxu0 %v5853
    %5987 = vmatprep.subr.mxu0 %v5858
    %5988 = vmatpush1.msra.mxu0 %v5857
    %5989 = vmatprep.subr.mxu0 %v5862
    %5990 = vmatpush1.msra.mxu0 %v5861
    %5991 = vmatprep.subr.mxu0 %v5866
    %5992 = vmatpush1.msra.mxu0 %v5865
    %5993 = vmatprep.subr.mxu0 %v5870
    %5994 = vmatpush1.msra.mxu0 %v5869
    %5995 = vmatprep.subr.mxu0 %v5874
    %5996 = vmatpush1.msra.mxu0 %v5873
    %5997 = vmatprep.subr.mxu0 %v5878
    %5998 = vmatpush1.msra.mxu0 %v5877
    %5999 = vmatprep.subr.mxu0 %v5882
    %6000 = vmatpush1.msra.mxu0 %v5881
    %6001 = vmatprep.subr.mxu0 %v5886
    %6002 = vmatpush1.msra.mxu0 %v5885
    %6003 = vmatprep.subr.mxu0 %v5890
    %6004 = vmatpush1.msra.mxu0 %v5889
    %6005 = vmatprep.subr.mxu0 %v5894
    %6006 = vmatpush1.msra.mxu0 %v5893
    %6007 = vmatprep.subr.mxu0 %v5898
    %6008 = vmatpush1.msra.mxu0 %v5897
    %6009 = vmatprep.subr.mxu0 %v5902
    %6010 = vmatpush1.msra.mxu0 %v5901
    %6011 = vmatprep.subr.mxu0 %v5906
    %6012 = vmatpush1.msra.mxu0 %v5905
    %6013 = vmatprep.subr.mxu0 %v5910
    %6014 = vmatpush1.msra.mxu0 %v5909
    %6015 = vmatprep.subr.mxu0 %v5914
    %6016 = vmatpush1.msra.mxu0 %v5913
    %6017 = vmatprep.subr.mxu0 %v5918
    %6018 = vmatpush1.msra.mxu0 %v5917
    %6019 = vmatprep.subr.mxu0 %v5922
    %6020 = vmatpush1.msra.mxu0 %v5921
    %6021 = vmatprep.subr.mxu0 %v5926
    %6022 = vmatpush1.msra.mxu0 %v5925
    %6023 = vmatprep.subr.mxu0 %v5930
    %6024 = vmatpush1.msra.mxu0 %v5929
    %6025 = vmatprep.subr.mxu0 %v5934
    %6026 = vmatpush1.msra.mxu0 %v5933
    %6027 = vmatprep.subr.mxu0 %v5938
    %6028 = vmatpush1.msra.mxu0 %v5937
    %6029 = vmatprep.subr.mxu0 %v5942
    %6030 = vmatpush1.msra.mxu0 %v5941
    %6031 = vmatprep.mubr.f32.mxu0 %v5816
    %6032 = vmatmul.mubr.f32.gmra.mrb[0].mxu0 %v5813
    %v6033 = vpop.f32.mrb[0].mxu0
    %v6034 = vadd.f32 %v5950, %v6033
    %v6035 = vpop.f32.mrb[0].mxu0
    %v6036 = vadd.f32 %v5954, %v6035
    %6037 = vdwg.mxu0
    %6038 = vmatprep.subr.mxu0 %v5820
    %6039 = vmatpush1.msra.mxu0 %v5819
    %6040 = vmatprep.subr.mxu0 %v5824
    %6041 = vmatpush1.msra.mxu0 %v5823
    %6042 = vmatprep.subr.mxu0 %v5828
    %6043 = vmatpush1.msra.mxu0 %v5827
    %6044 = vmatprep.subr.mxu0 %v5832
    %6045 = vmatpush1.msra.mxu0 %v5831
    %6046 = vmatprep.subr.mxu0 %v5836
    %6047 = vmatpush1.msra.mxu0 %v5835
    %6048 = vmatprep.subr.mxu0 %v5840
    %6049 = vmatpush1.msra.mxu0 %v5839
    %6050 = vmatprep.subr.mxu0 %v5844
    %6051 = vmatpush1.msra.mxu0 %v5843
    %6052 = vmatprep.subr.mxu0 %v5848
    %6053 = vmatpush1.msra.mxu0 %v5847
    %6054 = vmatprep.subr.mxu0 %v5852
    %6055 = vmatpush1.msra.mxu0 %v5851
    %6056 = vmatprep.subr.mxu0 %v5856
    %6057 = vmatpush1.msra.mxu0 %v5855
    %6058 = vmatprep.subr.mxu0 %v5860
    %6059 = vmatpush1.msra.mxu0 %v5859
    %6060 = vmatprep.subr.mxu0 %v5864
    %6061 = vmatpush1.msra.mxu0 %v5863
    %6062 = vmatprep.subr.mxu0 %v5868
    %6063 = vmatpush1.msra.mxu0 %v5867
    %6064 = vmatprep.subr.mxu0 %v5872
    %6065 = vmatpush1.msra.mxu0 %v5871
    %6066 = vmatprep.subr.mxu0 %v5876
    %6067 = vmatpush1.msra.mxu0 %v5875
    %6068 = vmatprep.subr.mxu0 %v5880
    %6069 = vmatpush1.msra.mxu0 %v5879
    %6070 = vmatprep.subr.mxu0 %v5884
    %6071 = vmatpush1.msra.mxu0 %v5883
    %6072 = vmatprep.subr.mxu0 %v5888
    %6073 = vmatpush1.msra.mxu0 %v5887
    %6074 = vmatprep.subr.mxu0 %v5892
    %6075 = vmatpush1.msra.mxu0 %v5891
    %6076 = vmatprep.subr.mxu0 %v5896
    %6077 = vmatpush1.msra.mxu0 %v5895
    %6078 = vmatprep.subr.mxu0 %v5900
    %6079 = vmatpush1.msra.mxu0 %v5899
    %6080 = vmatprep.subr.mxu0 %v5904
    %6081 = vmatpush1.msra.mxu0 %v5903
    %6082 = vmatprep.subr.mxu0 %v5908
    %6083 = vmatpush1.msra.mxu0 %v5907
    %6084 = vmatprep.subr.mxu0 %v5912
    %6085 = vmatpush1.msra.mxu0 %v5911
    %6086 = vmatprep.subr.mxu0 %v5916
    %6087 = vmatpush1.msra.mxu0 %v5915
    %6088 = vmatprep.subr.mxu0 %v5920
    %6089 = vmatpush1.msra.mxu0 %v5919
    %6090 = vmatprep.subr.mxu0 %v5924
    %6091 = vmatpush1.msra.mxu0 %v5923
    %6092 = vmatprep.subr.mxu0 %v5928
    %6093 = vmatpush1.msra.mxu0 %v5927
    %6094 = vmatprep.subr.mxu0 %v5932
    %6095 = vmatpush1.msra.mxu0 %v5931
    %6096 = vmatprep.subr.mxu0 %v5936
    %6097 = vmatpush1.msra.mxu0 %v5935
    %6098 = vmatprep.subr.mxu0 %v5940
    %6099 = vmatpush1.msra.mxu0 %v5939
    %6100 = vmatprep.subr.mxu0 %v5944
    %6101 = vmatpush1.msra.mxu0 %v5943
    %6102 = vmatprep.mubr.f32.mxu0 %v5816
    %6103 = vmatmul.mubr.f32.gmra.mrb[0].mxu0 %v5813
    %v6104 = vpop.f32.mrb[0].mxu0
    %v6105 = vadd.f32 %v5958, %v6104
    %v6106 = vpop.f32.mrb[0].mxu0
    %v6107 = vadd.f32 %v5962, %v6106
    %6108 = vdwg.mxu0
    %v6109 = vld [vmem:[%s1024] sm:$0xff]
    %v6110 = vxor.u32 %v6034, 2147483648
    %v6111 = vmul.f32 %v6110, 1.442695
    %v6112 = vpow.pop %v6111
    %v6113 = vadd.f32 %v6112, 1.0
    %v6114 = vrcp.pop %v6113
    %v6115 = vmul.f32 1.0, %v6114
    %v6116 = vxor.u32 %v6036, 2147483648
    %v6117 = vmul.f32 %v6116, 1.442695
    %v6118 = vpow.pop %v6117
    %v6119 = vadd.f32 %v6118, 1.0
    %v6120 = vrcp.pop %v6119
    %v6121 = vmul.f32 1.0, %v6120
    %v6122 = vtanh.pop %v6105
    %v6123 = vxor.u32 %v6107, 2147483648
    %v6124 = vmul.f32 %v6123, 1.442695
    %v6125 = vpow.pop %v6124
    %v6126 = vadd.f32 %v6125, 1.0
    %v6127 = vrcp.pop %v6126
    %v6128 = vmul.f32 1.0, %v6127
    %v6129 = vmul.f32 %v6121, %v6109
    %v6130 = vmul.f32 %v6115, %v6122
    %v6131 = vadd.f32 %v6129, %v6130
    %v6132 = vtanh.pop %v6131
    %v6133 = vmul.f32 %v6128, %v6132
    %6134 = vst [vmem:[%s730] sm:$0xff] %v6133
    %6135 = vst [vmem:[%s1024] sm:$0xff] %v6131
    %s6136 = scalar_lea.vmem [#allocation3], 72
    %6137 = vst [vmem:[%s6136] sm:$0xff] %v6133
    %v6138 = vld [vmem:[#allocation3] sm:$0xff]
    %v6139 = vld [vmem:[#allocation3 + $0x8] sm:$0xff]
    %v6140 = vld [vmem:[#allocation3 + $0x10] sm:$0xff]
    %v6141 = vld [vmem:[#allocation3 + $0x18] sm:$0xff]
    %v6142 = vld [vmem:[#allocation3 + $0x20] sm:$0xff]
    %v6143 = vld [vmem:[#allocation3 + $0x28] sm:$0xff]
    %v6144 = vld [vmem:[#allocation3 + $0x30] sm:$0xff]
    %v6145 = vld [vmem:[#allocation3 + $0x38] sm:$0xff]
    %v6146 = vld [vmem:[#allocation3 + $0x40] sm:$0xff]
    %v6147 = vld [vmem:[#allocation3 + $0x48] sm:$0xff]
    %v6148 = vld [vmem:[#allocation14] sm:$0xff]
    %v6149 = vld [vmem:[#allocation14 + $0x8] sm:$0xff]
    %v6150 = vld [vmem:[#allocation14 + $0x10] sm:$0xff]
    %v6151 = vld [vmem:[#allocation14 + $0x18] sm:$0xff]
    %v6152 = vld [vmem:[#allocation14 + $0x20] sm:$0xff]
    %v6153 = vld [vmem:[#allocation14 + $0x28] sm:$0xff]
    %v6154 = vld [vmem:[#allocation14 + $0x30] sm:$0xff]
    %v6155 = vld [vmem:[#allocation14 + $0x38] sm:$0xff]
    %v6156 = vld [vmem:[#allocation14 + $0x40] sm:$0xff]
    %v6157 = vld [vmem:[#allocation14 + $0x48] sm:$0xff]
    %v6158 = vld [vmem:[#allocation14 + $0x50] sm:$0xff]
    %v6159 = vld [vmem:[#allocation14 + $0x58] sm:$0xff]
    %v6160 = vld [vmem:[#allocation14 + $0x60] sm:$0xff]
    %v6161 = vld [vmem:[#allocation14 + $0x68] sm:$0xff]
    %v6162 = vld [vmem:[#allocation14 + $0x70] sm:$0xff]
    %v6163 = vld [vmem:[#allocation14 + $0x78] sm:$0xff]
    %v6164 = vld [vmem:[%s7] sm:$0x1]
    %v6166 = vlaneseq
    %v6167 = vshrl.u32 %v6166, 7
    %v6168 = vsub.s32 0, %v6167
    %v6169 = vrot.slane %v6164, %v6168
    %6171 = vmatprep.subr.mxu0 0.0
    %6172 = vmatpush1.msra.mxu0 %v6148
    %6173 = vmatprep.subr.mxu0 0.0
    %6174 = vmatpush1.msra.mxu0 %v6149
    %6175 = vmatprep.subr.mxu0 0.0
    %6176 = vmatpush1.msra.mxu0 %v6150
    %6177 = vmatprep.subr.mxu0 0.0
    %6178 = vmatpush1.msra.mxu0 %v6151
    %6179 = vmatprep.subr.mxu0 0.0
    %6180 = vmatpush1.msra.mxu0 %v6152
    %6181 = vmatprep.subr.mxu0 0.0
    %6182 = vmatpush1.msra.mxu0 %v6153
    %6183 = vmatprep.subr.mxu0 0.0
    %6184 = vmatpush1.msra.mxu0 %v6154
    %6185 = vmatprep.subr.mxu0 0.0
    %6186 = vmatpush1.msra.mxu0 %v6155
    %6187 = vmatprep.subr.mxu0 0.0
    %6188 = vmatpush1.msra.mxu0 %v6156
    %6189 = vmatprep.subr.mxu0 0.0
    %6190 = vmatpush1.msra.mxu0 %v6157
    %6191 = vmatprep.subr.mxu0 0.0
    %6192 = vmatpush1.msra.mxu0 %v6158
    %6193 = vmatprep.subr.mxu0 0.0
    %6194 = vmatpush1.msra.mxu0 %v6159
    %6195 = vmatprep.subr.mxu0 0.0
    %6196 = vmatpush1.msra.mxu0 %v6160
    %6197 = vmatprep.subr.mxu0 0.0
    %6198 = vmatpush1.msra.mxu0 %v6161
    %6199 = vmatprep.subr.mxu0 0.0
    %6200 = vmatpush1.msra.mxu0 %v6162
    %6201 = vmatprep.subr.mxu0 0.0
    %6202 = vmatpush1.msra.mxu0 %v6163
    %6203 = vmatprep.subr.mxu0 0.0
    %6204 = vmatpush1.msra.mxu0 0.0
    %6205 = vmatprep.subr.mxu0 0.0
    %6206 = vmatpush1.msra.mxu0 0.0
    %6207 = vmatprep.subr.mxu0 0.0
    %6208 = vmatpush1.msra.mxu0 0.0
    %6209 = vmatprep.subr.mxu0 0.0
    %6210 = vmatpush1.msra.mxu0 0.0
    %6211 = vmatprep.subr.mxu0 0.0
    %6212 = vmatpush1.msra.mxu0 0.0
    %6213 = vmatprep.subr.mxu0 0.0
    %6214 = vmatpush1.msra.mxu0 0.0
    %6215 = vmatprep.subr.mxu0 0.0
    %6216 = vmatpush1.msra.mxu0 0.0
    %6217 = vmatprep.subr.mxu0 0.0
    %6218 = vmatpush1.msra.mxu0 0.0
    %6219 = vmatprep.subr.mxu0 0.0
    %6220 = vmatpush1.msra.mxu0 0.0
    %6221 = vmatprep.subr.mxu0 0.0
    %6222 = vmatpush1.msra.mxu0 0.0
    %6223 = vmatprep.subr.mxu0 0.0
    %6224 = vmatpush1.msra.mxu0 0.0
    %6225 = vmatprep.subr.mxu0 0.0
    %6226 = vmatpush1.msra.mxu0 0.0
    %6227 = vmatprep.subr.mxu0 0.0
    %6228 = vmatpush1.msra.mxu0 0.0
    %6229 = vmatprep.subr.mxu0 0.0
    %6230 = vmatpush1.msra.mxu0 0.0
    %6231 = vmatprep.subr.mxu0 0.0
    %6232 = vmatpush1.msra.mxu0 0.0
    %6233 = vmatprep.subr.mxu0 0.0
    %6234 = vmatpush1.msra.mxu0 0.0
    %6235 = vmatprep.mubr.f32.mxu0 0.0
    %6236 = vmatmul.mubr.f32.gmra.mrb[0].mxu0 %v6138
    %v6237 = vpop.f32.mrb[0].mxu0
    %v6238 = vadd.f32 %v6169, %v6237
    %v6239 = vpop.f32.mrb[0].mxu0
    %6240 = vmatprep.mubr.f32.mxu0 0.0
    %6241 = vmatmul.mubr.f32.gmra.mrb[0].mxu0 %v6139
    %v6242 = vpop.f32.mrb[0].mxu0
    %v6243 = vadd.f32 %v6169, %v6242
    %v6244 = vpop.f32.mrb[0].mxu0
    %6245 = vmatprep.mubr.f32.mxu0 0.0
    %6246 = vmatmul.mubr.f32.gmra.mrb[0].mxu0 %v6140
    %v6247 = vpop.f32.mrb[0].mxu0
    %v6248 = vadd.f32 %v6169, %v6247
    %v6249 = vpop.f32.mrb[0].mxu0
    %6250 = vmatprep.mubr.f32.mxu0 0.0
    %6251 = vmatmul.mubr.f32.gmra.mrb[0].mxu0 %v6141
    %v6252 = vpop.f32.mrb[0].mxu0
    %v6253 = vadd.f32 %v6169, %v6252
    %v6254 = vpop.f32.mrb[0].mxu0
    %6255 = vmatprep.mubr.f32.mxu0 0.0
    %6256 = vmatmul.mubr.f32.gmra.mrb[0].mxu0 %v6142
    %v6257 = vpop.f32.mrb[0].mxu0
    %v6258 = vadd.f32 %v6169, %v6257
    %v6259 = vpop.f32.mrb[0].mxu0
    %6260 = vmatprep.mubr.f32.mxu0 0.0
    %6261 = vmatmul.mubr.f32.gmra.mrb[0].mxu0 %v6143
    %v6262 = vpop.f32.mrb[0].mxu0
    %v6263 = vadd.f32 %v6169, %v6262
    %v6264 = vpop.f32.mrb[0].mxu0
    %6265 = vmatprep.mubr.f32.mxu0 0.0
    %6266 = vmatmul.mubr.f32.gmra.mrb[0].mxu0 %v6144
    %v6267 = vpop.f32.mrb[0].mxu0
    %v6268 = vadd.f32 %v6169, %v6267
    %v6269 = vpop.f32.mrb[0].mxu0
    %6270 = vmatprep.mubr.f32.mxu0 0.0
    %6271 = vmatmul.mubr.f32.gmra.mrb[0].mxu0 %v6145
    %v6272 = vpop.f32.mrb[0].mxu0
    %v6273 = vadd.f32 %v6169, %v6272
    %v6274 = vpop.f32.mrb[0].mxu0
    %6275 = vmatprep.mubr.f32.mxu0 0.0
    %6276 = vmatmul.mubr.f32.gmra.mrb[0].mxu0 %v6146
    %v6277 = vpop.f32.mrb[0].mxu0
    %v6278 = vadd.f32 %v6169, %v6277
    %v6279 = vpop.f32.mrb[0].mxu0
    %6280 = vmatprep.mubr.f32.mxu0 0.0
    %6281 = vmatmul.mubr.f32.gmra.mrb[0].mxu0 %v6147
    %v6282 = vpop.f32.mrb[0].mxu0
    %v6283 = vadd.f32 %v6169, %v6282
    %v6284 = vpop.f32.mrb[0].mxu0
    %6285 = vdwg.mxu0
    %6286 = vst [vmem:[#allocation15] sm:$0xff] %v6238
    %6287 = vst [vmem:[#allocation15 + $0x8] sm:$0xff] %v6243
    %6288 = vst [vmem:[#allocation15 + $0x10] sm:$0xff] %v6248
    %6289 = vst [vmem:[#allocation15 + $0x18] sm:$0xff] %v6253
    %6290 = vst [vmem:[#allocation15 + $0x20] sm:$0xff] %v6258
    %6291 = vst [vmem:[#allocation15 + $0x28] sm:$0xff] %v6263
    %6292 = vst [vmem:[#allocation15 + $0x30] sm:$0xff] %v6268
    %6293 = vst [vmem:[#allocation15 + $0x38] sm:$0xff] %v6273
    %6294 = vst [vmem:[#allocation15 + $0x40] sm:$0xff] %v6278
    %6295 = vst [vmem:[#allocation15 + $0x48] sm:$0xff] %v6283
    // Predicated region
    $region54: #{tpu_custom_call.1} parent=1 // pred_check
      _
    $region55: #{tpu_custom_call.1} parent=1 // pred_check_branch
      %6297 = sbr.rel (0) target = $region57
    $region56: #{tpu_custom_call.1} parent=1 // pred_region
      %s6299 = ssub.s32 1280, 1280
      %6300 = vsyncadd [#allocation8], %s6299
      %s6301 = sshll.u32 [#allocation15], 4
      %s6302 = int_to_ptr.vmem [resolvable:$true] %s6301
      %6307 = dma.vmem_to_hbm [thread:$0]  %s6302, 1280, %s8, [#allocation8], 128, 128, 8
    $region57: #{tpu_custom_call.1} parent=1 // pred_fallthru
      _
    // Predicated region
    $region58: #{tpu_custom_call.1} parent=1 // pred_check
      _
    $region59: #{tpu_custom_call.1} parent=1 // pred_check_branch
      %6309 = sbr.rel (0) target = $region61
    $region60: #{tpu_custom_call.1} parent=1 // pred_region
      %6310 = dma.done [#allocation8], 1280
    $region61: #{tpu_custom_call.1} parent=1 // pred_fallthru
      _
    %6311 = vsyncpa [#allocation7], 1
    %6312 = vsyncpa [#allocation10], 1
    %6313 = vsyncpa [#allocation13], 1
    %6314 = vsyncpa [#allocation8], 1

</llo_original>
